<compile_context>
chip_gen: v6e
topology: v6e:2x2x1
jax: 0.10.0
libtpu: 0.0.40
codegen_flags: <defaults>
</compile_context>

<pallas_src>
import functools

import jax
import jax.numpy as jnp
from jax.experimental import pallas as pl
from jax.experimental.pallas import tpu as pltpu


def _attention_kernel(z_ref, w1b_ref, b1t_ref, w2b_ref, bexp_ref, vsumw_ref,
                      out_ref, beta_ref):
    # z_ref    : (tn, M*D)     streamed input tile (bf16 by default, f32 optional)
    # w1b_ref  : (M*D, M*H)    block-diagonal first Linear weight (f32, resident)
    # b1t_ref  : (1, M*H)      first Linear bias tiled per view (f32)
    # w2b_ref  : (M*H, M)      block-diagonal second Linear weight (f32)
    # bexp_ref : (M, M*D)      0/1 matrix broadcasting beta[:, m] over view m's lanes
    # vsumw_ref: (G, M*D, G*D) 0/1 group-block view-sum matrices: row group g of the
    #                          tile lands in lane block g of the packed output
    # out_ref  : (tn/G, G*D)   lane-dense packed pooled output (f32)
    # beta_ref : (tn, M)       softmax attention weights (f32)
    #
    # Compute is f32 throughout; z streams in bf16 only to halve the HBM read.
    zf = z_ref[...].astype(jnp.float32)                                   # (tn, M*D)

    # --- project: Linear -> Tanh -> Linear(., 1), all views in one matmul -----
    h = jnp.tanh(
        jnp.dot(zf, w1b_ref[...], preferred_element_type=jnp.float32)
        + b1t_ref[...]
    )                                                                     # (tn, M*H)
    w = jnp.dot(h, w2b_ref[...], preferred_element_type=jnp.float32)      # (tn, M)

    # --- softmax over the view axis (dim=1 in PyTorch) ------------------------
    w_max = jnp.max(w, axis=-1, keepdims=True)                            # (tn, 1)
    e = jnp.exp(w - w_max)                                                # (tn, M)
    denom = jnp.sum(e, axis=-1, keepdims=True)                            # (tn, 1)
    beta = e * pl.reciprocal(denom, approx=False)                         # (tn, M)

    # --- weighted view-sum, emitted directly in the lane-packed layout --------
    beta_full = jnp.dot(beta, bexp_ref[...],
                        preferred_element_type=jnp.float32)               # (tn, M*D)
    prod = beta_full * zf                                                 # (tn, M*D)

    tn = prod.shape[0]
    G = vsumw_ref.shape[0]
    tng = tn // G
    acc = None
    for g in range(G):  # static unroll; row-group slices are vreg-row aligned
        part = jnp.dot(prod[g * tng:(g + 1) * tng, :], vsumw_ref[g],
                       preferred_element_type=jnp.float32)                # (tng, G*D)
        acc = part if acc is None else acc + part

    out_ref[...] = acc
    beta_ref[...] = beta


def _pick_tiles(N, D, tn):
    """Adaptive row tile + row-group packing factor for the pooled output."""
    if tn is None:
        # Big enough to amortize the ~0.35us per-grid-step overhead, small enough
        # that the parallel grid axis keeps >= 2 steps (v7x has 2 TensorCores).
        tn = int(pl.next_power_of_2(max(1, pl.cdiv(N, 2))))
        tn = max(512, min(4096, tn))
    if tn % 32 != 0:
        raise ValueError("tn must be a multiple of 32")
    # Pack G row groups into G*D output lanes (ideally 128 -> unmasked stores).
    G = 1
    while (G * 2 * D <= 128) and (G * 2 <= 8) and (tn % (8 * G * 2) == 0):
        G *= 2
    return tn, G


@functools.partial(jax.jit, static_argnames=("tn", "stream_dtype"))
def attention_forward(z, w1, b1, w2_row, *, tn=None, stream_dtype=jnp.bfloat16):
    """z: (N, M, D); w1: (D, H); b1: (1, H); w2_row: (1, H).

    Returns (pooled (N, D) float32, beta (N, M, 1) float32) matching the
    PyTorch module.  `stream_dtype` controls only how z is streamed HBM->VMEM;
    compute and outputs are float32.
    """
    N, M, D = z.shape
    H = w1.shape[1]
    f32 = jnp.float32
    stream_dtype = jnp.dtype(stream_dtype)

    tn, G = _pick_tiles(N, D, tn)
    n_pad = int(pl.cdiv(N, tn)) * tn
    n_steps = n_pad // tn
    tng = tn // G

    # Lane-dense 2D layout, streamed in stream_dtype (bf16 halves the dominant
    # HBM read).  Zero-padded rows give uniform beta and zero pooled and are
    # sliced off below -- intentional, do not "fix".
    z2d = z.reshape(N, M * D).astype(stream_dtype)
    if n_pad != N:
        z2d = jnp.pad(z2d, ((0, n_pad - N), (0, 0)))

    eye_m = jnp.eye(M, dtype=f32)
    # Block-diagonal W1: out[m*D+d, k*H+h] = (m==k) * w1[d, h]
    w1_blk = jnp.einsum("mk,dh->mdkh", eye_m, w1.astype(f32)).reshape(M * D, M * H)
    # Bias tiled per view: (1, M*H)
    b1_t = jnp.tile(b1.astype(f32), (1, M))
    # Block-diagonal W2 (output width 1 per view): out[k*H+h, m] = (k==m) * w2[h]
    w2_blk = jnp.einsum("km,h->khm", eye_m, w2_row[0].astype(f32)).reshape(M * H, M)
    # Broadcast matrix: beta (tn, M) @ bexp (M, M*D) -> per-view-column beta
    bexp = jnp.repeat(eye_m, D, axis=1)                                   # (M, M*D)
    # Group-block view-sum matrices: vsumw[g, m*D+d, g*D+d] = 1.  Summing the G
    # per-group matmul results yields the packed (tn/G, G*D) pooled output with
    # no in-kernel reshape/relayout and no extra MXU passes.
    vsum = jnp.tile(jnp.eye(D, dtype=f32), (M, 1))                        # (M*D, D)
    vsumw = jnp.zeros((G, M * D, G * D), f32)
    for g in range(G):
        vsumw = vsumw.at[g, :, g * D:(g + 1) * D].set(vsum)

    grid_spec = pltpu.PrefetchScalarGridSpec(
        num_scalar_prefetch=0,
        grid=(n_steps,),
        in_specs=[
            pl.BlockSpec((tn, M * D), lambda i: (i, 0)),           # z tile (streamed)
            pl.BlockSpec((M * D, M * H), lambda i: (0, 0)),        # W1 block-diag
            pl.BlockSpec((1, M * H), lambda i: (0, 0)),            # b1 tiled
            pl.BlockSpec((M * H, M), lambda i: (0, 0)),            # W2 block-diag
            pl.BlockSpec((M, M * D), lambda i: (0, 0)),            # beta broadcast
            pl.BlockSpec((G, M * D, G * D), lambda i: (0, 0, 0)),  # view-sum blocks
        ],
        out_specs=[
            pl.BlockSpec((tng, G * D), lambda i: (i, 0)),          # packed pooled
            pl.BlockSpec((tn, M), lambda i: (i, 0)),               # beta
        ],
    )

    out_shapes = (
        jax.ShapeDtypeStruct((n_pad // G, G * D), f32),
        jax.ShapeDtypeStruct((n_pad, M), f32),
    )

    cost = pl.CostEstimate(
        flops=(2 * n_pad * (M * D) * (M * H)        # projection matmul
               + 2 * n_pad * (M * H) * M            # width-1 second linear
               + 2 * n_pad * M * (M * D)            # beta broadcast matmul
               + n_pad * M * D                      # beta_full * z
               + 2 * n_pad * (M * D) * (G * D)),    # packed view-sum matmuls
        transcendentals=n_pad * M * H + n_pad * M,  # tanh + exp
        bytes_accessed=(n_pad * M * D * stream_dtype.itemsize  # z read (bf16)
                        + n_pad * D * 4                        # pooled write (f32)
                        + n_pad * M * 4),                      # beta write (f32)
    )

    pooled_packed, beta2d = pl.pallas_call(
        _attention_kernel,
        out_shape=out_shapes,
        grid_spec=grid_spec,
        compiler_params=pltpu.CompilerParams(
            dimension_semantics=("parallel",),
            vmem_limit_bytes=32 * 1024 * 1024,
        ),
        cost_estimate=cost,
    )(z2d, w1_blk, b1_t, w2_blk, bexp, vsumw)

    # Unpack (n_pad/G, G*D) -> (n_pad, D): within grid step i, lane block g,
    # packed row k holds original row i*tn + g*(tn/G) + k.
    pooled = (pooled_packed.reshape(n_steps, tng, G, D)
              .transpose(0, 2, 1, 3)
              .reshape(n_pad, D))

    return pooled[:N], beta2d[:N, :, None]


def attention_reference(z, w1, b1, w2_row):
    """Pure-JAX reference mirroring the PyTorch module (high-precision matmuls)."""
    hp = jax.lax.Precision.HIGHEST
    h = jnp.tanh(jnp.einsum("nmd,dh->nmh", z, w1, precision=hp) + b1[None, :, :])
    w = jnp.einsum("nmh,h->nm", h, w2_row[0], precision=hp)[:, :, None]   # (N, M, 1)
    beta = jax.nn.softmax(w, axis=1)
    return (beta * z).sum(axis=1), beta


if __name__ == "__main__":
    # N nodes, M=3 views, in_size=32, hidden=16 (module defaults).
    N, M, D, H = 4096, 3, 32, 16
    key = jax.random.PRNGKey(0)
    kz, kw1, kb1, kw2 = jax.random.split(key, 4)

    z = jax.random.normal(kz, (N, M, D), dtype=jnp.float32)

    # Deterministic PyTorch-Linear-style uniform init (synthetic weights).
    lim1 = 1.0 / jnp.sqrt(jnp.float32(D))
    lim2 = 1.0 / jnp.sqrt(jnp.float32(H))
    w1 = jax.random.uniform(kw1, (D, H), jnp.float32, -lim1, lim1)      # Linear(in, hidden).weight.T
    b1 = jax.random.uniform(kb1, (1, H), jnp.float32, -lim1, lim1)      # Linear(in, hidden).bias
    w2_row = jax.random.uniform(kw2, (1, H), jnp.float32, -lim2, lim2)  # Linear(hidden, 1).weight

    # Default fast path: z streamed as bf16 (f32 compute / f32 outputs).
    pooled, beta = attention_forward(z, w1, b1, w2_row)
    jax.block_until_ready((pooled, beta))
    assert pooled.shape == (N, D) and beta.shape == (N, M, 1)

    # Exact semantics of the bf16-streamed kernel: reference on bf16-rounded z.
    z_bf = z.astype(jnp.bfloat16).astype(jnp.float32)
    pooled_bref, beta_bref = attention_reference(z_bf, w1, b1, w2_row)
    assert jnp.allclose(pooled, pooled_bref, atol=1e-4, rtol=1e-4), "pooled mismatch (bf16 stream)"
    assert jnp.allclose(beta, beta_bref, atol=1e-4, rtol=1e-4), "beta mismatch (bf16 stream)"
    # Loose sanity check against the full-f32 reference (bf16 input rounding only).
    pooled_f32, beta_f32 = attention_reference(z, w1, b1, w2_row)
    assert jnp.allclose(pooled, pooled_f32, atol=5e-2, rtol=5e-2), "pooled far from f32 reference"

    # Exact-precision path (stream z as f32), tight tolerance vs f32 reference.
    pooled_x, beta_x = attention_forward(z, w1, b1, w2_row, stream_dtype=jnp.float32)
    jax.block_until_ready((pooled_x, beta_x))
    assert jnp.allclose(pooled_x, pooled_f32, atol=2e-5, rtol=2e-5), "pooled mismatch (f32 stream)"
    assert jnp.allclose(beta_x, beta_f32, atol=2e-5, rtol=2e-5), "beta mismatch (f32 stream)"

    # Exercise the remainder (padding) path: N not a multiple of the tile.
    N2 = 1000
    z2 = jax.random.normal(jax.random.PRNGKey(1), (N2, M, D), dtype=jnp.float32)
    pooled2, beta2 = attention_forward(z2, w1, b1, w2_row)
    jax.block_until_ready((pooled2, beta2))
    z2_bf = z2.astype(jnp.bfloat16).astype(jnp.float32)
    pooled2_ref, beta2_ref = attention_reference(z2_bf, w1, b1, w2_row)
    assert jnp.allclose(pooled2, pooled2_ref, atol=1e-4, rtol=1e-4), "pooled mismatch (ragged N)"
    assert jnp.allclose(beta2, beta2_ref, atol=1e-4, rtol=1e-4), "beta mismatch (ragged N)"

    print("KERNEL_OK")
</pallas_src>

<mosaic_0001>
module attributes {stable_mosaic.version = 11 : i64} {
  func.func @_attention_kernel(%arg0: i32, %arg1: memref<2048x96xbf16, #tpu.memory_space<vmem>>, %arg2: memref<96x48xf32, #tpu.memory_space<vmem>>, %arg3: memref<1x48xf32, #tpu.memory_space<vmem>>, %arg4: memref<48x3xf32, #tpu.memory_space<vmem>>, %arg5: memref<3x96xf32, #tpu.memory_space<vmem>>, %arg6: memref<4x96x128xf32, #tpu.memory_space<vmem>>, %arg7: memref<512x128xf32, #tpu.memory_space<vmem>>, %arg8: memref<2048x3xf32, #tpu.memory_space<vmem>>) attributes {dimension_semantics = [#tpu.dimension_semantics<parallel>], iteration_bounds = array<i64: 2>, scalar_prefetch = 0 : i64, scratch_operands = 0 : i64, tpu.core_type = #tpu.core_type<tc>, window_params = [{transform_indices = @transform_0, window_bounds = array<i64: 2048, 96>}, {pipeline_mode = #tpu.pipeline_mode<synchronous>, transform_indices = @transform_1, window_bounds = array<i64: 96, 48>}, {pipeline_mode = #tpu.pipeline_mode<synchronous>, transform_indices = @transform_2, window_bounds = array<i64: 1, 48>}, {pipeline_mode = #tpu.pipeline_mode<synchronous>, transform_indices = @transform_3, window_bounds = array<i64: 48, 3>}, {pipeline_mode = #tpu.pipeline_mode<synchronous>, transform_indices = @transform_4, window_bounds = array<i64: 3, 96>}, {pipeline_mode = #tpu.pipeline_mode<synchronous>, transform_indices = @transform_5, window_bounds = array<i64: 4, 96, 128>}, {transform_indices = @transform_6, window_bounds = array<i64: 512, 128>}, {transform_indices = @transform_7, window_bounds = array<i64: 2048, 3>}]} {
    %c0 = arith.constant 0 : index
    %c0_0 = arith.constant 0 : index
    %0 = vector.load %arg1[%c0, %c0_0] : memref<2048x96xbf16, #tpu.memory_space<vmem>>, vector<2048x96xbf16>
    %1 = arith.extf %0 : vector<2048x96xbf16> to vector<2048x96xf32>
    %c0_1 = arith.constant 0 : index
    %c0_2 = arith.constant 0 : index
    %2 = vector.load %arg2[%c0_1, %c0_2] : memref<96x48xf32, #tpu.memory_space<vmem>>, vector<96x48xf32>
    %cst = arith.constant dense<0.000000e+00> : vector<2048x48xf32>
    %3 = tpu.matmul %1, %2, %cst {dimension_numbers = #tpu.dot_dimension_numbers<[1], [0], [0], [1], [0, 0, 1, 1], [], []>} : vector<2048x96xf32>, vector<96x48xf32>, vector<2048x48xf32> -> vector<2048x48xf32>
    %c0_3 = arith.constant 0 : index
    %c0_4 = arith.constant 0 : index
    %4 = vector.load %arg3[%c0_3, %c0_4] : memref<1x48xf32, #tpu.memory_space<vmem>>, vector<1x48xf32>
    %5 = vector.broadcast %4 : vector<1x48xf32> to vector<2048x48xf32>
    %6 = arith.addf %3, %5 : vector<2048x48xf32>
    %7 = math.tanh %6 : vector<2048x48xf32>
    %c0_5 = arith.constant 0 : index
    %c0_6 = arith.constant 0 : index
    %8 = vector.load %arg4[%c0_5, %c0_6] : memref<48x3xf32, #tpu.memory_space<vmem>>, vector<48x3xf32>
    %cst_7 = arith.constant dense<0.000000e+00> : vector<2048x3xf32>
    %9 = tpu.matmul %7, %8, %cst_7 {dimension_numbers = #tpu.dot_dimension_numbers<[1], [0], [0], [1], [0, 0, 1, 1], [], []>} : vector<2048x48xf32>, vector<48x3xf32>, vector<2048x3xf32> -> vector<2048x3xf32>
    %cst_8 = arith.constant dense<0xFF800000> : vector<2048xf32>
    %10 = vector.multi_reduction <maximumf>, %9, %cst_8 [1] : vector<2048x3xf32> to vector<2048xf32>
    %11 = vector.shape_cast %10 : vector<2048xf32> to vector<2048x1xf32>
    %12 = vector.broadcast %11 : vector<2048x1xf32> to vector<2048x3xf32>
    %13 = arith.subf %9, %12 : vector<2048x3xf32>
    %14 = math.exp %13 : vector<2048x3xf32>
    %cst_9 = arith.constant dense<0.000000e+00> : vector<2048xf32>
    %15 = vector.multi_reduction <add>, %14, %cst_9 [1] : vector<2048x3xf32> to vector<2048xf32>
    %16 = vector.shape_cast %15 : vector<2048xf32> to vector<2048x1xf32>
    %17 = tpu.reciprocal %16 : vector<2048x1xf32> -> vector<2048x1xf32>
    %18 = vector.broadcast %17 : vector<2048x1xf32> to vector<2048x3xf32>
    %19 = arith.mulf %14, %18 : vector<2048x3xf32>
    %c0_10 = arith.constant 0 : index
    %c0_11 = arith.constant 0 : index
    %20 = vector.load %arg5[%c0_10, %c0_11] : memref<3x96xf32, #tpu.memory_space<vmem>>, vector<3x96xf32>
    %cst_12 = arith.constant dense<0.000000e+00> : vector<2048x96xf32>
    %21 = tpu.matmul %19, %20, %cst_12 {dimension_numbers = #tpu.dot_dimension_numbers<[1], [0], [0], [1], [0, 0, 1, 1], [], []>} : vector<2048x3xf32>, vector<3x96xf32>, vector<2048x96xf32> -> vector<2048x96xf32>
    %22 = arith.mulf %21, %1 : vector<2048x96xf32>
    %23 = vector.extract_strided_slice %22 {offsets = [0, 0], sizes = [512, 96], strides = [1, 1]} : vector<2048x96xf32> to vector<512x96xf32>
    %c0_13 = arith.constant 0 : index
    %c0_14 = arith.constant 0 : index
    %c0_15 = arith.constant 0 : index
    %24 = vector.load %arg6[%c0_13, %c0_14, %c0_15] : memref<4x96x128xf32, #tpu.memory_space<vmem>>, vector<1x96x128xf32>
    %25 = vector.shape_cast %24 : vector<1x96x128xf32> to vector<96x128xf32>
    %cst_16 = arith.constant dense<0.000000e+00> : vector<512x128xf32>
    %26 = tpu.matmul %23, %25, %cst_16 {dimension_numbers = #tpu.dot_dimension_numbers<[1], [0], [0], [1], [0, 0, 1, 1], [], []>} : vector<512x96xf32>, vector<96x128xf32>, vector<512x128xf32> -> vector<512x128xf32>
    %27 = vector.extract_strided_slice %22 {offsets = [512, 0], sizes = [512, 96], strides = [1, 1]} : vector<2048x96xf32> to vector<512x96xf32>
    %c1 = arith.constant 1 : index
    %c0_17 = arith.constant 0 : index
    %c0_18 = arith.constant 0 : index
    %28 = vector.load %arg6[%c1, %c0_17, %c0_18] : memref<4x96x128xf32, #tpu.memory_space<vmem>>, vector<1x96x128xf32>
    %29 = vector.shape_cast %28 : vector<1x96x128xf32> to vector<96x128xf32>
    %cst_19 = arith.constant dense<0.000000e+00> : vector<512x128xf32>
    %30 = tpu.matmul %27, %29, %cst_19 {dimension_numbers = #tpu.dot_dimension_numbers<[1], [0], [0], [1], [0, 0, 1, 1], [], []>} : vector<512x96xf32>, vector<96x128xf32>, vector<512x128xf32> -> vector<512x128xf32>
    %31 = arith.addf %26, %30 : vector<512x128xf32>
    %32 = vector.extract_strided_slice %22 {offsets = [1024, 0], sizes = [512, 96], strides = [1, 1]} : vector<2048x96xf32> to vector<512x96xf32>
    %c2 = arith.constant 2 : index
    %c0_20 = arith.constant 0 : index
    %c0_21 = arith.constant 0 : index
    %33 = vector.load %arg6[%c2, %c0_20, %c0_21] : memref<4x96x128xf32, #tpu.memory_space<vmem>>, vector<1x96x128xf32>
    %34 = vector.shape_cast %33 : vector<1x96x128xf32> to vector<96x128xf32>
    %cst_22 = arith.constant dense<0.000000e+00> : vector<512x128xf32>
    %35 = tpu.matmul %32, %34, %cst_22 {dimension_numbers = #tpu.dot_dimension_numbers<[1], [0], [0], [1], [0, 0, 1, 1], [], []>} : vector<512x96xf32>, vector<96x128xf32>, vector<512x128xf32> -> vector<512x128xf32>
    %36 = arith.addf %31, %35 : vector<512x128xf32>
    %37 = vector.extract_strided_slice %22 {offsets = [1536, 0], sizes = [512, 96], strides = [1, 1]} : vector<2048x96xf32> to vector<512x96xf32>
    %c3 = arith.constant 3 : index
    %c0_23 = arith.constant 0 : index
    %c0_24 = arith.constant 0 : index
    %38 = vector.load %arg6[%c3, %c0_23, %c0_24] : memref<4x96x128xf32, #tpu.memory_space<vmem>>, vector<1x96x128xf32>
    %39 = vector.shape_cast %38 : vector<1x96x128xf32> to vector<96x128xf32>
    %cst_25 = arith.constant dense<0.000000e+00> : vector<512x128xf32>
    %40 = tpu.matmul %37, %39, %cst_25 {dimension_numbers = #tpu.dot_dimension_numbers<[1], [0], [0], [1], [0, 0, 1, 1], [], []>} : vector<512x96xf32>, vector<96x128xf32>, vector<512x128xf32> -> vector<512x128xf32>
    %41 = arith.addf %36, %40 : vector<512x128xf32>
    %c0_26 = arith.constant 0 : index
    %c0_27 = arith.constant 0 : index
    %42 = vector.load %arg7[%c0_26, %c0_27] : memref<512x128xf32, #tpu.memory_space<vmem>>, vector<512x128xf32>
    tpu.vector_store %arg7[%c0_26, %c0_27], %41 {strides = array<i32>} : memref<512x128xf32, #tpu.memory_space<vmem>>, vector<512x128xf32>,
    %c0_28 = arith.constant 0 : index
    %c0_29 = arith.constant 0 : index
    %43 = vector.load %arg8[%c0_28, %c0_29] : memref<2048x3xf32, #tpu.memory_space<vmem>>, vector<2048x3xf32>
    tpu.vector_store %arg8[%c0_28, %c0_29], %19 {strides = array<i32>} : memref<2048x3xf32, #tpu.memory_space<vmem>>, vector<2048x3xf32>,
    return
  }
  func.func @transform_0(%arg0: i32) -> (i32, i32) {
    %c0_i32 = arith.constant 0 : i32
    %c0_i32_0 = arith.constant 0 : i32
    return %arg0, %c0_i32 : i32, i32
  }
  func.func @transform_1(%arg0: i32) -> (i32, i32) {
    %c0_i32 = arith.constant 0 : i32
    %c0_i32_0 = arith.constant 0 : i32
    %c0_i32_1 = arith.constant 0 : i32
    return %c0_i32, %c0_i32_0 : i32, i32
  }
  func.func @transform_2(%arg0: i32) -> (i32, i32) {
    %c0_i32 = arith.constant 0 : i32
    %c0_i32_0 = arith.constant 0 : i32
    %c0_i32_1 = arith.constant 0 : i32
    return %c0_i32, %c0_i32_0 : i32, i32
  }
  func.func @transform_3(%arg0: i32) -> (i32, i32) {
    %c0_i32 = arith.constant 0 : i32
    %c0_i32_0 = arith.constant 0 : i32
    %c0_i32_1 = arith.constant 0 : i32
    return %c0_i32, %c0_i32_0 : i32, i32
  }
  func.func @transform_4(%arg0: i32) -> (i32, i32) {
    %c0_i32 = arith.constant 0 : i32
    %c0_i32_0 = arith.constant 0 : i32
    %c0_i32_1 = arith.constant 0 : i32
    return %c0_i32, %c0_i32_0 : i32, i32
  }
  func.func @transform_5(%arg0: i32) -> (i32, i32, i32) {
    %c0_i32 = arith.constant 0 : i32
    %c0_i32_0 = arith.constant 0 : i32
    %c0_i32_1 = arith.constant 0 : i32
    %c0_i32_2 = arith.constant 0 : i32
    return %c0_i32, %c0_i32_0, %c0_i32_1 : i32, i32, i32
  }
  func.func @transform_6(%arg0: i32) -> (i32, i32) {
    %c0_i32 = arith.constant 0 : i32
    %c0_i32_0 = arith.constant 0 : i32
    return %arg0, %c0_i32 : i32, i32
  }
  func.func @transform_7(%arg0: i32) -> (i32, i32) {
    %c0_i32 = arith.constant 0 : i32
    %c0_i32_0 = arith.constant 0 : i32
    return %arg0, %c0_i32 : i32, i32
  }
}

</mosaic_0001>

<llo_original>
// kernel: attention_forward.1
$region0: #{attention_forward.1}
  #allocation0 [shape = 'u32[]', space=smem, size = 0x4, offset = 0x4, fixed_abs, tag = 'smem constant byte address 0x4 - core index']
  #allocation1 [shape = 'u32[144,128]{1,0:T(1,128)}', space=vmem, size = 0x12000, scoped, tag = 'internal scratch']
  %s0 = inlined_call_operand.vmem [shape: bf16[4096,96], index: 0, kind: input, shape index: {}]
  %s1 = inlined_call_operand.vmem [shape: f32[96,48], index: 1, kind: input, shape index: {}]
  %s2 = inlined_call_operand.vmem [shape: f32[1,48], index: 2, kind: input, shape index: {}]
  %s3 = inlined_call_operand.vmem [shape: f32[48,3], index: 3, kind: input, shape index: {}]
  %s4 = inlined_call_operand.vmem [shape: f32[3,96], index: 4, kind: input, shape index: {}]
  %s5 = inlined_call_operand.vmem [shape: f32[4,96,128], index: 5, kind: input, shape index: {}]
  %s6 = inlined_call_operand.vmem [shape: f32[1024,128], index: 6, kind: output, shape index: {0}]
  %s7 = inlined_call_operand.vmem [shape: f32[4096,3], index: 7, kind: output, shape index: {1}]
  %8 = xla_tuple %s6, %s7
  %s9 = sld [smem:[#allocation0]]
  $region65: #{attention_forward.1} parent=0
    _
  %s11 = ssub.s32 1, %s9
  %s12 = scalar_select 0, %s11, %s9
  loop: start=0, step=1, limit=4
  $region2: #{attention_forward.1} parent=0 // loop_pre_header
    _
  $region3: #{attention_forward.1} parent=0 // loop_header
    %s14 = sphi 0, %s18
    %p15 = scmp.ge.s32.totalorder %s14, 4
    %s24 = sphi 0, %s26
    %s27 = sphi 0, %s24
    %s28 = sphi 0, %s27
    %s44 = sphi 0, %s28
    %s48 = sphi 0, %s48
    %s50 = sphi 0, %s48
    %s51 = sphi 0, %s50
    %s65 = sphi 0, %s51
    %s69 = sphi 0, %s69
    %s71 = sphi 0, %s69
    %s72 = sphi 0, %s71
    %s86 = sphi 0, %s72
    %s90 = sphi 0, %s90
    %s92 = sphi 0, %s90
    %s93 = sphi 0, %s92
    %s107 = sphi 0, %s93
    %s111 = sphi 0, %s111
    %s113 = sphi 0, %s111
    %s114 = sphi 0, %s113
    %s128 = sphi 0, %s114
    %s132 = sphi 0, %s132
    %s134 = sphi 0, %s132
    %s135 = sphi 0, %s134
    %s149 = sphi 0, %s135
    %s155 = sphi 0, %s157
    %s158 = sphi 0, %s155
    %s159 = sphi 0, %s158
    %s175 = sphi 0, %s159
    %s181 = sphi 0, %s183
    %s184 = sphi 0, %s181
    %s185 = sphi 0, %s184
    %s201 = sphi 0, %s185
  $region4: #{attention_forward.1} parent=0 // loop_header_branch
    %17 = sbr.rel (%p15) target = $region8
  $region5: #{attention_forward.1} parent=0 // loop_body
    %s19 = ssub.s32 %s14, 1
    %s20 = ssub.s32 %s14, 2
    %s21 = sadd.s32 %s14, 1
    %s22 = ssub.s32 %s14, %s21
    %p23 = scmp.eq.s32.totalorder %s22, 0
    %s25 = sadd.s32 %s24, 1
    %s26 = scalar_select %p23, %s24, %s25
    %p29 = pneg %p23
    %p30 = scmp.eq.s32.totalorder %s14, 1
    %p31 = por %p29, %p30
    %p32 = scmp.ne.s32.totalorder %s24, %s27
    %p33 = scmp.eq.s32.totalorder %s14, 0
    %p34 = por %p32, %p33
    %p35 = scmp.ne.s32.totalorder %s24, %s27
    %p36 = scmp.eq.s32.totalorder %s19, 1
    %p37 = por %p35, %p36
    %p38 = scmp.ne.s32.totalorder %s27, %s28
    %p39 = scmp.eq.s32.totalorder %s19, 0
    %p40 = por %p38, %p39
    %p41 = scmp.ne.s32.totalorder %s27, %s28
    %p42 = scmp.eq.s32.totalorder %s20, 1
    %p43 = por %p41, %p42
    %p45 = scmp.ne.s32.totalorder %s28, %s44
    %p46 = scmp.eq.s32.totalorder %s20, 0
    %p47 = por %p45, %p46
    %s49 = sadd.s32 %s48, 1
    %p52 = scmp.eq.s32.totalorder %s14, 1
    %p53 = scmp.ne.s32.totalorder %s48, %s50
    %p54 = scmp.eq.s32.totalorder %s14, 0
    %p55 = por %p53, %p54
    %p56 = scmp.ne.s32.totalorder %s48, %s50
    %p57 = scmp.eq.s32.totalorder %s19, 1
    %p58 = por %p56, %p57
    %p59 = scmp.ne.s32.totalorder %s50, %s51
    %p60 = scmp.eq.s32.totalorder %s19, 0
    %p61 = por %p59, %p60
    %p62 = scmp.ne.s32.totalorder %s50, %s51
    %p63 = scmp.eq.s32.totalorder %s20, 1
    %p64 = por %p62, %p63
    %p66 = scmp.ne.s32.totalorder %s51, %s65
    %p67 = scmp.eq.s32.totalorder %s20, 0
    %p68 = por %p66, %p67
    %s70 = sadd.s32 %s69, 1
    %p73 = scmp.eq.s32.totalorder %s14, 1
    %p74 = scmp.ne.s32.totalorder %s69, %s71
    %p75 = scmp.eq.s32.totalorder %s14, 0
    %p76 = por %p74, %p75
    %p77 = scmp.ne.s32.totalorder %s69, %s71
    %p78 = scmp.eq.s32.totalorder %s19, 1
    %p79 = por %p77, %p78
    %p80 = scmp.ne.s32.totalorder %s71, %s72
    %p81 = scmp.eq.s32.totalorder %s19, 0
    %p82 = por %p80, %p81
    %p83 = scmp.ne.s32.totalorder %s71, %s72
    %p84 = scmp.eq.s32.totalorder %s20, 1
    %p85 = por %p83, %p84
    %p87 = scmp.ne.s32.totalorder %s72, %s86
    %p88 = scmp.eq.s32.totalorder %s20, 0
    %p89 = por %p87, %p88
    %s91 = sadd.s32 %s90, 1
    %p94 = scmp.eq.s32.totalorder %s14, 1
    %p95 = scmp.ne.s32.totalorder %s90, %s92
    %p96 = scmp.eq.s32.totalorder %s14, 0
    %p97 = por %p95, %p96
    %p98 = scmp.ne.s32.totalorder %s90, %s92
    %p99 = scmp.eq.s32.totalorder %s19, 1
    %p100 = por %p98, %p99
    %p101 = scmp.ne.s32.totalorder %s92, %s93
    %p102 = scmp.eq.s32.totalorder %s19, 0
    %p103 = por %p101, %p102
    %p104 = scmp.ne.s32.totalorder %s92, %s93
    %p105 = scmp.eq.s32.totalorder %s20, 1
    %p106 = por %p104, %p105
    %p108 = scmp.ne.s32.totalorder %s93, %s107
    %p109 = scmp.eq.s32.totalorder %s20, 0
    %p110 = por %p108, %p109
    %s112 = sadd.s32 %s111, 1
    %p115 = scmp.eq.s32.totalorder %s14, 1
    %p116 = scmp.ne.s32.totalorder %s111, %s113
    %p117 = scmp.eq.s32.totalorder %s14, 0
    %p118 = por %p116, %p117
    %p119 = scmp.ne.s32.totalorder %s111, %s113
    %p120 = scmp.eq.s32.totalorder %s19, 1
    %p121 = por %p119, %p120
    %p122 = scmp.ne.s32.totalorder %s113, %s114
    %p123 = scmp.eq.s32.totalorder %s19, 0
    %p124 = por %p122, %p123
    %p125 = scmp.ne.s32.totalorder %s113, %s114
    %p126 = scmp.eq.s32.totalorder %s20, 1
    %p127 = por %p125, %p126
    %p129 = scmp.ne.s32.totalorder %s114, %s128
    %p130 = scmp.eq.s32.totalorder %s20, 0
    %p131 = por %p129, %p130
    %s133 = sadd.s32 %s132, 1
    %p136 = scmp.eq.s32.totalorder %s14, 1
    %p137 = scmp.ne.s32.totalorder %s132, %s134
    %p138 = scmp.eq.s32.totalorder %s14, 0
    %p139 = por %p137, %p138
    %p140 = scmp.ne.s32.totalorder %s132, %s134
    %p141 = scmp.eq.s32.totalorder %s19, 1
    %p142 = por %p140, %p141
    %p143 = scmp.ne.s32.totalorder %s134, %s135
    %p144 = scmp.eq.s32.totalorder %s19, 0
    %p145 = por %p143, %p144
    %p146 = scmp.ne.s32.totalorder %s134, %s135
    %p147 = scmp.eq.s32.totalorder %s20, 1
    %p148 = por %p146, %p147
    %p150 = scmp.ne.s32.totalorder %s135, %s149
    %p151 = scmp.eq.s32.totalorder %s20, 0
    %p152 = por %p150, %p151
    %s153 = ssub.s32 %s14, %s21
    %p154 = scmp.eq.s32.totalorder %s153, 0
    %s156 = sadd.s32 %s155, 1
    %s157 = scalar_select %p154, %s155, %s156
    %p160 = pneg %p154
    %p161 = scmp.eq.s32.totalorder %s14, 1
    %p162 = por %p160, %p161
    %p163 = scmp.ne.s32.totalorder %s155, %s158
    %p164 = scmp.eq.s32.totalorder %s14, 0
    %p165 = por %p163, %p164
    %p166 = scmp.ne.s32.totalorder %s155, %s158
    %p167 = scmp.eq.s32.totalorder %s19, 1
    %p168 = por %p166, %p167
    %p169 = scmp.ne.s32.totalorder %s158, %s159
    %p170 = scmp.eq.s32.totalorder %s19, 0
    %p171 = por %p169, %p170
    %p172 = scmp.ne.s32.totalorder %s158, %s159
    %p173 = scmp.eq.s32.totalorder %s20, 1
    %p174 = por %p172, %p173
    %p176 = scmp.ne.s32.totalorder %s159, %s175
    %p177 = scmp.eq.s32.totalorder %s20, 0
    %p178 = por %p176, %p177
    %s179 = ssub.s32 %s14, %s21
    %p180 = scmp.eq.s32.totalorder %s179, 0
    %s182 = sadd.s32 %s181, 1
    %s183 = scalar_select %p180, %s181, %s182
    %p186 = pneg %p180
    %p187 = scmp.eq.s32.totalorder %s14, 1
    %p188 = por %p186, %p187
    %p189 = scmp.ne.s32.totalorder %s181, %s184
    %p190 = scmp.eq.s32.totalorder %s14, 0
    %p191 = por %p189, %p190
    %p192 = scmp.ne.s32.totalorder %s181, %s184
    %p193 = scmp.eq.s32.totalorder %s19, 1
    %p194 = por %p192, %p193
    %p195 = scmp.ne.s32.totalorder %s184, %s185
    %p196 = scmp.eq.s32.totalorder %s19, 0
    %p197 = por %p195, %p196
    %p198 = scmp.ne.s32.totalorder %s184, %s185
    %p199 = scmp.eq.s32.totalorder %s20, 1
    %p200 = por %p198, %p199
    %p202 = scmp.ne.s32.totalorder %s185, %s201
    %p203 = scmp.eq.s32.totalorder %s20, 0
    %p204 = por %p202, %p203
    %p205 = scmp.le.s32.totalorder 1, %s14
    %p206 = scmp.lt.s32.totalorder %s14, 3
    %p207 = pnand %p205, %p206
    %p208 = pneg %p207
    // Predicated region
    $region9: #{attention_forward.1} parent=5 // pred_check
      _
    $region10: #{attention_forward.1} parent=5 // pred_check_branch
      %210 = sbr.rel (%p207) target = $region12
    $region11: #{attention_forward.1} parent=5 // pred_region
      %s211 = ssub.s32 %s14, 1
      // Predicated region
      $region13: #{attention_forward.1} parent=11 // pred_check
        %p212 = pneg %p61
      $region14: #{attention_forward.1} parent=11 // pred_check_branch
        %214 = sbr.rel (%p212) target = $region16
      $region15: #{attention_forward.1} parent=11 // pred_region
        _
      $region16: #{attention_forward.1} parent=11 // pred_fallthru
        _
      // Predicated region
      $region17: #{attention_forward.1} parent=11 // pred_check
        %p215 = pneg %p82
      $region18: #{attention_forward.1} parent=11 // pred_check_branch
        %217 = sbr.rel (%p215) target = $region20
      $region19: #{attention_forward.1} parent=11 // pred_region
        _
      $region20: #{attention_forward.1} parent=11 // pred_fallthru
        _
      // Predicated region
      $region21: #{attention_forward.1} parent=11 // pred_check
        %p218 = pneg %p103
      $region22: #{attention_forward.1} parent=11 // pred_check_branch
        %220 = sbr.rel (%p218) target = $region24
      $region23: #{attention_forward.1} parent=11 // pred_region
        _
      $region24: #{attention_forward.1} parent=11 // pred_fallthru
        _
      // Predicated region
      $region25: #{attention_forward.1} parent=11 // pred_check
        %p221 = pneg %p124
      $region26: #{attention_forward.1} parent=11 // pred_check_branch
        %223 = sbr.rel (%p221) target = $region28
      $region27: #{attention_forward.1} parent=11 // pred_region
        _
      $region28: #{attention_forward.1} parent=11 // pred_fallthru
        _
      // Predicated region
      $region29: #{attention_forward.1} parent=11 // pred_check
        %p224 = pneg %p145
      $region30: #{attention_forward.1} parent=11 // pred_check_branch
        %226 = sbr.rel (%p224) target = $region32
      $region31: #{attention_forward.1} parent=11 // pred_region
        _
      $region32: #{attention_forward.1} parent=11 // pred_fallthru
        _
    $region12: #{attention_forward.1} parent=5 // pred_fallthru
      _
    %p227 = scmp.lt.s32.totalorder %s14, 2
    // Predicated region
    $region33: #{attention_forward.1} parent=5 // pred_check
      %p228 = pneg %p227
    $region34: #{attention_forward.1} parent=5 // pred_check_branch
      %230 = sbr.rel (%p228) target = $region36
    $region35: #{attention_forward.1} parent=5 // pred_region
      // Predicated region
      $region37: #{attention_forward.1} parent=35 // pred_check
        %p231 = pneg %p34
      $region38: #{attention_forward.1} parent=35 // pred_check_branch
        %233 = sbr.rel (%p231) target = $region40
      $region39: #{attention_forward.1} parent=35 // pred_region
        %s234 = smul.u32 256, %s14
        %p235 = scmp.lt.s32.totalorder %s234, 511
        %s236 = scalar_select %p235, %s234, 511
        %s237 = smul.addr %s236, 4
        %s238 = scalar_lea.vmem %s0, %s237
        %s239 = smul.u32 256, %s14
      $region40: #{attention_forward.1} parent=35 // pred_fallthru
        _
    $region36: #{attention_forward.1} parent=5 // pred_fallthru
      _
    %p240 = scmp.le.s32.totalorder 1, %s14
    %p241 = scmp.lt.s32.totalorder %s14, 3
    %p242 = pnand %p240, %p241
    %p243 = pneg %p242
    // Predicated region
    $region41: #{attention_forward.1} parent=5 // pred_check
      _
    $region42: #{attention_forward.1} parent=5 // pred_check_branch
      %245 = sbr.rel (%p242) target = $region44
    $region43: #{attention_forward.1} parent=5 // pred_region
      %s246 = ssub.s32 %s14, 1
      %s247 = smul.u32 256, %s19
      %p248 = scmp.lt.s32.totalorder %s247, 511
      %s249 = scalar_select %p248, %s247, 511
      %s250 = smul.addr %s249, 4
      %s251 = scalar_lea.vmem %s0, %s250
      %p252 = pneg %p40
      %p253 = pneg %p37
      %p254 = pneg %p61
      %p255 = pneg %p58
      %p256 = pneg %p82
      %p257 = pneg %p79
      %p258 = pneg %p103
      %p259 = pneg %p100
      %p260 = pneg %p124
      %p261 = pneg %p121
      %p262 = pneg %p145
      %p263 = pneg %p142
      %p264 = pneg %p171
      %p265 = pneg %p168
      %s266 = smul.u32 64, %s19
      %p267 = scmp.lt.s32.totalorder %s266, 127
      %s268 = scalar_select %p267, %s266, 127
      %s269 = smul.addr %s268, 8
      %s270 = scalar_lea.vmem %s6, %s269
      %p271 = pneg %p197
      %p272 = pneg %p194
      %s273 = smul.u32 256, %s19
      %p274 = scmp.lt.s32.totalorder %s273, 511
      %s275 = scalar_select %p274, %s273, 511
      %s276 = smul.addr %s275, 8
      %s277 = scalar_lea.vmem %s7, %s276
      %s278 = smul.u32 256, %s19
      %p279 = scmp.lt.s32.totalorder %s278, 511
      %s280 = scalar_select %p279, %s278, 511
      %s281 = smul.addr %s280, 4
      %s282 = scalar_lea.vmem %s0, %s281
      %s283 = smul.u32 256, %s19
      %s284 = smul.u32 64, %s19
      %p285 = scmp.lt.s32.totalorder %s284, 127
      %s286 = scalar_select %p285, %s284, 127
      %s287 = smul.addr %s286, 8
      %s288 = scalar_lea.vmem %s6, %s287
      %s289 = smul.u32 64, %s19
      %s290 = smul.u32 256, %s19
      %p291 = scmp.lt.s32.totalorder %s290, 511
      %s292 = scalar_select %p291, %s290, 511
      %s293 = smul.addr %s292, 8
      %s294 = scalar_lea.vmem %s7, %s293
      %s295 = smul.u32 256, %s19
      %v296 = vld [vmem:[%s282] sm:$0xf]
      %v297 = vld [vmem:[%s282 + $0x4] sm:$0xf]
      %v298 = vld [vmem:[%s282 + $0x8] sm:$0xf]
      %v299 = vld [vmem:[%s282 + $0xc] sm:$0xf]
      %v300 = vld [vmem:[%s282 + $0x10] sm:$0xf]
      %v301 = vld [vmem:[%s282 + $0x14] sm:$0xf]
      %v302 = vld [vmem:[%s282 + $0x18] sm:$0xf]
      %v303 = vld [vmem:[%s282 + $0x1c] sm:$0xf]
      %v304 = vld [vmem:[%s282 + $0x20] sm:$0xf]
      %v305 = vld [vmem:[%s282 + $0x24] sm:$0xf]
      %v306 = vld [vmem:[%s282 + $0x28] sm:$0xf]
      %v307 = vld [vmem:[%s282 + $0x2c] sm:$0xf]
      %v308 = vld [vmem:[%s282 + $0x30] sm:$0xf]
      %v309 = vld [vmem:[%s282 + $0x34] sm:$0xf]
      %v310 = vld [vmem:[%s282 + $0x38] sm:$0xf]
      %v311 = vld [vmem:[%s282 + $0x3c] sm:$0xf]
      %v312 = vld [vmem:[%s282 + $0x40] sm:$0xf]
      %v313 = vld [vmem:[%s282 + $0x44] sm:$0xf]
      %v314 = vld [vmem:[%s282 + $0x48] sm:$0xf]
      %v315 = vld [vmem:[%s282 + $0x4c] sm:$0xf]
      %v316 = vld [vmem:[%s282 + $0x50] sm:$0xf]
      %v317 = vld [vmem:[%s282 + $0x54] sm:$0xf]
      %v318 = vld [vmem:[%s282 + $0x58] sm:$0xf]
      %v319 = vld [vmem:[%s282 + $0x5c] sm:$0xf]
      %v320 = vld [vmem:[%s282 + $0x60] sm:$0xf]
      %v321 = vld [vmem:[%s282 + $0x64] sm:$0xf]
      %v322 = vld [vmem:[%s282 + $0x68] sm:$0xf]
      %v323 = vld [vmem:[%s282 + $0x6c] sm:$0xf]
      %v324 = vld [vmem:[%s282 + $0x70] sm:$0xf]
      %v325 = vld [vmem:[%s282 + $0x74] sm:$0xf]
      %v326 = vld [vmem:[%s282 + $0x78] sm:$0xf]
      %v327 = vld [vmem:[%s282 + $0x7c] sm:$0xf]
      %v328 = vld [vmem:[%s282 + $0x80] sm:$0xf]
      %v329 = vld [vmem:[%s282 + $0x84] sm:$0xf]
      %v330 = vld [vmem:[%s282 + $0x88] sm:$0xf]
      %v331 = vld [vmem:[%s282 + $0x8c] sm:$0xf]
      %v332 = vld [vmem:[%s282 + $0x90] sm:$0xf]
      %v333 = vld [vmem:[%s282 + $0x94] sm:$0xf]
      %v334 = vld [vmem:[%s282 + $0x98] sm:$0xf]
      %v335 = vld [vmem:[%s282 + $0x9c] sm:$0xf]
      %v336 = vld [vmem:[%s282 + $0xa0] sm:$0xf]
      %v337 = vld [vmem:[%s282 + $0xa4] sm:$0xf]
      %v338 = vld [vmem:[%s282 + $0xa8] sm:$0xf]
      %v339 = vld [vmem:[%s282 + $0xac] sm:$0xf]
      %v340 = vld [vmem:[%s282 + $0xb0] sm:$0xf]
      %v341 = vld [vmem:[%s282 + $0xb4] sm:$0xf]
      %v342 = vld [vmem:[%s282 + $0xb8] sm:$0xf]
      %v343 = vld [vmem:[%s282 + $0xbc] sm:$0xf]
      %v344 = vld [vmem:[%s282 + $0xc0] sm:$0xf]
      %v345 = vld [vmem:[%s282 + $0xc4] sm:$0xf]
      %v346 = vld [vmem:[%s282 + $0xc8] sm:$0xf]
      %v347 = vld [vmem:[%s282 + $0xcc] sm:$0xf]
      %v348 = vld [vmem:[%s282 + $0xd0] sm:$0xf]
      %v349 = vld [vmem:[%s282 + $0xd4] sm:$0xf]
      %v350 = vld [vmem:[%s282 + $0xd8] sm:$0xf]
      %v351 = vld [vmem:[%s282 + $0xdc] sm:$0xf]
      %v352 = vld [vmem:[%s282 + $0xe0] sm:$0xf]
      %v353 = vld [vmem:[%s282 + $0xe4] sm:$0xf]
      %v354 = vld [vmem:[%s282 + $0xe8] sm:$0xf]
      %v355 = vld [vmem:[%s282 + $0xec] sm:$0xf]
      %v356 = vld [vmem:[%s282 + $0xf0] sm:$0xf]
      %v357 = vld [vmem:[%s282 + $0xf4] sm:$0xf]
      %v358 = vld [vmem:[%s282 + $0xf8] sm:$0xf]
      %v359 = vld [vmem:[%s282 + $0xfc] sm:$0xf]
      %v360 = vld [vmem:[%s282 + $0x100] sm:$0xf]
      %v361 = vld [vmem:[%s282 + $0x104] sm:$0xf]
      %v362 = vld [vmem:[%s282 + $0x108] sm:$0xf]
      %v363 = vld [vmem:[%s282 + $0x10c] sm:$0xf]
      %v364 = vld [vmem:[%s282 + $0x110] sm:$0xf]
      %v365 = vld [vmem:[%s282 + $0x114] sm:$0xf]
      %v366 = vld [vmem:[%s282 + $0x118] sm:$0xf]
      %v367 = vld [vmem:[%s282 + $0x11c] sm:$0xf]
      %v368 = vld [vmem:[%s282 + $0x120] sm:$0xf]
      %v369 = vld [vmem:[%s282 + $0x124] sm:$0xf]
      %v370 = vld [vmem:[%s282 + $0x128] sm:$0xf]
      %v371 = vld [vmem:[%s282 + $0x12c] sm:$0xf]
      %v372 = vld [vmem:[%s282 + $0x130] sm:$0xf]
      %v373 = vld [vmem:[%s282 + $0x134] sm:$0xf]
      %v374 = vld [vmem:[%s282 + $0x138] sm:$0xf]
      %v375 = vld [vmem:[%s282 + $0x13c] sm:$0xf]
      %v376 = vld [vmem:[%s282 + $0x140] sm:$0xf]
      %v377 = vld [vmem:[%s282 + $0x144] sm:$0xf]
      %v378 = vld [vmem:[%s282 + $0x148] sm:$0xf]
      %v379 = vld [vmem:[%s282 + $0x14c] sm:$0xf]
      %v380 = vld [vmem:[%s282 + $0x150] sm:$0xf]
      %v381 = vld [vmem:[%s282 + $0x154] sm:$0xf]
      %v382 = vld [vmem:[%s282 + $0x158] sm:$0xf]
      %v383 = vld [vmem:[%s282 + $0x15c] sm:$0xf]
      %v384 = vld [vmem:[%s282 + $0x160] sm:$0xf]
      %v385 = vld [vmem:[%s282 + $0x164] sm:$0xf]
      %v386 = vld [vmem:[%s282 + $0x168] sm:$0xf]
      %v387 = vld [vmem:[%s282 + $0x16c] sm:$0xf]
      %v388 = vld [vmem:[%s282 + $0x170] sm:$0xf]
      %v389 = vld [vmem:[%s282 + $0x174] sm:$0xf]
      %v390 = vld [vmem:[%s282 + $0x178] sm:$0xf]
      %v391 = vld [vmem:[%s282 + $0x17c] sm:$0xf]
      %v392 = vld [vmem:[%s282 + $0x180] sm:$0xf]
      %v393 = vld [vmem:[%s282 + $0x184] sm:$0xf]
      %v394 = vld [vmem:[%s282 + $0x188] sm:$0xf]
      %v395 = vld [vmem:[%s282 + $0x18c] sm:$0xf]
      %v396 = vld [vmem:[%s282 + $0x190] sm:$0xf]
      %v397 = vld [vmem:[%s282 + $0x194] sm:$0xf]
      %v398 = vld [vmem:[%s282 + $0x198] sm:$0xf]
      %v399 = vld [vmem:[%s282 + $0x19c] sm:$0xf]
      %v400 = vld [vmem:[%s282 + $0x1a0] sm:$0xf]
      %v401 = vld [vmem:[%s282 + $0x1a4] sm:$0xf]
      %v402 = vld [vmem:[%s282 + $0x1a8] sm:$0xf]
      %v403 = vld [vmem:[%s282 + $0x1ac] sm:$0xf]
      %v404 = vld [vmem:[%s282 + $0x1b0] sm:$0xf]
      %v405 = vld [vmem:[%s282 + $0x1b4] sm:$0xf]
      %v406 = vld [vmem:[%s282 + $0x1b8] sm:$0xf]
      %v407 = vld [vmem:[%s282 + $0x1bc] sm:$0xf]
      %v408 = vld [vmem:[%s282 + $0x1c0] sm:$0xf]
      %v409 = vld [vmem:[%s282 + $0x1c4] sm:$0xf]
      %v410 = vld [vmem:[%s282 + $0x1c8] sm:$0xf]
      %v411 = vld [vmem:[%s282 + $0x1cc] sm:$0xf]
      %v412 = vld [vmem:[%s282 + $0x1d0] sm:$0xf]
      %v413 = vld [vmem:[%s282 + $0x1d4] sm:$0xf]
      %v414 = vld [vmem:[%s282 + $0x1d8] sm:$0xf]
      %v415 = vld [vmem:[%s282 + $0x1dc] sm:$0xf]
      %v416 = vld [vmem:[%s282 + $0x1e0] sm:$0xf]
      %v417 = vld [vmem:[%s282 + $0x1e4] sm:$0xf]
      %v418 = vld [vmem:[%s282 + $0x1e8] sm:$0xf]
      %v419 = vld [vmem:[%s282 + $0x1ec] sm:$0xf]
      %v420 = vld [vmem:[%s282 + $0x1f0] sm:$0xf]
      %v421 = vld [vmem:[%s282 + $0x1f4] sm:$0xf]
      %v422 = vld [vmem:[%s282 + $0x1f8] sm:$0xf]
      %v423 = vld [vmem:[%s282 + $0x1fc] sm:$0xf]
      %v424 = vld [vmem:[%s282 + $0x200] sm:$0xf]
      %v425 = vld [vmem:[%s282 + $0x204] sm:$0xf]
      %v426 = vld [vmem:[%s282 + $0x208] sm:$0xf]
      %v427 = vld [vmem:[%s282 + $0x20c] sm:$0xf]
      %v428 = vld [vmem:[%s282 + $0x210] sm:$0xf]
      %v429 = vld [vmem:[%s282 + $0x214] sm:$0xf]
      %v430 = vld [vmem:[%s282 + $0x218] sm:$0xf]
      %v431 = vld [vmem:[%s282 + $0x21c] sm:$0xf]
      %v432 = vld [vmem:[%s282 + $0x220] sm:$0xf]
      %v433 = vld [vmem:[%s282 + $0x224] sm:$0xf]
      %v434 = vld [vmem:[%s282 + $0x228] sm:$0xf]
      %v435 = vld [vmem:[%s282 + $0x22c] sm:$0xf]
      %v436 = vld [vmem:[%s282 + $0x230] sm:$0xf]
      %v437 = vld [vmem:[%s282 + $0x234] sm:$0xf]
      %v438 = vld [vmem:[%s282 + $0x238] sm:$0xf]
      %v439 = vld [vmem:[%s282 + $0x23c] sm:$0xf]
      %v440 = vld [vmem:[%s282 + $0x240] sm:$0xf]
      %v441 = vld [vmem:[%s282 + $0x244] sm:$0xf]
      %v442 = vld [vmem:[%s282 + $0x248] sm:$0xf]
      %v443 = vld [vmem:[%s282 + $0x24c] sm:$0xf]
      %v444 = vld [vmem:[%s282 + $0x250] sm:$0xf]
      %v445 = vld [vmem:[%s282 + $0x254] sm:$0xf]
      %v446 = vld [vmem:[%s282 + $0x258] sm:$0xf]
      %v447 = vld [vmem:[%s282 + $0x25c] sm:$0xf]
      %v448 = vld [vmem:[%s282 + $0x260] sm:$0xf]
      %v449 = vld [vmem:[%s282 + $0x264] sm:$0xf]
      %v450 = vld [vmem:[%s282 + $0x268] sm:$0xf]
      %v451 = vld [vmem:[%s282 + $0x26c] sm:$0xf]
      %v452 = vld [vmem:[%s282 + $0x270] sm:$0xf]
      %v453 = vld [vmem:[%s282 + $0x274] sm:$0xf]
      %v454 = vld [vmem:[%s282 + $0x278] sm:$0xf]
      %v455 = vld [vmem:[%s282 + $0x27c] sm:$0xf]
      %v456 = vld [vmem:[%s282 + $0x280] sm:$0xf]
      %v457 = vld [vmem:[%s282 + $0x284] sm:$0xf]
      %v458 = vld [vmem:[%s282 + $0x288] sm:$0xf]
      %v459 = vld [vmem:[%s282 + $0x28c] sm:$0xf]
      %v460 = vld [vmem:[%s282 + $0x290] sm:$0xf]
      %v461 = vld [vmem:[%s282 + $0x294] sm:$0xf]
      %v462 = vld [vmem:[%s282 + $0x298] sm:$0xf]
      %v463 = vld [vmem:[%s282 + $0x29c] sm:$0xf]
      %v464 = vld [vmem:[%s282 + $0x2a0] sm:$0xf]
      %v465 = vld [vmem:[%s282 + $0x2a4] sm:$0xf]
      %v466 = vld [vmem:[%s282 + $0x2a8] sm:$0xf]
      %v467 = vld [vmem:[%s282 + $0x2ac] sm:$0xf]
      %v468 = vld [vmem:[%s282 + $0x2b0] sm:$0xf]
      %v469 = vld [vmem:[%s282 + $0x2b4] sm:$0xf]
      %v470 = vld [vmem:[%s282 + $0x2b8] sm:$0xf]
      %v471 = vld [vmem:[%s282 + $0x2bc] sm:$0xf]
      %v472 = vld [vmem:[%s282 + $0x2c0] sm:$0xf]
      %v473 = vld [vmem:[%s282 + $0x2c4] sm:$0xf]
      %v474 = vld [vmem:[%s282 + $0x2c8] sm:$0xf]
      %v475 = vld [vmem:[%s282 + $0x2cc] sm:$0xf]
      %v476 = vld [vmem:[%s282 + $0x2d0] sm:$0xf]
      %v477 = vld [vmem:[%s282 + $0x2d4] sm:$0xf]
      %v478 = vld [vmem:[%s282 + $0x2d8] sm:$0xf]
      %v479 = vld [vmem:[%s282 + $0x2dc] sm:$0xf]
      %v480 = vld [vmem:[%s282 + $0x2e0] sm:$0xf]
      %v481 = vld [vmem:[%s282 + $0x2e4] sm:$0xf]
      %v482 = vld [vmem:[%s282 + $0x2e8] sm:$0xf]
      %v483 = vld [vmem:[%s282 + $0x2ec] sm:$0xf]
      %v484 = vld [vmem:[%s282 + $0x2f0] sm:$0xf]
      %v485 = vld [vmem:[%s282 + $0x2f4] sm:$0xf]
      %v486 = vld [vmem:[%s282 + $0x2f8] sm:$0xf]
      %v487 = vld [vmem:[%s282 + $0x2fc] sm:$0xf]
      %v488 = vld [vmem:[%s282 + $0x300] sm:$0xf]
      %v489 = vld [vmem:[%s282 + $0x304] sm:$0xf]
      %v490 = vld [vmem:[%s282 + $0x308] sm:$0xf]
      %v491 = vld [vmem:[%s282 + $0x30c] sm:$0xf]
      %v492 = vld [vmem:[%s282 + $0x310] sm:$0xf]
      %v493 = vld [vmem:[%s282 + $0x314] sm:$0xf]
      %v494 = vld [vmem:[%s282 + $0x318] sm:$0xf]
      %v495 = vld [vmem:[%s282 + $0x31c] sm:$0xf]
      %v496 = vld [vmem:[%s282 + $0x320] sm:$0xf]
      %v497 = vld [vmem:[%s282 + $0x324] sm:$0xf]
      %v498 = vld [vmem:[%s282 + $0x328] sm:$0xf]
      %v499 = vld [vmem:[%s282 + $0x32c] sm:$0xf]
      %v500 = vld [vmem:[%s282 + $0x330] sm:$0xf]
      %v501 = vld [vmem:[%s282 + $0x334] sm:$0xf]
      %v502 = vld [vmem:[%s282 + $0x338] sm:$0xf]
      %v503 = vld [vmem:[%s282 + $0x33c] sm:$0xf]
      %v504 = vld [vmem:[%s282 + $0x340] sm:$0xf]
      %v505 = vld [vmem:[%s282 + $0x344] sm:$0xf]
      %v506 = vld [vmem:[%s282 + $0x348] sm:$0xf]
      %v507 = vld [vmem:[%s282 + $0x34c] sm:$0xf]
      %v508 = vld [vmem:[%s282 + $0x350] sm:$0xf]
      %v509 = vld [vmem:[%s282 + $0x354] sm:$0xf]
      %v510 = vld [vmem:[%s282 + $0x358] sm:$0xf]
      %v511 = vld [vmem:[%s282 + $0x35c] sm:$0xf]
      %v512 = vld [vmem:[%s282 + $0x360] sm:$0xf]
      %v513 = vld [vmem:[%s282 + $0x364] sm:$0xf]
      %v514 = vld [vmem:[%s282 + $0x368] sm:$0xf]
      %v515 = vld [vmem:[%s282 + $0x36c] sm:$0xf]
      %v516 = vld [vmem:[%s282 + $0x370] sm:$0xf]
      %v517 = vld [vmem:[%s282 + $0x374] sm:$0xf]
      %v518 = vld [vmem:[%s282 + $0x378] sm:$0xf]
      %v519 = vld [vmem:[%s282 + $0x37c] sm:$0xf]
      %v520 = vld [vmem:[%s282 + $0x380] sm:$0xf]
      %v521 = vld [vmem:[%s282 + $0x384] sm:$0xf]
      %v522 = vld [vmem:[%s282 + $0x388] sm:$0xf]
      %v523 = vld [vmem:[%s282 + $0x38c] sm:$0xf]
      %v524 = vld [vmem:[%s282 + $0x390] sm:$0xf]
      %v525 = vld [vmem:[%s282 + $0x394] sm:$0xf]
      %v526 = vld [vmem:[%s282 + $0x398] sm:$0xf]
      %v527 = vld [vmem:[%s282 + $0x39c] sm:$0xf]
      %v528 = vld [vmem:[%s282 + $0x3a0] sm:$0xf]
      %v529 = vld [vmem:[%s282 + $0x3a4] sm:$0xf]
      %v530 = vld [vmem:[%s282 + $0x3a8] sm:$0xf]
      %v531 = vld [vmem:[%s282 + $0x3ac] sm:$0xf]
      %v532 = vld [vmem:[%s282 + $0x3b0] sm:$0xf]
      %v533 = vld [vmem:[%s282 + $0x3b4] sm:$0xf]
      %v534 = vld [vmem:[%s282 + $0x3b8] sm:$0xf]
      %v535 = vld [vmem:[%s282 + $0x3bc] sm:$0xf]
      %v536 = vld [vmem:[%s282 + $0x3c0] sm:$0xf]
      %v537 = vld [vmem:[%s282 + $0x3c4] sm:$0xf]
      %v538 = vld [vmem:[%s282 + $0x3c8] sm:$0xf]
      %v539 = vld [vmem:[%s282 + $0x3cc] sm:$0xf]
      %v540 = vld [vmem:[%s282 + $0x3d0] sm:$0xf]
      %v541 = vld [vmem:[%s282 + $0x3d4] sm:$0xf]
      %v542 = vld [vmem:[%s282 + $0x3d8] sm:$0xf]
      %v543 = vld [vmem:[%s282 + $0x3dc] sm:$0xf]
      %v544 = vld [vmem:[%s282 + $0x3e0] sm:$0xf]
      %v545 = vld [vmem:[%s282 + $0x3e4] sm:$0xf]
      %v546 = vld [vmem:[%s282 + $0x3e8] sm:$0xf]
      %v547 = vld [vmem:[%s282 + $0x3ec] sm:$0xf]
      %v548 = vld [vmem:[%s282 + $0x3f0] sm:$0xf]
      %v549 = vld [vmem:[%s282 + $0x3f4] sm:$0xf]
      %v550 = vld [vmem:[%s282 + $0x3f8] sm:$0xf]
      %v551 = vld [vmem:[%s282 + $0x3fc] sm:$0xf]
      %v552 = vunpack.c.l.bf16 %v296
      %v553 = vunpack.c.l.bf16 %v297
      %v554 = vunpack.c.l.bf16 %v298
      %v555 = vunpack.c.l.bf16 %v299
      %v556 = vunpack.c.l.bf16 %v300
      %v557 = vunpack.c.l.bf16 %v301
      %v558 = vunpack.c.l.bf16 %v302
      %v559 = vunpack.c.l.bf16 %v303
      %v560 = vunpack.c.l.bf16 %v304
      %v561 = vunpack.c.l.bf16 %v305
      %v562 = vunpack.c.l.bf16 %v306
      %v563 = vunpack.c.l.bf16 %v307
      %v564 = vunpack.c.l.bf16 %v308
      %v565 = vunpack.c.l.bf16 %v309
      %v566 = vunpack.c.l.bf16 %v310
      %v567 = vunpack.c.l.bf16 %v311
      %v568 = vunpack.c.l.bf16 %v312
      %v569 = vunpack.c.l.bf16 %v313
      %v570 = vunpack.c.l.bf16 %v314
      %v571 = vunpack.c.l.bf16 %v315
      %v572 = vunpack.c.l.bf16 %v316
      %v573 = vunpack.c.l.bf16 %v317
      %v574 = vunpack.c.l.bf16 %v318
      %v575 = vunpack.c.l.bf16 %v319
      %v576 = vunpack.c.l.bf16 %v320
      %v577 = vunpack.c.l.bf16 %v321
      %v578 = vunpack.c.l.bf16 %v322
      %v579 = vunpack.c.l.bf16 %v323
      %v580 = vunpack.c.l.bf16 %v324
      %v581 = vunpack.c.l.bf16 %v325
      %v582 = vunpack.c.l.bf16 %v326
      %v583 = vunpack.c.l.bf16 %v327
      %v584 = vunpack.c.l.bf16 %v328
      %v585 = vunpack.c.l.bf16 %v329
      %v586 = vunpack.c.l.bf16 %v330
      %v587 = vunpack.c.l.bf16 %v331
      %v588 = vunpack.c.l.bf16 %v332
      %v589 = vunpack.c.l.bf16 %v333
      %v590 = vunpack.c.l.bf16 %v334
      %v591 = vunpack.c.l.bf16 %v335
      %v592 = vunpack.c.l.bf16 %v336
      %v593 = vunpack.c.l.bf16 %v337
      %v594 = vunpack.c.l.bf16 %v338
      %v595 = vunpack.c.l.bf16 %v339
      %v596 = vunpack.c.l.bf16 %v340
      %v597 = vunpack.c.l.bf16 %v341
      %v598 = vunpack.c.l.bf16 %v342
      %v599 = vunpack.c.l.bf16 %v343
      %v600 = vunpack.c.l.bf16 %v344
      %v601 = vunpack.c.l.bf16 %v345
      %v602 = vunpack.c.l.bf16 %v346
      %v603 = vunpack.c.l.bf16 %v347
      %v604 = vunpack.c.l.bf16 %v348
      %v605 = vunpack.c.l.bf16 %v349
      %v606 = vunpack.c.l.bf16 %v350
      %v607 = vunpack.c.l.bf16 %v351
      %v608 = vunpack.c.l.bf16 %v352
      %v609 = vunpack.c.l.bf16 %v353
      %v610 = vunpack.c.l.bf16 %v354
      %v611 = vunpack.c.l.bf16 %v355
      %v612 = vunpack.c.l.bf16 %v356
      %v613 = vunpack.c.l.bf16 %v357
      %v614 = vunpack.c.l.bf16 %v358
      %v615 = vunpack.c.l.bf16 %v359
      %v616 = vunpack.c.l.bf16 %v360
      %v617 = vunpack.c.l.bf16 %v361
      %v618 = vunpack.c.l.bf16 %v362
      %v619 = vunpack.c.l.bf16 %v363
      %v620 = vunpack.c.l.bf16 %v364
      %v621 = vunpack.c.l.bf16 %v365
      %v622 = vunpack.c.l.bf16 %v366
      %v623 = vunpack.c.l.bf16 %v367
      %v624 = vunpack.c.l.bf16 %v368
      %v625 = vunpack.c.l.bf16 %v369
      %v626 = vunpack.c.l.bf16 %v370
      %v627 = vunpack.c.l.bf16 %v371
      %v628 = vunpack.c.l.bf16 %v372
      %v629 = vunpack.c.l.bf16 %v373
      %v630 = vunpack.c.l.bf16 %v374
      %v631 = vunpack.c.l.bf16 %v375
      %v632 = vunpack.c.l.bf16 %v376
      %v633 = vunpack.c.l.bf16 %v377
      %v634 = vunpack.c.l.bf16 %v378
      %v635 = vunpack.c.l.bf16 %v379
      %v636 = vunpack.c.l.bf16 %v380
      %v637 = vunpack.c.l.bf16 %v381
      %v638 = vunpack.c.l.bf16 %v382
      %v639 = vunpack.c.l.bf16 %v383
      %v640 = vunpack.c.l.bf16 %v384
      %v641 = vunpack.c.l.bf16 %v385
      %v642 = vunpack.c.l.bf16 %v386
      %v643 = vunpack.c.l.bf16 %v387
      %v644 = vunpack.c.l.bf16 %v388
      %v645 = vunpack.c.l.bf16 %v389
      %v646 = vunpack.c.l.bf16 %v390
      %v647 = vunpack.c.l.bf16 %v391
      %v648 = vunpack.c.l.bf16 %v392
      %v649 = vunpack.c.l.bf16 %v393
      %v650 = vunpack.c.l.bf16 %v394
      %v651 = vunpack.c.l.bf16 %v395
      %v652 = vunpack.c.l.bf16 %v396
      %v653 = vunpack.c.l.bf16 %v397
      %v654 = vunpack.c.l.bf16 %v398
      %v655 = vunpack.c.l.bf16 %v399
      %v656 = vunpack.c.l.bf16 %v400
      %v657 = vunpack.c.l.bf16 %v401
      %v658 = vunpack.c.l.bf16 %v402
      %v659 = vunpack.c.l.bf16 %v403
      %v660 = vunpack.c.l.bf16 %v404
      %v661 = vunpack.c.l.bf16 %v405
      %v662 = vunpack.c.l.bf16 %v406
      %v663 = vunpack.c.l.bf16 %v407
      %v664 = vunpack.c.l.bf16 %v408
      %v665 = vunpack.c.l.bf16 %v409
      %v666 = vunpack.c.l.bf16 %v410
      %v667 = vunpack.c.l.bf16 %v411
      %v668 = vunpack.c.l.bf16 %v412
      %v669 = vunpack.c.l.bf16 %v413
      %v670 = vunpack.c.l.bf16 %v414
      %v671 = vunpack.c.l.bf16 %v415
      %v672 = vunpack.c.l.bf16 %v416
      %v673 = vunpack.c.l.bf16 %v417
      %v674 = vunpack.c.l.bf16 %v418
      %v675 = vunpack.c.l.bf16 %v419
      %v676 = vunpack.c.l.bf16 %v420
      %v677 = vunpack.c.l.bf16 %v421
      %v678 = vunpack.c.l.bf16 %v422
      %v679 = vunpack.c.l.bf16 %v423
      %v680 = vunpack.c.l.bf16 %v424
      %v681 = vunpack.c.l.bf16 %v425
      %v682 = vunpack.c.l.bf16 %v426
      %v683 = vunpack.c.l.bf16 %v427
      %v684 = vunpack.c.l.bf16 %v428
      %v685 = vunpack.c.l.bf16 %v429
      %v686 = vunpack.c.l.bf16 %v430
      %v687 = vunpack.c.l.bf16 %v431
      %v688 = vunpack.c.l.bf16 %v432
      %v689 = vunpack.c.l.bf16 %v433
      %v690 = vunpack.c.l.bf16 %v434
      %v691 = vunpack.c.l.bf16 %v435
      %v692 = vunpack.c.l.bf16 %v436
      %v693 = vunpack.c.l.bf16 %v437
      %v694 = vunpack.c.l.bf16 %v438
      %v695 = vunpack.c.l.bf16 %v439
      %v696 = vunpack.c.l.bf16 %v440
      %v697 = vunpack.c.l.bf16 %v441
      %v698 = vunpack.c.l.bf16 %v442
      %v699 = vunpack.c.l.bf16 %v443
      %v700 = vunpack.c.l.bf16 %v444
      %v701 = vunpack.c.l.bf16 %v445
      %v702 = vunpack.c.l.bf16 %v446
      %v703 = vunpack.c.l.bf16 %v447
      %v704 = vunpack.c.l.bf16 %v448
      %v705 = vunpack.c.l.bf16 %v449
      %v706 = vunpack.c.l.bf16 %v450
      %v707 = vunpack.c.l.bf16 %v451
      %v708 = vunpack.c.l.bf16 %v452
      %v709 = vunpack.c.l.bf16 %v453
      %v710 = vunpack.c.l.bf16 %v454
      %v711 = vunpack.c.l.bf16 %v455
      %v712 = vunpack.c.l.bf16 %v456
      %v713 = vunpack.c.l.bf16 %v457
      %v714 = vunpack.c.l.bf16 %v458
      %v715 = vunpack.c.l.bf16 %v459
      %v716 = vunpack.c.l.bf16 %v460
      %v717 = vunpack.c.l.bf16 %v461
      %v718 = vunpack.c.l.bf16 %v462
      %v719 = vunpack.c.l.bf16 %v463
      %v720 = vunpack.c.l.bf16 %v464
      %v721 = vunpack.c.l.bf16 %v465
      %v722 = vunpack.c.l.bf16 %v466
      %v723 = vunpack.c.l.bf16 %v467
      %v724 = vunpack.c.l.bf16 %v468
      %v725 = vunpack.c.l.bf16 %v469
      %v726 = vunpack.c.l.bf16 %v470
      %v727 = vunpack.c.l.bf16 %v471
      %v728 = vunpack.c.l.bf16 %v472
      %v729 = vunpack.c.l.bf16 %v473
      %v730 = vunpack.c.l.bf16 %v474
      %v731 = vunpack.c.l.bf16 %v475
      %v732 = vunpack.c.l.bf16 %v476
      %v733 = vunpack.c.l.bf16 %v477
      %v734 = vunpack.c.l.bf16 %v478
      %v735 = vunpack.c.l.bf16 %v479
      %v736 = vunpack.c.l.bf16 %v480
      %v737 = vunpack.c.l.bf16 %v481
      %v738 = vunpack.c.l.bf16 %v482
      %v739 = vunpack.c.l.bf16 %v483
      %v740 = vunpack.c.l.bf16 %v484
      %v741 = vunpack.c.l.bf16 %v485
      %v742 = vunpack.c.l.bf16 %v486
      %v743 = vunpack.c.l.bf16 %v487
      %v744 = vunpack.c.l.bf16 %v488
      %v745 = vunpack.c.l.bf16 %v489
      %v746 = vunpack.c.l.bf16 %v490
      %v747 = vunpack.c.l.bf16 %v491
      %v748 = vunpack.c.l.bf16 %v492
      %v749 = vunpack.c.l.bf16 %v493
      %v750 = vunpack.c.l.bf16 %v494
      %v751 = vunpack.c.l.bf16 %v495
      %v752 = vunpack.c.l.bf16 %v496
      %v753 = vunpack.c.l.bf16 %v497
      %v754 = vunpack.c.l.bf16 %v498
      %v755 = vunpack.c.l.bf16 %v499
      %v756 = vunpack.c.l.bf16 %v500
      %v757 = vunpack.c.l.bf16 %v501
      %v758 = vunpack.c.l.bf16 %v502
      %v759 = vunpack.c.l.bf16 %v503
      %v760 = vunpack.c.l.bf16 %v504
      %v761 = vunpack.c.l.bf16 %v505
      %v762 = vunpack.c.l.bf16 %v506
      %v763 = vunpack.c.l.bf16 %v507
      %v764 = vunpack.c.l.bf16 %v508
      %v765 = vunpack.c.l.bf16 %v509
      %v766 = vunpack.c.l.bf16 %v510
      %v767 = vunpack.c.l.bf16 %v511
      %v768 = vunpack.c.l.bf16 %v512
      %v769 = vunpack.c.l.bf16 %v513
      %v770 = vunpack.c.l.bf16 %v514
      %v771 = vunpack.c.l.bf16 %v515
      %v772 = vunpack.c.l.bf16 %v516
      %v773 = vunpack.c.l.bf16 %v517
      %v774 = vunpack.c.l.bf16 %v518
      %v775 = vunpack.c.l.bf16 %v519
      %v776 = vunpack.c.l.bf16 %v520
      %v777 = vunpack.c.l.bf16 %v521
      %v778 = vunpack.c.l.bf16 %v522
      %v779 = vunpack.c.l.bf16 %v523
      %v780 = vunpack.c.l.bf16 %v524
      %v781 = vunpack.c.l.bf16 %v525
      %v782 = vunpack.c.l.bf16 %v526
      %v783 = vunpack.c.l.bf16 %v527
      %v784 = vunpack.c.l.bf16 %v528
      %v785 = vunpack.c.l.bf16 %v529
      %v786 = vunpack.c.l.bf16 %v530
      %v787 = vunpack.c.l.bf16 %v531
      %v788 = vunpack.c.l.bf16 %v532
      %v789 = vunpack.c.l.bf16 %v533
      %v790 = vunpack.c.l.bf16 %v534
      %v791 = vunpack.c.l.bf16 %v535
      %v792 = vunpack.c.l.bf16 %v536
      %v793 = vunpack.c.l.bf16 %v537
      %v794 = vunpack.c.l.bf16 %v538
      %v795 = vunpack.c.l.bf16 %v539
      %v796 = vunpack.c.l.bf16 %v540
      %v797 = vunpack.c.l.bf16 %v541
      %v798 = vunpack.c.l.bf16 %v542
      %v799 = vunpack.c.l.bf16 %v543
      %v800 = vunpack.c.l.bf16 %v544
      %v801 = vunpack.c.l.bf16 %v545
      %v802 = vunpack.c.l.bf16 %v546
      %v803 = vunpack.c.l.bf16 %v547
      %v804 = vunpack.c.l.bf16 %v548
      %v805 = vunpack.c.l.bf16 %v549
      %v806 = vunpack.c.l.bf16 %v550
      %v807 = vunpack.c.l.bf16 %v551
      %v808 = vld [vmem:[%s1] sm:$0xff]
      %v809 = vld [vmem:[%s1 + $0x8] sm:$0xff]
      %v810 = vld [vmem:[%s1 + $0x10] sm:$0xff]
      %v811 = vld [vmem:[%s1 + $0x18] sm:$0xff]
      %v812 = vld [vmem:[%s1 + $0x20] sm:$0xff]
      %v813 = vld [vmem:[%s1 + $0x28] sm:$0xff]
      %v814 = vld [vmem:[%s1 + $0x30] sm:$0xff]
      %v815 = vld [vmem:[%s1 + $0x38] sm:$0xff]
      %v816 = vld [vmem:[%s1 + $0x40] sm:$0xff]
      %v817 = vld [vmem:[%s1 + $0x48] sm:$0xff]
      %v818 = vld [vmem:[%s1 + $0x50] sm:$0xff]
      %v819 = vld [vmem:[%s1 + $0x58] sm:$0xff]
      %v820 = vld [vmem:[%s2] sm:$0x1]
      %v822 = vlaneseq
      %v823 = vshrl.u32 %v822, 7
      %v824 = vsub.s32 0, %v823
      %v825 = vrot.slane %v820, %v824
      %vm827 = vcmask 785408
      %v829 = vsel %vm827, %v552, 0
      %v832 = vsel %vm827, %v553, 0
      %v835 = vsel %vm827, %v554, 0
      %v838 = vsel %vm827, %v555, 0
      %v841 = vsel %vm827, %v556, 0
      %v844 = vsel %vm827, %v557, 0
      %v847 = vsel %vm827, %v558, 0
      %v850 = vsel %vm827, %v559, 0
      %v853 = vsel %vm827, %v560, 0
      %v856 = vsel %vm827, %v561, 0
      %v859 = vsel %vm827, %v562, 0
      %v862 = vsel %vm827, %v563, 0
      %v865 = vsel %vm827, %v564, 0
      %v868 = vsel %vm827, %v565, 0
      %v871 = vsel %vm827, %v566, 0
      %v874 = vsel %vm827, %v567, 0
      %v877 = vsel %vm827, %v568, 0
      %v880 = vsel %vm827, %v569, 0
      %v883 = vsel %vm827, %v570, 0
      %v886 = vsel %vm827, %v571, 0
      %v889 = vsel %vm827, %v572, 0
      %v892 = vsel %vm827, %v573, 0
      %v895 = vsel %vm827, %v574, 0
      %v898 = vsel %vm827, %v575, 0
      %v901 = vsel %vm827, %v576, 0
      %v904 = vsel %vm827, %v577, 0
      %v907 = vsel %vm827, %v578, 0
      %v910 = vsel %vm827, %v579, 0
      %v913 = vsel %vm827, %v580, 0
      %v916 = vsel %vm827, %v581, 0
      %v919 = vsel %vm827, %v582, 0
      %v922 = vsel %vm827, %v583, 0
      %v925 = vsel %vm827, %v584, 0
      %v928 = vsel %vm827, %v585, 0
      %v931 = vsel %vm827, %v586, 0
      %v934 = vsel %vm827, %v587, 0
      %v937 = vsel %vm827, %v588, 0
      %v940 = vsel %vm827, %v589, 0
      %v943 = vsel %vm827, %v590, 0
      %v946 = vsel %vm827, %v591, 0
      %v949 = vsel %vm827, %v592, 0
      %v952 = vsel %vm827, %v593, 0
      %v955 = vsel %vm827, %v594, 0
      %v958 = vsel %vm827, %v595, 0
      %v961 = vsel %vm827, %v596, 0
      %v964 = vsel %vm827, %v597, 0
      %v967 = vsel %vm827, %v598, 0
      %v970 = vsel %vm827, %v599, 0
      %v973 = vsel %vm827, %v600, 0
      %v976 = vsel %vm827, %v601, 0
      %v979 = vsel %vm827, %v602, 0
      %v982 = vsel %vm827, %v603, 0
      %v985 = vsel %vm827, %v604, 0
      %v988 = vsel %vm827, %v605, 0
      %v991 = vsel %vm827, %v606, 0
      %v994 = vsel %vm827, %v607, 0
      %v997 = vsel %vm827, %v608, 0
      %v1000 = vsel %vm827, %v609, 0
      %v1003 = vsel %vm827, %v610, 0
      %v1006 = vsel %vm827, %v611, 0
      %v1009 = vsel %vm827, %v612, 0
      %v1012 = vsel %vm827, %v613, 0
      %v1015 = vsel %vm827, %v614, 0
      %v1018 = vsel %vm827, %v615, 0
      %v1021 = vsel %vm827, %v616, 0
      %v1024 = vsel %vm827, %v617, 0
      %v1027 = vsel %vm827, %v618, 0
      %v1030 = vsel %vm827, %v619, 0
      %v1033 = vsel %vm827, %v620, 0
      %v1036 = vsel %vm827, %v621, 0
      %v1039 = vsel %vm827, %v622, 0
      %v1042 = vsel %vm827, %v623, 0
      %v1045 = vsel %vm827, %v624, 0
      %v1048 = vsel %vm827, %v625, 0
      %v1051 = vsel %vm827, %v626, 0
      %v1054 = vsel %vm827, %v627, 0
      %v1057 = vsel %vm827, %v628, 0
      %v1060 = vsel %vm827, %v629, 0
      %v1063 = vsel %vm827, %v630, 0
      %v1066 = vsel %vm827, %v631, 0
      %v1069 = vsel %vm827, %v632, 0
      %v1072 = vsel %vm827, %v633, 0
      %v1075 = vsel %vm827, %v634, 0
      %v1078 = vsel %vm827, %v635, 0
      %v1081 = vsel %vm827, %v636, 0
      %v1084 = vsel %vm827, %v637, 0
      %v1087 = vsel %vm827, %v638, 0
      %v1090 = vsel %vm827, %v639, 0
      %v1093 = vsel %vm827, %v640, 0
      %v1096 = vsel %vm827, %v641, 0
      %v1099 = vsel %vm827, %v642, 0
      %v1102 = vsel %vm827, %v643, 0
      %v1105 = vsel %vm827, %v644, 0
      %v1108 = vsel %vm827, %v645, 0
      %v1111 = vsel %vm827, %v646, 0
      %v1114 = vsel %vm827, %v647, 0
      %v1117 = vsel %vm827, %v648, 0
      %v1120 = vsel %vm827, %v649, 0
      %v1123 = vsel %vm827, %v650, 0
      %v1126 = vsel %vm827, %v651, 0
      %v1129 = vsel %vm827, %v652, 0
      %v1132 = vsel %vm827, %v653, 0
      %v1135 = vsel %vm827, %v654, 0
      %v1138 = vsel %vm827, %v655, 0
      %v1141 = vsel %vm827, %v656, 0
      %v1144 = vsel %vm827, %v657, 0
      %v1147 = vsel %vm827, %v658, 0
      %v1150 = vsel %vm827, %v659, 0
      %v1153 = vsel %vm827, %v660, 0
      %v1156 = vsel %vm827, %v661, 0
      %v1159 = vsel %vm827, %v662, 0
      %v1162 = vsel %vm827, %v663, 0
      %v1165 = vsel %vm827, %v664, 0
      %v1168 = vsel %vm827, %v665, 0
      %v1171 = vsel %vm827, %v666, 0
      %v1174 = vsel %vm827, %v667, 0
      %v1177 = vsel %vm827, %v668, 0
      %v1180 = vsel %vm827, %v669, 0
      %v1183 = vsel %vm827, %v670, 0
      %v1186 = vsel %vm827, %v671, 0
      %v1189 = vsel %vm827, %v672, 0
      %v1192 = vsel %vm827, %v673, 0
      %v1195 = vsel %vm827, %v674, 0
      %v1198 = vsel %vm827, %v675, 0
      %v1201 = vsel %vm827, %v676, 0
      %v1204 = vsel %vm827, %v677, 0
      %v1207 = vsel %vm827, %v678, 0
      %v1210 = vsel %vm827, %v679, 0
      %v1213 = vsel %vm827, %v680, 0
      %v1216 = vsel %vm827, %v681, 0
      %v1219 = vsel %vm827, %v682, 0
      %v1222 = vsel %vm827, %v683, 0
      %v1225 = vsel %vm827, %v684, 0
      %v1228 = vsel %vm827, %v685, 0
      %v1231 = vsel %vm827, %v686, 0
      %v1234 = vsel %vm827, %v687, 0
      %v1237 = vsel %vm827, %v688, 0
      %v1240 = vsel %vm827, %v689, 0
      %v1243 = vsel %vm827, %v690, 0
      %v1246 = vsel %vm827, %v691, 0
      %v1249 = vsel %vm827, %v692, 0
      %v1252 = vsel %vm827, %v693, 0
      %v1255 = vsel %vm827, %v694, 0
      %v1258 = vsel %vm827, %v695, 0
      %v1261 = vsel %vm827, %v696, 0
      %v1264 = vsel %vm827, %v697, 0
      %v1267 = vsel %vm827, %v698, 0
      %v1270 = vsel %vm827, %v699, 0
      %v1273 = vsel %vm827, %v700, 0
      %v1276 = vsel %vm827, %v701, 0
      %v1279 = vsel %vm827, %v702, 0
      %v1282 = vsel %vm827, %v703, 0
      %v1285 = vsel %vm827, %v704, 0
      %v1288 = vsel %vm827, %v705, 0
      %v1291 = vsel %vm827, %v706, 0
      %v1294 = vsel %vm827, %v707, 0
      %v1297 = vsel %vm827, %v708, 0
      %v1300 = vsel %vm827, %v709, 0
      %v1303 = vsel %vm827, %v710, 0
      %v1306 = vsel %vm827, %v711, 0
      %v1309 = vsel %vm827, %v712, 0
      %v1312 = vsel %vm827, %v713, 0
      %v1315 = vsel %vm827, %v714, 0
      %v1318 = vsel %vm827, %v715, 0
      %v1321 = vsel %vm827, %v716, 0
      %v1324 = vsel %vm827, %v717, 0
      %v1327 = vsel %vm827, %v718, 0
      %v1330 = vsel %vm827, %v719, 0
      %v1333 = vsel %vm827, %v720, 0
      %v1336 = vsel %vm827, %v721, 0
      %v1339 = vsel %vm827, %v722, 0
      %v1342 = vsel %vm827, %v723, 0
      %v1345 = vsel %vm827, %v724, 0
      %v1348 = vsel %vm827, %v725, 0
      %v1351 = vsel %vm827, %v726, 0
      %v1354 = vsel %vm827, %v727, 0
      %v1357 = vsel %vm827, %v728, 0
      %v1360 = vsel %vm827, %v729, 0
      %v1363 = vsel %vm827, %v730, 0
      %v1366 = vsel %vm827, %v731, 0
      %v1369 = vsel %vm827, %v732, 0
      %v1372 = vsel %vm827, %v733, 0
      %v1375 = vsel %vm827, %v734, 0
      %v1378 = vsel %vm827, %v735, 0
      %v1381 = vsel %vm827, %v736, 0
      %v1384 = vsel %vm827, %v737, 0
      %v1387 = vsel %vm827, %v738, 0
      %v1390 = vsel %vm827, %v739, 0
      %v1393 = vsel %vm827, %v740, 0
      %v1396 = vsel %vm827, %v741, 0
      %v1399 = vsel %vm827, %v742, 0
      %v1402 = vsel %vm827, %v743, 0
      %v1405 = vsel %vm827, %v744, 0
      %v1408 = vsel %vm827, %v745, 0
      %v1411 = vsel %vm827, %v746, 0
      %v1414 = vsel %vm827, %v747, 0
      %v1417 = vsel %vm827, %v748, 0
      %v1420 = vsel %vm827, %v749, 0
      %v1423 = vsel %vm827, %v750, 0
      %v1426 = vsel %vm827, %v751, 0
      %v1429 = vsel %vm827, %v752, 0
      %v1432 = vsel %vm827, %v753, 0
      %v1435 = vsel %vm827, %v754, 0
      %v1438 = vsel %vm827, %v755, 0
      %v1441 = vsel %vm827, %v756, 0
      %v1444 = vsel %vm827, %v757, 0
      %v1447 = vsel %vm827, %v758, 0
      %v1450 = vsel %vm827, %v759, 0
      %v1453 = vsel %vm827, %v760, 0
      %v1456 = vsel %vm827, %v761, 0
      %v1459 = vsel %vm827, %v762, 0
      %v1462 = vsel %vm827, %v763, 0
      %v1465 = vsel %vm827, %v764, 0
      %v1468 = vsel %vm827, %v765, 0
      %v1471 = vsel %vm827, %v766, 0
      %v1474 = vsel %vm827, %v767, 0
      %v1477 = vsel %vm827, %v768, 0
      %v1480 = vsel %vm827, %v769, 0
      %v1483 = vsel %vm827, %v770, 0
      %v1486 = vsel %vm827, %v771, 0
      %v1489 = vsel %vm827, %v772, 0
      %v1492 = vsel %vm827, %v773, 0
      %v1495 = vsel %vm827, %v774, 0
      %v1498 = vsel %vm827, %v775, 0
      %v1501 = vsel %vm827, %v776, 0
      %v1504 = vsel %vm827, %v777, 0
      %v1507 = vsel %vm827, %v778, 0
      %v1510 = vsel %vm827, %v779, 0
      %v1513 = vsel %vm827, %v780, 0
      %v1516 = vsel %vm827, %v781, 0
      %v1519 = vsel %vm827, %v782, 0
      %v1522 = vsel %vm827, %v783, 0
      %v1525 = vsel %vm827, %v784, 0
      %v1528 = vsel %vm827, %v785, 0
      %v1531 = vsel %vm827, %v786, 0
      %v1534 = vsel %vm827, %v787, 0
      %v1537 = vsel %vm827, %v788, 0
      %v1540 = vsel %vm827, %v789, 0
      %v1543 = vsel %vm827, %v790, 0
      %v1546 = vsel %vm827, %v791, 0
      %v1549 = vsel %vm827, %v792, 0
      %v1552 = vsel %vm827, %v793, 0
      %v1555 = vsel %vm827, %v794, 0
      %v1558 = vsel %vm827, %v795, 0
      %v1561 = vsel %vm827, %v796, 0
      %v1564 = vsel %vm827, %v797, 0
      %v1567 = vsel %vm827, %v798, 0
      %v1570 = vsel %vm827, %v799, 0
      %v1573 = vsel %vm827, %v800, 0
      %v1576 = vsel %vm827, %v801, 0
      %v1579 = vsel %vm827, %v802, 0
      %v1582 = vsel %vm827, %v803, 0
      %v1585 = vsel %vm827, %v804, 0
      %v1588 = vsel %vm827, %v805, 0
      %v1591 = vsel %vm827, %v806, 0
      %v1594 = vsel %vm827, %v807, 0
      %1596 = vmatprep.subr.mxu0 0.0
      %1597 = vmatpush1.msra.mxu0 0.0
      %1598 = vmatprep.subr.mxu0 0.0
      %1599 = vmatpush1.msra.mxu0 0.0
      %1600 = vmatprep.subr.mxu0 0.0
      %1601 = vmatpush1.msra.mxu0 0.0
      %1602 = vmatprep.subr.mxu0 0.0
      %1603 = vmatpush1.msra.mxu0 0.0
      %1604 = vmatprep.subr.mxu0 0.0
      %1605 = vmatpush1.msra.mxu0 %v819
      %1606 = vmatprep.subr.mxu0 0.0
      %1607 = vmatpush1.msra.mxu0 %v818
      %1608 = vmatprep.subr.mxu0 0.0
      %1609 = vmatpush1.msra.mxu0 %v817
      %1610 = vmatprep.subr.mxu0 0.0
      %1611 = vmatpush1.msra.mxu0 %v816
      %1612 = vmatprep.subr.mxu0 0.0
      %1613 = vmatpush1.msra.mxu0 %v815
      %1614 = vmatprep.subr.mxu0 0.0
      %1615 = vmatpush1.msra.mxu0 %v814
      %1616 = vmatprep.subr.mxu0 0.0
      %1617 = vmatpush1.msra.mxu0 %v813
      %1618 = vmatprep.subr.mxu0 0.0
      %1619 = vmatpush1.msra.mxu0 %v812
      %1620 = vmatprep.subr.mxu0 0.0
      %1621 = vmatpush1.msra.mxu0 %v811
      %1622 = vmatprep.subr.mxu0 0.0
      %1623 = vmatpush1.msra.mxu0 %v810
      %1624 = vmatprep.subr.mxu0 0.0
      %1625 = vmatpush1.msra.mxu0 %v809
      %1626 = vmatprep.subr.mxu0 0.0
      %1627 = vmatpush1.msra.mxu0 %v808
      %1628 = vmatprep.subr.mxu0 0.0
      %1629 = vmatpush2.msra.mxu0 0.0
      %1630 = vmatprep.subr.mxu0 0.0
      %1631 = vmatpush2.msra.mxu0 0.0
      %1632 = vmatprep.subr.mxu0 0.0
      %1633 = vmatpush2.msra.mxu0 0.0
      %1634 = vmatprep.subr.mxu0 0.0
      %1635 = vmatpush2.msra.mxu0 0.0
      %1636 = vmatprep.subr.mxu0 0.0
      %1637 = vmatpush2.msra.mxu0 0.0
      %1638 = vmatprep.subr.mxu0 0.0
      %1639 = vmatpush2.msra.mxu0 0.0
      %1640 = vmatprep.subr.mxu0 0.0
      %1641 = vmatpush2.msra.mxu0 0.0
      %1642 = vmatprep.subr.mxu0 0.0
      %1643 = vmatpush2.msra.mxu0 0.0
      %1644 = vmatprep.subr.mxu0 0.0
      %1645 = vmatpush2.msra.mxu0 0.0
      %1646 = vmatprep.subr.mxu0 0.0
      %1647 = vmatpush2.msra.mxu0 0.0
      %1648 = vmatprep.subr.mxu0 0.0
      %1649 = vmatpush2.msra.mxu0 0.0
      %1650 = vmatprep.subr.mxu0 0.0
      %1651 = vmatpush2.msra.mxu0 0.0
      %1652 = vmatprep.subr.mxu0 0.0
      %1653 = vmatpush2.msra.mxu0 0.0
      %1654 = vmatprep.subr.mxu0 0.0
      %1655 = vmatpush2.msra.mxu0 0.0
      %1656 = vmatprep.subr.mxu0 0.0
      %1657 = vmatpush2.msra.mxu0 0.0
      %1658 = vmatprep.subr.mxu0 0.0
      %1659 = vmatpush2.msra.mxu0 0.0
      %1660 = vmatprep.mubr.f32.mxu0 0.0
      %1661 = vmatmul.mubr.f32.gmra.mxu0 %v829
      %v1662 = vpop.f32.mrf.mxu0
      %v1663 = vadd.f32 %v825, %v1662
      %v1664 = vpop.f32.mrf.mxu0
      %1665 = vmatprep.mubr.f32.mxu0 0.0
      %1666 = vmatmul.mubr.f32.gmra.mxu0 %v832
      %v1667 = vpop.f32.mrf.mxu0
      %v1668 = vadd.f32 %v825, %v1667
      %v1669 = vpop.f32.mrf.mxu0
      %1670 = vmatprep.mubr.f32.mxu0 0.0
      %1671 = vmatmul.mubr.f32.gmra.mxu0 %v835
      %v1672 = vpop.f32.mrf.mxu0
      %v1673 = vadd.f32 %v825, %v1672
      %v1674 = vpop.f32.mrf.mxu0
      %1675 = vmatprep.mubr.f32.mxu0 0.0
      %1676 = vmatmul.mubr.f32.gmra.mxu0 %v838
      %v1677 = vpop.f32.mrf.mxu0
      %v1678 = vadd.f32 %v825, %v1677
      %v1679 = vpop.f32.mrf.mxu0
      %1680 = vmatprep.mubr.f32.mxu0 0.0
      %1681 = vmatmul.mubr.f32.gmra.mxu0 %v841
      %v1682 = vpop.f32.mrf.mxu0
      %v1683 = vadd.f32 %v825, %v1682
      %v1684 = vpop.f32.mrf.mxu0
      %1685 = vmatprep.mubr.f32.mxu0 0.0
      %1686 = vmatmul.mubr.f32.gmra.mxu0 %v844
      %v1687 = vpop.f32.mrf.mxu0
      %v1688 = vadd.f32 %v825, %v1687
      %v1689 = vpop.f32.mrf.mxu0
      %1690 = vmatprep.mubr.f32.mxu0 0.0
      %1691 = vmatmul.mubr.f32.gmra.mxu0 %v847
      %v1692 = vpop.f32.mrf.mxu0
      %v1693 = vadd.f32 %v825, %v1692
      %v1694 = vpop.f32.mrf.mxu0
      %1695 = vmatprep.mubr.f32.mxu0 0.0
      %1696 = vmatmul.mubr.f32.gmra.mxu0 %v850
      %v1697 = vpop.f32.mrf.mxu0
      %v1698 = vadd.f32 %v825, %v1697
      %v1699 = vpop.f32.mrf.mxu0
      %1700 = vmatprep.mubr.f32.mxu0 0.0
      %1701 = vmatmul.mubr.f32.gmra.mxu0 %v853
      %v1702 = vpop.f32.mrf.mxu0
      %v1703 = vadd.f32 %v825, %v1702
      %v1704 = vpop.f32.mrf.mxu0
      %1705 = vmatprep.mubr.f32.mxu0 0.0
      %1706 = vmatmul.mubr.f32.gmra.mxu0 %v856
      %v1707 = vpop.f32.mrf.mxu0
      %v1708 = vadd.f32 %v825, %v1707
      %v1709 = vpop.f32.mrf.mxu0
      %1710 = vmatprep.mubr.f32.mxu0 0.0
      %1711 = vmatmul.mubr.f32.gmra.mxu0 %v859
      %v1712 = vpop.f32.mrf.mxu0
      %v1713 = vadd.f32 %v825, %v1712
      %v1714 = vpop.f32.mrf.mxu0
      %1715 = vmatprep.mubr.f32.mxu0 0.0
      %1716 = vmatmul.mubr.f32.gmra.mxu0 %v862
      %v1717 = vpop.f32.mrf.mxu0
      %v1718 = vadd.f32 %v825, %v1717
      %v1719 = vpop.f32.mrf.mxu0
      %1720 = vmatprep.mubr.f32.mxu0 0.0
      %1721 = vmatmul.mubr.f32.gmra.mxu0 %v865
      %v1722 = vpop.f32.mrf.mxu0
      %v1723 = vadd.f32 %v825, %v1722
      %v1724 = vpop.f32.mrf.mxu0
      %1725 = vmatprep.mubr.f32.mxu0 0.0
      %1726 = vmatmul.mubr.f32.gmra.mxu0 %v868
      %v1727 = vpop.f32.mrf.mxu0
      %v1728 = vadd.f32 %v825, %v1727
      %v1729 = vpop.f32.mrf.mxu0
      %1730 = vmatprep.mubr.f32.mxu0 0.0
      %1731 = vmatmul.mubr.f32.gmra.mxu0 %v871
      %v1732 = vpop.f32.mrf.mxu0
      %v1733 = vadd.f32 %v825, %v1732
      %v1734 = vpop.f32.mrf.mxu0
      %1735 = vmatprep.mubr.f32.mxu0 0.0
      %1736 = vmatmul.mubr.f32.gmra.mxu0 %v874
      %v1737 = vpop.f32.mrf.mxu0
      %v1738 = vadd.f32 %v825, %v1737
      %v1739 = vpop.f32.mrf.mxu0
      %1740 = vmatprep.mubr.f32.mxu0 0.0
      %1741 = vmatmul.mubr.f32.gmra.mxu0 %v877
      %v1742 = vpop.f32.mrf.mxu0
      %v1743 = vadd.f32 %v825, %v1742
      %v1744 = vpop.f32.mrf.mxu0
      %1745 = vmatprep.mubr.f32.mxu0 0.0
      %1746 = vmatmul.mubr.f32.gmra.mxu0 %v880
      %v1747 = vpop.f32.mrf.mxu0
      %v1748 = vadd.f32 %v825, %v1747
      %v1749 = vpop.f32.mrf.mxu0
      %1750 = vmatprep.mubr.f32.mxu0 0.0
      %1751 = vmatmul.mubr.f32.gmra.mxu0 %v883
      %v1752 = vpop.f32.mrf.mxu0
      %v1753 = vadd.f32 %v825, %v1752
      %v1754 = vpop.f32.mrf.mxu0
      %1755 = vmatprep.mubr.f32.mxu0 0.0
      %1756 = vmatmul.mubr.f32.gmra.mxu0 %v886
      %v1757 = vpop.f32.mrf.mxu0
      %v1758 = vadd.f32 %v825, %v1757
      %v1759 = vpop.f32.mrf.mxu0
      %1760 = vmatprep.mubr.f32.mxu0 0.0
      %1761 = vmatmul.mubr.f32.gmra.mxu0 %v889
      %v1762 = vpop.f32.mrf.mxu0
      %v1763 = vadd.f32 %v825, %v1762
      %v1764 = vpop.f32.mrf.mxu0
      %1765 = vmatprep.mubr.f32.mxu0 0.0
      %1766 = vmatmul.mubr.f32.gmra.mxu0 %v892
      %v1767 = vpop.f32.mrf.mxu0
      %v1768 = vadd.f32 %v825, %v1767
      %v1769 = vpop.f32.mrf.mxu0
      %1770 = vmatprep.mubr.f32.mxu0 0.0
      %1771 = vmatmul.mubr.f32.gmra.mxu0 %v895
      %v1772 = vpop.f32.mrf.mxu0
      %v1773 = vadd.f32 %v825, %v1772
      %v1774 = vpop.f32.mrf.mxu0
      %1775 = vmatprep.mubr.f32.mxu0 0.0
      %1776 = vmatmul.mubr.f32.gmra.mxu0 %v898
      %v1777 = vpop.f32.mrf.mxu0
      %v1778 = vadd.f32 %v825, %v1777
      %v1779 = vpop.f32.mrf.mxu0
      %1780 = vmatprep.mubr.f32.mxu0 0.0
      %1781 = vmatmul.mubr.f32.gmra.mxu0 %v901
      %v1782 = vpop.f32.mrf.mxu0
      %v1783 = vadd.f32 %v825, %v1782
      %v1784 = vpop.f32.mrf.mxu0
      %1785 = vmatprep.mubr.f32.mxu0 0.0
      %1786 = vmatmul.mubr.f32.gmra.mxu0 %v904
      %v1787 = vpop.f32.mrf.mxu0
      %v1788 = vadd.f32 %v825, %v1787
      %v1789 = vpop.f32.mrf.mxu0
      %1790 = vmatprep.mubr.f32.mxu0 0.0
      %1791 = vmatmul.mubr.f32.gmra.mxu0 %v907
      %v1792 = vpop.f32.mrf.mxu0
      %v1793 = vadd.f32 %v825, %v1792
      %v1794 = vpop.f32.mrf.mxu0
      %1795 = vmatprep.mubr.f32.mxu0 0.0
      %1796 = vmatmul.mubr.f32.gmra.mxu0 %v910
      %v1797 = vpop.f32.mrf.mxu0
      %v1798 = vadd.f32 %v825, %v1797
      %v1799 = vpop.f32.mrf.mxu0
      %1800 = vmatprep.mubr.f32.mxu0 0.0
      %1801 = vmatmul.mubr.f32.gmra.mxu0 %v913
      %v1802 = vpop.f32.mrf.mxu0
      %v1803 = vadd.f32 %v825, %v1802
      %v1804 = vpop.f32.mrf.mxu0
      %1805 = vmatprep.mubr.f32.mxu0 0.0
      %1806 = vmatmul.mubr.f32.gmra.mxu0 %v916
      %v1807 = vpop.f32.mrf.mxu0
      %v1808 = vadd.f32 %v825, %v1807
      %v1809 = vpop.f32.mrf.mxu0
      %1810 = vmatprep.mubr.f32.mxu0 0.0
      %1811 = vmatmul.mubr.f32.gmra.mxu0 %v919
      %v1812 = vpop.f32.mrf.mxu0
      %v1813 = vadd.f32 %v825, %v1812
      %v1814 = vpop.f32.mrf.mxu0
      %1815 = vmatprep.mubr.f32.mxu0 0.0
      %1816 = vmatmul.mubr.f32.gmra.mxu0 %v922
      %v1817 = vpop.f32.mrf.mxu0
      %v1818 = vadd.f32 %v825, %v1817
      %v1819 = vpop.f32.mrf.mxu0
      %1820 = vmatprep.mubr.f32.mxu0 0.0
      %1821 = vmatmul.mubr.f32.gmra.mxu0 %v925
      %v1822 = vpop.f32.mrf.mxu0
      %v1823 = vadd.f32 %v825, %v1822
      %v1824 = vpop.f32.mrf.mxu0
      %1825 = vmatprep.mubr.f32.mxu0 0.0
      %1826 = vmatmul.mubr.f32.gmra.mxu0 %v928
      %v1827 = vpop.f32.mrf.mxu0
      %v1828 = vadd.f32 %v825, %v1827
      %v1829 = vpop.f32.mrf.mxu0
      %1830 = vmatprep.mubr.f32.mxu0 0.0
      %1831 = vmatmul.mubr.f32.gmra.mxu0 %v931
      %v1832 = vpop.f32.mrf.mxu0
      %v1833 = vadd.f32 %v825, %v1832
      %v1834 = vpop.f32.mrf.mxu0
      %1835 = vmatprep.mubr.f32.mxu0 0.0
      %1836 = vmatmul.mubr.f32.gmra.mxu0 %v934
      %v1837 = vpop.f32.mrf.mxu0
      %v1838 = vadd.f32 %v825, %v1837
      %v1839 = vpop.f32.mrf.mxu0
      %1840 = vmatprep.mubr.f32.mxu0 0.0
      %1841 = vmatmul.mubr.f32.gmra.mxu0 %v937
      %v1842 = vpop.f32.mrf.mxu0
      %v1843 = vadd.f32 %v825, %v1842
      %v1844 = vpop.f32.mrf.mxu0
      %1845 = vmatprep.mubr.f32.mxu0 0.0
      %1846 = vmatmul.mubr.f32.gmra.mxu0 %v940
      %v1847 = vpop.f32.mrf.mxu0
      %v1848 = vadd.f32 %v825, %v1847
      %v1849 = vpop.f32.mrf.mxu0
      %1850 = vmatprep.mubr.f32.mxu0 0.0
      %1851 = vmatmul.mubr.f32.gmra.mxu0 %v943
      %v1852 = vpop.f32.mrf.mxu0
      %v1853 = vadd.f32 %v825, %v1852
      %v1854 = vpop.f32.mrf.mxu0
      %1855 = vmatprep.mubr.f32.mxu0 0.0
      %1856 = vmatmul.mubr.f32.gmra.mxu0 %v946
      %v1857 = vpop.f32.mrf.mxu0
      %v1858 = vadd.f32 %v825, %v1857
      %v1859 = vpop.f32.mrf.mxu0
      %1860 = vmatprep.mubr.f32.mxu0 0.0
      %1861 = vmatmul.mubr.f32.gmra.mxu0 %v949
      %v1862 = vpop.f32.mrf.mxu0
      %v1863 = vadd.f32 %v825, %v1862
      %v1864 = vpop.f32.mrf.mxu0
      %1865 = vmatprep.mubr.f32.mxu0 0.0
      %1866 = vmatmul.mubr.f32.gmra.mxu0 %v952
      %v1867 = vpop.f32.mrf.mxu0
      %v1868 = vadd.f32 %v825, %v1867
      %v1869 = vpop.f32.mrf.mxu0
      %1870 = vmatprep.mubr.f32.mxu0 0.0
      %1871 = vmatmul.mubr.f32.gmra.mxu0 %v955
      %v1872 = vpop.f32.mrf.mxu0
      %v1873 = vadd.f32 %v825, %v1872
      %v1874 = vpop.f32.mrf.mxu0
      %1875 = vmatprep.mubr.f32.mxu0 0.0
      %1876 = vmatmul.mubr.f32.gmra.mxu0 %v958
      %v1877 = vpop.f32.mrf.mxu0
      %v1878 = vadd.f32 %v825, %v1877
      %v1879 = vpop.f32.mrf.mxu0
      %1880 = vmatprep.mubr.f32.mxu0 0.0
      %1881 = vmatmul.mubr.f32.gmra.mxu0 %v961
      %v1882 = vpop.f32.mrf.mxu0
      %v1883 = vadd.f32 %v825, %v1882
      %v1884 = vpop.f32.mrf.mxu0
      %1885 = vmatprep.mubr.f32.mxu0 0.0
      %1886 = vmatmul.mubr.f32.gmra.mxu0 %v964
      %v1887 = vpop.f32.mrf.mxu0
      %v1888 = vadd.f32 %v825, %v1887
      %v1889 = vpop.f32.mrf.mxu0
      %1890 = vmatprep.mubr.f32.mxu0 0.0
      %1891 = vmatmul.mubr.f32.gmra.mxu0 %v967
      %v1892 = vpop.f32.mrf.mxu0
      %v1893 = vadd.f32 %v825, %v1892
      %v1894 = vpop.f32.mrf.mxu0
      %1895 = vmatprep.mubr.f32.mxu0 0.0
      %1896 = vmatmul.mubr.f32.gmra.mxu0 %v970
      %v1897 = vpop.f32.mrf.mxu0
      %v1898 = vadd.f32 %v825, %v1897
      %v1899 = vpop.f32.mrf.mxu0
      %1900 = vmatprep.mubr.f32.mxu0 0.0
      %1901 = vmatmul.mubr.f32.gmra.mxu0 %v973
      %v1902 = vpop.f32.mrf.mxu0
      %v1903 = vadd.f32 %v825, %v1902
      %v1904 = vpop.f32.mrf.mxu0
      %1905 = vmatprep.mubr.f32.mxu0 0.0
      %1906 = vmatmul.mubr.f32.gmra.mxu0 %v976
      %v1907 = vpop.f32.mrf.mxu0
      %v1908 = vadd.f32 %v825, %v1907
      %v1909 = vpop.f32.mrf.mxu0
      %1910 = vmatprep.mubr.f32.mxu0 0.0
      %1911 = vmatmul.mubr.f32.gmra.mxu0 %v979
      %v1912 = vpop.f32.mrf.mxu0
      %v1913 = vadd.f32 %v825, %v1912
      %v1914 = vpop.f32.mrf.mxu0
      %1915 = vmatprep.mubr.f32.mxu0 0.0
      %1916 = vmatmul.mubr.f32.gmra.mxu0 %v982
      %v1917 = vpop.f32.mrf.mxu0
      %v1918 = vadd.f32 %v825, %v1917
      %v1919 = vpop.f32.mrf.mxu0
      %1920 = vmatprep.mubr.f32.mxu0 0.0
      %1921 = vmatmul.mubr.f32.gmra.mxu0 %v985
      %v1922 = vpop.f32.mrf.mxu0
      %v1923 = vadd.f32 %v825, %v1922
      %v1924 = vpop.f32.mrf.mxu0
      %1925 = vmatprep.mubr.f32.mxu0 0.0
      %1926 = vmatmul.mubr.f32.gmra.mxu0 %v988
      %v1927 = vpop.f32.mrf.mxu0
      %v1928 = vadd.f32 %v825, %v1927
      %v1929 = vpop.f32.mrf.mxu0
      %1930 = vmatprep.mubr.f32.mxu0 0.0
      %1931 = vmatmul.mubr.f32.gmra.mxu0 %v991
      %v1932 = vpop.f32.mrf.mxu0
      %v1933 = vadd.f32 %v825, %v1932
      %v1934 = vpop.f32.mrf.mxu0
      %1935 = vmatprep.mubr.f32.mxu0 0.0
      %1936 = vmatmul.mubr.f32.gmra.mxu0 %v994
      %v1937 = vpop.f32.mrf.mxu0
      %v1938 = vadd.f32 %v825, %v1937
      %v1939 = vpop.f32.mrf.mxu0
      %1940 = vmatprep.mubr.f32.mxu0 0.0
      %1941 = vmatmul.mubr.f32.gmra.mxu0 %v997
      %v1942 = vpop.f32.mrf.mxu0
      %v1943 = vadd.f32 %v825, %v1942
      %v1944 = vpop.f32.mrf.mxu0
      %1945 = vmatprep.mubr.f32.mxu0 0.0
      %1946 = vmatmul.mubr.f32.gmra.mxu0 %v1000
      %v1947 = vpop.f32.mrf.mxu0
      %v1948 = vadd.f32 %v825, %v1947
      %v1949 = vpop.f32.mrf.mxu0
      %1950 = vmatprep.mubr.f32.mxu0 0.0
      %1951 = vmatmul.mubr.f32.gmra.mxu0 %v1003
      %v1952 = vpop.f32.mrf.mxu0
      %v1953 = vadd.f32 %v825, %v1952
      %v1954 = vpop.f32.mrf.mxu0
      %1955 = vmatprep.mubr.f32.mxu0 0.0
      %1956 = vmatmul.mubr.f32.gmra.mxu0 %v1006
      %v1957 = vpop.f32.mrf.mxu0
      %v1958 = vadd.f32 %v825, %v1957
      %v1959 = vpop.f32.mrf.mxu0
      %1960 = vmatprep.mubr.f32.mxu0 0.0
      %1961 = vmatmul.mubr.f32.gmra.mxu0 %v1009
      %v1962 = vpop.f32.mrf.mxu0
      %v1963 = vadd.f32 %v825, %v1962
      %v1964 = vpop.f32.mrf.mxu0
      %1965 = vmatprep.mubr.f32.mxu0 0.0
      %1966 = vmatmul.mubr.f32.gmra.mxu0 %v1012
      %v1967 = vpop.f32.mrf.mxu0
      %v1968 = vadd.f32 %v825, %v1967
      %v1969 = vpop.f32.mrf.mxu0
      %1970 = vmatprep.mubr.f32.mxu0 0.0
      %1971 = vmatmul.mubr.f32.gmra.mxu0 %v1015
      %v1972 = vpop.f32.mrf.mxu0
      %v1973 = vadd.f32 %v825, %v1972
      %v1974 = vpop.f32.mrf.mxu0
      %1975 = vmatprep.mubr.f32.mxu0 0.0
      %1976 = vmatmul.mubr.f32.gmra.mxu0 %v1018
      %v1977 = vpop.f32.mrf.mxu0
      %v1978 = vadd.f32 %v825, %v1977
      %v1979 = vpop.f32.mrf.mxu0
      %1980 = vmatprep.mubr.f32.mxu0 0.0
      %1981 = vmatmul.mubr.f32.gmra.mxu0 %v1021
      %v1982 = vpop.f32.mrf.mxu0
      %v1983 = vadd.f32 %v825, %v1982
      %v1984 = vpop.f32.mrf.mxu0
      %1985 = vmatprep.mubr.f32.mxu0 0.0
      %1986 = vmatmul.mubr.f32.gmra.mxu0 %v1024
      %v1987 = vpop.f32.mrf.mxu0
      %v1988 = vadd.f32 %v825, %v1987
      %v1989 = vpop.f32.mrf.mxu0
      %1990 = vmatprep.mubr.f32.mxu0 0.0
      %1991 = vmatmul.mubr.f32.gmra.mxu0 %v1027
      %v1992 = vpop.f32.mrf.mxu0
      %v1993 = vadd.f32 %v825, %v1992
      %v1994 = vpop.f32.mrf.mxu0
      %1995 = vmatprep.mubr.f32.mxu0 0.0
      %1996 = vmatmul.mubr.f32.gmra.mxu0 %v1030
      %v1997 = vpop.f32.mrf.mxu0
      %v1998 = vadd.f32 %v825, %v1997
      %v1999 = vpop.f32.mrf.mxu0
      %2000 = vmatprep.mubr.f32.mxu0 0.0
      %2001 = vmatmul.mubr.f32.gmra.mxu0 %v1033
      %v2002 = vpop.f32.mrf.mxu0
      %v2003 = vadd.f32 %v825, %v2002
      %v2004 = vpop.f32.mrf.mxu0
      %2005 = vmatprep.mubr.f32.mxu0 0.0
      %2006 = vmatmul.mubr.f32.gmra.mxu0 %v1036
      %v2007 = vpop.f32.mrf.mxu0
      %v2008 = vadd.f32 %v825, %v2007
      %v2009 = vpop.f32.mrf.mxu0
      %2010 = vmatprep.mubr.f32.mxu0 0.0
      %2011 = vmatmul.mubr.f32.gmra.mxu0 %v1039
      %v2012 = vpop.f32.mrf.mxu0
      %v2013 = vadd.f32 %v825, %v2012
      %v2014 = vpop.f32.mrf.mxu0
      %2015 = vmatprep.mubr.f32.mxu0 0.0
      %2016 = vmatmul.mubr.f32.gmra.mxu0 %v1042
      %v2017 = vpop.f32.mrf.mxu0
      %v2018 = vadd.f32 %v825, %v2017
      %v2019 = vpop.f32.mrf.mxu0
      %2020 = vmatprep.mubr.f32.mxu0 0.0
      %2021 = vmatmul.mubr.f32.gmra.mxu0 %v1045
      %v2022 = vpop.f32.mrf.mxu0
      %v2023 = vadd.f32 %v825, %v2022
      %v2024 = vpop.f32.mrf.mxu0
      %2025 = vmatprep.mubr.f32.mxu0 0.0
      %2026 = vmatmul.mubr.f32.gmra.mxu0 %v1048
      %v2027 = vpop.f32.mrf.mxu0
      %v2028 = vadd.f32 %v825, %v2027
      %v2029 = vpop.f32.mrf.mxu0
      %2030 = vmatprep.mubr.f32.mxu0 0.0
      %2031 = vmatmul.mubr.f32.gmra.mxu0 %v1051
      %v2032 = vpop.f32.mrf.mxu0
      %v2033 = vadd.f32 %v825, %v2032
      %v2034 = vpop.f32.mrf.mxu0
      %2035 = vmatprep.mubr.f32.mxu0 0.0
      %2036 = vmatmul.mubr.f32.gmra.mxu0 %v1054
      %v2037 = vpop.f32.mrf.mxu0
      %v2038 = vadd.f32 %v825, %v2037
      %v2039 = vpop.f32.mrf.mxu0
      %2040 = vmatprep.mubr.f32.mxu0 0.0
      %2041 = vmatmul.mubr.f32.gmra.mxu0 %v1057
      %v2042 = vpop.f32.mrf.mxu0
      %v2043 = vadd.f32 %v825, %v2042
      %v2044 = vpop.f32.mrf.mxu0
      %2045 = vmatprep.mubr.f32.mxu0 0.0
      %2046 = vmatmul.mubr.f32.gmra.mxu0 %v1060
      %v2047 = vpop.f32.mrf.mxu0
      %v2048 = vadd.f32 %v825, %v2047
      %v2049 = vpop.f32.mrf.mxu0
      %2050 = vmatprep.mubr.f32.mxu0 0.0
      %2051 = vmatmul.mubr.f32.gmra.mxu0 %v1063
      %v2052 = vpop.f32.mrf.mxu0
      %v2053 = vadd.f32 %v825, %v2052
      %v2054 = vpop.f32.mrf.mxu0
      %2055 = vmatprep.mubr.f32.mxu0 0.0
      %2056 = vmatmul.mubr.f32.gmra.mxu0 %v1066
      %v2057 = vpop.f32.mrf.mxu0
      %v2058 = vadd.f32 %v825, %v2057
      %v2059 = vpop.f32.mrf.mxu0
      %2060 = vmatprep.mubr.f32.mxu0 0.0
      %2061 = vmatmul.mubr.f32.gmra.mxu0 %v1069
      %v2062 = vpop.f32.mrf.mxu0
      %v2063 = vadd.f32 %v825, %v2062
      %v2064 = vpop.f32.mrf.mxu0
      %2065 = vmatprep.mubr.f32.mxu0 0.0
      %2066 = vmatmul.mubr.f32.gmra.mxu0 %v1072
      %v2067 = vpop.f32.mrf.mxu0
      %v2068 = vadd.f32 %v825, %v2067
      %v2069 = vpop.f32.mrf.mxu0
      %2070 = vmatprep.mubr.f32.mxu0 0.0
      %2071 = vmatmul.mubr.f32.gmra.mxu0 %v1075
      %v2072 = vpop.f32.mrf.mxu0
      %v2073 = vadd.f32 %v825, %v2072
      %v2074 = vpop.f32.mrf.mxu0
      %2075 = vmatprep.mubr.f32.mxu0 0.0
      %2076 = vmatmul.mubr.f32.gmra.mxu0 %v1078
      %v2077 = vpop.f32.mrf.mxu0
      %v2078 = vadd.f32 %v825, %v2077
      %v2079 = vpop.f32.mrf.mxu0
      %2080 = vmatprep.mubr.f32.mxu0 0.0
      %2081 = vmatmul.mubr.f32.gmra.mxu0 %v1081
      %v2082 = vpop.f32.mrf.mxu0
      %v2083 = vadd.f32 %v825, %v2082
      %v2084 = vpop.f32.mrf.mxu0
      %2085 = vmatprep.mubr.f32.mxu0 0.0
      %2086 = vmatmul.mubr.f32.gmra.mxu0 %v1084
      %v2087 = vpop.f32.mrf.mxu0
      %v2088 = vadd.f32 %v825, %v2087
      %v2089 = vpop.f32.mrf.mxu0
      %2090 = vmatprep.mubr.f32.mxu0 0.0
      %2091 = vmatmul.mubr.f32.gmra.mxu0 %v1087
      %v2092 = vpop.f32.mrf.mxu0
      %v2093 = vadd.f32 %v825, %v2092
      %v2094 = vpop.f32.mrf.mxu0
      %2095 = vmatprep.mubr.f32.mxu0 0.0
      %2096 = vmatmul.mubr.f32.gmra.mxu0 %v1090
      %v2097 = vpop.f32.mrf.mxu0
      %v2098 = vadd.f32 %v825, %v2097
      %v2099 = vpop.f32.mrf.mxu0
      %2100 = vmatprep.mubr.f32.mxu0 0.0
      %2101 = vmatmul.mubr.f32.gmra.mxu0 %v1093
      %v2102 = vpop.f32.mrf.mxu0
      %v2103 = vadd.f32 %v825, %v2102
      %v2104 = vpop.f32.mrf.mxu0
      %2105 = vmatprep.mubr.f32.mxu0 0.0
      %2106 = vmatmul.mubr.f32.gmra.mxu0 %v1096
      %v2107 = vpop.f32.mrf.mxu0
      %v2108 = vadd.f32 %v825, %v2107
      %v2109 = vpop.f32.mrf.mxu0
      %2110 = vmatprep.mubr.f32.mxu0 0.0
      %2111 = vmatmul.mubr.f32.gmra.mxu0 %v1099
      %v2112 = vpop.f32.mrf.mxu0
      %v2113 = vadd.f32 %v825, %v2112
      %v2114 = vpop.f32.mrf.mxu0
      %2115 = vmatprep.mubr.f32.mxu0 0.0
      %2116 = vmatmul.mubr.f32.gmra.mxu0 %v1102
      %v2117 = vpop.f32.mrf.mxu0
      %v2118 = vadd.f32 %v825, %v2117
      %v2119 = vpop.f32.mrf.mxu0
      %2120 = vmatprep.mubr.f32.mxu0 0.0
      %2121 = vmatmul.mubr.f32.gmra.mxu0 %v1105
      %v2122 = vpop.f32.mrf.mxu0
      %v2123 = vadd.f32 %v825, %v2122
      %v2124 = vpop.f32.mrf.mxu0
      %2125 = vmatprep.mubr.f32.mxu0 0.0
      %2126 = vmatmul.mubr.f32.gmra.mxu0 %v1108
      %v2127 = vpop.f32.mrf.mxu0
      %v2128 = vadd.f32 %v825, %v2127
      %v2129 = vpop.f32.mrf.mxu0
      %2130 = vmatprep.mubr.f32.mxu0 0.0
      %2131 = vmatmul.mubr.f32.gmra.mxu0 %v1111
      %v2132 = vpop.f32.mrf.mxu0
      %v2133 = vadd.f32 %v825, %v2132
      %v2134 = vpop.f32.mrf.mxu0
      %2135 = vmatprep.mubr.f32.mxu0 0.0
      %2136 = vmatmul.mubr.f32.gmra.mxu0 %v1114
      %v2137 = vpop.f32.mrf.mxu0
      %v2138 = vadd.f32 %v825, %v2137
      %v2139 = vpop.f32.mrf.mxu0
      %2140 = vmatprep.mubr.f32.mxu0 0.0
      %2141 = vmatmul.mubr.f32.gmra.mxu0 %v1117
      %v2142 = vpop.f32.mrf.mxu0
      %v2143 = vadd.f32 %v825, %v2142
      %v2144 = vpop.f32.mrf.mxu0
      %2145 = vmatprep.mubr.f32.mxu0 0.0
      %2146 = vmatmul.mubr.f32.gmra.mxu0 %v1120
      %v2147 = vpop.f32.mrf.mxu0
      %v2148 = vadd.f32 %v825, %v2147
      %v2149 = vpop.f32.mrf.mxu0
      %2150 = vmatprep.mubr.f32.mxu0 0.0
      %2151 = vmatmul.mubr.f32.gmra.mxu0 %v1123
      %v2152 = vpop.f32.mrf.mxu0
      %v2153 = vadd.f32 %v825, %v2152
      %v2154 = vpop.f32.mrf.mxu0
      %2155 = vmatprep.mubr.f32.mxu0 0.0
      %2156 = vmatmul.mubr.f32.gmra.mxu0 %v1126
      %v2157 = vpop.f32.mrf.mxu0
      %v2158 = vadd.f32 %v825, %v2157
      %v2159 = vpop.f32.mrf.mxu0
      %2160 = vmatprep.mubr.f32.mxu0 0.0
      %2161 = vmatmul.mubr.f32.gmra.mxu0 %v1129
      %v2162 = vpop.f32.mrf.mxu0
      %v2163 = vadd.f32 %v825, %v2162
      %v2164 = vpop.f32.mrf.mxu0
      %2165 = vmatprep.mubr.f32.mxu0 0.0
      %2166 = vmatmul.mubr.f32.gmra.mxu0 %v1132
      %v2167 = vpop.f32.mrf.mxu0
      %v2168 = vadd.f32 %v825, %v2167
      %v2169 = vpop.f32.mrf.mxu0
      %2170 = vmatprep.mubr.f32.mxu0 0.0
      %2171 = vmatmul.mubr.f32.gmra.mxu0 %v1135
      %v2172 = vpop.f32.mrf.mxu0
      %v2173 = vadd.f32 %v825, %v2172
      %v2174 = vpop.f32.mrf.mxu0
      %2175 = vmatprep.mubr.f32.mxu0 0.0
      %2176 = vmatmul.mubr.f32.gmra.mxu0 %v1138
      %v2177 = vpop.f32.mrf.mxu0
      %v2178 = vadd.f32 %v825, %v2177
      %v2179 = vpop.f32.mrf.mxu0
      %2180 = vmatprep.mubr.f32.mxu0 0.0
      %2181 = vmatmul.mubr.f32.gmra.mxu0 %v1141
      %v2182 = vpop.f32.mrf.mxu0
      %v2183 = vadd.f32 %v825, %v2182
      %v2184 = vpop.f32.mrf.mxu0
      %2185 = vmatprep.mubr.f32.mxu0 0.0
      %2186 = vmatmul.mubr.f32.gmra.mxu0 %v1144
      %v2187 = vpop.f32.mrf.mxu0
      %v2188 = vadd.f32 %v825, %v2187
      %v2189 = vpop.f32.mrf.mxu0
      %2190 = vmatprep.mubr.f32.mxu0 0.0
      %2191 = vmatmul.mubr.f32.gmra.mxu0 %v1147
      %v2192 = vpop.f32.mrf.mxu0
      %v2193 = vadd.f32 %v825, %v2192
      %v2194 = vpop.f32.mrf.mxu0
      %2195 = vmatprep.mubr.f32.mxu0 0.0
      %2196 = vmatmul.mubr.f32.gmra.mxu0 %v1150
      %v2197 = vpop.f32.mrf.mxu0
      %v2198 = vadd.f32 %v825, %v2197
      %v2199 = vpop.f32.mrf.mxu0
      %2200 = vmatprep.mubr.f32.mxu0 0.0
      %2201 = vmatmul.mubr.f32.gmra.mxu0 %v1153
      %v2202 = vpop.f32.mrf.mxu0
      %v2203 = vadd.f32 %v825, %v2202
      %v2204 = vpop.f32.mrf.mxu0
      %2205 = vmatprep.mubr.f32.mxu0 0.0
      %2206 = vmatmul.mubr.f32.gmra.mxu0 %v1156
      %v2207 = vpop.f32.mrf.mxu0
      %v2208 = vadd.f32 %v825, %v2207
      %v2209 = vpop.f32.mrf.mxu0
      %2210 = vmatprep.mubr.f32.mxu0 0.0
      %2211 = vmatmul.mubr.f32.gmra.mxu0 %v1159
      %v2212 = vpop.f32.mrf.mxu0
      %v2213 = vadd.f32 %v825, %v2212
      %v2214 = vpop.f32.mrf.mxu0
      %2215 = vmatprep.mubr.f32.mxu0 0.0
      %2216 = vmatmul.mubr.f32.gmra.mxu0 %v1162
      %v2217 = vpop.f32.mrf.mxu0
      %v2218 = vadd.f32 %v825, %v2217
      %v2219 = vpop.f32.mrf.mxu0
      %2220 = vmatprep.mubr.f32.mxu0 0.0
      %2221 = vmatmul.mubr.f32.gmra.mxu0 %v1165
      %v2222 = vpop.f32.mrf.mxu0
      %v2223 = vadd.f32 %v825, %v2222
      %v2224 = vpop.f32.mrf.mxu0
      %2225 = vmatprep.mubr.f32.mxu0 0.0
      %2226 = vmatmul.mubr.f32.gmra.mxu0 %v1168
      %v2227 = vpop.f32.mrf.mxu0
      %v2228 = vadd.f32 %v825, %v2227
      %v2229 = vpop.f32.mrf.mxu0
      %2230 = vmatprep.mubr.f32.mxu0 0.0
      %2231 = vmatmul.mubr.f32.gmra.mxu0 %v1171
      %v2232 = vpop.f32.mrf.mxu0
      %v2233 = vadd.f32 %v825, %v2232
      %v2234 = vpop.f32.mrf.mxu0
      %2235 = vmatprep.mubr.f32.mxu0 0.0
      %2236 = vmatmul.mubr.f32.gmra.mxu0 %v1174
      %v2237 = vpop.f32.mrf.mxu0
      %v2238 = vadd.f32 %v825, %v2237
      %v2239 = vpop.f32.mrf.mxu0
      %2240 = vmatprep.mubr.f32.mxu0 0.0
      %2241 = vmatmul.mubr.f32.gmra.mxu0 %v1177
      %v2242 = vpop.f32.mrf.mxu0
      %v2243 = vadd.f32 %v825, %v2242
      %v2244 = vpop.f32.mrf.mxu0
      %2245 = vmatprep.mubr.f32.mxu0 0.0
      %2246 = vmatmul.mubr.f32.gmra.mxu0 %v1180
      %v2247 = vpop.f32.mrf.mxu0
      %v2248 = vadd.f32 %v825, %v2247
      %v2249 = vpop.f32.mrf.mxu0
      %2250 = vmatprep.mubr.f32.mxu0 0.0
      %2251 = vmatmul.mubr.f32.gmra.mxu0 %v1183
      %v2252 = vpop.f32.mrf.mxu0
      %v2253 = vadd.f32 %v825, %v2252
      %v2254 = vpop.f32.mrf.mxu0
      %2255 = vmatprep.mubr.f32.mxu0 0.0
      %2256 = vmatmul.mubr.f32.gmra.mxu0 %v1186
      %v2257 = vpop.f32.mrf.mxu0
      %v2258 = vadd.f32 %v825, %v2257
      %v2259 = vpop.f32.mrf.mxu0
      %2260 = vmatprep.mubr.f32.mxu0 0.0
      %2261 = vmatmul.mubr.f32.gmra.mxu0 %v1189
      %v2262 = vpop.f32.mrf.mxu0
      %v2263 = vadd.f32 %v825, %v2262
      %v2264 = vpop.f32.mrf.mxu0
      %2265 = vmatprep.mubr.f32.mxu0 0.0
      %2266 = vmatmul.mubr.f32.gmra.mxu0 %v1192
      %v2267 = vpop.f32.mrf.mxu0
      %v2268 = vadd.f32 %v825, %v2267
      %v2269 = vpop.f32.mrf.mxu0
      %2270 = vmatprep.mubr.f32.mxu0 0.0
      %2271 = vmatmul.mubr.f32.gmra.mxu0 %v1195
      %v2272 = vpop.f32.mrf.mxu0
      %v2273 = vadd.f32 %v825, %v2272
      %v2274 = vpop.f32.mrf.mxu0
      %2275 = vmatprep.mubr.f32.mxu0 0.0
      %2276 = vmatmul.mubr.f32.gmra.mxu0 %v1198
      %v2277 = vpop.f32.mrf.mxu0
      %v2278 = vadd.f32 %v825, %v2277
      %v2279 = vpop.f32.mrf.mxu0
      %2280 = vmatprep.mubr.f32.mxu0 0.0
      %2281 = vmatmul.mubr.f32.gmra.mxu0 %v1201
      %v2282 = vpop.f32.mrf.mxu0
      %v2283 = vadd.f32 %v825, %v2282
      %v2284 = vpop.f32.mrf.mxu0
      %2285 = vmatprep.mubr.f32.mxu0 0.0
      %2286 = vmatmul.mubr.f32.gmra.mxu0 %v1204
      %v2287 = vpop.f32.mrf.mxu0
      %v2288 = vadd.f32 %v825, %v2287
      %v2289 = vpop.f32.mrf.mxu0
      %2290 = vmatprep.mubr.f32.mxu0 0.0
      %2291 = vmatmul.mubr.f32.gmra.mxu0 %v1207
      %v2292 = vpop.f32.mrf.mxu0
      %v2293 = vadd.f32 %v825, %v2292
      %v2294 = vpop.f32.mrf.mxu0
      %2295 = vmatprep.mubr.f32.mxu0 0.0
      %2296 = vmatmul.mubr.f32.gmra.mxu0 %v1210
      %v2297 = vpop.f32.mrf.mxu0
      %v2298 = vadd.f32 %v825, %v2297
      %v2299 = vpop.f32.mrf.mxu0
      %2300 = vmatprep.mubr.f32.mxu0 0.0
      %2301 = vmatmul.mubr.f32.gmra.mxu0 %v1213
      %v2302 = vpop.f32.mrf.mxu0
      %v2303 = vadd.f32 %v825, %v2302
      %v2304 = vpop.f32.mrf.mxu0
      %2305 = vmatprep.mubr.f32.mxu0 0.0
      %2306 = vmatmul.mubr.f32.gmra.mxu0 %v1216
      %v2307 = vpop.f32.mrf.mxu0
      %v2308 = vadd.f32 %v825, %v2307
      %v2309 = vpop.f32.mrf.mxu0
      %2310 = vmatprep.mubr.f32.mxu0 0.0
      %2311 = vmatmul.mubr.f32.gmra.mxu0 %v1219
      %v2312 = vpop.f32.mrf.mxu0
      %v2313 = vadd.f32 %v825, %v2312
      %v2314 = vpop.f32.mrf.mxu0
      %2315 = vmatprep.mubr.f32.mxu0 0.0
      %2316 = vmatmul.mubr.f32.gmra.mxu0 %v1222
      %v2317 = vpop.f32.mrf.mxu0
      %v2318 = vadd.f32 %v825, %v2317
      %v2319 = vpop.f32.mrf.mxu0
      %2320 = vmatprep.mubr.f32.mxu0 0.0
      %2321 = vmatmul.mubr.f32.gmra.mxu0 %v1225
      %v2322 = vpop.f32.mrf.mxu0
      %v2323 = vadd.f32 %v825, %v2322
      %v2324 = vpop.f32.mrf.mxu0
      %2325 = vmatprep.mubr.f32.mxu0 0.0
      %2326 = vmatmul.mubr.f32.gmra.mxu0 %v1228
      %v2327 = vpop.f32.mrf.mxu0
      %v2328 = vadd.f32 %v825, %v2327
      %v2329 = vpop.f32.mrf.mxu0
      %2330 = vmatprep.mubr.f32.mxu0 0.0
      %2331 = vmatmul.mubr.f32.gmra.mxu0 %v1231
      %v2332 = vpop.f32.mrf.mxu0
      %v2333 = vadd.f32 %v825, %v2332
      %v2334 = vpop.f32.mrf.mxu0
      %2335 = vmatprep.mubr.f32.mxu0 0.0
      %2336 = vmatmul.mubr.f32.gmra.mxu0 %v1234
      %v2337 = vpop.f32.mrf.mxu0
      %v2338 = vadd.f32 %v825, %v2337
      %v2339 = vpop.f32.mrf.mxu0
      %2340 = vmatprep.mubr.f32.mxu0 0.0
      %2341 = vmatmul.mubr.f32.gmra.mxu0 %v1237
      %v2342 = vpop.f32.mrf.mxu0
      %v2343 = vadd.f32 %v825, %v2342
      %v2344 = vpop.f32.mrf.mxu0
      %2345 = vmatprep.mubr.f32.mxu0 0.0
      %2346 = vmatmul.mubr.f32.gmra.mxu0 %v1240
      %v2347 = vpop.f32.mrf.mxu0
      %v2348 = vadd.f32 %v825, %v2347
      %v2349 = vpop.f32.mrf.mxu0
      %2350 = vmatprep.mubr.f32.mxu0 0.0
      %2351 = vmatmul.mubr.f32.gmra.mxu0 %v1243
      %v2352 = vpop.f32.mrf.mxu0
      %v2353 = vadd.f32 %v825, %v2352
      %v2354 = vpop.f32.mrf.mxu0
      %2355 = vmatprep.mubr.f32.mxu0 0.0
      %2356 = vmatmul.mubr.f32.gmra.mxu0 %v1246
      %v2357 = vpop.f32.mrf.mxu0
      %v2358 = vadd.f32 %v825, %v2357
      %v2359 = vpop.f32.mrf.mxu0
      %2360 = vmatprep.mubr.f32.mxu0 0.0
      %2361 = vmatmul.mubr.f32.gmra.mxu0 %v1249
      %v2362 = vpop.f32.mrf.mxu0
      %v2363 = vadd.f32 %v825, %v2362
      %v2364 = vpop.f32.mrf.mxu0
      %2365 = vmatprep.mubr.f32.mxu0 0.0
      %2366 = vmatmul.mubr.f32.gmra.mxu0 %v1252
      %v2367 = vpop.f32.mrf.mxu0
      %v2368 = vadd.f32 %v825, %v2367
      %v2369 = vpop.f32.mrf.mxu0
      %2370 = vmatprep.mubr.f32.mxu0 0.0
      %2371 = vmatmul.mubr.f32.gmra.mxu0 %v1255
      %v2372 = vpop.f32.mrf.mxu0
      %v2373 = vadd.f32 %v825, %v2372
      %v2374 = vpop.f32.mrf.mxu0
      %2375 = vmatprep.mubr.f32.mxu0 0.0
      %2376 = vmatmul.mubr.f32.gmra.mxu0 %v1258
      %v2377 = vpop.f32.mrf.mxu0
      %v2378 = vadd.f32 %v825, %v2377
      %v2379 = vpop.f32.mrf.mxu0
      %2380 = vmatprep.mubr.f32.mxu0 0.0
      %2381 = vmatmul.mubr.f32.gmra.mxu0 %v1261
      %v2382 = vpop.f32.mrf.mxu0
      %v2383 = vadd.f32 %v825, %v2382
      %v2384 = vpop.f32.mrf.mxu0
      %2385 = vmatprep.mubr.f32.mxu0 0.0
      %2386 = vmatmul.mubr.f32.gmra.mxu0 %v1264
      %v2387 = vpop.f32.mrf.mxu0
      %v2388 = vadd.f32 %v825, %v2387
      %v2389 = vpop.f32.mrf.mxu0
      %2390 = vmatprep.mubr.f32.mxu0 0.0
      %2391 = vmatmul.mubr.f32.gmra.mxu0 %v1267
      %v2392 = vpop.f32.mrf.mxu0
      %v2393 = vadd.f32 %v825, %v2392
      %v2394 = vpop.f32.mrf.mxu0
      %2395 = vmatprep.mubr.f32.mxu0 0.0
      %2396 = vmatmul.mubr.f32.gmra.mxu0 %v1270
      %v2397 = vpop.f32.mrf.mxu0
      %v2398 = vadd.f32 %v825, %v2397
      %v2399 = vpop.f32.mrf.mxu0
      %2400 = vmatprep.mubr.f32.mxu0 0.0
      %2401 = vmatmul.mubr.f32.gmra.mxu0 %v1273
      %v2402 = vpop.f32.mrf.mxu0
      %v2403 = vadd.f32 %v825, %v2402
      %v2404 = vpop.f32.mrf.mxu0
      %2405 = vmatprep.mubr.f32.mxu0 0.0
      %2406 = vmatmul.mubr.f32.gmra.mxu0 %v1276
      %v2407 = vpop.f32.mrf.mxu0
      %v2408 = vadd.f32 %v825, %v2407
      %v2409 = vpop.f32.mrf.mxu0
      %2410 = vmatprep.mubr.f32.mxu0 0.0
      %2411 = vmatmul.mubr.f32.gmra.mxu0 %v1279
      %v2412 = vpop.f32.mrf.mxu0
      %v2413 = vadd.f32 %v825, %v2412
      %v2414 = vpop.f32.mrf.mxu0
      %2415 = vmatprep.mubr.f32.mxu0 0.0
      %2416 = vmatmul.mubr.f32.gmra.mxu0 %v1282
      %v2417 = vpop.f32.mrf.mxu0
      %v2418 = vadd.f32 %v825, %v2417
      %v2419 = vpop.f32.mrf.mxu0
      %2420 = vmatprep.mubr.f32.mxu0 0.0
      %2421 = vmatmul.mubr.f32.gmra.mxu0 %v1285
      %v2422 = vpop.f32.mrf.mxu0
      %v2423 = vadd.f32 %v825, %v2422
      %v2424 = vpop.f32.mrf.mxu0
      %2425 = vmatprep.mubr.f32.mxu0 0.0
      %2426 = vmatmul.mubr.f32.gmra.mxu0 %v1288
      %v2427 = vpop.f32.mrf.mxu0
      %v2428 = vadd.f32 %v825, %v2427
      %v2429 = vpop.f32.mrf.mxu0
      %2430 = vmatprep.mubr.f32.mxu0 0.0
      %2431 = vmatmul.mubr.f32.gmra.mxu0 %v1291
      %v2432 = vpop.f32.mrf.mxu0
      %v2433 = vadd.f32 %v825, %v2432
      %v2434 = vpop.f32.mrf.mxu0
      %2435 = vmatprep.mubr.f32.mxu0 0.0
      %2436 = vmatmul.mubr.f32.gmra.mxu0 %v1294
      %v2437 = vpop.f32.mrf.mxu0
      %v2438 = vadd.f32 %v825, %v2437
      %v2439 = vpop.f32.mrf.mxu0
      %2440 = vmatprep.mubr.f32.mxu0 0.0
      %2441 = vmatmul.mubr.f32.gmra.mxu0 %v1297
      %v2442 = vpop.f32.mrf.mxu0
      %v2443 = vadd.f32 %v825, %v2442
      %v2444 = vpop.f32.mrf.mxu0
      %2445 = vmatprep.mubr.f32.mxu0 0.0
      %2446 = vmatmul.mubr.f32.gmra.mxu0 %v1300
      %v2447 = vpop.f32.mrf.mxu0
      %v2448 = vadd.f32 %v825, %v2447
      %v2449 = vpop.f32.mrf.mxu0
      %2450 = vmatprep.mubr.f32.mxu0 0.0
      %2451 = vmatmul.mubr.f32.gmra.mxu0 %v1303
      %v2452 = vpop.f32.mrf.mxu0
      %v2453 = vadd.f32 %v825, %v2452
      %v2454 = vpop.f32.mrf.mxu0
      %2455 = vmatprep.mubr.f32.mxu0 0.0
      %2456 = vmatmul.mubr.f32.gmra.mxu0 %v1306
      %v2457 = vpop.f32.mrf.mxu0
      %v2458 = vadd.f32 %v825, %v2457
      %v2459 = vpop.f32.mrf.mxu0
      %2460 = vmatprep.mubr.f32.mxu0 0.0
      %2461 = vmatmul.mubr.f32.gmra.mxu0 %v1309
      %v2462 = vpop.f32.mrf.mxu0
      %v2463 = vadd.f32 %v825, %v2462
      %v2464 = vpop.f32.mrf.mxu0
      %2465 = vmatprep.mubr.f32.mxu0 0.0
      %2466 = vmatmul.mubr.f32.gmra.mxu0 %v1312
      %v2467 = vpop.f32.mrf.mxu0
      %v2468 = vadd.f32 %v825, %v2467
      %v2469 = vpop.f32.mrf.mxu0
      %2470 = vmatprep.mubr.f32.mxu0 0.0
      %2471 = vmatmul.mubr.f32.gmra.mxu0 %v1315
      %v2472 = vpop.f32.mrf.mxu0
      %v2473 = vadd.f32 %v825, %v2472
      %v2474 = vpop.f32.mrf.mxu0
      %2475 = vmatprep.mubr.f32.mxu0 0.0
      %2476 = vmatmul.mubr.f32.gmra.mxu0 %v1318
      %v2477 = vpop.f32.mrf.mxu0
      %v2478 = vadd.f32 %v825, %v2477
      %v2479 = vpop.f32.mrf.mxu0
      %2480 = vmatprep.mubr.f32.mxu0 0.0
      %2481 = vmatmul.mubr.f32.gmra.mxu0 %v1321
      %v2482 = vpop.f32.mrf.mxu0
      %v2483 = vadd.f32 %v825, %v2482
      %v2484 = vpop.f32.mrf.mxu0
      %2485 = vmatprep.mubr.f32.mxu0 0.0
      %2486 = vmatmul.mubr.f32.gmra.mxu0 %v1324
      %v2487 = vpop.f32.mrf.mxu0
      %v2488 = vadd.f32 %v825, %v2487
      %v2489 = vpop.f32.mrf.mxu0
      %2490 = vmatprep.mubr.f32.mxu0 0.0
      %2491 = vmatmul.mubr.f32.gmra.mxu0 %v1327
      %v2492 = vpop.f32.mrf.mxu0
      %v2493 = vadd.f32 %v825, %v2492
      %v2494 = vpop.f32.mrf.mxu0
      %2495 = vmatprep.mubr.f32.mxu0 0.0
      %2496 = vmatmul.mubr.f32.gmra.mxu0 %v1330
      %v2497 = vpop.f32.mrf.mxu0
      %v2498 = vadd.f32 %v825, %v2497
      %v2499 = vpop.f32.mrf.mxu0
      %2500 = vmatprep.mubr.f32.mxu0 0.0
      %2501 = vmatmul.mubr.f32.gmra.mxu0 %v1333
      %v2502 = vpop.f32.mrf.mxu0
      %v2503 = vadd.f32 %v825, %v2502
      %v2504 = vpop.f32.mrf.mxu0
      %2505 = vmatprep.mubr.f32.mxu0 0.0
      %2506 = vmatmul.mubr.f32.gmra.mxu0 %v1336
      %v2507 = vpop.f32.mrf.mxu0
      %v2508 = vadd.f32 %v825, %v2507
      %v2509 = vpop.f32.mrf.mxu0
      %2510 = vmatprep.mubr.f32.mxu0 0.0
      %2511 = vmatmul.mubr.f32.gmra.mxu0 %v1339
      %v2512 = vpop.f32.mrf.mxu0
      %v2513 = vadd.f32 %v825, %v2512
      %v2514 = vpop.f32.mrf.mxu0
      %2515 = vmatprep.mubr.f32.mxu0 0.0
      %2516 = vmatmul.mubr.f32.gmra.mxu0 %v1342
      %v2517 = vpop.f32.mrf.mxu0
      %v2518 = vadd.f32 %v825, %v2517
      %v2519 = vpop.f32.mrf.mxu0
      %2520 = vmatprep.mubr.f32.mxu0 0.0
      %2521 = vmatmul.mubr.f32.gmra.mxu0 %v1345
      %v2522 = vpop.f32.mrf.mxu0
      %v2523 = vadd.f32 %v825, %v2522
      %v2524 = vpop.f32.mrf.mxu0
      %2525 = vmatprep.mubr.f32.mxu0 0.0
      %2526 = vmatmul.mubr.f32.gmra.mxu0 %v1348
      %v2527 = vpop.f32.mrf.mxu0
      %v2528 = vadd.f32 %v825, %v2527
      %v2529 = vpop.f32.mrf.mxu0
      %2530 = vmatprep.mubr.f32.mxu0 0.0
      %2531 = vmatmul.mubr.f32.gmra.mxu0 %v1351
      %v2532 = vpop.f32.mrf.mxu0
      %v2533 = vadd.f32 %v825, %v2532
      %v2534 = vpop.f32.mrf.mxu0
      %2535 = vmatprep.mubr.f32.mxu0 0.0
      %2536 = vmatmul.mubr.f32.gmra.mxu0 %v1354
      %v2537 = vpop.f32.mrf.mxu0
      %v2538 = vadd.f32 %v825, %v2537
      %v2539 = vpop.f32.mrf.mxu0
      %2540 = vmatprep.mubr.f32.mxu0 0.0
      %2541 = vmatmul.mubr.f32.gmra.mxu0 %v1357
      %v2542 = vpop.f32.mrf.mxu0
      %v2543 = vadd.f32 %v825, %v2542
      %v2544 = vpop.f32.mrf.mxu0
      %2545 = vmatprep.mubr.f32.mxu0 0.0
      %2546 = vmatmul.mubr.f32.gmra.mxu0 %v1360
      %v2547 = vpop.f32.mrf.mxu0
      %v2548 = vadd.f32 %v825, %v2547
      %v2549 = vpop.f32.mrf.mxu0
      %2550 = vmatprep.mubr.f32.mxu0 0.0
      %2551 = vmatmul.mubr.f32.gmra.mxu0 %v1363
      %v2552 = vpop.f32.mrf.mxu0
      %v2553 = vadd.f32 %v825, %v2552
      %v2554 = vpop.f32.mrf.mxu0
      %2555 = vmatprep.mubr.f32.mxu0 0.0
      %2556 = vmatmul.mubr.f32.gmra.mxu0 %v1366
      %v2557 = vpop.f32.mrf.mxu0
      %v2558 = vadd.f32 %v825, %v2557
      %v2559 = vpop.f32.mrf.mxu0
      %2560 = vmatprep.mubr.f32.mxu0 0.0
      %2561 = vmatmul.mubr.f32.gmra.mxu0 %v1369
      %v2562 = vpop.f32.mrf.mxu0
      %v2563 = vadd.f32 %v825, %v2562
      %v2564 = vpop.f32.mrf.mxu0
      %2565 = vmatprep.mubr.f32.mxu0 0.0
      %2566 = vmatmul.mubr.f32.gmra.mxu0 %v1372
      %v2567 = vpop.f32.mrf.mxu0
      %v2568 = vadd.f32 %v825, %v2567
      %v2569 = vpop.f32.mrf.mxu0
      %2570 = vmatprep.mubr.f32.mxu0 0.0
      %2571 = vmatmul.mubr.f32.gmra.mxu0 %v1375
      %v2572 = vpop.f32.mrf.mxu0
      %v2573 = vadd.f32 %v825, %v2572
      %v2574 = vpop.f32.mrf.mxu0
      %2575 = vmatprep.mubr.f32.mxu0 0.0
      %2576 = vmatmul.mubr.f32.gmra.mxu0 %v1378
      %v2577 = vpop.f32.mrf.mxu0
      %v2578 = vadd.f32 %v825, %v2577
      %v2579 = vpop.f32.mrf.mxu0
      %2580 = vmatprep.mubr.f32.mxu0 0.0
      %2581 = vmatmul.mubr.f32.gmra.mxu0 %v1381
      %v2582 = vpop.f32.mrf.mxu0
      %v2583 = vadd.f32 %v825, %v2582
      %v2584 = vpop.f32.mrf.mxu0
      %2585 = vmatprep.mubr.f32.mxu0 0.0
      %2586 = vmatmul.mubr.f32.gmra.mxu0 %v1384
      %v2587 = vpop.f32.mrf.mxu0
      %v2588 = vadd.f32 %v825, %v2587
      %v2589 = vpop.f32.mrf.mxu0
      %2590 = vmatprep.mubr.f32.mxu0 0.0
      %2591 = vmatmul.mubr.f32.gmra.mxu0 %v1387
      %v2592 = vpop.f32.mrf.mxu0
      %v2593 = vadd.f32 %v825, %v2592
      %v2594 = vpop.f32.mrf.mxu0
      %2595 = vmatprep.mubr.f32.mxu0 0.0
      %2596 = vmatmul.mubr.f32.gmra.mxu0 %v1390
      %v2597 = vpop.f32.mrf.mxu0
      %v2598 = vadd.f32 %v825, %v2597
      %v2599 = vpop.f32.mrf.mxu0
      %2600 = vmatprep.mubr.f32.mxu0 0.0
      %2601 = vmatmul.mubr.f32.gmra.mxu0 %v1393
      %v2602 = vpop.f32.mrf.mxu0
      %v2603 = vadd.f32 %v825, %v2602
      %v2604 = vpop.f32.mrf.mxu0
      %2605 = vmatprep.mubr.f32.mxu0 0.0
      %2606 = vmatmul.mubr.f32.gmra.mxu0 %v1396
      %v2607 = vpop.f32.mrf.mxu0
      %v2608 = vadd.f32 %v825, %v2607
      %v2609 = vpop.f32.mrf.mxu0
      %2610 = vmatprep.mubr.f32.mxu0 0.0
      %2611 = vmatmul.mubr.f32.gmra.mxu0 %v1399
      %v2612 = vpop.f32.mrf.mxu0
      %v2613 = vadd.f32 %v825, %v2612
      %v2614 = vpop.f32.mrf.mxu0
      %2615 = vmatprep.mubr.f32.mxu0 0.0
      %2616 = vmatmul.mubr.f32.gmra.mxu0 %v1402
      %v2617 = vpop.f32.mrf.mxu0
      %v2618 = vadd.f32 %v825, %v2617
      %v2619 = vpop.f32.mrf.mxu0
      %2620 = vmatprep.mubr.f32.mxu0 0.0
      %2621 = vmatmul.mubr.f32.gmra.mxu0 %v1405
      %v2622 = vpop.f32.mrf.mxu0
      %v2623 = vadd.f32 %v825, %v2622
      %v2624 = vpop.f32.mrf.mxu0
      %2625 = vmatprep.mubr.f32.mxu0 0.0
      %2626 = vmatmul.mubr.f32.gmra.mxu0 %v1408
      %v2627 = vpop.f32.mrf.mxu0
      %v2628 = vadd.f32 %v825, %v2627
      %v2629 = vpop.f32.mrf.mxu0
      %2630 = vmatprep.mubr.f32.mxu0 0.0
      %2631 = vmatmul.mubr.f32.gmra.mxu0 %v1411
      %v2632 = vpop.f32.mrf.mxu0
      %v2633 = vadd.f32 %v825, %v2632
      %v2634 = vpop.f32.mrf.mxu0
      %2635 = vmatprep.mubr.f32.mxu0 0.0
      %2636 = vmatmul.mubr.f32.gmra.mxu0 %v1414
      %v2637 = vpop.f32.mrf.mxu0
      %v2638 = vadd.f32 %v825, %v2637
      %v2639 = vpop.f32.mrf.mxu0
      %2640 = vmatprep.mubr.f32.mxu0 0.0
      %2641 = vmatmul.mubr.f32.gmra.mxu0 %v1417
      %v2642 = vpop.f32.mrf.mxu0
      %v2643 = vadd.f32 %v825, %v2642
      %v2644 = vpop.f32.mrf.mxu0
      %2645 = vmatprep.mubr.f32.mxu0 0.0
      %2646 = vmatmul.mubr.f32.gmra.mxu0 %v1420
      %v2647 = vpop.f32.mrf.mxu0
      %v2648 = vadd.f32 %v825, %v2647
      %v2649 = vpop.f32.mrf.mxu0
      %2650 = vmatprep.mubr.f32.mxu0 0.0
      %2651 = vmatmul.mubr.f32.gmra.mxu0 %v1423
      %v2652 = vpop.f32.mrf.mxu0
      %v2653 = vadd.f32 %v825, %v2652
      %v2654 = vpop.f32.mrf.mxu0
      %2655 = vmatprep.mubr.f32.mxu0 0.0
      %2656 = vmatmul.mubr.f32.gmra.mxu0 %v1426
      %v2657 = vpop.f32.mrf.mxu0
      %v2658 = vadd.f32 %v825, %v2657
      %v2659 = vpop.f32.mrf.mxu0
      %2660 = vmatprep.mubr.f32.mxu0 0.0
      %2661 = vmatmul.mubr.f32.gmra.mxu0 %v1429
      %v2662 = vpop.f32.mrf.mxu0
      %v2663 = vadd.f32 %v825, %v2662
      %v2664 = vpop.f32.mrf.mxu0
      %2665 = vmatprep.mubr.f32.mxu0 0.0
      %2666 = vmatmul.mubr.f32.gmra.mxu0 %v1432
      %v2667 = vpop.f32.mrf.mxu0
      %v2668 = vadd.f32 %v825, %v2667
      %v2669 = vpop.f32.mrf.mxu0
      %2670 = vmatprep.mubr.f32.mxu0 0.0
      %2671 = vmatmul.mubr.f32.gmra.mxu0 %v1435
      %v2672 = vpop.f32.mrf.mxu0
      %v2673 = vadd.f32 %v825, %v2672
      %v2674 = vpop.f32.mrf.mxu0
      %2675 = vmatprep.mubr.f32.mxu0 0.0
      %2676 = vmatmul.mubr.f32.gmra.mxu0 %v1438
      %v2677 = vpop.f32.mrf.mxu0
      %v2678 = vadd.f32 %v825, %v2677
      %v2679 = vpop.f32.mrf.mxu0
      %2680 = vmatprep.mubr.f32.mxu0 0.0
      %2681 = vmatmul.mubr.f32.gmra.mxu0 %v1441
      %v2682 = vpop.f32.mrf.mxu0
      %v2683 = vadd.f32 %v825, %v2682
      %v2684 = vpop.f32.mrf.mxu0
      %2685 = vmatprep.mubr.f32.mxu0 0.0
      %2686 = vmatmul.mubr.f32.gmra.mxu0 %v1444
      %v2687 = vpop.f32.mrf.mxu0
      %v2688 = vadd.f32 %v825, %v2687
      %v2689 = vpop.f32.mrf.mxu0
      %2690 = vmatprep.mubr.f32.mxu0 0.0
      %2691 = vmatmul.mubr.f32.gmra.mxu0 %v1447
      %v2692 = vpop.f32.mrf.mxu0
      %v2693 = vadd.f32 %v825, %v2692
      %v2694 = vpop.f32.mrf.mxu0
      %2695 = vmatprep.mubr.f32.mxu0 0.0
      %2696 = vmatmul.mubr.f32.gmra.mxu0 %v1450
      %v2697 = vpop.f32.mrf.mxu0
      %v2698 = vadd.f32 %v825, %v2697
      %v2699 = vpop.f32.mrf.mxu0
      %2700 = vmatprep.mubr.f32.mxu0 0.0
      %2701 = vmatmul.mubr.f32.gmra.mxu0 %v1453
      %v2702 = vpop.f32.mrf.mxu0
      %v2703 = vadd.f32 %v825, %v2702
      %v2704 = vpop.f32.mrf.mxu0
      %2705 = vmatprep.mubr.f32.mxu0 0.0
      %2706 = vmatmul.mubr.f32.gmra.mxu0 %v1456
      %v2707 = vpop.f32.mrf.mxu0
      %v2708 = vadd.f32 %v825, %v2707
      %v2709 = vpop.f32.mrf.mxu0
      %2710 = vmatprep.mubr.f32.mxu0 0.0
      %2711 = vmatmul.mubr.f32.gmra.mxu0 %v1459
      %v2712 = vpop.f32.mrf.mxu0
      %v2713 = vadd.f32 %v825, %v2712
      %v2714 = vpop.f32.mrf.mxu0
      %2715 = vmatprep.mubr.f32.mxu0 0.0
      %2716 = vmatmul.mubr.f32.gmra.mxu0 %v1462
      %v2717 = vpop.f32.mrf.mxu0
      %v2718 = vadd.f32 %v825, %v2717
      %v2719 = vpop.f32.mrf.mxu0
      %2720 = vmatprep.mubr.f32.mxu0 0.0
      %2721 = vmatmul.mubr.f32.gmra.mxu0 %v1465
      %v2722 = vpop.f32.mrf.mxu0
      %v2723 = vadd.f32 %v825, %v2722
      %v2724 = vpop.f32.mrf.mxu0
      %2725 = vmatprep.mubr.f32.mxu0 0.0
      %2726 = vmatmul.mubr.f32.gmra.mxu0 %v1468
      %v2727 = vpop.f32.mrf.mxu0
      %v2728 = vadd.f32 %v825, %v2727
      %v2729 = vpop.f32.mrf.mxu0
      %2730 = vmatprep.mubr.f32.mxu0 0.0
      %2731 = vmatmul.mubr.f32.gmra.mxu0 %v1471
      %v2732 = vpop.f32.mrf.mxu0
      %v2733 = vadd.f32 %v825, %v2732
      %v2734 = vpop.f32.mrf.mxu0
      %2735 = vmatprep.mubr.f32.mxu0 0.0
      %2736 = vmatmul.mubr.f32.gmra.mxu0 %v1474
      %v2737 = vpop.f32.mrf.mxu0
      %v2738 = vadd.f32 %v825, %v2737
      %v2739 = vpop.f32.mrf.mxu0
      %2740 = vmatprep.mubr.f32.mxu0 0.0
      %2741 = vmatmul.mubr.f32.gmra.mxu0 %v1477
      %v2742 = vpop.f32.mrf.mxu0
      %v2743 = vadd.f32 %v825, %v2742
      %v2744 = vpop.f32.mrf.mxu0
      %2745 = vmatprep.mubr.f32.mxu0 0.0
      %2746 = vmatmul.mubr.f32.gmra.mxu0 %v1480
      %v2747 = vpop.f32.mrf.mxu0
      %v2748 = vadd.f32 %v825, %v2747
      %v2749 = vpop.f32.mrf.mxu0
      %2750 = vmatprep.mubr.f32.mxu0 0.0
      %2751 = vmatmul.mubr.f32.gmra.mxu0 %v1483
      %v2752 = vpop.f32.mrf.mxu0
      %v2753 = vadd.f32 %v825, %v2752
      %v2754 = vpop.f32.mrf.mxu0
      %2755 = vmatprep.mubr.f32.mxu0 0.0
      %2756 = vmatmul.mubr.f32.gmra.mxu0 %v1486
      %v2757 = vpop.f32.mrf.mxu0
      %v2758 = vadd.f32 %v825, %v2757
      %v2759 = vpop.f32.mrf.mxu0
      %2760 = vmatprep.mubr.f32.mxu0 0.0
      %2761 = vmatmul.mubr.f32.gmra.mxu0 %v1489
      %v2762 = vpop.f32.mrf.mxu0
      %v2763 = vadd.f32 %v825, %v2762
      %v2764 = vpop.f32.mrf.mxu0
      %2765 = vmatprep.mubr.f32.mxu0 0.0
      %2766 = vmatmul.mubr.f32.gmra.mxu0 %v1492
      %v2767 = vpop.f32.mrf.mxu0
      %v2768 = vadd.f32 %v825, %v2767
      %v2769 = vpop.f32.mrf.mxu0
      %2770 = vmatprep.mubr.f32.mxu0 0.0
      %2771 = vmatmul.mubr.f32.gmra.mxu0 %v1495
      %v2772 = vpop.f32.mrf.mxu0
      %v2773 = vadd.f32 %v825, %v2772
      %v2774 = vpop.f32.mrf.mxu0
      %2775 = vmatprep.mubr.f32.mxu0 0.0
      %2776 = vmatmul.mubr.f32.gmra.mxu0 %v1498
      %v2777 = vpop.f32.mrf.mxu0
      %v2778 = vadd.f32 %v825, %v2777
      %v2779 = vpop.f32.mrf.mxu0
      %2780 = vmatprep.mubr.f32.mxu0 0.0
      %2781 = vmatmul.mubr.f32.gmra.mxu0 %v1501
      %v2782 = vpop.f32.mrf.mxu0
      %v2783 = vadd.f32 %v825, %v2782
      %v2784 = vpop.f32.mrf.mxu0
      %2785 = vmatprep.mubr.f32.mxu0 0.0
      %2786 = vmatmul.mubr.f32.gmra.mxu0 %v1504
      %v2787 = vpop.f32.mrf.mxu0
      %v2788 = vadd.f32 %v825, %v2787
      %v2789 = vpop.f32.mrf.mxu0
      %2790 = vmatprep.mubr.f32.mxu0 0.0
      %2791 = vmatmul.mubr.f32.gmra.mxu0 %v1507
      %v2792 = vpop.f32.mrf.mxu0
      %v2793 = vadd.f32 %v825, %v2792
      %v2794 = vpop.f32.mrf.mxu0
      %2795 = vmatprep.mubr.f32.mxu0 0.0
      %2796 = vmatmul.mubr.f32.gmra.mxu0 %v1510
      %v2797 = vpop.f32.mrf.mxu0
      %v2798 = vadd.f32 %v825, %v2797
      %v2799 = vpop.f32.mrf.mxu0
      %2800 = vmatprep.mubr.f32.mxu0 0.0
      %2801 = vmatmul.mubr.f32.gmra.mxu0 %v1513
      %v2802 = vpop.f32.mrf.mxu0
      %v2803 = vadd.f32 %v825, %v2802
      %v2804 = vpop.f32.mrf.mxu0
      %2805 = vmatprep.mubr.f32.mxu0 0.0
      %2806 = vmatmul.mubr.f32.gmra.mxu0 %v1516
      %v2807 = vpop.f32.mrf.mxu0
      %v2808 = vadd.f32 %v825, %v2807
      %v2809 = vpop.f32.mrf.mxu0
      %2810 = vmatprep.mubr.f32.mxu0 0.0
      %2811 = vmatmul.mubr.f32.gmra.mxu0 %v1519
      %v2812 = vpop.f32.mrf.mxu0
      %v2813 = vadd.f32 %v825, %v2812
      %v2814 = vpop.f32.mrf.mxu0
      %2815 = vmatprep.mubr.f32.mxu0 0.0
      %2816 = vmatmul.mubr.f32.gmra.mxu0 %v1522
      %v2817 = vpop.f32.mrf.mxu0
      %v2818 = vadd.f32 %v825, %v2817
      %v2819 = vpop.f32.mrf.mxu0
      %2820 = vmatprep.mubr.f32.mxu0 0.0
      %2821 = vmatmul.mubr.f32.gmra.mxu0 %v1525
      %v2822 = vpop.f32.mrf.mxu0
      %v2823 = vadd.f32 %v825, %v2822
      %v2824 = vpop.f32.mrf.mxu0
      %2825 = vmatprep.mubr.f32.mxu0 0.0
      %2826 = vmatmul.mubr.f32.gmra.mxu0 %v1528
      %v2827 = vpop.f32.mrf.mxu0
      %v2828 = vadd.f32 %v825, %v2827
      %v2829 = vpop.f32.mrf.mxu0
      %2830 = vmatprep.mubr.f32.mxu0 0.0
      %2831 = vmatmul.mubr.f32.gmra.mxu0 %v1531
      %v2832 = vpop.f32.mrf.mxu0
      %v2833 = vadd.f32 %v825, %v2832
      %v2834 = vpop.f32.mrf.mxu0
      %2835 = vmatprep.mubr.f32.mxu0 0.0
      %2836 = vmatmul.mubr.f32.gmra.mxu0 %v1534
      %v2837 = vpop.f32.mrf.mxu0
      %v2838 = vadd.f32 %v825, %v2837
      %v2839 = vpop.f32.mrf.mxu0
      %2840 = vmatprep.mubr.f32.mxu0 0.0
      %2841 = vmatmul.mubr.f32.gmra.mxu0 %v1537
      %v2842 = vpop.f32.mrf.mxu0
      %v2843 = vadd.f32 %v825, %v2842
      %v2844 = vpop.f32.mrf.mxu0
      %2845 = vmatprep.mubr.f32.mxu0 0.0
      %2846 = vmatmul.mubr.f32.gmra.mxu0 %v1540
      %v2847 = vpop.f32.mrf.mxu0
      %v2848 = vadd.f32 %v825, %v2847
      %v2849 = vpop.f32.mrf.mxu0
      %2850 = vmatprep.mubr.f32.mxu0 0.0
      %2851 = vmatmul.mubr.f32.gmra.mxu0 %v1543
      %v2852 = vpop.f32.mrf.mxu0
      %v2853 = vadd.f32 %v825, %v2852
      %v2854 = vpop.f32.mrf.mxu0
      %2855 = vmatprep.mubr.f32.mxu0 0.0
      %2856 = vmatmul.mubr.f32.gmra.mxu0 %v1546
      %v2857 = vpop.f32.mrf.mxu0
      %v2858 = vadd.f32 %v825, %v2857
      %v2859 = vpop.f32.mrf.mxu0
      %2860 = vmatprep.mubr.f32.mxu0 0.0
      %2861 = vmatmul.mubr.f32.gmra.mxu0 %v1549
      %v2862 = vpop.f32.mrf.mxu0
      %v2863 = vadd.f32 %v825, %v2862
      %v2864 = vpop.f32.mrf.mxu0
      %2865 = vmatprep.mubr.f32.mxu0 0.0
      %2866 = vmatmul.mubr.f32.gmra.mxu0 %v1552
      %v2867 = vpop.f32.mrf.mxu0
      %v2868 = vadd.f32 %v825, %v2867
      %v2869 = vpop.f32.mrf.mxu0
      %2870 = vmatprep.mubr.f32.mxu0 0.0
      %2871 = vmatmul.mubr.f32.gmra.mxu0 %v1555
      %v2872 = vpop.f32.mrf.mxu0
      %v2873 = vadd.f32 %v825, %v2872
      %v2874 = vpop.f32.mrf.mxu0
      %2875 = vmatprep.mubr.f32.mxu0 0.0
      %2876 = vmatmul.mubr.f32.gmra.mxu0 %v1558
      %v2877 = vpop.f32.mrf.mxu0
      %v2878 = vadd.f32 %v825, %v2877
      %v2879 = vpop.f32.mrf.mxu0
      %2880 = vmatprep.mubr.f32.mxu0 0.0
      %2881 = vmatmul.mubr.f32.gmra.mxu0 %v1561
      %v2882 = vpop.f32.mrf.mxu0
      %v2883 = vadd.f32 %v825, %v2882
      %v2884 = vpop.f32.mrf.mxu0
      %2885 = vmatprep.mubr.f32.mxu0 0.0
      %2886 = vmatmul.mubr.f32.gmra.mxu0 %v1564
      %v2887 = vpop.f32.mrf.mxu0
      %v2888 = vadd.f32 %v825, %v2887
      %v2889 = vpop.f32.mrf.mxu0
      %2890 = vmatprep.mubr.f32.mxu0 0.0
      %2891 = vmatmul.mubr.f32.gmra.mxu0 %v1567
      %v2892 = vpop.f32.mrf.mxu0
      %v2893 = vadd.f32 %v825, %v2892
      %v2894 = vpop.f32.mrf.mxu0
      %2895 = vmatprep.mubr.f32.mxu0 0.0
      %2896 = vmatmul.mubr.f32.gmra.mxu0 %v1570
      %v2897 = vpop.f32.mrf.mxu0
      %v2898 = vadd.f32 %v825, %v2897
      %v2899 = vpop.f32.mrf.mxu0
      %2900 = vmatprep.mubr.f32.mxu0 0.0
      %2901 = vmatmul.mubr.f32.gmra.mxu0 %v1573
      %v2902 = vpop.f32.mrf.mxu0
      %v2903 = vadd.f32 %v825, %v2902
      %v2904 = vpop.f32.mrf.mxu0
      %2905 = vmatprep.mubr.f32.mxu0 0.0
      %2906 = vmatmul.mubr.f32.gmra.mxu0 %v1576
      %v2907 = vpop.f32.mrf.mxu0
      %v2908 = vadd.f32 %v825, %v2907
      %v2909 = vpop.f32.mrf.mxu0
      %2910 = vmatprep.mubr.f32.mxu0 0.0
      %2911 = vmatmul.mubr.f32.gmra.mxu0 %v1579
      %v2912 = vpop.f32.mrf.mxu0
      %v2913 = vadd.f32 %v825, %v2912
      %v2914 = vpop.f32.mrf.mxu0
      %2915 = vmatprep.mubr.f32.mxu0 0.0
      %2916 = vmatmul.mubr.f32.gmra.mxu0 %v1582
      %v2917 = vpop.f32.mrf.mxu0
      %v2918 = vadd.f32 %v825, %v2917
      %v2919 = vpop.f32.mrf.mxu0
      %2920 = vmatprep.mubr.f32.mxu0 0.0
      %2921 = vmatmul.mubr.f32.gmra.mxu0 %v1585
      %v2922 = vpop.f32.mrf.mxu0
      %v2923 = vadd.f32 %v825, %v2922
      %v2924 = vpop.f32.mrf.mxu0
      %2925 = vmatprep.mubr.f32.mxu0 0.0
      %2926 = vmatmul.mubr.f32.gmra.mxu0 %v1588
      %v2927 = vpop.f32.mrf.mxu0
      %v2928 = vadd.f32 %v825, %v2927
      %v2929 = vpop.f32.mrf.mxu0
      %2930 = vmatprep.mubr.f32.mxu0 0.0
      %2931 = vmatmul.mubr.f32.gmra.mxu0 %v1591
      %v2932 = vpop.f32.mrf.mxu0
      %v2933 = vadd.f32 %v825, %v2932
      %v2934 = vpop.f32.mrf.mxu0
      %2935 = vmatprep.mubr.f32.mxu0 0.0
      %2936 = vmatmul.mubr.f32.gmra.mxu0 %v1594
      %v2937 = vpop.f32.mrf.mxu0
      %v2938 = vadd.f32 %v825, %v2937
      %v2939 = vpop.f32.mrf.mxu0
      %2940 = vdwg.mxu0
      %v2941 = vtanh.pop %v1663
      %v2942 = vtanh.pop %v1668
      %v2943 = vtanh.pop %v1673
      %v2944 = vtanh.pop %v1678
      %v2945 = vtanh.pop %v1683
      %v2946 = vtanh.pop %v1688
      %v2947 = vtanh.pop %v1693
      %v2948 = vtanh.pop %v1698
      %v2949 = vtanh.pop %v1703
      %v2950 = vtanh.pop %v1708
      %v2951 = vtanh.pop %v1713
      %v2952 = vtanh.pop %v1718
      %v2953 = vtanh.pop %v1723
      %v2954 = vtanh.pop %v1728
      %v2955 = vtanh.pop %v1733
      %v2956 = vtanh.pop %v1738
      %v2957 = vtanh.pop %v1743
      %v2958 = vtanh.pop %v1748
      %v2959 = vtanh.pop %v1753
      %v2960 = vtanh.pop %v1758
      %v2961 = vtanh.pop %v1763
      %v2962 = vtanh.pop %v1768
      %v2963 = vtanh.pop %v1773
      %v2964 = vtanh.pop %v1778
      %v2965 = vtanh.pop %v1783
      %v2966 = vtanh.pop %v1788
      %v2967 = vtanh.pop %v1793
      %v2968 = vtanh.pop %v1798
      %v2969 = vtanh.pop %v1803
      %v2970 = vtanh.pop %v1808
      %v2971 = vtanh.pop %v1813
      %v2972 = vtanh.pop %v1818
      %v2973 = vtanh.pop %v1823
      %v2974 = vtanh.pop %v1828
      %v2975 = vtanh.pop %v1833
      %v2976 = vtanh.pop %v1838
      %v2977 = vtanh.pop %v1843
      %v2978 = vtanh.pop %v1848
      %v2979 = vtanh.pop %v1853
      %v2980 = vtanh.pop %v1858
      %v2981 = vtanh.pop %v1863
      %v2982 = vtanh.pop %v1868
      %v2983 = vtanh.pop %v1873
      %v2984 = vtanh.pop %v1878
      %v2985 = vtanh.pop %v1883
      %v2986 = vtanh.pop %v1888
      %v2987 = vtanh.pop %v1893
      %v2988 = vtanh.pop %v1898
      %v2989 = vtanh.pop %v1903
      %v2990 = vtanh.pop %v1908
      %v2991 = vtanh.pop %v1913
      %v2992 = vtanh.pop %v1918
      %v2993 = vtanh.pop %v1923
      %v2994 = vtanh.pop %v1928
      %v2995 = vtanh.pop %v1933
      %v2996 = vtanh.pop %v1938
      %v2997 = vtanh.pop %v1943
      %v2998 = vtanh.pop %v1948
      %v2999 = vtanh.pop %v1953
      %v3000 = vtanh.pop %v1958
      %v3001 = vtanh.pop %v1963
      %v3002 = vtanh.pop %v1968
      %v3003 = vtanh.pop %v1973
      %v3004 = vtanh.pop %v1978
      %v3005 = vtanh.pop %v1983
      %v3006 = vtanh.pop %v1988
      %v3007 = vtanh.pop %v1993
      %v3008 = vtanh.pop %v1998
      %v3009 = vtanh.pop %v2003
      %v3010 = vtanh.pop %v2008
      %v3011 = vtanh.pop %v2013
      %v3012 = vtanh.pop %v2018
      %v3013 = vtanh.pop %v2023
      %v3014 = vtanh.pop %v2028
      %v3015 = vtanh.pop %v2033
      %v3016 = vtanh.pop %v2038
      %v3017 = vtanh.pop %v2043
      %v3018 = vtanh.pop %v2048
      %v3019 = vtanh.pop %v2053
      %v3020 = vtanh.pop %v2058
      %v3021 = vtanh.pop %v2063
      %v3022 = vtanh.pop %v2068
      %v3023 = vtanh.pop %v2073
      %v3024 = vtanh.pop %v2078
      %v3025 = vtanh.pop %v2083
      %v3026 = vtanh.pop %v2088
      %v3027 = vtanh.pop %v2093
      %v3028 = vtanh.pop %v2098
      %v3029 = vtanh.pop %v2103
      %v3030 = vtanh.pop %v2108
      %v3031 = vtanh.pop %v2113
      %v3032 = vtanh.pop %v2118
      %v3033 = vtanh.pop %v2123
      %v3034 = vtanh.pop %v2128
      %v3035 = vtanh.pop %v2133
      %v3036 = vtanh.pop %v2138
      %v3037 = vtanh.pop %v2143
      %v3038 = vtanh.pop %v2148
      %v3039 = vtanh.pop %v2153
      %v3040 = vtanh.pop %v2158
      %v3041 = vtanh.pop %v2163
      %v3042 = vtanh.pop %v2168
      %v3043 = vtanh.pop %v2173
      %v3044 = vtanh.pop %v2178
      %v3045 = vtanh.pop %v2183
      %v3046 = vtanh.pop %v2188
      %v3047 = vtanh.pop %v2193
      %v3048 = vtanh.pop %v2198
      %v3049 = vtanh.pop %v2203
      %v3050 = vtanh.pop %v2208
      %v3051 = vtanh.pop %v2213
      %v3052 = vtanh.pop %v2218
      %v3053 = vtanh.pop %v2223
      %v3054 = vtanh.pop %v2228
      %v3055 = vtanh.pop %v2233
      %v3056 = vtanh.pop %v2238
      %v3057 = vtanh.pop %v2243
      %v3058 = vtanh.pop %v2248
      %v3059 = vtanh.pop %v2253
      %v3060 = vtanh.pop %v2258
      %v3061 = vtanh.pop %v2263
      %v3062 = vtanh.pop %v2268
      %v3063 = vtanh.pop %v2273
      %v3064 = vtanh.pop %v2278
      %v3065 = vtanh.pop %v2283
      %v3066 = vtanh.pop %v2288
      %v3067 = vtanh.pop %v2293
      %v3068 = vtanh.pop %v2298
      %v3069 = vtanh.pop %v2303
      %v3070 = vtanh.pop %v2308
      %v3071 = vtanh.pop %v2313
      %v3072 = vtanh.pop %v2318
      %v3073 = vtanh.pop %v2323
      %v3074 = vtanh.pop %v2328
      %v3075 = vtanh.pop %v2333
      %v3076 = vtanh.pop %v2338
      %v3077 = vtanh.pop %v2343
      %v3078 = vtanh.pop %v2348
      %v3079 = vtanh.pop %v2353
      %v3080 = vtanh.pop %v2358
      %v3081 = vtanh.pop %v2363
      %v3082 = vtanh.pop %v2368
      %v3083 = vtanh.pop %v2373
      %v3084 = vtanh.pop %v2378
      %v3085 = vtanh.pop %v2383
      %v3086 = vtanh.pop %v2388
      %v3087 = vtanh.pop %v2393
      %v3088 = vtanh.pop %v2398
      %v3089 = vtanh.pop %v2403
      %v3090 = vtanh.pop %v2408
      %v3091 = vtanh.pop %v2413
      %v3092 = vtanh.pop %v2418
      %v3093 = vtanh.pop %v2423
      %v3094 = vtanh.pop %v2428
      %v3095 = vtanh.pop %v2433
      %v3096 = vtanh.pop %v2438
      %v3097 = vtanh.pop %v2443
      %v3098 = vtanh.pop %v2448
      %v3099 = vtanh.pop %v2453
      %v3100 = vtanh.pop %v2458
      %v3101 = vtanh.pop %v2463
      %v3102 = vtanh.pop %v2468
      %v3103 = vtanh.pop %v2473
      %v3104 = vtanh.pop %v2478
      %v3105 = vtanh.pop %v2483
      %v3106 = vtanh.pop %v2488
      %v3107 = vtanh.pop %v2493
      %v3108 = vtanh.pop %v2498
      %v3109 = vtanh.pop %v2503
      %v3110 = vtanh.pop %v2508
      %v3111 = vtanh.pop %v2513
      %v3112 = vtanh.pop %v2518
      %v3113 = vtanh.pop %v2523
      %v3114 = vtanh.pop %v2528
      %v3115 = vtanh.pop %v2533
      %v3116 = vtanh.pop %v2538
      %v3117 = vtanh.pop %v2543
      %v3118 = vtanh.pop %v2548
      %v3119 = vtanh.pop %v2553
      %v3120 = vtanh.pop %v2558
      %v3121 = vtanh.pop %v2563
      %v3122 = vtanh.pop %v2568
      %v3123 = vtanh.pop %v2573
      %v3124 = vtanh.pop %v2578
      %v3125 = vtanh.pop %v2583
      %v3126 = vtanh.pop %v2588
      %v3127 = vtanh.pop %v2593
      %v3128 = vtanh.pop %v2598
      %v3129 = vtanh.pop %v2603
      %v3130 = vtanh.pop %v2608
      %v3131 = vtanh.pop %v2613
      %v3132 = vtanh.pop %v2618
      %v3133 = vtanh.pop %v2623
      %v3134 = vtanh.pop %v2628
      %v3135 = vtanh.pop %v2633
      %v3136 = vtanh.pop %v2638
      %v3137 = vtanh.pop %v2643
      %v3138 = vtanh.pop %v2648
      %v3139 = vtanh.pop %v2653
      %v3140 = vtanh.pop %v2658
      %v3141 = vtanh.pop %v2663
      %v3142 = vtanh.pop %v2668
      %v3143 = vtanh.pop %v2673
      %v3144 = vtanh.pop %v2678
      %v3145 = vtanh.pop %v2683
      %v3146 = vtanh.pop %v2688
      %v3147 = vtanh.pop %v2693
      %v3148 = vtanh.pop %v2698
      %v3149 = vtanh.pop %v2703
      %v3150 = vtanh.pop %v2708
      %v3151 = vtanh.pop %v2713
      %v3152 = vtanh.pop %v2718
      %v3153 = vtanh.pop %v2723
      %v3154 = vtanh.pop %v2728
      %v3155 = vtanh.pop %v2733
      %v3156 = vtanh.pop %v2738
      %v3157 = vtanh.pop %v2743
      %v3158 = vtanh.pop %v2748
      %v3159 = vtanh.pop %v2753
      %v3160 = vtanh.pop %v2758
      %v3161 = vtanh.pop %v2763
      %v3162 = vtanh.pop %v2768
      %v3163 = vtanh.pop %v2773
      %v3164 = vtanh.pop %v2778
      %v3165 = vtanh.pop %v2783
      %v3166 = vtanh.pop %v2788
      %v3167 = vtanh.pop %v2793
      %v3168 = vtanh.pop %v2798
      %v3169 = vtanh.pop %v2803
      %v3170 = vtanh.pop %v2808
      %v3171 = vtanh.pop %v2813
      %v3172 = vtanh.pop %v2818
      %v3173 = vtanh.pop %v2823
      %v3174 = vtanh.pop %v2828
      %v3175 = vtanh.pop %v2833
      %v3176 = vtanh.pop %v2838
      %v3177 = vtanh.pop %v2843
      %v3178 = vtanh.pop %v2848
      %v3179 = vtanh.pop %v2853
      %v3180 = vtanh.pop %v2858
      %v3181 = vtanh.pop %v2863
      %v3182 = vtanh.pop %v2868
      %v3183 = vtanh.pop %v2873
      %v3184 = vtanh.pop %v2878
      %v3185 = vtanh.pop %v2883
      %v3186 = vtanh.pop %v2888
      %v3187 = vtanh.pop %v2893
      %v3188 = vtanh.pop %v2898
      %v3189 = vtanh.pop %v2903
      %v3190 = vtanh.pop %v2908
      %v3191 = vtanh.pop %v2913
      %v3192 = vtanh.pop %v2918
      %v3193 = vtanh.pop %v2923
      %v3194 = vtanh.pop %v2928
      %v3195 = vtanh.pop %v2933
      %v3196 = vtanh.pop %v2938
      %v3197 = vld [vmem:[%s3] sm:$0xff]
      %v3198 = vld [vmem:[%s3 + $0x8] sm:$0xff]
      %v3199 = vld [vmem:[%s3 + $0x10] sm:$0xff]
      %v3200 = vld [vmem:[%s3 + $0x18] sm:$0xff]
      %v3201 = vld [vmem:[%s3 + $0x20] sm:$0xff]
      %v3202 = vld [vmem:[%s3 + $0x28] sm:$0xff]
      %vm3203 = vcmask 392192
      %v3205 = vsel %vm3203, %v2941, 0
      %v3208 = vsel %vm3203, %v2942, 0
      %v3211 = vsel %vm3203, %v2943, 0
      %v3214 = vsel %vm3203, %v2944, 0
      %v3217 = vsel %vm3203, %v2945, 0
      %v3220 = vsel %vm3203, %v2946, 0
      %v3223 = vsel %vm3203, %v2947, 0
      %v3226 = vsel %vm3203, %v2948, 0
      %v3229 = vsel %vm3203, %v2949, 0
      %v3232 = vsel %vm3203, %v2950, 0
      %v3235 = vsel %vm3203, %v2951, 0
      %v3238 = vsel %vm3203, %v2952, 0
      %v3241 = vsel %vm3203, %v2953, 0
      %v3244 = vsel %vm3203, %v2954, 0
      %v3247 = vsel %vm3203, %v2955, 0
      %v3250 = vsel %vm3203, %v2956, 0
      %v3253 = vsel %vm3203, %v2957, 0
      %v3256 = vsel %vm3203, %v2958, 0
      %v3259 = vsel %vm3203, %v2959, 0
      %v3262 = vsel %vm3203, %v2960, 0
      %v3265 = vsel %vm3203, %v2961, 0
      %v3268 = vsel %vm3203, %v2962, 0
      %v3271 = vsel %vm3203, %v2963, 0
      %v3274 = vsel %vm3203, %v2964, 0
      %v3277 = vsel %vm3203, %v2965, 0
      %v3280 = vsel %vm3203, %v2966, 0
      %v3283 = vsel %vm3203, %v2967, 0
      %v3286 = vsel %vm3203, %v2968, 0
      %v3289 = vsel %vm3203, %v2969, 0
      %v3292 = vsel %vm3203, %v2970, 0
      %v3295 = vsel %vm3203, %v2971, 0
      %v3298 = vsel %vm3203, %v2972, 0
      %v3301 = vsel %vm3203, %v2973, 0
      %v3304 = vsel %vm3203, %v2974, 0
      %v3307 = vsel %vm3203, %v2975, 0
      %v3310 = vsel %vm3203, %v2976, 0
      %v3313 = vsel %vm3203, %v2977, 0
      %v3316 = vsel %vm3203, %v2978, 0
      %v3319 = vsel %vm3203, %v2979, 0
      %v3322 = vsel %vm3203, %v2980, 0
      %v3325 = vsel %vm3203, %v2981, 0
      %v3328 = vsel %vm3203, %v2982, 0
      %v3331 = vsel %vm3203, %v2983, 0
      %v3334 = vsel %vm3203, %v2984, 0
      %v3337 = vsel %vm3203, %v2985, 0
      %v3340 = vsel %vm3203, %v2986, 0
      %v3343 = vsel %vm3203, %v2987, 0
      %v3346 = vsel %vm3203, %v2988, 0
      %v3349 = vsel %vm3203, %v2989, 0
      %v3352 = vsel %vm3203, %v2990, 0
      %v3355 = vsel %vm3203, %v2991, 0
      %v3358 = vsel %vm3203, %v2992, 0
      %v3361 = vsel %vm3203, %v2993, 0
      %v3364 = vsel %vm3203, %v2994, 0
      %v3367 = vsel %vm3203, %v2995, 0
      %v3370 = vsel %vm3203, %v2996, 0
      %v3373 = vsel %vm3203, %v2997, 0
      %v3376 = vsel %vm3203, %v2998, 0
      %v3379 = vsel %vm3203, %v2999, 0
      %v3382 = vsel %vm3203, %v3000, 0
      %v3385 = vsel %vm3203, %v3001, 0
      %v3388 = vsel %vm3203, %v3002, 0
      %v3391 = vsel %vm3203, %v3003, 0
      %v3394 = vsel %vm3203, %v3004, 0
      %v3397 = vsel %vm3203, %v3005, 0
      %v3400 = vsel %vm3203, %v3006, 0
      %v3403 = vsel %vm3203, %v3007, 0
      %v3406 = vsel %vm3203, %v3008, 0
      %v3409 = vsel %vm3203, %v3009, 0
      %v3412 = vsel %vm3203, %v3010, 0
      %v3415 = vsel %vm3203, %v3011, 0
      %v3418 = vsel %vm3203, %v3012, 0
      %v3421 = vsel %vm3203, %v3013, 0
      %v3424 = vsel %vm3203, %v3014, 0
      %v3427 = vsel %vm3203, %v3015, 0
      %v3430 = vsel %vm3203, %v3016, 0
      %v3433 = vsel %vm3203, %v3017, 0
      %v3436 = vsel %vm3203, %v3018, 0
      %v3439 = vsel %vm3203, %v3019, 0
      %v3442 = vsel %vm3203, %v3020, 0
      %v3445 = vsel %vm3203, %v3021, 0
      %v3448 = vsel %vm3203, %v3022, 0
      %v3451 = vsel %vm3203, %v3023, 0
      %v3454 = vsel %vm3203, %v3024, 0
      %v3457 = vsel %vm3203, %v3025, 0
      %v3460 = vsel %vm3203, %v3026, 0
      %v3463 = vsel %vm3203, %v3027, 0
      %v3466 = vsel %vm3203, %v3028, 0
      %v3469 = vsel %vm3203, %v3029, 0
      %v3472 = vsel %vm3203, %v3030, 0
      %v3475 = vsel %vm3203, %v3031, 0
      %v3478 = vsel %vm3203, %v3032, 0
      %v3481 = vsel %vm3203, %v3033, 0
      %v3484 = vsel %vm3203, %v3034, 0
      %v3487 = vsel %vm3203, %v3035, 0
      %v3490 = vsel %vm3203, %v3036, 0
      %v3493 = vsel %vm3203, %v3037, 0
      %v3496 = vsel %vm3203, %v3038, 0
      %v3499 = vsel %vm3203, %v3039, 0
      %v3502 = vsel %vm3203, %v3040, 0
      %v3505 = vsel %vm3203, %v3041, 0
      %v3508 = vsel %vm3203, %v3042, 0
      %v3511 = vsel %vm3203, %v3043, 0
      %v3514 = vsel %vm3203, %v3044, 0
      %v3517 = vsel %vm3203, %v3045, 0
      %v3520 = vsel %vm3203, %v3046, 0
      %v3523 = vsel %vm3203, %v3047, 0
      %v3526 = vsel %vm3203, %v3048, 0
      %v3529 = vsel %vm3203, %v3049, 0
      %v3532 = vsel %vm3203, %v3050, 0
      %v3535 = vsel %vm3203, %v3051, 0
      %v3538 = vsel %vm3203, %v3052, 0
      %v3541 = vsel %vm3203, %v3053, 0
      %v3544 = vsel %vm3203, %v3054, 0
      %v3547 = vsel %vm3203, %v3055, 0
      %v3550 = vsel %vm3203, %v3056, 0
      %v3553 = vsel %vm3203, %v3057, 0
      %v3556 = vsel %vm3203, %v3058, 0
      %v3559 = vsel %vm3203, %v3059, 0
      %v3562 = vsel %vm3203, %v3060, 0
      %v3565 = vsel %vm3203, %v3061, 0
      %v3568 = vsel %vm3203, %v3062, 0
      %v3571 = vsel %vm3203, %v3063, 0
      %v3574 = vsel %vm3203, %v3064, 0
      %v3577 = vsel %vm3203, %v3065, 0
      %v3580 = vsel %vm3203, %v3066, 0
      %v3583 = vsel %vm3203, %v3067, 0
      %v3586 = vsel %vm3203, %v3068, 0
      %v3589 = vsel %vm3203, %v3069, 0
      %v3592 = vsel %vm3203, %v3070, 0
      %v3595 = vsel %vm3203, %v3071, 0
      %v3598 = vsel %vm3203, %v3072, 0
      %v3601 = vsel %vm3203, %v3073, 0
      %v3604 = vsel %vm3203, %v3074, 0
      %v3607 = vsel %vm3203, %v3075, 0
      %v3610 = vsel %vm3203, %v3076, 0
      %v3613 = vsel %vm3203, %v3077, 0
      %v3616 = vsel %vm3203, %v3078, 0
      %v3619 = vsel %vm3203, %v3079, 0
      %v3622 = vsel %vm3203, %v3080, 0
      %v3625 = vsel %vm3203, %v3081, 0
      %v3628 = vsel %vm3203, %v3082, 0
      %v3631 = vsel %vm3203, %v3083, 0
      %v3634 = vsel %vm3203, %v3084, 0
      %v3637 = vsel %vm3203, %v3085, 0
      %v3640 = vsel %vm3203, %v3086, 0
      %v3643 = vsel %vm3203, %v3087, 0
      %v3646 = vsel %vm3203, %v3088, 0
      %v3649 = vsel %vm3203, %v3089, 0
      %v3652 = vsel %vm3203, %v3090, 0
      %v3655 = vsel %vm3203, %v3091, 0
      %v3658 = vsel %vm3203, %v3092, 0
      %v3661 = vsel %vm3203, %v3093, 0
      %v3664 = vsel %vm3203, %v3094, 0
      %v3667 = vsel %vm3203, %v3095, 0
      %v3670 = vsel %vm3203, %v3096, 0
      %v3673 = vsel %vm3203, %v3097, 0
      %v3676 = vsel %vm3203, %v3098, 0
      %v3679 = vsel %vm3203, %v3099, 0
      %v3682 = vsel %vm3203, %v3100, 0
      %v3685 = vsel %vm3203, %v3101, 0
      %v3688 = vsel %vm3203, %v3102, 0
      %v3691 = vsel %vm3203, %v3103, 0
      %v3694 = vsel %vm3203, %v3104, 0
      %v3697 = vsel %vm3203, %v3105, 0
      %v3700 = vsel %vm3203, %v3106, 0
      %v3703 = vsel %vm3203, %v3107, 0
      %v3706 = vsel %vm3203, %v3108, 0
      %v3709 = vsel %vm3203, %v3109, 0
      %v3712 = vsel %vm3203, %v3110, 0
      %v3715 = vsel %vm3203, %v3111, 0
      %v3718 = vsel %vm3203, %v3112, 0
      %v3721 = vsel %vm3203, %v3113, 0
      %v3724 = vsel %vm3203, %v3114, 0
      %v3727 = vsel %vm3203, %v3115, 0
      %v3730 = vsel %vm3203, %v3116, 0
      %v3733 = vsel %vm3203, %v3117, 0
      %v3736 = vsel %vm3203, %v3118, 0
      %v3739 = vsel %vm3203, %v3119, 0
      %v3742 = vsel %vm3203, %v3120, 0
      %v3745 = vsel %vm3203, %v3121, 0
      %v3748 = vsel %vm3203, %v3122, 0
      %v3751 = vsel %vm3203, %v3123, 0
      %v3754 = vsel %vm3203, %v3124, 0
      %v3757 = vsel %vm3203, %v3125, 0
      %v3760 = vsel %vm3203, %v3126, 0
      %v3763 = vsel %vm3203, %v3127, 0
      %v3766 = vsel %vm3203, %v3128, 0
      %v3769 = vsel %vm3203, %v3129, 0
      %v3772 = vsel %vm3203, %v3130, 0
      %v3775 = vsel %vm3203, %v3131, 0
      %v3778 = vsel %vm3203, %v3132, 0
      %v3781 = vsel %vm3203, %v3133, 0
      %v3784 = vsel %vm3203, %v3134, 0
      %v3787 = vsel %vm3203, %v3135, 0
      %v3790 = vsel %vm3203, %v3136, 0
      %v3793 = vsel %vm3203, %v3137, 0
      %v3796 = vsel %vm3203, %v3138, 0
      %v3799 = vsel %vm3203, %v3139, 0
      %v3802 = vsel %vm3203, %v3140, 0
      %v3805 = vsel %vm3203, %v3141, 0
      %v3808 = vsel %vm3203, %v3142, 0
      %v3811 = vsel %vm3203, %v3143, 0
      %v3814 = vsel %vm3203, %v3144, 0
      %v3817 = vsel %vm3203, %v3145, 0
      %v3820 = vsel %vm3203, %v3146, 0
      %v3823 = vsel %vm3203, %v3147, 0
      %v3826 = vsel %vm3203, %v3148, 0
      %v3829 = vsel %vm3203, %v3149, 0
      %v3832 = vsel %vm3203, %v3150, 0
      %v3835 = vsel %vm3203, %v3151, 0
      %v3838 = vsel %vm3203, %v3152, 0
      %v3841 = vsel %vm3203, %v3153, 0
      %v3844 = vsel %vm3203, %v3154, 0
      %v3847 = vsel %vm3203, %v3155, 0
      %v3850 = vsel %vm3203, %v3156, 0
      %v3853 = vsel %vm3203, %v3157, 0
      %v3856 = vsel %vm3203, %v3158, 0
      %v3859 = vsel %vm3203, %v3159, 0
      %v3862 = vsel %vm3203, %v3160, 0
      %v3865 = vsel %vm3203, %v3161, 0
      %v3868 = vsel %vm3203, %v3162, 0
      %v3871 = vsel %vm3203, %v3163, 0
      %v3874 = vsel %vm3203, %v3164, 0
      %v3877 = vsel %vm3203, %v3165, 0
      %v3880 = vsel %vm3203, %v3166, 0
      %v3883 = vsel %vm3203, %v3167, 0
      %v3886 = vsel %vm3203, %v3168, 0
      %v3889 = vsel %vm3203, %v3169, 0
      %v3892 = vsel %vm3203, %v3170, 0
      %v3895 = vsel %vm3203, %v3171, 0
      %v3898 = vsel %vm3203, %v3172, 0
      %v3901 = vsel %vm3203, %v3173, 0
      %v3904 = vsel %vm3203, %v3174, 0
      %v3907 = vsel %vm3203, %v3175, 0
      %v3910 = vsel %vm3203, %v3176, 0
      %v3913 = vsel %vm3203, %v3177, 0
      %v3916 = vsel %vm3203, %v3178, 0
      %v3919 = vsel %vm3203, %v3179, 0
      %v3922 = vsel %vm3203, %v3180, 0
      %v3925 = vsel %vm3203, %v3181, 0
      %v3928 = vsel %vm3203, %v3182, 0
      %v3931 = vsel %vm3203, %v3183, 0
      %v3934 = vsel %vm3203, %v3184, 0
      %v3937 = vsel %vm3203, %v3185, 0
      %v3940 = vsel %vm3203, %v3186, 0
      %v3943 = vsel %vm3203, %v3187, 0
      %v3946 = vsel %vm3203, %v3188, 0
      %v3949 = vsel %vm3203, %v3189, 0
      %v3952 = vsel %vm3203, %v3190, 0
      %v3955 = vsel %vm3203, %v3191, 0
      %v3958 = vsel %vm3203, %v3192, 0
      %v3961 = vsel %vm3203, %v3193, 0
      %v3964 = vsel %vm3203, %v3194, 0
      %v3967 = vsel %vm3203, %v3195, 0
      %v3970 = vsel %vm3203, %v3196, 0
      %3972 = vmatprep.subr.mxu0 0.0
      %3973 = vmatpush1.msra.mxu0 0.0
      %3974 = vmatprep.subr.mxu0 0.0
      %3975 = vmatpush1.msra.mxu0 0.0
      %3976 = vmatprep.subr.mxu0 0.0
      %3977 = vmatpush1.msra.mxu0 0.0
      %3978 = vmatprep.subr.mxu0 0.0
      %3979 = vmatpush1.msra.mxu0 0.0
      %3980 = vmatprep.subr.mxu0 0.0
      %3981 = vmatpush1.msra.mxu0 0.0
      %3982 = vmatprep.subr.mxu0 0.0
      %3983 = vmatpush1.msra.mxu0 0.0
      %3984 = vmatprep.subr.mxu0 0.0
      %3985 = vmatpush1.msra.mxu0 0.0
      %3986 = vmatprep.subr.mxu0 0.0
      %3987 = vmatpush1.msra.mxu0 0.0
      %3988 = vmatprep.subr.mxu0 0.0
      %3989 = vmatpush1.msra.mxu0 0.0
      %3990 = vmatprep.subr.mxu0 0.0
      %3991 = vmatpush1.msra.mxu0 0.0
      %3992 = vmatprep.subr.mxu0 0.0
      %3993 = vmatpush1.msra.mxu0 %v3202
      %3994 = vmatprep.subr.mxu0 0.0
      %3995 = vmatpush1.msra.mxu0 %v3201
      %3996 = vmatprep.subr.mxu0 0.0
      %3997 = vmatpush1.msra.mxu0 %v3200
      %3998 = vmatprep.subr.mxu0 0.0
      %3999 = vmatpush1.msra.mxu0 %v3199
      %4000 = vmatprep.subr.mxu0 0.0
      %4001 = vmatpush1.msra.mxu0 %v3198
      %4002 = vmatprep.subr.mxu0 0.0
      %4003 = vmatpush1.msra.mxu0 %v3197
      %4004 = vmatprep.subr.mxu0 0.0
      %4005 = vmatpush2.msra.mxu0 0.0
      %4006 = vmatprep.subr.mxu0 0.0
      %4007 = vmatpush2.msra.mxu0 0.0
      %4008 = vmatprep.subr.mxu0 0.0
      %4009 = vmatpush2.msra.mxu0 0.0
      %4010 = vmatprep.subr.mxu0 0.0
      %4011 = vmatpush2.msra.mxu0 0.0
      %4012 = vmatprep.subr.mxu0 0.0
      %4013 = vmatpush2.msra.mxu0 0.0
      %4014 = vmatprep.subr.mxu0 0.0
      %4015 = vmatpush2.msra.mxu0 0.0
      %4016 = vmatprep.subr.mxu0 0.0
      %4017 = vmatpush2.msra.mxu0 0.0
      %4018 = vmatprep.subr.mxu0 0.0
      %4019 = vmatpush2.msra.mxu0 0.0
      %4020 = vmatprep.subr.mxu0 0.0
      %4021 = vmatpush2.msra.mxu0 0.0
      %4022 = vmatprep.subr.mxu0 0.0
      %4023 = vmatpush2.msra.mxu0 0.0
      %4024 = vmatprep.subr.mxu0 0.0
      %4025 = vmatpush2.msra.mxu0 0.0
      %4026 = vmatprep.subr.mxu0 0.0
      %4027 = vmatpush2.msra.mxu0 0.0
      %4028 = vmatprep.subr.mxu0 0.0
      %4029 = vmatpush2.msra.mxu0 0.0
      %4030 = vmatprep.subr.mxu0 0.0
      %4031 = vmatpush2.msra.mxu0 0.0
      %4032 = vmatprep.subr.mxu0 0.0
      %4033 = vmatpush2.msra.mxu0 0.0
      %4034 = vmatprep.subr.mxu0 0.0
      %4035 = vmatpush2.msra.mxu0 0.0
      %4036 = vmatprep.mubr.f32.mxu0 0.0
      %4037 = vmatmul.mubr.f32.gmra.mxu0 %v3205
      %v4038 = vpop.f32.mrf.mxu0
      %v4039 = vadd.f32 0.0, %v4038
      %v4040 = vpop.f32.mrf.mxu0
      %4041 = vmatprep.mubr.f32.mxu0 0.0
      %4042 = vmatmul.mubr.f32.gmra.mxu0 %v3208
      %v4043 = vpop.f32.mrf.mxu0
      %v4044 = vadd.f32 0.0, %v4043
      %v4045 = vpop.f32.mrf.mxu0
      %4046 = vmatprep.mubr.f32.mxu0 0.0
      %4047 = vmatmul.mubr.f32.gmra.mxu0 %v3211
      %v4048 = vpop.f32.mrf.mxu0
      %v4049 = vadd.f32 0.0, %v4048
      %v4050 = vpop.f32.mrf.mxu0
      %4051 = vmatprep.mubr.f32.mxu0 0.0
      %4052 = vmatmul.mubr.f32.gmra.mxu0 %v3214
      %v4053 = vpop.f32.mrf.mxu0
      %v4054 = vadd.f32 0.0, %v4053
      %v4055 = vpop.f32.mrf.mxu0
      %4056 = vmatprep.mubr.f32.mxu0 0.0
      %4057 = vmatmul.mubr.f32.gmra.mxu0 %v3217
      %v4058 = vpop.f32.mrf.mxu0
      %v4059 = vadd.f32 0.0, %v4058
      %v4060 = vpop.f32.mrf.mxu0
      %4061 = vmatprep.mubr.f32.mxu0 0.0
      %4062 = vmatmul.mubr.f32.gmra.mxu0 %v3220
      %v4063 = vpop.f32.mrf.mxu0
      %v4064 = vadd.f32 0.0, %v4063
      %v4065 = vpop.f32.mrf.mxu0
      %4066 = vmatprep.mubr.f32.mxu0 0.0
      %4067 = vmatmul.mubr.f32.gmra.mxu0 %v3223
      %v4068 = vpop.f32.mrf.mxu0
      %v4069 = vadd.f32 0.0, %v4068
      %v4070 = vpop.f32.mrf.mxu0
      %4071 = vmatprep.mubr.f32.mxu0 0.0
      %4072 = vmatmul.mubr.f32.gmra.mxu0 %v3226
      %v4073 = vpop.f32.mrf.mxu0
      %v4074 = vadd.f32 0.0, %v4073
      %v4075 = vpop.f32.mrf.mxu0
      %4076 = vmatprep.mubr.f32.mxu0 0.0
      %4077 = vmatmul.mubr.f32.gmra.mxu0 %v3229
      %v4078 = vpop.f32.mrf.mxu0
      %v4079 = vadd.f32 0.0, %v4078
      %v4080 = vpop.f32.mrf.mxu0
      %4081 = vmatprep.mubr.f32.mxu0 0.0
      %4082 = vmatmul.mubr.f32.gmra.mxu0 %v3232
      %v4083 = vpop.f32.mrf.mxu0
      %v4084 = vadd.f32 0.0, %v4083
      %v4085 = vpop.f32.mrf.mxu0
      %4086 = vmatprep.mubr.f32.mxu0 0.0
      %4087 = vmatmul.mubr.f32.gmra.mxu0 %v3235
      %v4088 = vpop.f32.mrf.mxu0
      %v4089 = vadd.f32 0.0, %v4088
      %v4090 = vpop.f32.mrf.mxu0
      %4091 = vmatprep.mubr.f32.mxu0 0.0
      %4092 = vmatmul.mubr.f32.gmra.mxu0 %v3238
      %v4093 = vpop.f32.mrf.mxu0
      %v4094 = vadd.f32 0.0, %v4093
      %v4095 = vpop.f32.mrf.mxu0
      %4096 = vmatprep.mubr.f32.mxu0 0.0
      %4097 = vmatmul.mubr.f32.gmra.mxu0 %v3241
      %v4098 = vpop.f32.mrf.mxu0
      %v4099 = vadd.f32 0.0, %v4098
      %v4100 = vpop.f32.mrf.mxu0
      %4101 = vmatprep.mubr.f32.mxu0 0.0
      %4102 = vmatmul.mubr.f32.gmra.mxu0 %v3244
      %v4103 = vpop.f32.mrf.mxu0
      %v4104 = vadd.f32 0.0, %v4103
      %v4105 = vpop.f32.mrf.mxu0
      %4106 = vmatprep.mubr.f32.mxu0 0.0
      %4107 = vmatmul.mubr.f32.gmra.mxu0 %v3247
      %v4108 = vpop.f32.mrf.mxu0
      %v4109 = vadd.f32 0.0, %v4108
      %v4110 = vpop.f32.mrf.mxu0
      %4111 = vmatprep.mubr.f32.mxu0 0.0
      %4112 = vmatmul.mubr.f32.gmra.mxu0 %v3250
      %v4113 = vpop.f32.mrf.mxu0
      %v4114 = vadd.f32 0.0, %v4113
      %v4115 = vpop.f32.mrf.mxu0
      %4116 = vmatprep.mubr.f32.mxu0 0.0
      %4117 = vmatmul.mubr.f32.gmra.mxu0 %v3253
      %v4118 = vpop.f32.mrf.mxu0
      %v4119 = vadd.f32 0.0, %v4118
      %v4120 = vpop.f32.mrf.mxu0
      %4121 = vmatprep.mubr.f32.mxu0 0.0
      %4122 = vmatmul.mubr.f32.gmra.mxu0 %v3256
      %v4123 = vpop.f32.mrf.mxu0
      %v4124 = vadd.f32 0.0, %v4123
      %v4125 = vpop.f32.mrf.mxu0
      %4126 = vmatprep.mubr.f32.mxu0 0.0
      %4127 = vmatmul.mubr.f32.gmra.mxu0 %v3259
      %v4128 = vpop.f32.mrf.mxu0
      %v4129 = vadd.f32 0.0, %v4128
      %v4130 = vpop.f32.mrf.mxu0
      %4131 = vmatprep.mubr.f32.mxu0 0.0
      %4132 = vmatmul.mubr.f32.gmra.mxu0 %v3262
      %v4133 = vpop.f32.mrf.mxu0
      %v4134 = vadd.f32 0.0, %v4133
      %v4135 = vpop.f32.mrf.mxu0
      %4136 = vmatprep.mubr.f32.mxu0 0.0
      %4137 = vmatmul.mubr.f32.gmra.mxu0 %v3265
      %v4138 = vpop.f32.mrf.mxu0
      %v4139 = vadd.f32 0.0, %v4138
      %v4140 = vpop.f32.mrf.mxu0
      %4141 = vmatprep.mubr.f32.mxu0 0.0
      %4142 = vmatmul.mubr.f32.gmra.mxu0 %v3268
      %v4143 = vpop.f32.mrf.mxu0
      %v4144 = vadd.f32 0.0, %v4143
      %v4145 = vpop.f32.mrf.mxu0
      %4146 = vmatprep.mubr.f32.mxu0 0.0
      %4147 = vmatmul.mubr.f32.gmra.mxu0 %v3271
      %v4148 = vpop.f32.mrf.mxu0
      %v4149 = vadd.f32 0.0, %v4148
      %v4150 = vpop.f32.mrf.mxu0
      %4151 = vmatprep.mubr.f32.mxu0 0.0
      %4152 = vmatmul.mubr.f32.gmra.mxu0 %v3274
      %v4153 = vpop.f32.mrf.mxu0
      %v4154 = vadd.f32 0.0, %v4153
      %v4155 = vpop.f32.mrf.mxu0
      %4156 = vmatprep.mubr.f32.mxu0 0.0
      %4157 = vmatmul.mubr.f32.gmra.mxu0 %v3277
      %v4158 = vpop.f32.mrf.mxu0
      %v4159 = vadd.f32 0.0, %v4158
      %v4160 = vpop.f32.mrf.mxu0
      %4161 = vmatprep.mubr.f32.mxu0 0.0
      %4162 = vmatmul.mubr.f32.gmra.mxu0 %v3280
      %v4163 = vpop.f32.mrf.mxu0
      %v4164 = vadd.f32 0.0, %v4163
      %v4165 = vpop.f32.mrf.mxu0
      %4166 = vmatprep.mubr.f32.mxu0 0.0
      %4167 = vmatmul.mubr.f32.gmra.mxu0 %v3283
      %v4168 = vpop.f32.mrf.mxu0
      %v4169 = vadd.f32 0.0, %v4168
      %v4170 = vpop.f32.mrf.mxu0
      %4171 = vmatprep.mubr.f32.mxu0 0.0
      %4172 = vmatmul.mubr.f32.gmra.mxu0 %v3286
      %v4173 = vpop.f32.mrf.mxu0
      %v4174 = vadd.f32 0.0, %v4173
      %v4175 = vpop.f32.mrf.mxu0
      %4176 = vmatprep.mubr.f32.mxu0 0.0
      %4177 = vmatmul.mubr.f32.gmra.mxu0 %v3289
      %v4178 = vpop.f32.mrf.mxu0
      %v4179 = vadd.f32 0.0, %v4178
      %v4180 = vpop.f32.mrf.mxu0
      %4181 = vmatprep.mubr.f32.mxu0 0.0
      %4182 = vmatmul.mubr.f32.gmra.mxu0 %v3292
      %v4183 = vpop.f32.mrf.mxu0
      %v4184 = vadd.f32 0.0, %v4183
      %v4185 = vpop.f32.mrf.mxu0
      %4186 = vmatprep.mubr.f32.mxu0 0.0
      %4187 = vmatmul.mubr.f32.gmra.mxu0 %v3295
      %v4188 = vpop.f32.mrf.mxu0
      %v4189 = vadd.f32 0.0, %v4188
      %v4190 = vpop.f32.mrf.mxu0
      %4191 = vmatprep.mubr.f32.mxu0 0.0
      %4192 = vmatmul.mubr.f32.gmra.mxu0 %v3298
      %v4193 = vpop.f32.mrf.mxu0
      %v4194 = vadd.f32 0.0, %v4193
      %v4195 = vpop.f32.mrf.mxu0
      %4196 = vmatprep.mubr.f32.mxu0 0.0
      %4197 = vmatmul.mubr.f32.gmra.mxu0 %v3301
      %v4198 = vpop.f32.mrf.mxu0
      %v4199 = vadd.f32 0.0, %v4198
      %v4200 = vpop.f32.mrf.mxu0
      %4201 = vmatprep.mubr.f32.mxu0 0.0
      %4202 = vmatmul.mubr.f32.gmra.mxu0 %v3304
      %v4203 = vpop.f32.mrf.mxu0
      %v4204 = vadd.f32 0.0, %v4203
      %v4205 = vpop.f32.mrf.mxu0
      %4206 = vmatprep.mubr.f32.mxu0 0.0
      %4207 = vmatmul.mubr.f32.gmra.mxu0 %v3307
      %v4208 = vpop.f32.mrf.mxu0
      %v4209 = vadd.f32 0.0, %v4208
      %v4210 = vpop.f32.mrf.mxu0
      %4211 = vmatprep.mubr.f32.mxu0 0.0
      %4212 = vmatmul.mubr.f32.gmra.mxu0 %v3310
      %v4213 = vpop.f32.mrf.mxu0
      %v4214 = vadd.f32 0.0, %v4213
      %v4215 = vpop.f32.mrf.mxu0
      %4216 = vmatprep.mubr.f32.mxu0 0.0
      %4217 = vmatmul.mubr.f32.gmra.mxu0 %v3313
      %v4218 = vpop.f32.mrf.mxu0
      %v4219 = vadd.f32 0.0, %v4218
      %v4220 = vpop.f32.mrf.mxu0
      %4221 = vmatprep.mubr.f32.mxu0 0.0
      %4222 = vmatmul.mubr.f32.gmra.mxu0 %v3316
      %v4223 = vpop.f32.mrf.mxu0
      %v4224 = vadd.f32 0.0, %v4223
      %v4225 = vpop.f32.mrf.mxu0
      %4226 = vmatprep.mubr.f32.mxu0 0.0
      %4227 = vmatmul.mubr.f32.gmra.mxu0 %v3319
      %v4228 = vpop.f32.mrf.mxu0
      %v4229 = vadd.f32 0.0, %v4228
      %v4230 = vpop.f32.mrf.mxu0
      %4231 = vmatprep.mubr.f32.mxu0 0.0
      %4232 = vmatmul.mubr.f32.gmra.mxu0 %v3322
      %v4233 = vpop.f32.mrf.mxu0
      %v4234 = vadd.f32 0.0, %v4233
      %v4235 = vpop.f32.mrf.mxu0
      %4236 = vmatprep.mubr.f32.mxu0 0.0
      %4237 = vmatmul.mubr.f32.gmra.mxu0 %v3325
      %v4238 = vpop.f32.mrf.mxu0
      %v4239 = vadd.f32 0.0, %v4238
      %v4240 = vpop.f32.mrf.mxu0
      %4241 = vmatprep.mubr.f32.mxu0 0.0
      %4242 = vmatmul.mubr.f32.gmra.mxu0 %v3328
      %v4243 = vpop.f32.mrf.mxu0
      %v4244 = vadd.f32 0.0, %v4243
      %v4245 = vpop.f32.mrf.mxu0
      %4246 = vmatprep.mubr.f32.mxu0 0.0
      %4247 = vmatmul.mubr.f32.gmra.mxu0 %v3331
      %v4248 = vpop.f32.mrf.mxu0
      %v4249 = vadd.f32 0.0, %v4248
      %v4250 = vpop.f32.mrf.mxu0
      %4251 = vmatprep.mubr.f32.mxu0 0.0
      %4252 = vmatmul.mubr.f32.gmra.mxu0 %v3334
      %v4253 = vpop.f32.mrf.mxu0
      %v4254 = vadd.f32 0.0, %v4253
      %v4255 = vpop.f32.mrf.mxu0
      %4256 = vmatprep.mubr.f32.mxu0 0.0
      %4257 = vmatmul.mubr.f32.gmra.mxu0 %v3337
      %v4258 = vpop.f32.mrf.mxu0
      %v4259 = vadd.f32 0.0, %v4258
      %v4260 = vpop.f32.mrf.mxu0
      %4261 = vmatprep.mubr.f32.mxu0 0.0
      %4262 = vmatmul.mubr.f32.gmra.mxu0 %v3340
      %v4263 = vpop.f32.mrf.mxu0
      %v4264 = vadd.f32 0.0, %v4263
      %v4265 = vpop.f32.mrf.mxu0
      %4266 = vmatprep.mubr.f32.mxu0 0.0
      %4267 = vmatmul.mubr.f32.gmra.mxu0 %v3343
      %v4268 = vpop.f32.mrf.mxu0
      %v4269 = vadd.f32 0.0, %v4268
      %v4270 = vpop.f32.mrf.mxu0
      %4271 = vmatprep.mubr.f32.mxu0 0.0
      %4272 = vmatmul.mubr.f32.gmra.mxu0 %v3346
      %v4273 = vpop.f32.mrf.mxu0
      %v4274 = vadd.f32 0.0, %v4273
      %v4275 = vpop.f32.mrf.mxu0
      %4276 = vmatprep.mubr.f32.mxu0 0.0
      %4277 = vmatmul.mubr.f32.gmra.mxu0 %v3349
      %v4278 = vpop.f32.mrf.mxu0
      %v4279 = vadd.f32 0.0, %v4278
      %v4280 = vpop.f32.mrf.mxu0
      %4281 = vmatprep.mubr.f32.mxu0 0.0
      %4282 = vmatmul.mubr.f32.gmra.mxu0 %v3352
      %v4283 = vpop.f32.mrf.mxu0
      %v4284 = vadd.f32 0.0, %v4283
      %v4285 = vpop.f32.mrf.mxu0
      %4286 = vmatprep.mubr.f32.mxu0 0.0
      %4287 = vmatmul.mubr.f32.gmra.mxu0 %v3355
      %v4288 = vpop.f32.mrf.mxu0
      %v4289 = vadd.f32 0.0, %v4288
      %v4290 = vpop.f32.mrf.mxu0
      %4291 = vmatprep.mubr.f32.mxu0 0.0
      %4292 = vmatmul.mubr.f32.gmra.mxu0 %v3358
      %v4293 = vpop.f32.mrf.mxu0
      %v4294 = vadd.f32 0.0, %v4293
      %v4295 = vpop.f32.mrf.mxu0
      %4296 = vmatprep.mubr.f32.mxu0 0.0
      %4297 = vmatmul.mubr.f32.gmra.mxu0 %v3361
      %v4298 = vpop.f32.mrf.mxu0
      %v4299 = vadd.f32 0.0, %v4298
      %v4300 = vpop.f32.mrf.mxu0
      %4301 = vmatprep.mubr.f32.mxu0 0.0
      %4302 = vmatmul.mubr.f32.gmra.mxu0 %v3364
      %v4303 = vpop.f32.mrf.mxu0
      %v4304 = vadd.f32 0.0, %v4303
      %v4305 = vpop.f32.mrf.mxu0
      %4306 = vmatprep.mubr.f32.mxu0 0.0
      %4307 = vmatmul.mubr.f32.gmra.mxu0 %v3367
      %v4308 = vpop.f32.mrf.mxu0
      %v4309 = vadd.f32 0.0, %v4308
      %v4310 = vpop.f32.mrf.mxu0
      %4311 = vmatprep.mubr.f32.mxu0 0.0
      %4312 = vmatmul.mubr.f32.gmra.mxu0 %v3370
      %v4313 = vpop.f32.mrf.mxu0
      %v4314 = vadd.f32 0.0, %v4313
      %v4315 = vpop.f32.mrf.mxu0
      %4316 = vmatprep.mubr.f32.mxu0 0.0
      %4317 = vmatmul.mubr.f32.gmra.mxu0 %v3373
      %v4318 = vpop.f32.mrf.mxu0
      %v4319 = vadd.f32 0.0, %v4318
      %v4320 = vpop.f32.mrf.mxu0
      %4321 = vmatprep.mubr.f32.mxu0 0.0
      %4322 = vmatmul.mubr.f32.gmra.mxu0 %v3376
      %v4323 = vpop.f32.mrf.mxu0
      %v4324 = vadd.f32 0.0, %v4323
      %v4325 = vpop.f32.mrf.mxu0
      %4326 = vmatprep.mubr.f32.mxu0 0.0
      %4327 = vmatmul.mubr.f32.gmra.mxu0 %v3379
      %v4328 = vpop.f32.mrf.mxu0
      %v4329 = vadd.f32 0.0, %v4328
      %v4330 = vpop.f32.mrf.mxu0
      %4331 = vmatprep.mubr.f32.mxu0 0.0
      %4332 = vmatmul.mubr.f32.gmra.mxu0 %v3382
      %v4333 = vpop.f32.mrf.mxu0
      %v4334 = vadd.f32 0.0, %v4333
      %v4335 = vpop.f32.mrf.mxu0
      %4336 = vmatprep.mubr.f32.mxu0 0.0
      %4337 = vmatmul.mubr.f32.gmra.mxu0 %v3385
      %v4338 = vpop.f32.mrf.mxu0
      %v4339 = vadd.f32 0.0, %v4338
      %v4340 = vpop.f32.mrf.mxu0
      %4341 = vmatprep.mubr.f32.mxu0 0.0
      %4342 = vmatmul.mubr.f32.gmra.mxu0 %v3388
      %v4343 = vpop.f32.mrf.mxu0
      %v4344 = vadd.f32 0.0, %v4343
      %v4345 = vpop.f32.mrf.mxu0
      %4346 = vmatprep.mubr.f32.mxu0 0.0
      %4347 = vmatmul.mubr.f32.gmra.mxu0 %v3391
      %v4348 = vpop.f32.mrf.mxu0
      %v4349 = vadd.f32 0.0, %v4348
      %v4350 = vpop.f32.mrf.mxu0
      %4351 = vmatprep.mubr.f32.mxu0 0.0
      %4352 = vmatmul.mubr.f32.gmra.mxu0 %v3394
      %v4353 = vpop.f32.mrf.mxu0
      %v4354 = vadd.f32 0.0, %v4353
      %v4355 = vpop.f32.mrf.mxu0
      %4356 = vmatprep.mubr.f32.mxu0 0.0
      %4357 = vmatmul.mubr.f32.gmra.mxu0 %v3397
      %v4358 = vpop.f32.mrf.mxu0
      %v4359 = vadd.f32 0.0, %v4358
      %v4360 = vpop.f32.mrf.mxu0
      %4361 = vmatprep.mubr.f32.mxu0 0.0
      %4362 = vmatmul.mubr.f32.gmra.mxu0 %v3400
      %v4363 = vpop.f32.mrf.mxu0
      %v4364 = vadd.f32 0.0, %v4363
      %v4365 = vpop.f32.mrf.mxu0
      %4366 = vmatprep.mubr.f32.mxu0 0.0
      %4367 = vmatmul.mubr.f32.gmra.mxu0 %v3403
      %v4368 = vpop.f32.mrf.mxu0
      %v4369 = vadd.f32 0.0, %v4368
      %v4370 = vpop.f32.mrf.mxu0
      %4371 = vmatprep.mubr.f32.mxu0 0.0
      %4372 = vmatmul.mubr.f32.gmra.mxu0 %v3406
      %v4373 = vpop.f32.mrf.mxu0
      %v4374 = vadd.f32 0.0, %v4373
      %v4375 = vpop.f32.mrf.mxu0
      %4376 = vmatprep.mubr.f32.mxu0 0.0
      %4377 = vmatmul.mubr.f32.gmra.mxu0 %v3409
      %v4378 = vpop.f32.mrf.mxu0
      %v4379 = vadd.f32 0.0, %v4378
      %v4380 = vpop.f32.mrf.mxu0
      %4381 = vmatprep.mubr.f32.mxu0 0.0
      %4382 = vmatmul.mubr.f32.gmra.mxu0 %v3412
      %v4383 = vpop.f32.mrf.mxu0
      %v4384 = vadd.f32 0.0, %v4383
      %v4385 = vpop.f32.mrf.mxu0
      %4386 = vmatprep.mubr.f32.mxu0 0.0
      %4387 = vmatmul.mubr.f32.gmra.mxu0 %v3415
      %v4388 = vpop.f32.mrf.mxu0
      %v4389 = vadd.f32 0.0, %v4388
      %v4390 = vpop.f32.mrf.mxu0
      %4391 = vmatprep.mubr.f32.mxu0 0.0
      %4392 = vmatmul.mubr.f32.gmra.mxu0 %v3418
      %v4393 = vpop.f32.mrf.mxu0
      %v4394 = vadd.f32 0.0, %v4393
      %v4395 = vpop.f32.mrf.mxu0
      %4396 = vmatprep.mubr.f32.mxu0 0.0
      %4397 = vmatmul.mubr.f32.gmra.mxu0 %v3421
      %v4398 = vpop.f32.mrf.mxu0
      %v4399 = vadd.f32 0.0, %v4398
      %v4400 = vpop.f32.mrf.mxu0
      %4401 = vmatprep.mubr.f32.mxu0 0.0
      %4402 = vmatmul.mubr.f32.gmra.mxu0 %v3424
      %v4403 = vpop.f32.mrf.mxu0
      %v4404 = vadd.f32 0.0, %v4403
      %v4405 = vpop.f32.mrf.mxu0
      %4406 = vmatprep.mubr.f32.mxu0 0.0
      %4407 = vmatmul.mubr.f32.gmra.mxu0 %v3427
      %v4408 = vpop.f32.mrf.mxu0
      %v4409 = vadd.f32 0.0, %v4408
      %v4410 = vpop.f32.mrf.mxu0
      %4411 = vmatprep.mubr.f32.mxu0 0.0
      %4412 = vmatmul.mubr.f32.gmra.mxu0 %v3430
      %v4413 = vpop.f32.mrf.mxu0
      %v4414 = vadd.f32 0.0, %v4413
      %v4415 = vpop.f32.mrf.mxu0
      %4416 = vmatprep.mubr.f32.mxu0 0.0
      %4417 = vmatmul.mubr.f32.gmra.mxu0 %v3433
      %v4418 = vpop.f32.mrf.mxu0
      %v4419 = vadd.f32 0.0, %v4418
      %v4420 = vpop.f32.mrf.mxu0
      %4421 = vmatprep.mubr.f32.mxu0 0.0
      %4422 = vmatmul.mubr.f32.gmra.mxu0 %v3436
      %v4423 = vpop.f32.mrf.mxu0
      %v4424 = vadd.f32 0.0, %v4423
      %v4425 = vpop.f32.mrf.mxu0
      %4426 = vmatprep.mubr.f32.mxu0 0.0
      %4427 = vmatmul.mubr.f32.gmra.mxu0 %v3439
      %v4428 = vpop.f32.mrf.mxu0
      %v4429 = vadd.f32 0.0, %v4428
      %v4430 = vpop.f32.mrf.mxu0
      %4431 = vmatprep.mubr.f32.mxu0 0.0
      %4432 = vmatmul.mubr.f32.gmra.mxu0 %v3442
      %v4433 = vpop.f32.mrf.mxu0
      %v4434 = vadd.f32 0.0, %v4433
      %v4435 = vpop.f32.mrf.mxu0
      %4436 = vmatprep.mubr.f32.mxu0 0.0
      %4437 = vmatmul.mubr.f32.gmra.mxu0 %v3445
      %v4438 = vpop.f32.mrf.mxu0
      %v4439 = vadd.f32 0.0, %v4438
      %v4440 = vpop.f32.mrf.mxu0
      %4441 = vmatprep.mubr.f32.mxu0 0.0
      %4442 = vmatmul.mubr.f32.gmra.mxu0 %v3448
      %v4443 = vpop.f32.mrf.mxu0
      %v4444 = vadd.f32 0.0, %v4443
      %v4445 = vpop.f32.mrf.mxu0
      %4446 = vmatprep.mubr.f32.mxu0 0.0
      %4447 = vmatmul.mubr.f32.gmra.mxu0 %v3451
      %v4448 = vpop.f32.mrf.mxu0
      %v4449 = vadd.f32 0.0, %v4448
      %v4450 = vpop.f32.mrf.mxu0
      %4451 = vmatprep.mubr.f32.mxu0 0.0
      %4452 = vmatmul.mubr.f32.gmra.mxu0 %v3454
      %v4453 = vpop.f32.mrf.mxu0
      %v4454 = vadd.f32 0.0, %v4453
      %v4455 = vpop.f32.mrf.mxu0
      %4456 = vmatprep.mubr.f32.mxu0 0.0
      %4457 = vmatmul.mubr.f32.gmra.mxu0 %v3457
      %v4458 = vpop.f32.mrf.mxu0
      %v4459 = vadd.f32 0.0, %v4458
      %v4460 = vpop.f32.mrf.mxu0
      %4461 = vmatprep.mubr.f32.mxu0 0.0
      %4462 = vmatmul.mubr.f32.gmra.mxu0 %v3460
      %v4463 = vpop.f32.mrf.mxu0
      %v4464 = vadd.f32 0.0, %v4463
      %v4465 = vpop.f32.mrf.mxu0
      %4466 = vmatprep.mubr.f32.mxu0 0.0
      %4467 = vmatmul.mubr.f32.gmra.mxu0 %v3463
      %v4468 = vpop.f32.mrf.mxu0
      %v4469 = vadd.f32 0.0, %v4468
      %v4470 = vpop.f32.mrf.mxu0
      %4471 = vmatprep.mubr.f32.mxu0 0.0
      %4472 = vmatmul.mubr.f32.gmra.mxu0 %v3466
      %v4473 = vpop.f32.mrf.mxu0
      %v4474 = vadd.f32 0.0, %v4473
      %v4475 = vpop.f32.mrf.mxu0
      %4476 = vmatprep.mubr.f32.mxu0 0.0
      %4477 = vmatmul.mubr.f32.gmra.mxu0 %v3469
      %v4478 = vpop.f32.mrf.mxu0
      %v4479 = vadd.f32 0.0, %v4478
      %v4480 = vpop.f32.mrf.mxu0
      %4481 = vmatprep.mubr.f32.mxu0 0.0
      %4482 = vmatmul.mubr.f32.gmra.mxu0 %v3472
      %v4483 = vpop.f32.mrf.mxu0
      %v4484 = vadd.f32 0.0, %v4483
      %v4485 = vpop.f32.mrf.mxu0
      %4486 = vmatprep.mubr.f32.mxu0 0.0
      %4487 = vmatmul.mubr.f32.gmra.mxu0 %v3475
      %v4488 = vpop.f32.mrf.mxu0
      %v4489 = vadd.f32 0.0, %v4488
      %v4490 = vpop.f32.mrf.mxu0
      %4491 = vmatprep.mubr.f32.mxu0 0.0
      %4492 = vmatmul.mubr.f32.gmra.mxu0 %v3478
      %v4493 = vpop.f32.mrf.mxu0
      %v4494 = vadd.f32 0.0, %v4493
      %v4495 = vpop.f32.mrf.mxu0
      %4496 = vmatprep.mubr.f32.mxu0 0.0
      %4497 = vmatmul.mubr.f32.gmra.mxu0 %v3481
      %v4498 = vpop.f32.mrf.mxu0
      %v4499 = vadd.f32 0.0, %v4498
      %v4500 = vpop.f32.mrf.mxu0
      %4501 = vmatprep.mubr.f32.mxu0 0.0
      %4502 = vmatmul.mubr.f32.gmra.mxu0 %v3484
      %v4503 = vpop.f32.mrf.mxu0
      %v4504 = vadd.f32 0.0, %v4503
      %v4505 = vpop.f32.mrf.mxu0
      %4506 = vmatprep.mubr.f32.mxu0 0.0
      %4507 = vmatmul.mubr.f32.gmra.mxu0 %v3487
      %v4508 = vpop.f32.mrf.mxu0
      %v4509 = vadd.f32 0.0, %v4508
      %v4510 = vpop.f32.mrf.mxu0
      %4511 = vmatprep.mubr.f32.mxu0 0.0
      %4512 = vmatmul.mubr.f32.gmra.mxu0 %v3490
      %v4513 = vpop.f32.mrf.mxu0
      %v4514 = vadd.f32 0.0, %v4513
      %v4515 = vpop.f32.mrf.mxu0
      %4516 = vmatprep.mubr.f32.mxu0 0.0
      %4517 = vmatmul.mubr.f32.gmra.mxu0 %v3493
      %v4518 = vpop.f32.mrf.mxu0
      %v4519 = vadd.f32 0.0, %v4518
      %v4520 = vpop.f32.mrf.mxu0
      %4521 = vmatprep.mubr.f32.mxu0 0.0
      %4522 = vmatmul.mubr.f32.gmra.mxu0 %v3496
      %v4523 = vpop.f32.mrf.mxu0
      %v4524 = vadd.f32 0.0, %v4523
      %v4525 = vpop.f32.mrf.mxu0
      %4526 = vmatprep.mubr.f32.mxu0 0.0
      %4527 = vmatmul.mubr.f32.gmra.mxu0 %v3499
      %v4528 = vpop.f32.mrf.mxu0
      %v4529 = vadd.f32 0.0, %v4528
      %v4530 = vpop.f32.mrf.mxu0
      %4531 = vmatprep.mubr.f32.mxu0 0.0
      %4532 = vmatmul.mubr.f32.gmra.mxu0 %v3502
      %v4533 = vpop.f32.mrf.mxu0
      %v4534 = vadd.f32 0.0, %v4533
      %v4535 = vpop.f32.mrf.mxu0
      %4536 = vmatprep.mubr.f32.mxu0 0.0
      %4537 = vmatmul.mubr.f32.gmra.mxu0 %v3505
      %v4538 = vpop.f32.mrf.mxu0
      %v4539 = vadd.f32 0.0, %v4538
      %v4540 = vpop.f32.mrf.mxu0
      %4541 = vmatprep.mubr.f32.mxu0 0.0
      %4542 = vmatmul.mubr.f32.gmra.mxu0 %v3508
      %v4543 = vpop.f32.mrf.mxu0
      %v4544 = vadd.f32 0.0, %v4543
      %v4545 = vpop.f32.mrf.mxu0
      %4546 = vmatprep.mubr.f32.mxu0 0.0
      %4547 = vmatmul.mubr.f32.gmra.mxu0 %v3511
      %v4548 = vpop.f32.mrf.mxu0
      %v4549 = vadd.f32 0.0, %v4548
      %v4550 = vpop.f32.mrf.mxu0
      %4551 = vmatprep.mubr.f32.mxu0 0.0
      %4552 = vmatmul.mubr.f32.gmra.mxu0 %v3514
      %v4553 = vpop.f32.mrf.mxu0
      %v4554 = vadd.f32 0.0, %v4553
      %v4555 = vpop.f32.mrf.mxu0
      %4556 = vmatprep.mubr.f32.mxu0 0.0
      %4557 = vmatmul.mubr.f32.gmra.mxu0 %v3517
      %v4558 = vpop.f32.mrf.mxu0
      %v4559 = vadd.f32 0.0, %v4558
      %v4560 = vpop.f32.mrf.mxu0
      %4561 = vmatprep.mubr.f32.mxu0 0.0
      %4562 = vmatmul.mubr.f32.gmra.mxu0 %v3520
      %v4563 = vpop.f32.mrf.mxu0
      %v4564 = vadd.f32 0.0, %v4563
      %v4565 = vpop.f32.mrf.mxu0
      %4566 = vmatprep.mubr.f32.mxu0 0.0
      %4567 = vmatmul.mubr.f32.gmra.mxu0 %v3523
      %v4568 = vpop.f32.mrf.mxu0
      %v4569 = vadd.f32 0.0, %v4568
      %v4570 = vpop.f32.mrf.mxu0
      %4571 = vmatprep.mubr.f32.mxu0 0.0
      %4572 = vmatmul.mubr.f32.gmra.mxu0 %v3526
      %v4573 = vpop.f32.mrf.mxu0
      %v4574 = vadd.f32 0.0, %v4573
      %v4575 = vpop.f32.mrf.mxu0
      %4576 = vmatprep.mubr.f32.mxu0 0.0
      %4577 = vmatmul.mubr.f32.gmra.mxu0 %v3529
      %v4578 = vpop.f32.mrf.mxu0
      %v4579 = vadd.f32 0.0, %v4578
      %v4580 = vpop.f32.mrf.mxu0
      %4581 = vmatprep.mubr.f32.mxu0 0.0
      %4582 = vmatmul.mubr.f32.gmra.mxu0 %v3532
      %v4583 = vpop.f32.mrf.mxu0
      %v4584 = vadd.f32 0.0, %v4583
      %v4585 = vpop.f32.mrf.mxu0
      %4586 = vmatprep.mubr.f32.mxu0 0.0
      %4587 = vmatmul.mubr.f32.gmra.mxu0 %v3535
      %v4588 = vpop.f32.mrf.mxu0
      %v4589 = vadd.f32 0.0, %v4588
      %v4590 = vpop.f32.mrf.mxu0
      %4591 = vmatprep.mubr.f32.mxu0 0.0
      %4592 = vmatmul.mubr.f32.gmra.mxu0 %v3538
      %v4593 = vpop.f32.mrf.mxu0
      %v4594 = vadd.f32 0.0, %v4593
      %v4595 = vpop.f32.mrf.mxu0
      %4596 = vmatprep.mubr.f32.mxu0 0.0
      %4597 = vmatmul.mubr.f32.gmra.mxu0 %v3541
      %v4598 = vpop.f32.mrf.mxu0
      %v4599 = vadd.f32 0.0, %v4598
      %v4600 = vpop.f32.mrf.mxu0
      %4601 = vmatprep.mubr.f32.mxu0 0.0
      %4602 = vmatmul.mubr.f32.gmra.mxu0 %v3544
      %v4603 = vpop.f32.mrf.mxu0
      %v4604 = vadd.f32 0.0, %v4603
      %v4605 = vpop.f32.mrf.mxu0
      %4606 = vmatprep.mubr.f32.mxu0 0.0
      %4607 = vmatmul.mubr.f32.gmra.mxu0 %v3547
      %v4608 = vpop.f32.mrf.mxu0
      %v4609 = vadd.f32 0.0, %v4608
      %v4610 = vpop.f32.mrf.mxu0
      %4611 = vmatprep.mubr.f32.mxu0 0.0
      %4612 = vmatmul.mubr.f32.gmra.mxu0 %v3550
      %v4613 = vpop.f32.mrf.mxu0
      %v4614 = vadd.f32 0.0, %v4613
      %v4615 = vpop.f32.mrf.mxu0
      %4616 = vmatprep.mubr.f32.mxu0 0.0
      %4617 = vmatmul.mubr.f32.gmra.mxu0 %v3553
      %v4618 = vpop.f32.mrf.mxu0
      %v4619 = vadd.f32 0.0, %v4618
      %v4620 = vpop.f32.mrf.mxu0
      %4621 = vmatprep.mubr.f32.mxu0 0.0
      %4622 = vmatmul.mubr.f32.gmra.mxu0 %v3556
      %v4623 = vpop.f32.mrf.mxu0
      %v4624 = vadd.f32 0.0, %v4623
      %v4625 = vpop.f32.mrf.mxu0
      %4626 = vmatprep.mubr.f32.mxu0 0.0
      %4627 = vmatmul.mubr.f32.gmra.mxu0 %v3559
      %v4628 = vpop.f32.mrf.mxu0
      %v4629 = vadd.f32 0.0, %v4628
      %v4630 = vpop.f32.mrf.mxu0
      %4631 = vmatprep.mubr.f32.mxu0 0.0
      %4632 = vmatmul.mubr.f32.gmra.mxu0 %v3562
      %v4633 = vpop.f32.mrf.mxu0
      %v4634 = vadd.f32 0.0, %v4633
      %v4635 = vpop.f32.mrf.mxu0
      %4636 = vmatprep.mubr.f32.mxu0 0.0
      %4637 = vmatmul.mubr.f32.gmra.mxu0 %v3565
      %v4638 = vpop.f32.mrf.mxu0
      %v4639 = vadd.f32 0.0, %v4638
      %v4640 = vpop.f32.mrf.mxu0
      %4641 = vmatprep.mubr.f32.mxu0 0.0
      %4642 = vmatmul.mubr.f32.gmra.mxu0 %v3568
      %v4643 = vpop.f32.mrf.mxu0
      %v4644 = vadd.f32 0.0, %v4643
      %v4645 = vpop.f32.mrf.mxu0
      %4646 = vmatprep.mubr.f32.mxu0 0.0
      %4647 = vmatmul.mubr.f32.gmra.mxu0 %v3571
      %v4648 = vpop.f32.mrf.mxu0
      %v4649 = vadd.f32 0.0, %v4648
      %v4650 = vpop.f32.mrf.mxu0
      %4651 = vmatprep.mubr.f32.mxu0 0.0
      %4652 = vmatmul.mubr.f32.gmra.mxu0 %v3574
      %v4653 = vpop.f32.mrf.mxu0
      %v4654 = vadd.f32 0.0, %v4653
      %v4655 = vpop.f32.mrf.mxu0
      %4656 = vmatprep.mubr.f32.mxu0 0.0
      %4657 = vmatmul.mubr.f32.gmra.mxu0 %v3577
      %v4658 = vpop.f32.mrf.mxu0
      %v4659 = vadd.f32 0.0, %v4658
      %v4660 = vpop.f32.mrf.mxu0
      %4661 = vmatprep.mubr.f32.mxu0 0.0
      %4662 = vmatmul.mubr.f32.gmra.mxu0 %v3580
      %v4663 = vpop.f32.mrf.mxu0
      %v4664 = vadd.f32 0.0, %v4663
      %v4665 = vpop.f32.mrf.mxu0
      %4666 = vmatprep.mubr.f32.mxu0 0.0
      %4667 = vmatmul.mubr.f32.gmra.mxu0 %v3583
      %v4668 = vpop.f32.mrf.mxu0
      %v4669 = vadd.f32 0.0, %v4668
      %v4670 = vpop.f32.mrf.mxu0
      %4671 = vmatprep.mubr.f32.mxu0 0.0
      %4672 = vmatmul.mubr.f32.gmra.mxu0 %v3586
      %v4673 = vpop.f32.mrf.mxu0
      %v4674 = vadd.f32 0.0, %v4673
      %v4675 = vpop.f32.mrf.mxu0
      %4676 = vmatprep.mubr.f32.mxu0 0.0
      %4677 = vmatmul.mubr.f32.gmra.mxu0 %v3589
      %v4678 = vpop.f32.mrf.mxu0
      %v4679 = vadd.f32 0.0, %v4678
      %v4680 = vpop.f32.mrf.mxu0
      %4681 = vmatprep.mubr.f32.mxu0 0.0
      %4682 = vmatmul.mubr.f32.gmra.mxu0 %v3592
      %v4683 = vpop.f32.mrf.mxu0
      %v4684 = vadd.f32 0.0, %v4683
      %v4685 = vpop.f32.mrf.mxu0
      %4686 = vmatprep.mubr.f32.mxu0 0.0
      %4687 = vmatmul.mubr.f32.gmra.mxu0 %v3595
      %v4688 = vpop.f32.mrf.mxu0
      %v4689 = vadd.f32 0.0, %v4688
      %v4690 = vpop.f32.mrf.mxu0
      %4691 = vmatprep.mubr.f32.mxu0 0.0
      %4692 = vmatmul.mubr.f32.gmra.mxu0 %v3598
      %v4693 = vpop.f32.mrf.mxu0
      %v4694 = vadd.f32 0.0, %v4693
      %v4695 = vpop.f32.mrf.mxu0
      %4696 = vmatprep.mubr.f32.mxu0 0.0
      %4697 = vmatmul.mubr.f32.gmra.mxu0 %v3601
      %v4698 = vpop.f32.mrf.mxu0
      %v4699 = vadd.f32 0.0, %v4698
      %v4700 = vpop.f32.mrf.mxu0
      %4701 = vmatprep.mubr.f32.mxu0 0.0
      %4702 = vmatmul.mubr.f32.gmra.mxu0 %v3604
      %v4703 = vpop.f32.mrf.mxu0
      %v4704 = vadd.f32 0.0, %v4703
      %v4705 = vpop.f32.mrf.mxu0
      %4706 = vmatprep.mubr.f32.mxu0 0.0
      %4707 = vmatmul.mubr.f32.gmra.mxu0 %v3607
      %v4708 = vpop.f32.mrf.mxu0
      %v4709 = vadd.f32 0.0, %v4708
      %v4710 = vpop.f32.mrf.mxu0
      %4711 = vmatprep.mubr.f32.mxu0 0.0
      %4712 = vmatmul.mubr.f32.gmra.mxu0 %v3610
      %v4713 = vpop.f32.mrf.mxu0
      %v4714 = vadd.f32 0.0, %v4713
      %v4715 = vpop.f32.mrf.mxu0
      %4716 = vmatprep.mubr.f32.mxu0 0.0
      %4717 = vmatmul.mubr.f32.gmra.mxu0 %v3613
      %v4718 = vpop.f32.mrf.mxu0
      %v4719 = vadd.f32 0.0, %v4718
      %v4720 = vpop.f32.mrf.mxu0
      %4721 = vmatprep.mubr.f32.mxu0 0.0
      %4722 = vmatmul.mubr.f32.gmra.mxu0 %v3616
      %v4723 = vpop.f32.mrf.mxu0
      %v4724 = vadd.f32 0.0, %v4723
      %v4725 = vpop.f32.mrf.mxu0
      %4726 = vmatprep.mubr.f32.mxu0 0.0
      %4727 = vmatmul.mubr.f32.gmra.mxu0 %v3619
      %v4728 = vpop.f32.mrf.mxu0
      %v4729 = vadd.f32 0.0, %v4728
      %v4730 = vpop.f32.mrf.mxu0
      %4731 = vmatprep.mubr.f32.mxu0 0.0
      %4732 = vmatmul.mubr.f32.gmra.mxu0 %v3622
      %v4733 = vpop.f32.mrf.mxu0
      %v4734 = vadd.f32 0.0, %v4733
      %v4735 = vpop.f32.mrf.mxu0
      %4736 = vmatprep.mubr.f32.mxu0 0.0
      %4737 = vmatmul.mubr.f32.gmra.mxu0 %v3625
      %v4738 = vpop.f32.mrf.mxu0
      %v4739 = vadd.f32 0.0, %v4738
      %v4740 = vpop.f32.mrf.mxu0
      %4741 = vmatprep.mubr.f32.mxu0 0.0
      %4742 = vmatmul.mubr.f32.gmra.mxu0 %v3628
      %v4743 = vpop.f32.mrf.mxu0
      %v4744 = vadd.f32 0.0, %v4743
      %v4745 = vpop.f32.mrf.mxu0
      %4746 = vmatprep.mubr.f32.mxu0 0.0
      %4747 = vmatmul.mubr.f32.gmra.mxu0 %v3631
      %v4748 = vpop.f32.mrf.mxu0
      %v4749 = vadd.f32 0.0, %v4748
      %v4750 = vpop.f32.mrf.mxu0
      %4751 = vmatprep.mubr.f32.mxu0 0.0
      %4752 = vmatmul.mubr.f32.gmra.mxu0 %v3634
      %v4753 = vpop.f32.mrf.mxu0
      %v4754 = vadd.f32 0.0, %v4753
      %v4755 = vpop.f32.mrf.mxu0
      %4756 = vmatprep.mubr.f32.mxu0 0.0
      %4757 = vmatmul.mubr.f32.gmra.mxu0 %v3637
      %v4758 = vpop.f32.mrf.mxu0
      %v4759 = vadd.f32 0.0, %v4758
      %v4760 = vpop.f32.mrf.mxu0
      %4761 = vmatprep.mubr.f32.mxu0 0.0
      %4762 = vmatmul.mubr.f32.gmra.mxu0 %v3640
      %v4763 = vpop.f32.mrf.mxu0
      %v4764 = vadd.f32 0.0, %v4763
      %v4765 = vpop.f32.mrf.mxu0
      %4766 = vmatprep.mubr.f32.mxu0 0.0
      %4767 = vmatmul.mubr.f32.gmra.mxu0 %v3643
      %v4768 = vpop.f32.mrf.mxu0
      %v4769 = vadd.f32 0.0, %v4768
      %v4770 = vpop.f32.mrf.mxu0
      %4771 = vmatprep.mubr.f32.mxu0 0.0
      %4772 = vmatmul.mubr.f32.gmra.mxu0 %v3646
      %v4773 = vpop.f32.mrf.mxu0
      %v4774 = vadd.f32 0.0, %v4773
      %v4775 = vpop.f32.mrf.mxu0
      %4776 = vmatprep.mubr.f32.mxu0 0.0
      %4777 = vmatmul.mubr.f32.gmra.mxu0 %v3649
      %v4778 = vpop.f32.mrf.mxu0
      %v4779 = vadd.f32 0.0, %v4778
      %v4780 = vpop.f32.mrf.mxu0
      %4781 = vmatprep.mubr.f32.mxu0 0.0
      %4782 = vmatmul.mubr.f32.gmra.mxu0 %v3652
      %v4783 = vpop.f32.mrf.mxu0
      %v4784 = vadd.f32 0.0, %v4783
      %v4785 = vpop.f32.mrf.mxu0
      %4786 = vmatprep.mubr.f32.mxu0 0.0
      %4787 = vmatmul.mubr.f32.gmra.mxu0 %v3655
      %v4788 = vpop.f32.mrf.mxu0
      %v4789 = vadd.f32 0.0, %v4788
      %v4790 = vpop.f32.mrf.mxu0
      %4791 = vmatprep.mubr.f32.mxu0 0.0
      %4792 = vmatmul.mubr.f32.gmra.mxu0 %v3658
      %v4793 = vpop.f32.mrf.mxu0
      %v4794 = vadd.f32 0.0, %v4793
      %v4795 = vpop.f32.mrf.mxu0
      %4796 = vmatprep.mubr.f32.mxu0 0.0
      %4797 = vmatmul.mubr.f32.gmra.mxu0 %v3661
      %v4798 = vpop.f32.mrf.mxu0
      %v4799 = vadd.f32 0.0, %v4798
      %v4800 = vpop.f32.mrf.mxu0
      %4801 = vmatprep.mubr.f32.mxu0 0.0
      %4802 = vmatmul.mubr.f32.gmra.mxu0 %v3664
      %v4803 = vpop.f32.mrf.mxu0
      %v4804 = vadd.f32 0.0, %v4803
      %v4805 = vpop.f32.mrf.mxu0
      %4806 = vmatprep.mubr.f32.mxu0 0.0
      %4807 = vmatmul.mubr.f32.gmra.mxu0 %v3667
      %v4808 = vpop.f32.mrf.mxu0
      %v4809 = vadd.f32 0.0, %v4808
      %v4810 = vpop.f32.mrf.mxu0
      %4811 = vmatprep.mubr.f32.mxu0 0.0
      %4812 = vmatmul.mubr.f32.gmra.mxu0 %v3670
      %v4813 = vpop.f32.mrf.mxu0
      %v4814 = vadd.f32 0.0, %v4813
      %v4815 = vpop.f32.mrf.mxu0
      %4816 = vmatprep.mubr.f32.mxu0 0.0
      %4817 = vmatmul.mubr.f32.gmra.mxu0 %v3673
      %v4818 = vpop.f32.mrf.mxu0
      %v4819 = vadd.f32 0.0, %v4818
      %v4820 = vpop.f32.mrf.mxu0
      %4821 = vmatprep.mubr.f32.mxu0 0.0
      %4822 = vmatmul.mubr.f32.gmra.mxu0 %v3676
      %v4823 = vpop.f32.mrf.mxu0
      %v4824 = vadd.f32 0.0, %v4823
      %v4825 = vpop.f32.mrf.mxu0
      %4826 = vmatprep.mubr.f32.mxu0 0.0
      %4827 = vmatmul.mubr.f32.gmra.mxu0 %v3679
      %v4828 = vpop.f32.mrf.mxu0
      %v4829 = vadd.f32 0.0, %v4828
      %v4830 = vpop.f32.mrf.mxu0
      %4831 = vmatprep.mubr.f32.mxu0 0.0
      %4832 = vmatmul.mubr.f32.gmra.mxu0 %v3682
      %v4833 = vpop.f32.mrf.mxu0
      %v4834 = vadd.f32 0.0, %v4833
      %v4835 = vpop.f32.mrf.mxu0
      %4836 = vmatprep.mubr.f32.mxu0 0.0
      %4837 = vmatmul.mubr.f32.gmra.mxu0 %v3685
      %v4838 = vpop.f32.mrf.mxu0
      %v4839 = vadd.f32 0.0, %v4838
      %v4840 = vpop.f32.mrf.mxu0
      %4841 = vmatprep.mubr.f32.mxu0 0.0
      %4842 = vmatmul.mubr.f32.gmra.mxu0 %v3688
      %v4843 = vpop.f32.mrf.mxu0
      %v4844 = vadd.f32 0.0, %v4843
      %v4845 = vpop.f32.mrf.mxu0
      %4846 = vmatprep.mubr.f32.mxu0 0.0
      %4847 = vmatmul.mubr.f32.gmra.mxu0 %v3691
      %v4848 = vpop.f32.mrf.mxu0
      %v4849 = vadd.f32 0.0, %v4848
      %v4850 = vpop.f32.mrf.mxu0
      %4851 = vmatprep.mubr.f32.mxu0 0.0
      %4852 = vmatmul.mubr.f32.gmra.mxu0 %v3694
      %v4853 = vpop.f32.mrf.mxu0
      %v4854 = vadd.f32 0.0, %v4853
      %v4855 = vpop.f32.mrf.mxu0
      %4856 = vmatprep.mubr.f32.mxu0 0.0
      %4857 = vmatmul.mubr.f32.gmra.mxu0 %v3697
      %v4858 = vpop.f32.mrf.mxu0
      %v4859 = vadd.f32 0.0, %v4858
      %v4860 = vpop.f32.mrf.mxu0
      %4861 = vmatprep.mubr.f32.mxu0 0.0
      %4862 = vmatmul.mubr.f32.gmra.mxu0 %v3700
      %v4863 = vpop.f32.mrf.mxu0
      %v4864 = vadd.f32 0.0, %v4863
      %v4865 = vpop.f32.mrf.mxu0
      %4866 = vmatprep.mubr.f32.mxu0 0.0
      %4867 = vmatmul.mubr.f32.gmra.mxu0 %v3703
      %v4868 = vpop.f32.mrf.mxu0
      %v4869 = vadd.f32 0.0, %v4868
      %v4870 = vpop.f32.mrf.mxu0
      %4871 = vmatprep.mubr.f32.mxu0 0.0
      %4872 = vmatmul.mubr.f32.gmra.mxu0 %v3706
      %v4873 = vpop.f32.mrf.mxu0
      %v4874 = vadd.f32 0.0, %v4873
      %v4875 = vpop.f32.mrf.mxu0
      %4876 = vmatprep.mubr.f32.mxu0 0.0
      %4877 = vmatmul.mubr.f32.gmra.mxu0 %v3709
      %v4878 = vpop.f32.mrf.mxu0
      %v4879 = vadd.f32 0.0, %v4878
      %v4880 = vpop.f32.mrf.mxu0
      %4881 = vmatprep.mubr.f32.mxu0 0.0
      %4882 = vmatmul.mubr.f32.gmra.mxu0 %v3712
      %v4883 = vpop.f32.mrf.mxu0
      %v4884 = vadd.f32 0.0, %v4883
      %v4885 = vpop.f32.mrf.mxu0
      %4886 = vmatprep.mubr.f32.mxu0 0.0
      %4887 = vmatmul.mubr.f32.gmra.mxu0 %v3715
      %v4888 = vpop.f32.mrf.mxu0
      %v4889 = vadd.f32 0.0, %v4888
      %v4890 = vpop.f32.mrf.mxu0
      %4891 = vmatprep.mubr.f32.mxu0 0.0
      %4892 = vmatmul.mubr.f32.gmra.mxu0 %v3718
      %v4893 = vpop.f32.mrf.mxu0
      %v4894 = vadd.f32 0.0, %v4893
      %v4895 = vpop.f32.mrf.mxu0
      %4896 = vmatprep.mubr.f32.mxu0 0.0
      %4897 = vmatmul.mubr.f32.gmra.mxu0 %v3721
      %v4898 = vpop.f32.mrf.mxu0
      %v4899 = vadd.f32 0.0, %v4898
      %v4900 = vpop.f32.mrf.mxu0
      %4901 = vmatprep.mubr.f32.mxu0 0.0
      %4902 = vmatmul.mubr.f32.gmra.mxu0 %v3724
      %v4903 = vpop.f32.mrf.mxu0
      %v4904 = vadd.f32 0.0, %v4903
      %v4905 = vpop.f32.mrf.mxu0
      %4906 = vmatprep.mubr.f32.mxu0 0.0
      %4907 = vmatmul.mubr.f32.gmra.mxu0 %v3727
      %v4908 = vpop.f32.mrf.mxu0
      %v4909 = vadd.f32 0.0, %v4908
      %v4910 = vpop.f32.mrf.mxu0
      %4911 = vmatprep.mubr.f32.mxu0 0.0
      %4912 = vmatmul.mubr.f32.gmra.mxu0 %v3730
      %v4913 = vpop.f32.mrf.mxu0
      %v4914 = vadd.f32 0.0, %v4913
      %v4915 = vpop.f32.mrf.mxu0
      %4916 = vmatprep.mubr.f32.mxu0 0.0
      %4917 = vmatmul.mubr.f32.gmra.mxu0 %v3733
      %v4918 = vpop.f32.mrf.mxu0
      %v4919 = vadd.f32 0.0, %v4918
      %v4920 = vpop.f32.mrf.mxu0
      %4921 = vmatprep.mubr.f32.mxu0 0.0
      %4922 = vmatmul.mubr.f32.gmra.mxu0 %v3736
      %v4923 = vpop.f32.mrf.mxu0
      %v4924 = vadd.f32 0.0, %v4923
      %v4925 = vpop.f32.mrf.mxu0
      %4926 = vmatprep.mubr.f32.mxu0 0.0
      %4927 = vmatmul.mubr.f32.gmra.mxu0 %v3739
      %v4928 = vpop.f32.mrf.mxu0
      %v4929 = vadd.f32 0.0, %v4928
      %v4930 = vpop.f32.mrf.mxu0
      %4931 = vmatprep.mubr.f32.mxu0 0.0
      %4932 = vmatmul.mubr.f32.gmra.mxu0 %v3742
      %v4933 = vpop.f32.mrf.mxu0
      %v4934 = vadd.f32 0.0, %v4933
      %v4935 = vpop.f32.mrf.mxu0
      %4936 = vmatprep.mubr.f32.mxu0 0.0
      %4937 = vmatmul.mubr.f32.gmra.mxu0 %v3745
      %v4938 = vpop.f32.mrf.mxu0
      %v4939 = vadd.f32 0.0, %v4938
      %v4940 = vpop.f32.mrf.mxu0
      %4941 = vmatprep.mubr.f32.mxu0 0.0
      %4942 = vmatmul.mubr.f32.gmra.mxu0 %v3748
      %v4943 = vpop.f32.mrf.mxu0
      %v4944 = vadd.f32 0.0, %v4943
      %v4945 = vpop.f32.mrf.mxu0
      %4946 = vmatprep.mubr.f32.mxu0 0.0
      %4947 = vmatmul.mubr.f32.gmra.mxu0 %v3751
      %v4948 = vpop.f32.mrf.mxu0
      %v4949 = vadd.f32 0.0, %v4948
      %v4950 = vpop.f32.mrf.mxu0
      %4951 = vmatprep.mubr.f32.mxu0 0.0
      %4952 = vmatmul.mubr.f32.gmra.mxu0 %v3754
      %v4953 = vpop.f32.mrf.mxu0
      %v4954 = vadd.f32 0.0, %v4953
      %v4955 = vpop.f32.mrf.mxu0
      %4956 = vmatprep.mubr.f32.mxu0 0.0
      %4957 = vmatmul.mubr.f32.gmra.mxu0 %v3757
      %v4958 = vpop.f32.mrf.mxu0
      %v4959 = vadd.f32 0.0, %v4958
      %v4960 = vpop.f32.mrf.mxu0
      %4961 = vmatprep.mubr.f32.mxu0 0.0
      %4962 = vmatmul.mubr.f32.gmra.mxu0 %v3760
      %v4963 = vpop.f32.mrf.mxu0
      %v4964 = vadd.f32 0.0, %v4963
      %v4965 = vpop.f32.mrf.mxu0
      %4966 = vmatprep.mubr.f32.mxu0 0.0
      %4967 = vmatmul.mubr.f32.gmra.mxu0 %v3763
      %v4968 = vpop.f32.mrf.mxu0
      %v4969 = vadd.f32 0.0, %v4968
      %v4970 = vpop.f32.mrf.mxu0
      %4971 = vmatprep.mubr.f32.mxu0 0.0
      %4972 = vmatmul.mubr.f32.gmra.mxu0 %v3766
      %v4973 = vpop.f32.mrf.mxu0
      %v4974 = vadd.f32 0.0, %v4973
      %v4975 = vpop.f32.mrf.mxu0
      %4976 = vmatprep.mubr.f32.mxu0 0.0
      %4977 = vmatmul.mubr.f32.gmra.mxu0 %v3769
      %v4978 = vpop.f32.mrf.mxu0
      %v4979 = vadd.f32 0.0, %v4978
      %v4980 = vpop.f32.mrf.mxu0
      %4981 = vmatprep.mubr.f32.mxu0 0.0
      %4982 = vmatmul.mubr.f32.gmra.mxu0 %v3772
      %v4983 = vpop.f32.mrf.mxu0
      %v4984 = vadd.f32 0.0, %v4983
      %v4985 = vpop.f32.mrf.mxu0
      %4986 = vmatprep.mubr.f32.mxu0 0.0
      %4987 = vmatmul.mubr.f32.gmra.mxu0 %v3775
      %v4988 = vpop.f32.mrf.mxu0
      %v4989 = vadd.f32 0.0, %v4988
      %v4990 = vpop.f32.mrf.mxu0
      %4991 = vmatprep.mubr.f32.mxu0 0.0
      %4992 = vmatmul.mubr.f32.gmra.mxu0 %v3778
      %v4993 = vpop.f32.mrf.mxu0
      %v4994 = vadd.f32 0.0, %v4993
      %v4995 = vpop.f32.mrf.mxu0
      %4996 = vmatprep.mubr.f32.mxu0 0.0
      %4997 = vmatmul.mubr.f32.gmra.mxu0 %v3781
      %v4998 = vpop.f32.mrf.mxu0
      %v4999 = vadd.f32 0.0, %v4998
      %v5000 = vpop.f32.mrf.mxu0
      %5001 = vmatprep.mubr.f32.mxu0 0.0
      %5002 = vmatmul.mubr.f32.gmra.mxu0 %v3784
      %v5003 = vpop.f32.mrf.mxu0
      %v5004 = vadd.f32 0.0, %v5003
      %v5005 = vpop.f32.mrf.mxu0
      %5006 = vmatprep.mubr.f32.mxu0 0.0
      %5007 = vmatmul.mubr.f32.gmra.mxu0 %v3787
      %v5008 = vpop.f32.mrf.mxu0
      %v5009 = vadd.f32 0.0, %v5008
      %v5010 = vpop.f32.mrf.mxu0
      %5011 = vmatprep.mubr.f32.mxu0 0.0
      %5012 = vmatmul.mubr.f32.gmra.mxu0 %v3790
      %v5013 = vpop.f32.mrf.mxu0
      %v5014 = vadd.f32 0.0, %v5013
      %v5015 = vpop.f32.mrf.mxu0
      %5016 = vmatprep.mubr.f32.mxu0 0.0
      %5017 = vmatmul.mubr.f32.gmra.mxu0 %v3793
      %v5018 = vpop.f32.mrf.mxu0
      %v5019 = vadd.f32 0.0, %v5018
      %v5020 = vpop.f32.mrf.mxu0
      %5021 = vmatprep.mubr.f32.mxu0 0.0
      %5022 = vmatmul.mubr.f32.gmra.mxu0 %v3796
      %v5023 = vpop.f32.mrf.mxu0
      %v5024 = vadd.f32 0.0, %v5023
      %v5025 = vpop.f32.mrf.mxu0
      %5026 = vmatprep.mubr.f32.mxu0 0.0
      %5027 = vmatmul.mubr.f32.gmra.mxu0 %v3799
      %v5028 = vpop.f32.mrf.mxu0
      %v5029 = vadd.f32 0.0, %v5028
      %v5030 = vpop.f32.mrf.mxu0
      %5031 = vmatprep.mubr.f32.mxu0 0.0
      %5032 = vmatmul.mubr.f32.gmra.mxu0 %v3802
      %v5033 = vpop.f32.mrf.mxu0
      %v5034 = vadd.f32 0.0, %v5033
      %v5035 = vpop.f32.mrf.mxu0
      %5036 = vmatprep.mubr.f32.mxu0 0.0
      %5037 = vmatmul.mubr.f32.gmra.mxu0 %v3805
      %v5038 = vpop.f32.mrf.mxu0
      %v5039 = vadd.f32 0.0, %v5038
      %v5040 = vpop.f32.mrf.mxu0
      %5041 = vmatprep.mubr.f32.mxu0 0.0
      %5042 = vmatmul.mubr.f32.gmra.mxu0 %v3808
      %v5043 = vpop.f32.mrf.mxu0
      %v5044 = vadd.f32 0.0, %v5043
      %v5045 = vpop.f32.mrf.mxu0
      %5046 = vmatprep.mubr.f32.mxu0 0.0
      %5047 = vmatmul.mubr.f32.gmra.mxu0 %v3811
      %v5048 = vpop.f32.mrf.mxu0
      %v5049 = vadd.f32 0.0, %v5048
      %v5050 = vpop.f32.mrf.mxu0
      %5051 = vmatprep.mubr.f32.mxu0 0.0
      %5052 = vmatmul.mubr.f32.gmra.mxu0 %v3814
      %v5053 = vpop.f32.mrf.mxu0
      %v5054 = vadd.f32 0.0, %v5053
      %v5055 = vpop.f32.mrf.mxu0
      %5056 = vmatprep.mubr.f32.mxu0 0.0
      %5057 = vmatmul.mubr.f32.gmra.mxu0 %v3817
      %v5058 = vpop.f32.mrf.mxu0
      %v5059 = vadd.f32 0.0, %v5058
      %v5060 = vpop.f32.mrf.mxu0
      %5061 = vmatprep.mubr.f32.mxu0 0.0
      %5062 = vmatmul.mubr.f32.gmra.mxu0 %v3820
      %v5063 = vpop.f32.mrf.mxu0
      %v5064 = vadd.f32 0.0, %v5063
      %v5065 = vpop.f32.mrf.mxu0
      %5066 = vmatprep.mubr.f32.mxu0 0.0
      %5067 = vmatmul.mubr.f32.gmra.mxu0 %v3823
      %v5068 = vpop.f32.mrf.mxu0
      %v5069 = vadd.f32 0.0, %v5068
      %v5070 = vpop.f32.mrf.mxu0
      %5071 = vmatprep.mubr.f32.mxu0 0.0
      %5072 = vmatmul.mubr.f32.gmra.mxu0 %v3826
      %v5073 = vpop.f32.mrf.mxu0
      %v5074 = vadd.f32 0.0, %v5073
      %v5075 = vpop.f32.mrf.mxu0
      %5076 = vmatprep.mubr.f32.mxu0 0.0
      %5077 = vmatmul.mubr.f32.gmra.mxu0 %v3829
      %v5078 = vpop.f32.mrf.mxu0
      %v5079 = vadd.f32 0.0, %v5078
      %v5080 = vpop.f32.mrf.mxu0
      %5081 = vmatprep.mubr.f32.mxu0 0.0
      %5082 = vmatmul.mubr.f32.gmra.mxu0 %v3832
      %v5083 = vpop.f32.mrf.mxu0
      %v5084 = vadd.f32 0.0, %v5083
      %v5085 = vpop.f32.mrf.mxu0
      %5086 = vmatprep.mubr.f32.mxu0 0.0
      %5087 = vmatmul.mubr.f32.gmra.mxu0 %v3835
      %v5088 = vpop.f32.mrf.mxu0
      %v5089 = vadd.f32 0.0, %v5088
      %v5090 = vpop.f32.mrf.mxu0
      %5091 = vmatprep.mubr.f32.mxu0 0.0
      %5092 = vmatmul.mubr.f32.gmra.mxu0 %v3838
      %v5093 = vpop.f32.mrf.mxu0
      %v5094 = vadd.f32 0.0, %v5093
      %v5095 = vpop.f32.mrf.mxu0
      %5096 = vmatprep.mubr.f32.mxu0 0.0
      %5097 = vmatmul.mubr.f32.gmra.mxu0 %v3841
      %v5098 = vpop.f32.mrf.mxu0
      %v5099 = vadd.f32 0.0, %v5098
      %v5100 = vpop.f32.mrf.mxu0
      %5101 = vmatprep.mubr.f32.mxu0 0.0
      %5102 = vmatmul.mubr.f32.gmra.mxu0 %v3844
      %v5103 = vpop.f32.mrf.mxu0
      %v5104 = vadd.f32 0.0, %v5103
      %v5105 = vpop.f32.mrf.mxu0
      %5106 = vmatprep.mubr.f32.mxu0 0.0
      %5107 = vmatmul.mubr.f32.gmra.mxu0 %v3847
      %v5108 = vpop.f32.mrf.mxu0
      %v5109 = vadd.f32 0.0, %v5108
      %v5110 = vpop.f32.mrf.mxu0
      %5111 = vmatprep.mubr.f32.mxu0 0.0
      %5112 = vmatmul.mubr.f32.gmra.mxu0 %v3850
      %v5113 = vpop.f32.mrf.mxu0
      %v5114 = vadd.f32 0.0, %v5113
      %v5115 = vpop.f32.mrf.mxu0
      %5116 = vmatprep.mubr.f32.mxu0 0.0
      %5117 = vmatmul.mubr.f32.gmra.mxu0 %v3853
      %v5118 = vpop.f32.mrf.mxu0
      %v5119 = vadd.f32 0.0, %v5118
      %v5120 = vpop.f32.mrf.mxu0
      %5121 = vmatprep.mubr.f32.mxu0 0.0
      %5122 = vmatmul.mubr.f32.gmra.mxu0 %v3856
      %v5123 = vpop.f32.mrf.mxu0
      %v5124 = vadd.f32 0.0, %v5123
      %v5125 = vpop.f32.mrf.mxu0
      %5126 = vmatprep.mubr.f32.mxu0 0.0
      %5127 = vmatmul.mubr.f32.gmra.mxu0 %v3859
      %v5128 = vpop.f32.mrf.mxu0
      %v5129 = vadd.f32 0.0, %v5128
      %v5130 = vpop.f32.mrf.mxu0
      %5131 = vmatprep.mubr.f32.mxu0 0.0
      %5132 = vmatmul.mubr.f32.gmra.mxu0 %v3862
      %v5133 = vpop.f32.mrf.mxu0
      %v5134 = vadd.f32 0.0, %v5133
      %v5135 = vpop.f32.mrf.mxu0
      %5136 = vmatprep.mubr.f32.mxu0 0.0
      %5137 = vmatmul.mubr.f32.gmra.mxu0 %v3865
      %v5138 = vpop.f32.mrf.mxu0
      %v5139 = vadd.f32 0.0, %v5138
      %v5140 = vpop.f32.mrf.mxu0
      %5141 = vmatprep.mubr.f32.mxu0 0.0
      %5142 = vmatmul.mubr.f32.gmra.mxu0 %v3868
      %v5143 = vpop.f32.mrf.mxu0
      %v5144 = vadd.f32 0.0, %v5143
      %v5145 = vpop.f32.mrf.mxu0
      %5146 = vmatprep.mubr.f32.mxu0 0.0
      %5147 = vmatmul.mubr.f32.gmra.mxu0 %v3871
      %v5148 = vpop.f32.mrf.mxu0
      %v5149 = vadd.f32 0.0, %v5148
      %v5150 = vpop.f32.mrf.mxu0
      %5151 = vmatprep.mubr.f32.mxu0 0.0
      %5152 = vmatmul.mubr.f32.gmra.mxu0 %v3874
      %v5153 = vpop.f32.mrf.mxu0
      %v5154 = vadd.f32 0.0, %v5153
      %v5155 = vpop.f32.mrf.mxu0
      %5156 = vmatprep.mubr.f32.mxu0 0.0
      %5157 = vmatmul.mubr.f32.gmra.mxu0 %v3877
      %v5158 = vpop.f32.mrf.mxu0
      %v5159 = vadd.f32 0.0, %v5158
      %v5160 = vpop.f32.mrf.mxu0
      %5161 = vmatprep.mubr.f32.mxu0 0.0
      %5162 = vmatmul.mubr.f32.gmra.mxu0 %v3880
      %v5163 = vpop.f32.mrf.mxu0
      %v5164 = vadd.f32 0.0, %v5163
      %v5165 = vpop.f32.mrf.mxu0
      %5166 = vmatprep.mubr.f32.mxu0 0.0
      %5167 = vmatmul.mubr.f32.gmra.mxu0 %v3883
      %v5168 = vpop.f32.mrf.mxu0
      %v5169 = vadd.f32 0.0, %v5168
      %v5170 = vpop.f32.mrf.mxu0
      %5171 = vmatprep.mubr.f32.mxu0 0.0
      %5172 = vmatmul.mubr.f32.gmra.mxu0 %v3886
      %v5173 = vpop.f32.mrf.mxu0
      %v5174 = vadd.f32 0.0, %v5173
      %v5175 = vpop.f32.mrf.mxu0
      %5176 = vmatprep.mubr.f32.mxu0 0.0
      %5177 = vmatmul.mubr.f32.gmra.mxu0 %v3889
      %v5178 = vpop.f32.mrf.mxu0
      %v5179 = vadd.f32 0.0, %v5178
      %v5180 = vpop.f32.mrf.mxu0
      %5181 = vmatprep.mubr.f32.mxu0 0.0
      %5182 = vmatmul.mubr.f32.gmra.mxu0 %v3892
      %v5183 = vpop.f32.mrf.mxu0
      %v5184 = vadd.f32 0.0, %v5183
      %v5185 = vpop.f32.mrf.mxu0
      %5186 = vmatprep.mubr.f32.mxu0 0.0
      %5187 = vmatmul.mubr.f32.gmra.mxu0 %v3895
      %v5188 = vpop.f32.mrf.mxu0
      %v5189 = vadd.f32 0.0, %v5188
      %v5190 = vpop.f32.mrf.mxu0
      %5191 = vmatprep.mubr.f32.mxu0 0.0
      %5192 = vmatmul.mubr.f32.gmra.mxu0 %v3898
      %v5193 = vpop.f32.mrf.mxu0
      %v5194 = vadd.f32 0.0, %v5193
      %v5195 = vpop.f32.mrf.mxu0
      %5196 = vmatprep.mubr.f32.mxu0 0.0
      %5197 = vmatmul.mubr.f32.gmra.mxu0 %v3901
      %v5198 = vpop.f32.mrf.mxu0
      %v5199 = vadd.f32 0.0, %v5198
      %v5200 = vpop.f32.mrf.mxu0
      %5201 = vmatprep.mubr.f32.mxu0 0.0
      %5202 = vmatmul.mubr.f32.gmra.mxu0 %v3904
      %v5203 = vpop.f32.mrf.mxu0
      %v5204 = vadd.f32 0.0, %v5203
      %v5205 = vpop.f32.mrf.mxu0
      %5206 = vmatprep.mubr.f32.mxu0 0.0
      %5207 = vmatmul.mubr.f32.gmra.mxu0 %v3907
      %v5208 = vpop.f32.mrf.mxu0
      %v5209 = vadd.f32 0.0, %v5208
      %v5210 = vpop.f32.mrf.mxu0
      %5211 = vmatprep.mubr.f32.mxu0 0.0
      %5212 = vmatmul.mubr.f32.gmra.mxu0 %v3910
      %v5213 = vpop.f32.mrf.mxu0
      %v5214 = vadd.f32 0.0, %v5213
      %v5215 = vpop.f32.mrf.mxu0
      %5216 = vmatprep.mubr.f32.mxu0 0.0
      %5217 = vmatmul.mubr.f32.gmra.mxu0 %v3913
      %v5218 = vpop.f32.mrf.mxu0
      %v5219 = vadd.f32 0.0, %v5218
      %v5220 = vpop.f32.mrf.mxu0
      %5221 = vmatprep.mubr.f32.mxu0 0.0
      %5222 = vmatmul.mubr.f32.gmra.mxu0 %v3916
      %v5223 = vpop.f32.mrf.mxu0
      %v5224 = vadd.f32 0.0, %v5223
      %v5225 = vpop.f32.mrf.mxu0
      %5226 = vmatprep.mubr.f32.mxu0 0.0
      %5227 = vmatmul.mubr.f32.gmra.mxu0 %v3919
      %v5228 = vpop.f32.mrf.mxu0
      %v5229 = vadd.f32 0.0, %v5228
      %v5230 = vpop.f32.mrf.mxu0
      %5231 = vmatprep.mubr.f32.mxu0 0.0
      %5232 = vmatmul.mubr.f32.gmra.mxu0 %v3922
      %v5233 = vpop.f32.mrf.mxu0
      %v5234 = vadd.f32 0.0, %v5233
      %v5235 = vpop.f32.mrf.mxu0
      %5236 = vmatprep.mubr.f32.mxu0 0.0
      %5237 = vmatmul.mubr.f32.gmra.mxu0 %v3925
      %v5238 = vpop.f32.mrf.mxu0
      %v5239 = vadd.f32 0.0, %v5238
      %v5240 = vpop.f32.mrf.mxu0
      %5241 = vmatprep.mubr.f32.mxu0 0.0
      %5242 = vmatmul.mubr.f32.gmra.mxu0 %v3928
      %v5243 = vpop.f32.mrf.mxu0
      %v5244 = vadd.f32 0.0, %v5243
      %v5245 = vpop.f32.mrf.mxu0
      %5246 = vmatprep.mubr.f32.mxu0 0.0
      %5247 = vmatmul.mubr.f32.gmra.mxu0 %v3931
      %v5248 = vpop.f32.mrf.mxu0
      %v5249 = vadd.f32 0.0, %v5248
      %v5250 = vpop.f32.mrf.mxu0
      %5251 = vmatprep.mubr.f32.mxu0 0.0
      %5252 = vmatmul.mubr.f32.gmra.mxu0 %v3934
      %v5253 = vpop.f32.mrf.mxu0
      %v5254 = vadd.f32 0.0, %v5253
      %v5255 = vpop.f32.mrf.mxu0
      %5256 = vmatprep.mubr.f32.mxu0 0.0
      %5257 = vmatmul.mubr.f32.gmra.mxu0 %v3937
      %v5258 = vpop.f32.mrf.mxu0
      %v5259 = vadd.f32 0.0, %v5258
      %v5260 = vpop.f32.mrf.mxu0
      %5261 = vmatprep.mubr.f32.mxu0 0.0
      %5262 = vmatmul.mubr.f32.gmra.mxu0 %v3940
      %v5263 = vpop.f32.mrf.mxu0
      %v5264 = vadd.f32 0.0, %v5263
      %v5265 = vpop.f32.mrf.mxu0
      %5266 = vmatprep.mubr.f32.mxu0 0.0
      %5267 = vmatmul.mubr.f32.gmra.mxu0 %v3943
      %v5268 = vpop.f32.mrf.mxu0
      %v5269 = vadd.f32 0.0, %v5268
      %v5270 = vpop.f32.mrf.mxu0
      %5271 = vmatprep.mubr.f32.mxu0 0.0
      %5272 = vmatmul.mubr.f32.gmra.mxu0 %v3946
      %v5273 = vpop.f32.mrf.mxu0
      %v5274 = vadd.f32 0.0, %v5273
      %v5275 = vpop.f32.mrf.mxu0
      %5276 = vmatprep.mubr.f32.mxu0 0.0
      %5277 = vmatmul.mubr.f32.gmra.mxu0 %v3949
      %v5278 = vpop.f32.mrf.mxu0
      %v5279 = vadd.f32 0.0, %v5278
      %v5280 = vpop.f32.mrf.mxu0
      %5281 = vmatprep.mubr.f32.mxu0 0.0
      %5282 = vmatmul.mubr.f32.gmra.mxu0 %v3952
      %v5283 = vpop.f32.mrf.mxu0
      %v5284 = vadd.f32 0.0, %v5283
      %v5285 = vpop.f32.mrf.mxu0
      %5286 = vmatprep.mubr.f32.mxu0 0.0
      %5287 = vmatmul.mubr.f32.gmra.mxu0 %v3955
      %v5288 = vpop.f32.mrf.mxu0
      %v5289 = vadd.f32 0.0, %v5288
      %v5290 = vpop.f32.mrf.mxu0
      %5291 = vmatprep.mubr.f32.mxu0 0.0
      %5292 = vmatmul.mubr.f32.gmra.mxu0 %v3958
      %v5293 = vpop.f32.mrf.mxu0
      %v5294 = vadd.f32 0.0, %v5293
      %v5295 = vpop.f32.mrf.mxu0
      %5296 = vmatprep.mubr.f32.mxu0 0.0
      %5297 = vmatmul.mubr.f32.gmra.mxu0 %v3961
      %v5298 = vpop.f32.mrf.mxu0
      %v5299 = vadd.f32 0.0, %v5298
      %v5300 = vpop.f32.mrf.mxu0
      %5301 = vmatprep.mubr.f32.mxu0 0.0
      %5302 = vmatmul.mubr.f32.gmra.mxu0 %v3964
      %v5303 = vpop.f32.mrf.mxu0
      %v5304 = vadd.f32 0.0, %v5303
      %v5305 = vpop.f32.mrf.mxu0
      %5306 = vmatprep.mubr.f32.mxu0 0.0
      %5307 = vmatmul.mubr.f32.gmra.mxu0 %v3967
      %v5308 = vpop.f32.mrf.mxu0
      %v5309 = vadd.f32 0.0, %v5308
      %v5310 = vpop.f32.mrf.mxu0
      %5311 = vmatprep.mubr.f32.mxu0 0.0
      %5312 = vmatmul.mubr.f32.gmra.mxu0 %v3970
      %v5313 = vpop.f32.mrf.mxu0
      %v5314 = vadd.f32 0.0, %v5313
      %v5315 = vpop.f32.mrf.mxu0
      %5316 = vdwg.mxu0
      %vm5317 = vcmask 23552
      %v5318 = vsel %vm5317, %v4039, -inf
      %5319 = vmax.xlane.f32.xlu0 %v5318
      %v5320 = vpop.xlane.xlu0 %5319
      %v5321 = vsel %vm5317, %v4044, -inf
      %5322 = vmax.xlane.f32.xlu0 %v5321
      %v5323 = vpop.xlane.xlu0 %5322
      %v5324 = vsel %vm5317, %v4049, -inf
      %5325 = vmax.xlane.f32.xlu0 %v5324
      %v5326 = vpop.xlane.xlu0 %5325
      %v5327 = vsel %vm5317, %v4054, -inf
      %5328 = vmax.xlane.f32.xlu0 %v5327
      %v5329 = vpop.xlane.xlu0 %5328
      %v5330 = vsel %vm5317, %v4059, -inf
      %5331 = vmax.xlane.f32.xlu0 %v5330
      %v5332 = vpop.xlane.xlu0 %5331
      %v5333 = vsel %vm5317, %v4064, -inf
      %5334 = vmax.xlane.f32.xlu0 %v5333
      %v5335 = vpop.xlane.xlu0 %5334
      %v5336 = vsel %vm5317, %v4069, -inf
      %5337 = vmax.xlane.f32.xlu0 %v5336
      %v5338 = vpop.xlane.xlu0 %5337
      %v5339 = vsel %vm5317, %v4074, -inf
      %5340 = vmax.xlane.f32.xlu0 %v5339
      %v5341 = vpop.xlane.xlu0 %5340
      %v5342 = vsel %vm5317, %v4079, -inf
      %5343 = vmax.xlane.f32.xlu0 %v5342
      %v5344 = vpop.xlane.xlu0 %5343
      %v5345 = vsel %vm5317, %v4084, -inf
      %5346 = vmax.xlane.f32.xlu0 %v5345
      %v5347 = vpop.xlane.xlu0 %5346
      %v5348 = vsel %vm5317, %v4089, -inf
      %5349 = vmax.xlane.f32.xlu0 %v5348
      %v5350 = vpop.xlane.xlu0 %5349
      %v5351 = vsel %vm5317, %v4094, -inf
      %5352 = vmax.xlane.f32.xlu0 %v5351
      %v5353 = vpop.xlane.xlu0 %5352
      %v5354 = vsel %vm5317, %v4099, -inf
      %5355 = vmax.xlane.f32.xlu0 %v5354
      %v5356 = vpop.xlane.xlu0 %5355
      %v5357 = vsel %vm5317, %v4104, -inf
      %5358 = vmax.xlane.f32.xlu0 %v5357
      %v5359 = vpop.xlane.xlu0 %5358
      %v5360 = vsel %vm5317, %v4109, -inf
      %5361 = vmax.xlane.f32.xlu0 %v5360
      %v5362 = vpop.xlane.xlu0 %5361
      %v5363 = vsel %vm5317, %v4114, -inf
      %5364 = vmax.xlane.f32.xlu0 %v5363
      %v5365 = vpop.xlane.xlu0 %5364
      %v5366 = vsel %vm5317, %v4119, -inf
      %5367 = vmax.xlane.f32.xlu0 %v5366
      %v5368 = vpop.xlane.xlu0 %5367
      %v5369 = vsel %vm5317, %v4124, -inf
      %5370 = vmax.xlane.f32.xlu0 %v5369
      %v5371 = vpop.xlane.xlu0 %5370
      %v5372 = vsel %vm5317, %v4129, -inf
      %5373 = vmax.xlane.f32.xlu0 %v5372
      %v5374 = vpop.xlane.xlu0 %5373
      %v5375 = vsel %vm5317, %v4134, -inf
      %5376 = vmax.xlane.f32.xlu0 %v5375
      %v5377 = vpop.xlane.xlu0 %5376
      %v5378 = vsel %vm5317, %v4139, -inf
      %5379 = vmax.xlane.f32.xlu0 %v5378
      %v5380 = vpop.xlane.xlu0 %5379
      %v5381 = vsel %vm5317, %v4144, -inf
      %5382 = vmax.xlane.f32.xlu0 %v5381
      %v5383 = vpop.xlane.xlu0 %5382
      %v5384 = vsel %vm5317, %v4149, -inf
      %5385 = vmax.xlane.f32.xlu0 %v5384
      %v5386 = vpop.xlane.xlu0 %5385
      %v5387 = vsel %vm5317, %v4154, -inf
      %5388 = vmax.xlane.f32.xlu0 %v5387
      %v5389 = vpop.xlane.xlu0 %5388
      %v5390 = vsel %vm5317, %v4159, -inf
      %5391 = vmax.xlane.f32.xlu0 %v5390
      %v5392 = vpop.xlane.xlu0 %5391
      %v5393 = vsel %vm5317, %v4164, -inf
      %5394 = vmax.xlane.f32.xlu0 %v5393
      %v5395 = vpop.xlane.xlu0 %5394
      %v5396 = vsel %vm5317, %v4169, -inf
      %5397 = vmax.xlane.f32.xlu0 %v5396
      %v5398 = vpop.xlane.xlu0 %5397
      %v5399 = vsel %vm5317, %v4174, -inf
      %5400 = vmax.xlane.f32.xlu0 %v5399
      %v5401 = vpop.xlane.xlu0 %5400
      %v5402 = vsel %vm5317, %v4179, -inf
      %5403 = vmax.xlane.f32.xlu0 %v5402
      %v5404 = vpop.xlane.xlu0 %5403
      %v5405 = vsel %vm5317, %v4184, -inf
      %5406 = vmax.xlane.f32.xlu0 %v5405
      %v5407 = vpop.xlane.xlu0 %5406
      %v5408 = vsel %vm5317, %v4189, -inf
      %5409 = vmax.xlane.f32.xlu0 %v5408
      %v5410 = vpop.xlane.xlu0 %5409
      %v5411 = vsel %vm5317, %v4194, -inf
      %5412 = vmax.xlane.f32.xlu0 %v5411
      %v5413 = vpop.xlane.xlu0 %5412
      %v5414 = vsel %vm5317, %v4199, -inf
      %5415 = vmax.xlane.f32.xlu0 %v5414
      %v5416 = vpop.xlane.xlu0 %5415
      %v5417 = vsel %vm5317, %v4204, -inf
      %5418 = vmax.xlane.f32.xlu0 %v5417
      %v5419 = vpop.xlane.xlu0 %5418
      %v5420 = vsel %vm5317, %v4209, -inf
      %5421 = vmax.xlane.f32.xlu0 %v5420
      %v5422 = vpop.xlane.xlu0 %5421
      %v5423 = vsel %vm5317, %v4214, -inf
      %5424 = vmax.xlane.f32.xlu0 %v5423
      %v5425 = vpop.xlane.xlu0 %5424
      %v5426 = vsel %vm5317, %v4219, -inf
      %5427 = vmax.xlane.f32.xlu0 %v5426
      %v5428 = vpop.xlane.xlu0 %5427
      %v5429 = vsel %vm5317, %v4224, -inf
      %5430 = vmax.xlane.f32.xlu0 %v5429
      %v5431 = vpop.xlane.xlu0 %5430
      %v5432 = vsel %vm5317, %v4229, -inf
      %5433 = vmax.xlane.f32.xlu0 %v5432
      %v5434 = vpop.xlane.xlu0 %5433
      %v5435 = vsel %vm5317, %v4234, -inf
      %5436 = vmax.xlane.f32.xlu0 %v5435
      %v5437 = vpop.xlane.xlu0 %5436
      %v5438 = vsel %vm5317, %v4239, -inf
      %5439 = vmax.xlane.f32.xlu0 %v5438
      %v5440 = vpop.xlane.xlu0 %5439
      %v5441 = vsel %vm5317, %v4244, -inf
      %5442 = vmax.xlane.f32.xlu0 %v5441
      %v5443 = vpop.xlane.xlu0 %5442
      %v5444 = vsel %vm5317, %v4249, -inf
      %5445 = vmax.xlane.f32.xlu0 %v5444
      %v5446 = vpop.xlane.xlu0 %5445
      %v5447 = vsel %vm5317, %v4254, -inf
      %5448 = vmax.xlane.f32.xlu0 %v5447
      %v5449 = vpop.xlane.xlu0 %5448
      %v5450 = vsel %vm5317, %v4259, -inf
      %5451 = vmax.xlane.f32.xlu0 %v5450
      %v5452 = vpop.xlane.xlu0 %5451
      %v5453 = vsel %vm5317, %v4264, -inf
      %5454 = vmax.xlane.f32.xlu0 %v5453
      %v5455 = vpop.xlane.xlu0 %5454
      %v5456 = vsel %vm5317, %v4269, -inf
      %5457 = vmax.xlane.f32.xlu0 %v5456
      %v5458 = vpop.xlane.xlu0 %5457
      %v5459 = vsel %vm5317, %v4274, -inf
      %5460 = vmax.xlane.f32.xlu0 %v5459
      %v5461 = vpop.xlane.xlu0 %5460
      %v5462 = vsel %vm5317, %v4279, -inf
      %5463 = vmax.xlane.f32.xlu0 %v5462
      %v5464 = vpop.xlane.xlu0 %5463
      %v5465 = vsel %vm5317, %v4284, -inf
      %5466 = vmax.xlane.f32.xlu0 %v5465
      %v5467 = vpop.xlane.xlu0 %5466
      %v5468 = vsel %vm5317, %v4289, -inf
      %5469 = vmax.xlane.f32.xlu0 %v5468
      %v5470 = vpop.xlane.xlu0 %5469
      %v5471 = vsel %vm5317, %v4294, -inf
      %5472 = vmax.xlane.f32.xlu0 %v5471
      %v5473 = vpop.xlane.xlu0 %5472
      %v5474 = vsel %vm5317, %v4299, -inf
      %5475 = vmax.xlane.f32.xlu0 %v5474
      %v5476 = vpop.xlane.xlu0 %5475
      %v5477 = vsel %vm5317, %v4304, -inf
      %5478 = vmax.xlane.f32.xlu0 %v5477
      %v5479 = vpop.xlane.xlu0 %5478
      %v5480 = vsel %vm5317, %v4309, -inf
      %5481 = vmax.xlane.f32.xlu0 %v5480
      %v5482 = vpop.xlane.xlu0 %5481
      %v5483 = vsel %vm5317, %v4314, -inf
      %5484 = vmax.xlane.f32.xlu0 %v5483
      %v5485 = vpop.xlane.xlu0 %5484
      %v5486 = vsel %vm5317, %v4319, -inf
      %5487 = vmax.xlane.f32.xlu0 %v5486
      %v5488 = vpop.xlane.xlu0 %5487
      %v5489 = vsel %vm5317, %v4324, -inf
      %5490 = vmax.xlane.f32.xlu0 %v5489
      %v5491 = vpop.xlane.xlu0 %5490
      %v5492 = vsel %vm5317, %v4329, -inf
      %5493 = vmax.xlane.f32.xlu0 %v5492
      %v5494 = vpop.xlane.xlu0 %5493
      %v5495 = vsel %vm5317, %v4334, -inf
      %5496 = vmax.xlane.f32.xlu0 %v5495
      %v5497 = vpop.xlane.xlu0 %5496
      %v5498 = vsel %vm5317, %v4339, -inf
      %5499 = vmax.xlane.f32.xlu0 %v5498
      %v5500 = vpop.xlane.xlu0 %5499
      %v5501 = vsel %vm5317, %v4344, -inf
      %5502 = vmax.xlane.f32.xlu0 %v5501
      %v5503 = vpop.xlane.xlu0 %5502
      %v5504 = vsel %vm5317, %v4349, -inf
      %5505 = vmax.xlane.f32.xlu0 %v5504
      %v5506 = vpop.xlane.xlu0 %5505
      %v5507 = vsel %vm5317, %v4354, -inf
      %5508 = vmax.xlane.f32.xlu0 %v5507
      %v5509 = vpop.xlane.xlu0 %5508
      %v5510 = vsel %vm5317, %v4359, -inf
      %5511 = vmax.xlane.f32.xlu0 %v5510
      %v5512 = vpop.xlane.xlu0 %5511
      %v5513 = vsel %vm5317, %v4364, -inf
      %5514 = vmax.xlane.f32.xlu0 %v5513
      %v5515 = vpop.xlane.xlu0 %5514
      %v5516 = vsel %vm5317, %v4369, -inf
      %5517 = vmax.xlane.f32.xlu0 %v5516
      %v5518 = vpop.xlane.xlu0 %5517
      %v5519 = vsel %vm5317, %v4374, -inf
      %5520 = vmax.xlane.f32.xlu0 %v5519
      %v5521 = vpop.xlane.xlu0 %5520
      %v5522 = vsel %vm5317, %v4379, -inf
      %5523 = vmax.xlane.f32.xlu0 %v5522
      %v5524 = vpop.xlane.xlu0 %5523
      %v5525 = vsel %vm5317, %v4384, -inf
      %5526 = vmax.xlane.f32.xlu0 %v5525
      %v5527 = vpop.xlane.xlu0 %5526
      %v5528 = vsel %vm5317, %v4389, -inf
      %5529 = vmax.xlane.f32.xlu0 %v5528
      %v5530 = vpop.xlane.xlu0 %5529
      %v5531 = vsel %vm5317, %v4394, -inf
      %5532 = vmax.xlane.f32.xlu0 %v5531
      %v5533 = vpop.xlane.xlu0 %5532
      %v5534 = vsel %vm5317, %v4399, -inf
      %5535 = vmax.xlane.f32.xlu0 %v5534
      %v5536 = vpop.xlane.xlu0 %5535
      %v5537 = vsel %vm5317, %v4404, -inf
      %5538 = vmax.xlane.f32.xlu0 %v5537
      %v5539 = vpop.xlane.xlu0 %5538
      %v5540 = vsel %vm5317, %v4409, -inf
      %5541 = vmax.xlane.f32.xlu0 %v5540
      %v5542 = vpop.xlane.xlu0 %5541
      %v5543 = vsel %vm5317, %v4414, -inf
      %5544 = vmax.xlane.f32.xlu0 %v5543
      %v5545 = vpop.xlane.xlu0 %5544
      %v5546 = vsel %vm5317, %v4419, -inf
      %5547 = vmax.xlane.f32.xlu0 %v5546
      %v5548 = vpop.xlane.xlu0 %5547
      %v5549 = vsel %vm5317, %v4424, -inf
      %5550 = vmax.xlane.f32.xlu0 %v5549
      %v5551 = vpop.xlane.xlu0 %5550
      %v5552 = vsel %vm5317, %v4429, -inf
      %5553 = vmax.xlane.f32.xlu0 %v5552
      %v5554 = vpop.xlane.xlu0 %5553
      %v5555 = vsel %vm5317, %v4434, -inf
      %5556 = vmax.xlane.f32.xlu0 %v5555
      %v5557 = vpop.xlane.xlu0 %5556
      %v5558 = vsel %vm5317, %v4439, -inf
      %5559 = vmax.xlane.f32.xlu0 %v5558
      %v5560 = vpop.xlane.xlu0 %5559
      %v5561 = vsel %vm5317, %v4444, -inf
      %5562 = vmax.xlane.f32.xlu0 %v5561
      %v5563 = vpop.xlane.xlu0 %5562
      %v5564 = vsel %vm5317, %v4449, -inf
      %5565 = vmax.xlane.f32.xlu0 %v5564
      %v5566 = vpop.xlane.xlu0 %5565
      %v5567 = vsel %vm5317, %v4454, -inf
      %5568 = vmax.xlane.f32.xlu0 %v5567
      %v5569 = vpop.xlane.xlu0 %5568
      %v5570 = vsel %vm5317, %v4459, -inf
      %5571 = vmax.xlane.f32.xlu0 %v5570
      %v5572 = vpop.xlane.xlu0 %5571
      %v5573 = vsel %vm5317, %v4464, -inf
      %5574 = vmax.xlane.f32.xlu0 %v5573
      %v5575 = vpop.xlane.xlu0 %5574
      %v5576 = vsel %vm5317, %v4469, -inf
      %5577 = vmax.xlane.f32.xlu0 %v5576
      %v5578 = vpop.xlane.xlu0 %5577
      %v5579 = vsel %vm5317, %v4474, -inf
      %5580 = vmax.xlane.f32.xlu0 %v5579
      %v5581 = vpop.xlane.xlu0 %5580
      %v5582 = vsel %vm5317, %v4479, -inf
      %5583 = vmax.xlane.f32.xlu0 %v5582
      %v5584 = vpop.xlane.xlu0 %5583
      %v5585 = vsel %vm5317, %v4484, -inf
      %5586 = vmax.xlane.f32.xlu0 %v5585
      %v5587 = vpop.xlane.xlu0 %5586
      %v5588 = vsel %vm5317, %v4489, -inf
      %5589 = vmax.xlane.f32.xlu0 %v5588
      %v5590 = vpop.xlane.xlu0 %5589
      %v5591 = vsel %vm5317, %v4494, -inf
      %5592 = vmax.xlane.f32.xlu0 %v5591
      %v5593 = vpop.xlane.xlu0 %5592
      %v5594 = vsel %vm5317, %v4499, -inf
      %5595 = vmax.xlane.f32.xlu0 %v5594
      %v5596 = vpop.xlane.xlu0 %5595
      %v5597 = vsel %vm5317, %v4504, -inf
      %5598 = vmax.xlane.f32.xlu0 %v5597
      %v5599 = vpop.xlane.xlu0 %5598
      %v5600 = vsel %vm5317, %v4509, -inf
      %5601 = vmax.xlane.f32.xlu0 %v5600
      %v5602 = vpop.xlane.xlu0 %5601
      %v5603 = vsel %vm5317, %v4514, -inf
      %5604 = vmax.xlane.f32.xlu0 %v5603
      %v5605 = vpop.xlane.xlu0 %5604
      %v5606 = vsel %vm5317, %v4519, -inf
      %5607 = vmax.xlane.f32.xlu0 %v5606
      %v5608 = vpop.xlane.xlu0 %5607
      %v5609 = vsel %vm5317, %v4524, -inf
      %5610 = vmax.xlane.f32.xlu0 %v5609
      %v5611 = vpop.xlane.xlu0 %5610
      %v5612 = vsel %vm5317, %v4529, -inf
      %5613 = vmax.xlane.f32.xlu0 %v5612
      %v5614 = vpop.xlane.xlu0 %5613
      %v5615 = vsel %vm5317, %v4534, -inf
      %5616 = vmax.xlane.f32.xlu0 %v5615
      %v5617 = vpop.xlane.xlu0 %5616
      %v5618 = vsel %vm5317, %v4539, -inf
      %5619 = vmax.xlane.f32.xlu0 %v5618
      %v5620 = vpop.xlane.xlu0 %5619
      %v5621 = vsel %vm5317, %v4544, -inf
      %5622 = vmax.xlane.f32.xlu0 %v5621
      %v5623 = vpop.xlane.xlu0 %5622
      %v5624 = vsel %vm5317, %v4549, -inf
      %5625 = vmax.xlane.f32.xlu0 %v5624
      %v5626 = vpop.xlane.xlu0 %5625
      %v5627 = vsel %vm5317, %v4554, -inf
      %5628 = vmax.xlane.f32.xlu0 %v5627
      %v5629 = vpop.xlane.xlu0 %5628
      %v5630 = vsel %vm5317, %v4559, -inf
      %5631 = vmax.xlane.f32.xlu0 %v5630
      %v5632 = vpop.xlane.xlu0 %5631
      %v5633 = vsel %vm5317, %v4564, -inf
      %5634 = vmax.xlane.f32.xlu0 %v5633
      %v5635 = vpop.xlane.xlu0 %5634
      %v5636 = vsel %vm5317, %v4569, -inf
      %5637 = vmax.xlane.f32.xlu0 %v5636
      %v5638 = vpop.xlane.xlu0 %5637
      %v5639 = vsel %vm5317, %v4574, -inf
      %5640 = vmax.xlane.f32.xlu0 %v5639
      %v5641 = vpop.xlane.xlu0 %5640
      %v5642 = vsel %vm5317, %v4579, -inf
      %5643 = vmax.xlane.f32.xlu0 %v5642
      %v5644 = vpop.xlane.xlu0 %5643
      %v5645 = vsel %vm5317, %v4584, -inf
      %5646 = vmax.xlane.f32.xlu0 %v5645
      %v5647 = vpop.xlane.xlu0 %5646
      %v5648 = vsel %vm5317, %v4589, -inf
      %5649 = vmax.xlane.f32.xlu0 %v5648
      %v5650 = vpop.xlane.xlu0 %5649
      %v5651 = vsel %vm5317, %v4594, -inf
      %5652 = vmax.xlane.f32.xlu0 %v5651
      %v5653 = vpop.xlane.xlu0 %5652
      %v5654 = vsel %vm5317, %v4599, -inf
      %5655 = vmax.xlane.f32.xlu0 %v5654
      %v5656 = vpop.xlane.xlu0 %5655
      %v5657 = vsel %vm5317, %v4604, -inf
      %5658 = vmax.xlane.f32.xlu0 %v5657
      %v5659 = vpop.xlane.xlu0 %5658
      %v5660 = vsel %vm5317, %v4609, -inf
      %5661 = vmax.xlane.f32.xlu0 %v5660
      %v5662 = vpop.xlane.xlu0 %5661
      %v5663 = vsel %vm5317, %v4614, -inf
      %5664 = vmax.xlane.f32.xlu0 %v5663
      %v5665 = vpop.xlane.xlu0 %5664
      %v5666 = vsel %vm5317, %v4619, -inf
      %5667 = vmax.xlane.f32.xlu0 %v5666
      %v5668 = vpop.xlane.xlu0 %5667
      %v5669 = vsel %vm5317, %v4624, -inf
      %5670 = vmax.xlane.f32.xlu0 %v5669
      %v5671 = vpop.xlane.xlu0 %5670
      %v5672 = vsel %vm5317, %v4629, -inf
      %5673 = vmax.xlane.f32.xlu0 %v5672
      %v5674 = vpop.xlane.xlu0 %5673
      %v5675 = vsel %vm5317, %v4634, -inf
      %5676 = vmax.xlane.f32.xlu0 %v5675
      %v5677 = vpop.xlane.xlu0 %5676
      %v5678 = vsel %vm5317, %v4639, -inf
      %5679 = vmax.xlane.f32.xlu0 %v5678
      %v5680 = vpop.xlane.xlu0 %5679
      %v5681 = vsel %vm5317, %v4644, -inf
      %5682 = vmax.xlane.f32.xlu0 %v5681
      %v5683 = vpop.xlane.xlu0 %5682
      %v5684 = vsel %vm5317, %v4649, -inf
      %5685 = vmax.xlane.f32.xlu0 %v5684
      %v5686 = vpop.xlane.xlu0 %5685
      %v5687 = vsel %vm5317, %v4654, -inf
      %5688 = vmax.xlane.f32.xlu0 %v5687
      %v5689 = vpop.xlane.xlu0 %5688
      %v5690 = vsel %vm5317, %v4659, -inf
      %5691 = vmax.xlane.f32.xlu0 %v5690
      %v5692 = vpop.xlane.xlu0 %5691
      %v5693 = vsel %vm5317, %v4664, -inf
      %5694 = vmax.xlane.f32.xlu0 %v5693
      %v5695 = vpop.xlane.xlu0 %5694
      %v5696 = vsel %vm5317, %v4669, -inf
      %5697 = vmax.xlane.f32.xlu0 %v5696
      %v5698 = vpop.xlane.xlu0 %5697
      %v5699 = vsel %vm5317, %v4674, -inf
      %5700 = vmax.xlane.f32.xlu0 %v5699
      %v5701 = vpop.xlane.xlu0 %5700
      %v5702 = vsel %vm5317, %v4679, -inf
      %5703 = vmax.xlane.f32.xlu0 %v5702
      %v5704 = vpop.xlane.xlu0 %5703
      %v5705 = vsel %vm5317, %v4684, -inf
      %5706 = vmax.xlane.f32.xlu0 %v5705
      %v5707 = vpop.xlane.xlu0 %5706
      %v5708 = vsel %vm5317, %v4689, -inf
      %5709 = vmax.xlane.f32.xlu0 %v5708
      %v5710 = vpop.xlane.xlu0 %5709
      %v5711 = vsel %vm5317, %v4694, -inf
      %5712 = vmax.xlane.f32.xlu0 %v5711
      %v5713 = vpop.xlane.xlu0 %5712
      %v5714 = vsel %vm5317, %v4699, -inf
      %5715 = vmax.xlane.f32.xlu0 %v5714
      %v5716 = vpop.xlane.xlu0 %5715
      %v5717 = vsel %vm5317, %v4704, -inf
      %5718 = vmax.xlane.f32.xlu0 %v5717
      %v5719 = vpop.xlane.xlu0 %5718
      %v5720 = vsel %vm5317, %v4709, -inf
      %5721 = vmax.xlane.f32.xlu0 %v5720
      %v5722 = vpop.xlane.xlu0 %5721
      %v5723 = vsel %vm5317, %v4714, -inf
      %5724 = vmax.xlane.f32.xlu0 %v5723
      %v5725 = vpop.xlane.xlu0 %5724
      %v5726 = vsel %vm5317, %v4719, -inf
      %5727 = vmax.xlane.f32.xlu0 %v5726
      %v5728 = vpop.xlane.xlu0 %5727
      %v5729 = vsel %vm5317, %v4724, -inf
      %5730 = vmax.xlane.f32.xlu0 %v5729
      %v5731 = vpop.xlane.xlu0 %5730
      %v5732 = vsel %vm5317, %v4729, -inf
      %5733 = vmax.xlane.f32.xlu0 %v5732
      %v5734 = vpop.xlane.xlu0 %5733
      %v5735 = vsel %vm5317, %v4734, -inf
      %5736 = vmax.xlane.f32.xlu0 %v5735
      %v5737 = vpop.xlane.xlu0 %5736
      %v5738 = vsel %vm5317, %v4739, -inf
      %5739 = vmax.xlane.f32.xlu0 %v5738
      %v5740 = vpop.xlane.xlu0 %5739
      %v5741 = vsel %vm5317, %v4744, -inf
      %5742 = vmax.xlane.f32.xlu0 %v5741
      %v5743 = vpop.xlane.xlu0 %5742
      %v5744 = vsel %vm5317, %v4749, -inf
      %5745 = vmax.xlane.f32.xlu0 %v5744
      %v5746 = vpop.xlane.xlu0 %5745
      %v5747 = vsel %vm5317, %v4754, -inf
      %5748 = vmax.xlane.f32.xlu0 %v5747
      %v5749 = vpop.xlane.xlu0 %5748
      %v5750 = vsel %vm5317, %v4759, -inf
      %5751 = vmax.xlane.f32.xlu0 %v5750
      %v5752 = vpop.xlane.xlu0 %5751
      %v5753 = vsel %vm5317, %v4764, -inf
      %5754 = vmax.xlane.f32.xlu0 %v5753
      %v5755 = vpop.xlane.xlu0 %5754
      %v5756 = vsel %vm5317, %v4769, -inf
      %5757 = vmax.xlane.f32.xlu0 %v5756
      %v5758 = vpop.xlane.xlu0 %5757
      %v5759 = vsel %vm5317, %v4774, -inf
      %5760 = vmax.xlane.f32.xlu0 %v5759
      %v5761 = vpop.xlane.xlu0 %5760
      %v5762 = vsel %vm5317, %v4779, -inf
      %5763 = vmax.xlane.f32.xlu0 %v5762
      %v5764 = vpop.xlane.xlu0 %5763
      %v5765 = vsel %vm5317, %v4784, -inf
      %5766 = vmax.xlane.f32.xlu0 %v5765
      %v5767 = vpop.xlane.xlu0 %5766
      %v5768 = vsel %vm5317, %v4789, -inf
      %5769 = vmax.xlane.f32.xlu0 %v5768
      %v5770 = vpop.xlane.xlu0 %5769
      %v5771 = vsel %vm5317, %v4794, -inf
      %5772 = vmax.xlane.f32.xlu0 %v5771
      %v5773 = vpop.xlane.xlu0 %5772
      %v5774 = vsel %vm5317, %v4799, -inf
      %5775 = vmax.xlane.f32.xlu0 %v5774
      %v5776 = vpop.xlane.xlu0 %5775
      %v5777 = vsel %vm5317, %v4804, -inf
      %5778 = vmax.xlane.f32.xlu0 %v5777
      %v5779 = vpop.xlane.xlu0 %5778
      %v5780 = vsel %vm5317, %v4809, -inf
      %5781 = vmax.xlane.f32.xlu0 %v5780
      %v5782 = vpop.xlane.xlu0 %5781
      %v5783 = vsel %vm5317, %v4814, -inf
      %5784 = vmax.xlane.f32.xlu0 %v5783
      %v5785 = vpop.xlane.xlu0 %5784
      %v5786 = vsel %vm5317, %v4819, -inf
      %5787 = vmax.xlane.f32.xlu0 %v5786
      %v5788 = vpop.xlane.xlu0 %5787
      %v5789 = vsel %vm5317, %v4824, -inf
      %5790 = vmax.xlane.f32.xlu0 %v5789
      %v5791 = vpop.xlane.xlu0 %5790
      %v5792 = vsel %vm5317, %v4829, -inf
      %5793 = vmax.xlane.f32.xlu0 %v5792
      %v5794 = vpop.xlane.xlu0 %5793
      %v5795 = vsel %vm5317, %v4834, -inf
      %5796 = vmax.xlane.f32.xlu0 %v5795
      %v5797 = vpop.xlane.xlu0 %5796
      %v5798 = vsel %vm5317, %v4839, -inf
      %5799 = vmax.xlane.f32.xlu0 %v5798
      %v5800 = vpop.xlane.xlu0 %5799
      %v5801 = vsel %vm5317, %v4844, -inf
      %5802 = vmax.xlane.f32.xlu0 %v5801
      %v5803 = vpop.xlane.xlu0 %5802
      %v5804 = vsel %vm5317, %v4849, -inf
      %5805 = vmax.xlane.f32.xlu0 %v5804
      %v5806 = vpop.xlane.xlu0 %5805
      %v5807 = vsel %vm5317, %v4854, -inf
      %5808 = vmax.xlane.f32.xlu0 %v5807
      %v5809 = vpop.xlane.xlu0 %5808
      %v5810 = vsel %vm5317, %v4859, -inf
      %5811 = vmax.xlane.f32.xlu0 %v5810
      %v5812 = vpop.xlane.xlu0 %5811
      %v5813 = vsel %vm5317, %v4864, -inf
      %5814 = vmax.xlane.f32.xlu0 %v5813
      %v5815 = vpop.xlane.xlu0 %5814
      %v5816 = vsel %vm5317, %v4869, -inf
      %5817 = vmax.xlane.f32.xlu0 %v5816
      %v5818 = vpop.xlane.xlu0 %5817
      %v5819 = vsel %vm5317, %v4874, -inf
      %5820 = vmax.xlane.f32.xlu0 %v5819
      %v5821 = vpop.xlane.xlu0 %5820
      %v5822 = vsel %vm5317, %v4879, -inf
      %5823 = vmax.xlane.f32.xlu0 %v5822
      %v5824 = vpop.xlane.xlu0 %5823
      %v5825 = vsel %vm5317, %v4884, -inf
      %5826 = vmax.xlane.f32.xlu0 %v5825
      %v5827 = vpop.xlane.xlu0 %5826
      %v5828 = vsel %vm5317, %v4889, -inf
      %5829 = vmax.xlane.f32.xlu0 %v5828
      %v5830 = vpop.xlane.xlu0 %5829
      %v5831 = vsel %vm5317, %v4894, -inf
      %5832 = vmax.xlane.f32.xlu0 %v5831
      %v5833 = vpop.xlane.xlu0 %5832
      %v5834 = vsel %vm5317, %v4899, -inf
      %5835 = vmax.xlane.f32.xlu0 %v5834
      %v5836 = vpop.xlane.xlu0 %5835
      %v5837 = vsel %vm5317, %v4904, -inf
      %5838 = vmax.xlane.f32.xlu0 %v5837
      %v5839 = vpop.xlane.xlu0 %5838
      %v5840 = vsel %vm5317, %v4909, -inf
      %5841 = vmax.xlane.f32.xlu0 %v5840
      %v5842 = vpop.xlane.xlu0 %5841
      %v5843 = vsel %vm5317, %v4914, -inf
      %5844 = vmax.xlane.f32.xlu0 %v5843
      %v5845 = vpop.xlane.xlu0 %5844
      %v5846 = vsel %vm5317, %v4919, -inf
      %5847 = vmax.xlane.f32.xlu0 %v5846
      %v5848 = vpop.xlane.xlu0 %5847
      %v5849 = vsel %vm5317, %v4924, -inf
      %5850 = vmax.xlane.f32.xlu0 %v5849
      %v5851 = vpop.xlane.xlu0 %5850
      %v5852 = vsel %vm5317, %v4929, -inf
      %5853 = vmax.xlane.f32.xlu0 %v5852
      %v5854 = vpop.xlane.xlu0 %5853
      %v5855 = vsel %vm5317, %v4934, -inf
      %5856 = vmax.xlane.f32.xlu0 %v5855
      %v5857 = vpop.xlane.xlu0 %5856
      %v5858 = vsel %vm5317, %v4939, -inf
      %5859 = vmax.xlane.f32.xlu0 %v5858
      %v5860 = vpop.xlane.xlu0 %5859
      %v5861 = vsel %vm5317, %v4944, -inf
      %5862 = vmax.xlane.f32.xlu0 %v5861
      %v5863 = vpop.xlane.xlu0 %5862
      %v5864 = vsel %vm5317, %v4949, -inf
      %5865 = vmax.xlane.f32.xlu0 %v5864
      %v5866 = vpop.xlane.xlu0 %5865
      %v5867 = vsel %vm5317, %v4954, -inf
      %5868 = vmax.xlane.f32.xlu0 %v5867
      %v5869 = vpop.xlane.xlu0 %5868
      %v5870 = vsel %vm5317, %v4959, -inf
      %5871 = vmax.xlane.f32.xlu0 %v5870
      %v5872 = vpop.xlane.xlu0 %5871
      %v5873 = vsel %vm5317, %v4964, -inf
      %5874 = vmax.xlane.f32.xlu0 %v5873
      %v5875 = vpop.xlane.xlu0 %5874
      %v5876 = vsel %vm5317, %v4969, -inf
      %5877 = vmax.xlane.f32.xlu0 %v5876
      %v5878 = vpop.xlane.xlu0 %5877
      %v5879 = vsel %vm5317, %v4974, -inf
      %5880 = vmax.xlane.f32.xlu0 %v5879
      %v5881 = vpop.xlane.xlu0 %5880
      %v5882 = vsel %vm5317, %v4979, -inf
      %5883 = vmax.xlane.f32.xlu0 %v5882
      %v5884 = vpop.xlane.xlu0 %5883
      %v5885 = vsel %vm5317, %v4984, -inf
      %5886 = vmax.xlane.f32.xlu0 %v5885
      %v5887 = vpop.xlane.xlu0 %5886
      %v5888 = vsel %vm5317, %v4989, -inf
      %5889 = vmax.xlane.f32.xlu0 %v5888
      %v5890 = vpop.xlane.xlu0 %5889
      %v5891 = vsel %vm5317, %v4994, -inf
      %5892 = vmax.xlane.f32.xlu0 %v5891
      %v5893 = vpop.xlane.xlu0 %5892
      %v5894 = vsel %vm5317, %v4999, -inf
      %5895 = vmax.xlane.f32.xlu0 %v5894
      %v5896 = vpop.xlane.xlu0 %5895
      %v5897 = vsel %vm5317, %v5004, -inf
      %5898 = vmax.xlane.f32.xlu0 %v5897
      %v5899 = vpop.xlane.xlu0 %5898
      %v5900 = vsel %vm5317, %v5009, -inf
      %5901 = vmax.xlane.f32.xlu0 %v5900
      %v5902 = vpop.xlane.xlu0 %5901
      %v5903 = vsel %vm5317, %v5014, -inf
      %5904 = vmax.xlane.f32.xlu0 %v5903
      %v5905 = vpop.xlane.xlu0 %5904
      %v5906 = vsel %vm5317, %v5019, -inf
      %5907 = vmax.xlane.f32.xlu0 %v5906
      %v5908 = vpop.xlane.xlu0 %5907
      %v5909 = vsel %vm5317, %v5024, -inf
      %5910 = vmax.xlane.f32.xlu0 %v5909
      %v5911 = vpop.xlane.xlu0 %5910
      %v5912 = vsel %vm5317, %v5029, -inf
      %5913 = vmax.xlane.f32.xlu0 %v5912
      %v5914 = vpop.xlane.xlu0 %5913
      %v5915 = vsel %vm5317, %v5034, -inf
      %5916 = vmax.xlane.f32.xlu0 %v5915
      %v5917 = vpop.xlane.xlu0 %5916
      %v5918 = vsel %vm5317, %v5039, -inf
      %5919 = vmax.xlane.f32.xlu0 %v5918
      %v5920 = vpop.xlane.xlu0 %5919
      %v5921 = vsel %vm5317, %v5044, -inf
      %5922 = vmax.xlane.f32.xlu0 %v5921
      %v5923 = vpop.xlane.xlu0 %5922
      %v5924 = vsel %vm5317, %v5049, -inf
      %5925 = vmax.xlane.f32.xlu0 %v5924
      %v5926 = vpop.xlane.xlu0 %5925
      %v5927 = vsel %vm5317, %v5054, -inf
      %5928 = vmax.xlane.f32.xlu0 %v5927
      %v5929 = vpop.xlane.xlu0 %5928
      %v5930 = vsel %vm5317, %v5059, -inf
      %5931 = vmax.xlane.f32.xlu0 %v5930
      %v5932 = vpop.xlane.xlu0 %5931
      %v5933 = vsel %vm5317, %v5064, -inf
      %5934 = vmax.xlane.f32.xlu0 %v5933
      %v5935 = vpop.xlane.xlu0 %5934
      %v5936 = vsel %vm5317, %v5069, -inf
      %5937 = vmax.xlane.f32.xlu0 %v5936
      %v5938 = vpop.xlane.xlu0 %5937
      %v5939 = vsel %vm5317, %v5074, -inf
      %5940 = vmax.xlane.f32.xlu0 %v5939
      %v5941 = vpop.xlane.xlu0 %5940
      %v5942 = vsel %vm5317, %v5079, -inf
      %5943 = vmax.xlane.f32.xlu0 %v5942
      %v5944 = vpop.xlane.xlu0 %5943
      %v5945 = vsel %vm5317, %v5084, -inf
      %5946 = vmax.xlane.f32.xlu0 %v5945
      %v5947 = vpop.xlane.xlu0 %5946
      %v5948 = vsel %vm5317, %v5089, -inf
      %5949 = vmax.xlane.f32.xlu0 %v5948
      %v5950 = vpop.xlane.xlu0 %5949
      %v5951 = vsel %vm5317, %v5094, -inf
      %5952 = vmax.xlane.f32.xlu0 %v5951
      %v5953 = vpop.xlane.xlu0 %5952
      %v5954 = vsel %vm5317, %v5099, -inf
      %5955 = vmax.xlane.f32.xlu0 %v5954
      %v5956 = vpop.xlane.xlu0 %5955
      %v5957 = vsel %vm5317, %v5104, -inf
      %5958 = vmax.xlane.f32.xlu0 %v5957
      %v5959 = vpop.xlane.xlu0 %5958
      %v5960 = vsel %vm5317, %v5109, -inf
      %5961 = vmax.xlane.f32.xlu0 %v5960
      %v5962 = vpop.xlane.xlu0 %5961
      %v5963 = vsel %vm5317, %v5114, -inf
      %5964 = vmax.xlane.f32.xlu0 %v5963
      %v5965 = vpop.xlane.xlu0 %5964
      %v5966 = vsel %vm5317, %v5119, -inf
      %5967 = vmax.xlane.f32.xlu0 %v5966
      %v5968 = vpop.xlane.xlu0 %5967
      %v5969 = vsel %vm5317, %v5124, -inf
      %5970 = vmax.xlane.f32.xlu0 %v5969
      %v5971 = vpop.xlane.xlu0 %5970
      %v5972 = vsel %vm5317, %v5129, -inf
      %5973 = vmax.xlane.f32.xlu0 %v5972
      %v5974 = vpop.xlane.xlu0 %5973
      %v5975 = vsel %vm5317, %v5134, -inf
      %5976 = vmax.xlane.f32.xlu0 %v5975
      %v5977 = vpop.xlane.xlu0 %5976
      %v5978 = vsel %vm5317, %v5139, -inf
      %5979 = vmax.xlane.f32.xlu0 %v5978
      %v5980 = vpop.xlane.xlu0 %5979
      %v5981 = vsel %vm5317, %v5144, -inf
      %5982 = vmax.xlane.f32.xlu0 %v5981
      %v5983 = vpop.xlane.xlu0 %5982
      %v5984 = vsel %vm5317, %v5149, -inf
      %5985 = vmax.xlane.f32.xlu0 %v5984
      %v5986 = vpop.xlane.xlu0 %5985
      %v5987 = vsel %vm5317, %v5154, -inf
      %5988 = vmax.xlane.f32.xlu0 %v5987
      %v5989 = vpop.xlane.xlu0 %5988
      %v5990 = vsel %vm5317, %v5159, -inf
      %5991 = vmax.xlane.f32.xlu0 %v5990
      %v5992 = vpop.xlane.xlu0 %5991
      %v5993 = vsel %vm5317, %v5164, -inf
      %5994 = vmax.xlane.f32.xlu0 %v5993
      %v5995 = vpop.xlane.xlu0 %5994
      %v5996 = vsel %vm5317, %v5169, -inf
      %5997 = vmax.xlane.f32.xlu0 %v5996
      %v5998 = vpop.xlane.xlu0 %5997
      %v5999 = vsel %vm5317, %v5174, -inf
      %6000 = vmax.xlane.f32.xlu0 %v5999
      %v6001 = vpop.xlane.xlu0 %6000
      %v6002 = vsel %vm5317, %v5179, -inf
      %6003 = vmax.xlane.f32.xlu0 %v6002
      %v6004 = vpop.xlane.xlu0 %6003
      %v6005 = vsel %vm5317, %v5184, -inf
      %6006 = vmax.xlane.f32.xlu0 %v6005
      %v6007 = vpop.xlane.xlu0 %6006
      %v6008 = vsel %vm5317, %v5189, -inf
      %6009 = vmax.xlane.f32.xlu0 %v6008
      %v6010 = vpop.xlane.xlu0 %6009
      %v6011 = vsel %vm5317, %v5194, -inf
      %6012 = vmax.xlane.f32.xlu0 %v6011
      %v6013 = vpop.xlane.xlu0 %6012
      %v6014 = vsel %vm5317, %v5199, -inf
      %6015 = vmax.xlane.f32.xlu0 %v6014
      %v6016 = vpop.xlane.xlu0 %6015
      %v6017 = vsel %vm5317, %v5204, -inf
      %6018 = vmax.xlane.f32.xlu0 %v6017
      %v6019 = vpop.xlane.xlu0 %6018
      %v6020 = vsel %vm5317, %v5209, -inf
      %6021 = vmax.xlane.f32.xlu0 %v6020
      %v6022 = vpop.xlane.xlu0 %6021
      %v6023 = vsel %vm5317, %v5214, -inf
      %6024 = vmax.xlane.f32.xlu0 %v6023
      %v6025 = vpop.xlane.xlu0 %6024
      %v6026 = vsel %vm5317, %v5219, -inf
      %6027 = vmax.xlane.f32.xlu0 %v6026
      %v6028 = vpop.xlane.xlu0 %6027
      %v6029 = vsel %vm5317, %v5224, -inf
      %6030 = vmax.xlane.f32.xlu0 %v6029
      %v6031 = vpop.xlane.xlu0 %6030
      %v6032 = vsel %vm5317, %v5229, -inf
      %6033 = vmax.xlane.f32.xlu0 %v6032
      %v6034 = vpop.xlane.xlu0 %6033
      %v6035 = vsel %vm5317, %v5234, -inf
      %6036 = vmax.xlane.f32.xlu0 %v6035
      %v6037 = vpop.xlane.xlu0 %6036
      %v6038 = vsel %vm5317, %v5239, -inf
      %6039 = vmax.xlane.f32.xlu0 %v6038
      %v6040 = vpop.xlane.xlu0 %6039
      %v6041 = vsel %vm5317, %v5244, -inf
      %6042 = vmax.xlane.f32.xlu0 %v6041
      %v6043 = vpop.xlane.xlu0 %6042
      %v6044 = vsel %vm5317, %v5249, -inf
      %6045 = vmax.xlane.f32.xlu0 %v6044
      %v6046 = vpop.xlane.xlu0 %6045
      %v6047 = vsel %vm5317, %v5254, -inf
      %6048 = vmax.xlane.f32.xlu0 %v6047
      %v6049 = vpop.xlane.xlu0 %6048
      %v6050 = vsel %vm5317, %v5259, -inf
      %6051 = vmax.xlane.f32.xlu0 %v6050
      %v6052 = vpop.xlane.xlu0 %6051
      %v6053 = vsel %vm5317, %v5264, -inf
      %6054 = vmax.xlane.f32.xlu0 %v6053
      %v6055 = vpop.xlane.xlu0 %6054
      %v6056 = vsel %vm5317, %v5269, -inf
      %6057 = vmax.xlane.f32.xlu0 %v6056
      %v6058 = vpop.xlane.xlu0 %6057
      %v6059 = vsel %vm5317, %v5274, -inf
      %6060 = vmax.xlane.f32.xlu0 %v6059
      %v6061 = vpop.xlane.xlu0 %6060
      %v6062 = vsel %vm5317, %v5279, -inf
      %6063 = vmax.xlane.f32.xlu0 %v6062
      %v6064 = vpop.xlane.xlu0 %6063
      %v6065 = vsel %vm5317, %v5284, -inf
      %6066 = vmax.xlane.f32.xlu0 %v6065
      %v6067 = vpop.xlane.xlu0 %6066
      %v6068 = vsel %vm5317, %v5289, -inf
      %6069 = vmax.xlane.f32.xlu0 %v6068
      %v6070 = vpop.xlane.xlu0 %6069
      %v6071 = vsel %vm5317, %v5294, -inf
      %6072 = vmax.xlane.f32.xlu0 %v6071
      %v6073 = vpop.xlane.xlu0 %6072
      %v6074 = vsel %vm5317, %v5299, -inf
      %6075 = vmax.xlane.f32.xlu0 %v6074
      %v6076 = vpop.xlane.xlu0 %6075
      %v6077 = vsel %vm5317, %v5304, -inf
      %6078 = vmax.xlane.f32.xlu0 %v6077
      %v6079 = vpop.xlane.xlu0 %6078
      %v6080 = vsel %vm5317, %v5309, -inf
      %6081 = vmax.xlane.f32.xlu0 %v6080
      %v6082 = vpop.xlane.xlu0 %6081
      %v6083 = vsel %vm5317, %v5314, -inf
      %6084 = vmax.xlane.f32.xlu0 %v6083
      %v6085 = vpop.xlane.xlu0 %6084
      %v6086 = vsub.f32 %v4039, %v5320
      %v6087 = vsub.f32 %v4044, %v5323
      %v6088 = vsub.f32 %v4049, %v5326
      %v6089 = vsub.f32 %v4054, %v5329
      %v6090 = vsub.f32 %v4059, %v5332
      %v6091 = vsub.f32 %v4064, %v5335
      %v6092 = vsub.f32 %v4069, %v5338
      %v6093 = vsub.f32 %v4074, %v5341
      %v6094 = vsub.f32 %v4079, %v5344
      %v6095 = vsub.f32 %v4084, %v5347
      %v6096 = vsub.f32 %v4089, %v5350
      %v6097 = vsub.f32 %v4094, %v5353
      %v6098 = vsub.f32 %v4099, %v5356
      %v6099 = vsub.f32 %v4104, %v5359
      %v6100 = vsub.f32 %v4109, %v5362
      %v6101 = vsub.f32 %v4114, %v5365
      %v6102 = vsub.f32 %v4119, %v5368
      %v6103 = vsub.f32 %v4124, %v5371
      %v6104 = vsub.f32 %v4129, %v5374
      %v6105 = vsub.f32 %v4134, %v5377
      %v6106 = vsub.f32 %v4139, %v5380
      %v6107 = vsub.f32 %v4144, %v5383
      %v6108 = vsub.f32 %v4149, %v5386
      %v6109 = vsub.f32 %v4154, %v5389
      %v6110 = vsub.f32 %v4159, %v5392
      %v6111 = vsub.f32 %v4164, %v5395
      %v6112 = vsub.f32 %v4169, %v5398
      %v6113 = vsub.f32 %v4174, %v5401
      %v6114 = vsub.f32 %v4179, %v5404
      %v6115 = vsub.f32 %v4184, %v5407
      %v6116 = vsub.f32 %v4189, %v5410
      %v6117 = vsub.f32 %v4194, %v5413
      %v6118 = vsub.f32 %v4199, %v5416
      %v6119 = vsub.f32 %v4204, %v5419
      %v6120 = vsub.f32 %v4209, %v5422
      %v6121 = vsub.f32 %v4214, %v5425
      %v6122 = vsub.f32 %v4219, %v5428
      %v6123 = vsub.f32 %v4224, %v5431
      %v6124 = vsub.f32 %v4229, %v5434
      %v6125 = vsub.f32 %v4234, %v5437
      %v6126 = vsub.f32 %v4239, %v5440
      %v6127 = vsub.f32 %v4244, %v5443
      %v6128 = vsub.f32 %v4249, %v5446
      %v6129 = vsub.f32 %v4254, %v5449
      %v6130 = vsub.f32 %v4259, %v5452
      %v6131 = vsub.f32 %v4264, %v5455
      %v6132 = vsub.f32 %v4269, %v5458
      %v6133 = vsub.f32 %v4274, %v5461
      %v6134 = vsub.f32 %v4279, %v5464
      %v6135 = vsub.f32 %v4284, %v5467
      %v6136 = vsub.f32 %v4289, %v5470
      %v6137 = vsub.f32 %v4294, %v5473
      %v6138 = vsub.f32 %v4299, %v5476
      %v6139 = vsub.f32 %v4304, %v5479
      %v6140 = vsub.f32 %v4309, %v5482
      %v6141 = vsub.f32 %v4314, %v5485
      %v6142 = vsub.f32 %v4319, %v5488
      %v6143 = vsub.f32 %v4324, %v5491
      %v6144 = vsub.f32 %v4329, %v5494
      %v6145 = vsub.f32 %v4334, %v5497
      %v6146 = vsub.f32 %v4339, %v5500
      %v6147 = vsub.f32 %v4344, %v5503
      %v6148 = vsub.f32 %v4349, %v5506
      %v6149 = vsub.f32 %v4354, %v5509
      %v6150 = vsub.f32 %v4359, %v5512
      %v6151 = vsub.f32 %v4364, %v5515
      %v6152 = vsub.f32 %v4369, %v5518
      %v6153 = vsub.f32 %v4374, %v5521
      %v6154 = vsub.f32 %v4379, %v5524
      %v6155 = vsub.f32 %v4384, %v5527
      %v6156 = vsub.f32 %v4389, %v5530
      %v6157 = vsub.f32 %v4394, %v5533
      %v6158 = vsub.f32 %v4399, %v5536
      %v6159 = vsub.f32 %v4404, %v5539
      %v6160 = vsub.f32 %v4409, %v5542
      %v6161 = vsub.f32 %v4414, %v5545
      %v6162 = vsub.f32 %v4419, %v5548
      %v6163 = vsub.f32 %v4424, %v5551
      %v6164 = vsub.f32 %v4429, %v5554
      %v6165 = vsub.f32 %v4434, %v5557
      %v6166 = vsub.f32 %v4439, %v5560
      %v6167 = vsub.f32 %v4444, %v5563
      %v6168 = vsub.f32 %v4449, %v5566
      %v6169 = vsub.f32 %v4454, %v5569
      %v6170 = vsub.f32 %v4459, %v5572
      %v6171 = vsub.f32 %v4464, %v5575
      %v6172 = vsub.f32 %v4469, %v5578
      %v6173 = vsub.f32 %v4474, %v5581
      %v6174 = vsub.f32 %v4479, %v5584
      %v6175 = vsub.f32 %v4484, %v5587
      %v6176 = vsub.f32 %v4489, %v5590
      %v6177 = vsub.f32 %v4494, %v5593
      %v6178 = vsub.f32 %v4499, %v5596
      %v6179 = vsub.f32 %v4504, %v5599
      %v6180 = vsub.f32 %v4509, %v5602
      %v6181 = vsub.f32 %v4514, %v5605
      %v6182 = vsub.f32 %v4519, %v5608
      %v6183 = vsub.f32 %v4524, %v5611
      %v6184 = vsub.f32 %v4529, %v5614
      %v6185 = vsub.f32 %v4534, %v5617
      %v6186 = vsub.f32 %v4539, %v5620
      %v6187 = vsub.f32 %v4544, %v5623
      %v6188 = vsub.f32 %v4549, %v5626
      %v6189 = vsub.f32 %v4554, %v5629
      %v6190 = vsub.f32 %v4559, %v5632
      %v6191 = vsub.f32 %v4564, %v5635
      %v6192 = vsub.f32 %v4569, %v5638
      %v6193 = vsub.f32 %v4574, %v5641
      %v6194 = vsub.f32 %v4579, %v5644
      %v6195 = vsub.f32 %v4584, %v5647
      %v6196 = vsub.f32 %v4589, %v5650
      %v6197 = vsub.f32 %v4594, %v5653
      %v6198 = vsub.f32 %v4599, %v5656
      %v6199 = vsub.f32 %v4604, %v5659
      %v6200 = vsub.f32 %v4609, %v5662
      %v6201 = vsub.f32 %v4614, %v5665
      %v6202 = vsub.f32 %v4619, %v5668
      %v6203 = vsub.f32 %v4624, %v5671
      %v6204 = vsub.f32 %v4629, %v5674
      %v6205 = vsub.f32 %v4634, %v5677
      %v6206 = vsub.f32 %v4639, %v5680
      %v6207 = vsub.f32 %v4644, %v5683
      %v6208 = vsub.f32 %v4649, %v5686
      %v6209 = vsub.f32 %v4654, %v5689
      %v6210 = vsub.f32 %v4659, %v5692
      %v6211 = vsub.f32 %v4664, %v5695
      %v6212 = vsub.f32 %v4669, %v5698
      %v6213 = vsub.f32 %v4674, %v5701
      %v6214 = vsub.f32 %v4679, %v5704
      %v6215 = vsub.f32 %v4684, %v5707
      %v6216 = vsub.f32 %v4689, %v5710
      %v6217 = vsub.f32 %v4694, %v5713
      %v6218 = vsub.f32 %v4699, %v5716
      %v6219 = vsub.f32 %v4704, %v5719
      %v6220 = vsub.f32 %v4709, %v5722
      %v6221 = vsub.f32 %v4714, %v5725
      %v6222 = vsub.f32 %v4719, %v5728
      %v6223 = vsub.f32 %v4724, %v5731
      %v6224 = vsub.f32 %v4729, %v5734
      %v6225 = vsub.f32 %v4734, %v5737
      %v6226 = vsub.f32 %v4739, %v5740
      %v6227 = vsub.f32 %v4744, %v5743
      %v6228 = vsub.f32 %v4749, %v5746
      %v6229 = vsub.f32 %v4754, %v5749
      %v6230 = vsub.f32 %v4759, %v5752
      %v6231 = vsub.f32 %v4764, %v5755
      %v6232 = vsub.f32 %v4769, %v5758
      %v6233 = vsub.f32 %v4774, %v5761
      %v6234 = vsub.f32 %v4779, %v5764
      %v6235 = vsub.f32 %v4784, %v5767
      %v6236 = vsub.f32 %v4789, %v5770
      %v6237 = vsub.f32 %v4794, %v5773
      %v6238 = vsub.f32 %v4799, %v5776
      %v6239 = vsub.f32 %v4804, %v5779
      %v6240 = vsub.f32 %v4809, %v5782
      %v6241 = vsub.f32 %v4814, %v5785
      %v6242 = vsub.f32 %v4819, %v5788
      %v6243 = vsub.f32 %v4824, %v5791
      %v6244 = vsub.f32 %v4829, %v5794
      %v6245 = vsub.f32 %v4834, %v5797
      %v6246 = vsub.f32 %v4839, %v5800
      %v6247 = vsub.f32 %v4844, %v5803
      %v6248 = vsub.f32 %v4849, %v5806
      %v6249 = vsub.f32 %v4854, %v5809
      %v6250 = vsub.f32 %v4859, %v5812
      %v6251 = vsub.f32 %v4864, %v5815
      %v6252 = vsub.f32 %v4869, %v5818
      %v6253 = vsub.f32 %v4874, %v5821
      %v6254 = vsub.f32 %v4879, %v5824
      %v6255 = vsub.f32 %v4884, %v5827
      %v6256 = vsub.f32 %v4889, %v5830
      %v6257 = vsub.f32 %v4894, %v5833
      %v6258 = vsub.f32 %v4899, %v5836
      %v6259 = vsub.f32 %v4904, %v5839
      %v6260 = vsub.f32 %v4909, %v5842
      %v6261 = vsub.f32 %v4914, %v5845
      %v6262 = vsub.f32 %v4919, %v5848
      %v6263 = vsub.f32 %v4924, %v5851
      %v6264 = vsub.f32 %v4929, %v5854
      %v6265 = vsub.f32 %v4934, %v5857
      %v6266 = vsub.f32 %v4939, %v5860
      %v6267 = vsub.f32 %v4944, %v5863
      %v6268 = vsub.f32 %v4949, %v5866
      %v6269 = vsub.f32 %v4954, %v5869
      %v6270 = vsub.f32 %v4959, %v5872
      %v6271 = vsub.f32 %v4964, %v5875
      %v6272 = vsub.f32 %v4969, %v5878
      %v6273 = vsub.f32 %v4974, %v5881
      %v6274 = vsub.f32 %v4979, %v5884
      %v6275 = vsub.f32 %v4984, %v5887
      %v6276 = vsub.f32 %v4989, %v5890
      %v6277 = vsub.f32 %v4994, %v5893
      %v6278 = vsub.f32 %v4999, %v5896
      %v6279 = vsub.f32 %v5004, %v5899
      %v6280 = vsub.f32 %v5009, %v5902
      %v6281 = vsub.f32 %v5014, %v5905
      %v6282 = vsub.f32 %v5019, %v5908
      %v6283 = vsub.f32 %v5024, %v5911
      %v6284 = vsub.f32 %v5029, %v5914
      %v6285 = vsub.f32 %v5034, %v5917
      %v6286 = vsub.f32 %v5039, %v5920
      %v6287 = vsub.f32 %v5044, %v5923
      %v6288 = vsub.f32 %v5049, %v5926
      %v6289 = vsub.f32 %v5054, %v5929
      %v6290 = vsub.f32 %v5059, %v5932
      %v6291 = vsub.f32 %v5064, %v5935
      %v6292 = vsub.f32 %v5069, %v5938
      %v6293 = vsub.f32 %v5074, %v5941
      %v6294 = vsub.f32 %v5079, %v5944
      %v6295 = vsub.f32 %v5084, %v5947
      %v6296 = vsub.f32 %v5089, %v5950
      %v6297 = vsub.f32 %v5094, %v5953
      %v6298 = vsub.f32 %v5099, %v5956
      %v6299 = vsub.f32 %v5104, %v5959
      %v6300 = vsub.f32 %v5109, %v5962
      %v6301 = vsub.f32 %v5114, %v5965
      %v6302 = vsub.f32 %v5119, %v5968
      %v6303 = vsub.f32 %v5124, %v5971
      %v6304 = vsub.f32 %v5129, %v5974
      %v6305 = vsub.f32 %v5134, %v5977
      %v6306 = vsub.f32 %v5139, %v5980
      %v6307 = vsub.f32 %v5144, %v5983
      %v6308 = vsub.f32 %v5149, %v5986
      %v6309 = vsub.f32 %v5154, %v5989
      %v6310 = vsub.f32 %v5159, %v5992
      %v6311 = vsub.f32 %v5164, %v5995
      %v6312 = vsub.f32 %v5169, %v5998
      %v6313 = vsub.f32 %v5174, %v6001
      %v6314 = vsub.f32 %v5179, %v6004
      %v6315 = vsub.f32 %v5184, %v6007
      %v6316 = vsub.f32 %v5189, %v6010
      %v6317 = vsub.f32 %v5194, %v6013
      %v6318 = vsub.f32 %v5199, %v6016
      %v6319 = vsub.f32 %v5204, %v6019
      %v6320 = vsub.f32 %v5209, %v6022
      %v6321 = vsub.f32 %v5214, %v6025
      %v6322 = vsub.f32 %v5219, %v6028
      %v6323 = vsub.f32 %v5224, %v6031
      %v6324 = vsub.f32 %v5229, %v6034
      %v6325 = vsub.f32 %v5234, %v6037
      %v6326 = vsub.f32 %v5239, %v6040
      %v6327 = vsub.f32 %v5244, %v6043
      %v6328 = vsub.f32 %v5249, %v6046
      %v6329 = vsub.f32 %v5254, %v6049
      %v6330 = vsub.f32 %v5259, %v6052
      %v6331 = vsub.f32 %v5264, %v6055
      %v6332 = vsub.f32 %v5269, %v6058
      %v6333 = vsub.f32 %v5274, %v6061
      %v6334 = vsub.f32 %v5279, %v6064
      %v6335 = vsub.f32 %v5284, %v6067
      %v6336 = vsub.f32 %v5289, %v6070
      %v6337 = vsub.f32 %v5294, %v6073
      %v6338 = vsub.f32 %v5299, %v6076
      %v6339 = vsub.f32 %v5304, %v6079
      %v6340 = vsub.f32 %v5309, %v6082
      %v6341 = vsub.f32 %v5314, %v6085
      %v6342 = vmul.f32 %v6086, 1.442695
      %v6343 = vpow.pop %v6342
      %v6344 = vmul.f32 %v6087, 1.442695
      %v6345 = vpow.pop %v6344
      %v6346 = vmul.f32 %v6088, 1.442695
      %v6347 = vpow.pop %v6346
      %v6348 = vmul.f32 %v6089, 1.442695
      %v6349 = vpow.pop %v6348
      %v6350 = vmul.f32 %v6090, 1.442695
      %v6351 = vpow.pop %v6350
      %v6352 = vmul.f32 %v6091, 1.442695
      %v6353 = vpow.pop %v6352
      %v6354 = vmul.f32 %v6092, 1.442695
      %v6355 = vpow.pop %v6354
      %v6356 = vmul.f32 %v6093, 1.442695
      %v6357 = vpow.pop %v6356
      %v6358 = vmul.f32 %v6094, 1.442695
      %v6359 = vpow.pop %v6358
      %v6360 = vmul.f32 %v6095, 1.442695
      %v6361 = vpow.pop %v6360
      %v6362 = vmul.f32 %v6096, 1.442695
      %v6363 = vpow.pop %v6362
      %v6364 = vmul.f32 %v6097, 1.442695
      %v6365 = vpow.pop %v6364
      %v6366 = vmul.f32 %v6098, 1.442695
      %v6367 = vpow.pop %v6366
      %v6368 = vmul.f32 %v6099, 1.442695
      %v6369 = vpow.pop %v6368
      %v6370 = vmul.f32 %v6100, 1.442695
      %v6371 = vpow.pop %v6370
      %v6372 = vmul.f32 %v6101, 1.442695
      %v6373 = vpow.pop %v6372
      %v6374 = vmul.f32 %v6102, 1.442695
      %v6375 = vpow.pop %v6374
      %v6376 = vmul.f32 %v6103, 1.442695
      %v6377 = vpow.pop %v6376
      %v6378 = vmul.f32 %v6104, 1.442695
      %v6379 = vpow.pop %v6378
      %v6380 = vmul.f32 %v6105, 1.442695
      %v6381 = vpow.pop %v6380
      %v6382 = vmul.f32 %v6106, 1.442695
      %v6383 = vpow.pop %v6382
      %v6384 = vmul.f32 %v6107, 1.442695
      %v6385 = vpow.pop %v6384
      %v6386 = vmul.f32 %v6108, 1.442695
      %v6387 = vpow.pop %v6386
      %v6388 = vmul.f32 %v6109, 1.442695
      %v6389 = vpow.pop %v6388
      %v6390 = vmul.f32 %v6110, 1.442695
      %v6391 = vpow.pop %v6390
      %v6392 = vmul.f32 %v6111, 1.442695
      %v6393 = vpow.pop %v6392
      %v6394 = vmul.f32 %v6112, 1.442695
      %v6395 = vpow.pop %v6394
      %v6396 = vmul.f32 %v6113, 1.442695
      %v6397 = vpow.pop %v6396
      %v6398 = vmul.f32 %v6114, 1.442695
      %v6399 = vpow.pop %v6398
      %v6400 = vmul.f32 %v6115, 1.442695
      %v6401 = vpow.pop %v6400
      %v6402 = vmul.f32 %v6116, 1.442695
      %v6403 = vpow.pop %v6402
      %v6404 = vmul.f32 %v6117, 1.442695
      %v6405 = vpow.pop %v6404
      %v6406 = vmul.f32 %v6118, 1.442695
      %v6407 = vpow.pop %v6406
      %v6408 = vmul.f32 %v6119, 1.442695
      %v6409 = vpow.pop %v6408
      %v6410 = vmul.f32 %v6120, 1.442695
      %v6411 = vpow.pop %v6410
      %v6412 = vmul.f32 %v6121, 1.442695
      %v6413 = vpow.pop %v6412
      %v6414 = vmul.f32 %v6122, 1.442695
      %v6415 = vpow.pop %v6414
      %v6416 = vmul.f32 %v6123, 1.442695
      %v6417 = vpow.pop %v6416
      %v6418 = vmul.f32 %v6124, 1.442695
      %v6419 = vpow.pop %v6418
      %v6420 = vmul.f32 %v6125, 1.442695
      %v6421 = vpow.pop %v6420
      %v6422 = vmul.f32 %v6126, 1.442695
      %v6423 = vpow.pop %v6422
      %v6424 = vmul.f32 %v6127, 1.442695
      %v6425 = vpow.pop %v6424
      %v6426 = vmul.f32 %v6128, 1.442695
      %v6427 = vpow.pop %v6426
      %v6428 = vmul.f32 %v6129, 1.442695
      %v6429 = vpow.pop %v6428
      %v6430 = vmul.f32 %v6130, 1.442695
      %v6431 = vpow.pop %v6430
      %v6432 = vmul.f32 %v6131, 1.442695
      %v6433 = vpow.pop %v6432
      %v6434 = vmul.f32 %v6132, 1.442695
      %v6435 = vpow.pop %v6434
      %v6436 = vmul.f32 %v6133, 1.442695
      %v6437 = vpow.pop %v6436
      %v6438 = vmul.f32 %v6134, 1.442695
      %v6439 = vpow.pop %v6438
      %v6440 = vmul.f32 %v6135, 1.442695
      %v6441 = vpow.pop %v6440
      %v6442 = vmul.f32 %v6136, 1.442695
      %v6443 = vpow.pop %v6442
      %v6444 = vmul.f32 %v6137, 1.442695
      %v6445 = vpow.pop %v6444
      %v6446 = vmul.f32 %v6138, 1.442695
      %v6447 = vpow.pop %v6446
      %v6448 = vmul.f32 %v6139, 1.442695
      %v6449 = vpow.pop %v6448
      %v6450 = vmul.f32 %v6140, 1.442695
      %v6451 = vpow.pop %v6450
      %v6452 = vmul.f32 %v6141, 1.442695
      %v6453 = vpow.pop %v6452
      %v6454 = vmul.f32 %v6142, 1.442695
      %v6455 = vpow.pop %v6454
      %v6456 = vmul.f32 %v6143, 1.442695
      %v6457 = vpow.pop %v6456
      %v6458 = vmul.f32 %v6144, 1.442695
      %v6459 = vpow.pop %v6458
      %v6460 = vmul.f32 %v6145, 1.442695
      %v6461 = vpow.pop %v6460
      %v6462 = vmul.f32 %v6146, 1.442695
      %v6463 = vpow.pop %v6462
      %v6464 = vmul.f32 %v6147, 1.442695
      %v6465 = vpow.pop %v6464
      %v6466 = vmul.f32 %v6148, 1.442695
      %v6467 = vpow.pop %v6466
      %v6468 = vmul.f32 %v6149, 1.442695
      %v6469 = vpow.pop %v6468
      %v6470 = vmul.f32 %v6150, 1.442695
      %v6471 = vpow.pop %v6470
      %v6472 = vmul.f32 %v6151, 1.442695
      %v6473 = vpow.pop %v6472
      %v6474 = vmul.f32 %v6152, 1.442695
      %v6475 = vpow.pop %v6474
      %v6476 = vmul.f32 %v6153, 1.442695
      %v6477 = vpow.pop %v6476
      %v6478 = vmul.f32 %v6154, 1.442695
      %v6479 = vpow.pop %v6478
      %v6480 = vmul.f32 %v6155, 1.442695
      %v6481 = vpow.pop %v6480
      %v6482 = vmul.f32 %v6156, 1.442695
      %v6483 = vpow.pop %v6482
      %v6484 = vmul.f32 %v6157, 1.442695
      %v6485 = vpow.pop %v6484
      %v6486 = vmul.f32 %v6158, 1.442695
      %v6487 = vpow.pop %v6486
      %v6488 = vmul.f32 %v6159, 1.442695
      %v6489 = vpow.pop %v6488
      %v6490 = vmul.f32 %v6160, 1.442695
      %v6491 = vpow.pop %v6490
      %v6492 = vmul.f32 %v6161, 1.442695
      %v6493 = vpow.pop %v6492
      %v6494 = vmul.f32 %v6162, 1.442695
      %v6495 = vpow.pop %v6494
      %v6496 = vmul.f32 %v6163, 1.442695
      %v6497 = vpow.pop %v6496
      %v6498 = vmul.f32 %v6164, 1.442695
      %v6499 = vpow.pop %v6498
      %v6500 = vmul.f32 %v6165, 1.442695
      %v6501 = vpow.pop %v6500
      %v6502 = vmul.f32 %v6166, 1.442695
      %v6503 = vpow.pop %v6502
      %v6504 = vmul.f32 %v6167, 1.442695
      %v6505 = vpow.pop %v6504
      %v6506 = vmul.f32 %v6168, 1.442695
      %v6507 = vpow.pop %v6506
      %v6508 = vmul.f32 %v6169, 1.442695
      %v6509 = vpow.pop %v6508
      %v6510 = vmul.f32 %v6170, 1.442695
      %v6511 = vpow.pop %v6510
      %v6512 = vmul.f32 %v6171, 1.442695
      %v6513 = vpow.pop %v6512
      %v6514 = vmul.f32 %v6172, 1.442695
      %v6515 = vpow.pop %v6514
      %v6516 = vmul.f32 %v6173, 1.442695
      %v6517 = vpow.pop %v6516
      %v6518 = vmul.f32 %v6174, 1.442695
      %v6519 = vpow.pop %v6518
      %v6520 = vmul.f32 %v6175, 1.442695
      %v6521 = vpow.pop %v6520
      %v6522 = vmul.f32 %v6176, 1.442695
      %v6523 = vpow.pop %v6522
      %v6524 = vmul.f32 %v6177, 1.442695
      %v6525 = vpow.pop %v6524
      %v6526 = vmul.f32 %v6178, 1.442695
      %v6527 = vpow.pop %v6526
      %v6528 = vmul.f32 %v6179, 1.442695
      %v6529 = vpow.pop %v6528
      %v6530 = vmul.f32 %v6180, 1.442695
      %v6531 = vpow.pop %v6530
      %v6532 = vmul.f32 %v6181, 1.442695
      %v6533 = vpow.pop %v6532
      %v6534 = vmul.f32 %v6182, 1.442695
      %v6535 = vpow.pop %v6534
      %v6536 = vmul.f32 %v6183, 1.442695
      %v6537 = vpow.pop %v6536
      %v6538 = vmul.f32 %v6184, 1.442695
      %v6539 = vpow.pop %v6538
      %v6540 = vmul.f32 %v6185, 1.442695
      %v6541 = vpow.pop %v6540
      %v6542 = vmul.f32 %v6186, 1.442695
      %v6543 = vpow.pop %v6542
      %v6544 = vmul.f32 %v6187, 1.442695
      %v6545 = vpow.pop %v6544
      %v6546 = vmul.f32 %v6188, 1.442695
      %v6547 = vpow.pop %v6546
      %v6548 = vmul.f32 %v6189, 1.442695
      %v6549 = vpow.pop %v6548
      %v6550 = vmul.f32 %v6190, 1.442695
      %v6551 = vpow.pop %v6550
      %v6552 = vmul.f32 %v6191, 1.442695
      %v6553 = vpow.pop %v6552
      %v6554 = vmul.f32 %v6192, 1.442695
      %v6555 = vpow.pop %v6554
      %v6556 = vmul.f32 %v6193, 1.442695
      %v6557 = vpow.pop %v6556
      %v6558 = vmul.f32 %v6194, 1.442695
      %v6559 = vpow.pop %v6558
      %v6560 = vmul.f32 %v6195, 1.442695
      %v6561 = vpow.pop %v6560
      %v6562 = vmul.f32 %v6196, 1.442695
      %v6563 = vpow.pop %v6562
      %v6564 = vmul.f32 %v6197, 1.442695
      %v6565 = vpow.pop %v6564
      %v6566 = vmul.f32 %v6198, 1.442695
      %v6567 = vpow.pop %v6566
      %v6568 = vmul.f32 %v6199, 1.442695
      %v6569 = vpow.pop %v6568
      %v6570 = vmul.f32 %v6200, 1.442695
      %v6571 = vpow.pop %v6570
      %v6572 = vmul.f32 %v6201, 1.442695
      %v6573 = vpow.pop %v6572
      %v6574 = vmul.f32 %v6202, 1.442695
      %v6575 = vpow.pop %v6574
      %v6576 = vmul.f32 %v6203, 1.442695
      %v6577 = vpow.pop %v6576
      %v6578 = vmul.f32 %v6204, 1.442695
      %v6579 = vpow.pop %v6578
      %v6580 = vmul.f32 %v6205, 1.442695
      %v6581 = vpow.pop %v6580
      %v6582 = vmul.f32 %v6206, 1.442695
      %v6583 = vpow.pop %v6582
      %v6584 = vmul.f32 %v6207, 1.442695
      %v6585 = vpow.pop %v6584
      %v6586 = vmul.f32 %v6208, 1.442695
      %v6587 = vpow.pop %v6586
      %v6588 = vmul.f32 %v6209, 1.442695
      %v6589 = vpow.pop %v6588
      %v6590 = vmul.f32 %v6210, 1.442695
      %v6591 = vpow.pop %v6590
      %v6592 = vmul.f32 %v6211, 1.442695
      %v6593 = vpow.pop %v6592
      %v6594 = vmul.f32 %v6212, 1.442695
      %v6595 = vpow.pop %v6594
      %v6596 = vmul.f32 %v6213, 1.442695
      %v6597 = vpow.pop %v6596
      %v6598 = vmul.f32 %v6214, 1.442695
      %v6599 = vpow.pop %v6598
      %v6600 = vmul.f32 %v6215, 1.442695
      %v6601 = vpow.pop %v6600
      %v6602 = vmul.f32 %v6216, 1.442695
      %v6603 = vpow.pop %v6602
      %v6604 = vmul.f32 %v6217, 1.442695
      %v6605 = vpow.pop %v6604
      %v6606 = vmul.f32 %v6218, 1.442695
      %v6607 = vpow.pop %v6606
      %v6608 = vmul.f32 %v6219, 1.442695
      %v6609 = vpow.pop %v6608
      %v6610 = vmul.f32 %v6220, 1.442695
      %v6611 = vpow.pop %v6610
      %v6612 = vmul.f32 %v6221, 1.442695
      %v6613 = vpow.pop %v6612
      %v6614 = vmul.f32 %v6222, 1.442695
      %v6615 = vpow.pop %v6614
      %v6616 = vmul.f32 %v6223, 1.442695
      %v6617 = vpow.pop %v6616
      %v6618 = vmul.f32 %v6224, 1.442695
      %v6619 = vpow.pop %v6618
      %v6620 = vmul.f32 %v6225, 1.442695
      %v6621 = vpow.pop %v6620
      %v6622 = vmul.f32 %v6226, 1.442695
      %v6623 = vpow.pop %v6622
      %v6624 = vmul.f32 %v6227, 1.442695
      %v6625 = vpow.pop %v6624
      %v6626 = vmul.f32 %v6228, 1.442695
      %v6627 = vpow.pop %v6626
      %v6628 = vmul.f32 %v6229, 1.442695
      %v6629 = vpow.pop %v6628
      %v6630 = vmul.f32 %v6230, 1.442695
      %v6631 = vpow.pop %v6630
      %v6632 = vmul.f32 %v6231, 1.442695
      %v6633 = vpow.pop %v6632
      %v6634 = vmul.f32 %v6232, 1.442695
      %v6635 = vpow.pop %v6634
      %v6636 = vmul.f32 %v6233, 1.442695
      %v6637 = vpow.pop %v6636
      %v6638 = vmul.f32 %v6234, 1.442695
      %v6639 = vpow.pop %v6638
      %v6640 = vmul.f32 %v6235, 1.442695
      %v6641 = vpow.pop %v6640
      %v6642 = vmul.f32 %v6236, 1.442695
      %v6643 = vpow.pop %v6642
      %v6644 = vmul.f32 %v6237, 1.442695
      %v6645 = vpow.pop %v6644
      %v6646 = vmul.f32 %v6238, 1.442695
      %v6647 = vpow.pop %v6646
      %v6648 = vmul.f32 %v6239, 1.442695
      %v6649 = vpow.pop %v6648
      %v6650 = vmul.f32 %v6240, 1.442695
      %v6651 = vpow.pop %v6650
      %v6652 = vmul.f32 %v6241, 1.442695
      %v6653 = vpow.pop %v6652
      %v6654 = vmul.f32 %v6242, 1.442695
      %v6655 = vpow.pop %v6654
      %v6656 = vmul.f32 %v6243, 1.442695
      %v6657 = vpow.pop %v6656
      %v6658 = vmul.f32 %v6244, 1.442695
      %v6659 = vpow.pop %v6658
      %v6660 = vmul.f32 %v6245, 1.442695
      %v6661 = vpow.pop %v6660
      %v6662 = vmul.f32 %v6246, 1.442695
      %v6663 = vpow.pop %v6662
      %v6664 = vmul.f32 %v6247, 1.442695
      %v6665 = vpow.pop %v6664
      %v6666 = vmul.f32 %v6248, 1.442695
      %v6667 = vpow.pop %v6666
      %v6668 = vmul.f32 %v6249, 1.442695
      %v6669 = vpow.pop %v6668
      %v6670 = vmul.f32 %v6250, 1.442695
      %v6671 = vpow.pop %v6670
      %v6672 = vmul.f32 %v6251, 1.442695
      %v6673 = vpow.pop %v6672
      %v6674 = vmul.f32 %v6252, 1.442695
      %v6675 = vpow.pop %v6674
      %v6676 = vmul.f32 %v6253, 1.442695
      %v6677 = vpow.pop %v6676
      %v6678 = vmul.f32 %v6254, 1.442695
      %v6679 = vpow.pop %v6678
      %v6680 = vmul.f32 %v6255, 1.442695
      %v6681 = vpow.pop %v6680
      %v6682 = vmul.f32 %v6256, 1.442695
      %v6683 = vpow.pop %v6682
      %v6684 = vmul.f32 %v6257, 1.442695
      %v6685 = vpow.pop %v6684
      %v6686 = vmul.f32 %v6258, 1.442695
      %v6687 = vpow.pop %v6686
      %v6688 = vmul.f32 %v6259, 1.442695
      %v6689 = vpow.pop %v6688
      %v6690 = vmul.f32 %v6260, 1.442695
      %v6691 = vpow.pop %v6690
      %v6692 = vmul.f32 %v6261, 1.442695
      %v6693 = vpow.pop %v6692
      %v6694 = vmul.f32 %v6262, 1.442695
      %v6695 = vpow.pop %v6694
      %v6696 = vmul.f32 %v6263, 1.442695
      %v6697 = vpow.pop %v6696
      %v6698 = vmul.f32 %v6264, 1.442695
      %v6699 = vpow.pop %v6698
      %v6700 = vmul.f32 %v6265, 1.442695
      %v6701 = vpow.pop %v6700
      %v6702 = vmul.f32 %v6266, 1.442695
      %v6703 = vpow.pop %v6702
      %v6704 = vmul.f32 %v6267, 1.442695
      %v6705 = vpow.pop %v6704
      %v6706 = vmul.f32 %v6268, 1.442695
      %v6707 = vpow.pop %v6706
      %v6708 = vmul.f32 %v6269, 1.442695
      %v6709 = vpow.pop %v6708
      %v6710 = vmul.f32 %v6270, 1.442695
      %v6711 = vpow.pop %v6710
      %v6712 = vmul.f32 %v6271, 1.442695
      %v6713 = vpow.pop %v6712
      %v6714 = vmul.f32 %v6272, 1.442695
      %v6715 = vpow.pop %v6714
      %v6716 = vmul.f32 %v6273, 1.442695
      %v6717 = vpow.pop %v6716
      %v6718 = vmul.f32 %v6274, 1.442695
      %v6719 = vpow.pop %v6718
      %v6720 = vmul.f32 %v6275, 1.442695
      %v6721 = vpow.pop %v6720
      %v6722 = vmul.f32 %v6276, 1.442695
      %v6723 = vpow.pop %v6722
      %v6724 = vmul.f32 %v6277, 1.442695
      %v6725 = vpow.pop %v6724
      %v6726 = vmul.f32 %v6278, 1.442695
      %v6727 = vpow.pop %v6726
      %v6728 = vmul.f32 %v6279, 1.442695
      %v6729 = vpow.pop %v6728
      %v6730 = vmul.f32 %v6280, 1.442695
      %v6731 = vpow.pop %v6730
      %v6732 = vmul.f32 %v6281, 1.442695
      %v6733 = vpow.pop %v6732
      %v6734 = vmul.f32 %v6282, 1.442695
      %v6735 = vpow.pop %v6734
      %v6736 = vmul.f32 %v6283, 1.442695
      %v6737 = vpow.pop %v6736
      %v6738 = vmul.f32 %v6284, 1.442695
      %v6739 = vpow.pop %v6738
      %v6740 = vmul.f32 %v6285, 1.442695
      %v6741 = vpow.pop %v6740
      %v6742 = vmul.f32 %v6286, 1.442695
      %v6743 = vpow.pop %v6742
      %v6744 = vmul.f32 %v6287, 1.442695
      %v6745 = vpow.pop %v6744
      %v6746 = vmul.f32 %v6288, 1.442695
      %v6747 = vpow.pop %v6746
      %v6748 = vmul.f32 %v6289, 1.442695
      %v6749 = vpow.pop %v6748
      %v6750 = vmul.f32 %v6290, 1.442695
      %v6751 = vpow.pop %v6750
      %v6752 = vmul.f32 %v6291, 1.442695
      %v6753 = vpow.pop %v6752
      %v6754 = vmul.f32 %v6292, 1.442695
      %v6755 = vpow.pop %v6754
      %v6756 = vmul.f32 %v6293, 1.442695
      %v6757 = vpow.pop %v6756
      %v6758 = vmul.f32 %v6294, 1.442695
      %v6759 = vpow.pop %v6758
      %v6760 = vmul.f32 %v6295, 1.442695
      %v6761 = vpow.pop %v6760
      %v6762 = vmul.f32 %v6296, 1.442695
      %v6763 = vpow.pop %v6762
      %v6764 = vmul.f32 %v6297, 1.442695
      %v6765 = vpow.pop %v6764
      %v6766 = vmul.f32 %v6298, 1.442695
      %v6767 = vpow.pop %v6766
      %v6768 = vmul.f32 %v6299, 1.442695
      %v6769 = vpow.pop %v6768
      %v6770 = vmul.f32 %v6300, 1.442695
      %v6771 = vpow.pop %v6770
      %v6772 = vmul.f32 %v6301, 1.442695
      %v6773 = vpow.pop %v6772
      %v6774 = vmul.f32 %v6302, 1.442695
      %v6775 = vpow.pop %v6774
      %v6776 = vmul.f32 %v6303, 1.442695
      %v6777 = vpow.pop %v6776
      %v6778 = vmul.f32 %v6304, 1.442695
      %v6779 = vpow.pop %v6778
      %v6780 = vmul.f32 %v6305, 1.442695
      %v6781 = vpow.pop %v6780
      %v6782 = vmul.f32 %v6306, 1.442695
      %v6783 = vpow.pop %v6782
      %v6784 = vmul.f32 %v6307, 1.442695
      %v6785 = vpow.pop %v6784
      %v6786 = vmul.f32 %v6308, 1.442695
      %v6787 = vpow.pop %v6786
      %v6788 = vmul.f32 %v6309, 1.442695
      %v6789 = vpow.pop %v6788
      %v6790 = vmul.f32 %v6310, 1.442695
      %v6791 = vpow.pop %v6790
      %v6792 = vmul.f32 %v6311, 1.442695
      %v6793 = vpow.pop %v6792
      %v6794 = vmul.f32 %v6312, 1.442695
      %v6795 = vpow.pop %v6794
      %v6796 = vmul.f32 %v6313, 1.442695
      %v6797 = vpow.pop %v6796
      %v6798 = vmul.f32 %v6314, 1.442695
      %v6799 = vpow.pop %v6798
      %v6800 = vmul.f32 %v6315, 1.442695
      %v6801 = vpow.pop %v6800
      %v6802 = vmul.f32 %v6316, 1.442695
      %v6803 = vpow.pop %v6802
      %v6804 = vmul.f32 %v6317, 1.442695
      %v6805 = vpow.pop %v6804
      %v6806 = vmul.f32 %v6318, 1.442695
      %v6807 = vpow.pop %v6806
      %v6808 = vmul.f32 %v6319, 1.442695
      %v6809 = vpow.pop %v6808
      %v6810 = vmul.f32 %v6320, 1.442695
      %v6811 = vpow.pop %v6810
      %v6812 = vmul.f32 %v6321, 1.442695
      %v6813 = vpow.pop %v6812
      %v6814 = vmul.f32 %v6322, 1.442695
      %v6815 = vpow.pop %v6814
      %v6816 = vmul.f32 %v6323, 1.442695
      %v6817 = vpow.pop %v6816
      %v6818 = vmul.f32 %v6324, 1.442695
      %v6819 = vpow.pop %v6818
      %v6820 = vmul.f32 %v6325, 1.442695
      %v6821 = vpow.pop %v6820
      %v6822 = vmul.f32 %v6326, 1.442695
      %v6823 = vpow.pop %v6822
      %v6824 = vmul.f32 %v6327, 1.442695
      %v6825 = vpow.pop %v6824
      %v6826 = vmul.f32 %v6328, 1.442695
      %v6827 = vpow.pop %v6826
      %v6828 = vmul.f32 %v6329, 1.442695
      %v6829 = vpow.pop %v6828
      %v6830 = vmul.f32 %v6330, 1.442695
      %v6831 = vpow.pop %v6830
      %v6832 = vmul.f32 %v6331, 1.442695
      %v6833 = vpow.pop %v6832
      %v6834 = vmul.f32 %v6332, 1.442695
      %v6835 = vpow.pop %v6834
      %v6836 = vmul.f32 %v6333, 1.442695
      %v6837 = vpow.pop %v6836
      %v6838 = vmul.f32 %v6334, 1.442695
      %v6839 = vpow.pop %v6838
      %v6840 = vmul.f32 %v6335, 1.442695
      %v6841 = vpow.pop %v6840
      %v6842 = vmul.f32 %v6336, 1.442695
      %v6843 = vpow.pop %v6842
      %v6844 = vmul.f32 %v6337, 1.442695
      %v6845 = vpow.pop %v6844
      %v6846 = vmul.f32 %v6338, 1.442695
      %v6847 = vpow.pop %v6846
      %v6848 = vmul.f32 %v6339, 1.442695
      %v6849 = vpow.pop %v6848
      %v6850 = vmul.f32 %v6340, 1.442695
      %v6851 = vpow.pop %v6850
      %v6852 = vmul.f32 %v6341, 1.442695
      %v6853 = vpow.pop %v6852
      %v6854 = vsel %vm5317, %v6343, 0.0
      %6855 = vadd.xlane.f32.xlu0 %v6854
      %v6856 = vpop.xlane.xlu0 %6855
      %v6857 = vsel %vm5317, %v6345, 0.0
      %6858 = vadd.xlane.f32.xlu0 %v6857
      %v6859 = vpop.xlane.xlu0 %6858
      %v6860 = vsel %vm5317, %v6347, 0.0
      %6861 = vadd.xlane.f32.xlu0 %v6860
      %v6862 = vpop.xlane.xlu0 %6861
      %v6863 = vsel %vm5317, %v6349, 0.0
      %6864 = vadd.xlane.f32.xlu0 %v6863
      %v6865 = vpop.xlane.xlu0 %6864
      %v6866 = vsel %vm5317, %v6351, 0.0
      %6867 = vadd.xlane.f32.xlu0 %v6866
      %v6868 = vpop.xlane.xlu0 %6867
      %v6869 = vsel %vm5317, %v6353, 0.0
      %6870 = vadd.xlane.f32.xlu0 %v6869
      %v6871 = vpop.xlane.xlu0 %6870
      %v6872 = vsel %vm5317, %v6355, 0.0
      %6873 = vadd.xlane.f32.xlu0 %v6872
      %v6874 = vpop.xlane.xlu0 %6873
      %v6875 = vsel %vm5317, %v6357, 0.0
      %6876 = vadd.xlane.f32.xlu0 %v6875
      %v6877 = vpop.xlane.xlu0 %6876
      %v6878 = vsel %vm5317, %v6359, 0.0
      %6879 = vadd.xlane.f32.xlu0 %v6878
      %v6880 = vpop.xlane.xlu0 %6879
      %v6881 = vsel %vm5317, %v6361, 0.0
      %6882 = vadd.xlane.f32.xlu0 %v6881
      %v6883 = vpop.xlane.xlu0 %6882
      %v6884 = vsel %vm5317, %v6363, 0.0
      %6885 = vadd.xlane.f32.xlu0 %v6884
      %v6886 = vpop.xlane.xlu0 %6885
      %v6887 = vsel %vm5317, %v6365, 0.0
      %6888 = vadd.xlane.f32.xlu0 %v6887
      %v6889 = vpop.xlane.xlu0 %6888
      %v6890 = vsel %vm5317, %v6367, 0.0
      %6891 = vadd.xlane.f32.xlu0 %v6890
      %v6892 = vpop.xlane.xlu0 %6891
      %v6893 = vsel %vm5317, %v6369, 0.0
      %6894 = vadd.xlane.f32.xlu0 %v6893
      %v6895 = vpop.xlane.xlu0 %6894
      %v6896 = vsel %vm5317, %v6371, 0.0
      %6897 = vadd.xlane.f32.xlu0 %v6896
      %v6898 = vpop.xlane.xlu0 %6897
      %v6899 = vsel %vm5317, %v6373, 0.0
      %6900 = vadd.xlane.f32.xlu0 %v6899
      %v6901 = vpop.xlane.xlu0 %6900
      %v6902 = vsel %vm5317, %v6375, 0.0
      %6903 = vadd.xlane.f32.xlu0 %v6902
      %v6904 = vpop.xlane.xlu0 %6903
      %v6905 = vsel %vm5317, %v6377, 0.0
      %6906 = vadd.xlane.f32.xlu0 %v6905
      %v6907 = vpop.xlane.xlu0 %6906
      %v6908 = vsel %vm5317, %v6379, 0.0
      %6909 = vadd.xlane.f32.xlu0 %v6908
      %v6910 = vpop.xlane.xlu0 %6909
      %v6911 = vsel %vm5317, %v6381, 0.0
      %6912 = vadd.xlane.f32.xlu0 %v6911
      %v6913 = vpop.xlane.xlu0 %6912
      %v6914 = vsel %vm5317, %v6383, 0.0
      %6915 = vadd.xlane.f32.xlu0 %v6914
      %v6916 = vpop.xlane.xlu0 %6915
      %v6917 = vsel %vm5317, %v6385, 0.0
      %6918 = vadd.xlane.f32.xlu0 %v6917
      %v6919 = vpop.xlane.xlu0 %6918
      %v6920 = vsel %vm5317, %v6387, 0.0
      %6921 = vadd.xlane.f32.xlu0 %v6920
      %v6922 = vpop.xlane.xlu0 %6921
      %v6923 = vsel %vm5317, %v6389, 0.0
      %6924 = vadd.xlane.f32.xlu0 %v6923
      %v6925 = vpop.xlane.xlu0 %6924
      %v6926 = vsel %vm5317, %v6391, 0.0
      %6927 = vadd.xlane.f32.xlu0 %v6926
      %v6928 = vpop.xlane.xlu0 %6927
      %v6929 = vsel %vm5317, %v6393, 0.0
      %6930 = vadd.xlane.f32.xlu0 %v6929
      %v6931 = vpop.xlane.xlu0 %6930
      %v6932 = vsel %vm5317, %v6395, 0.0
      %6933 = vadd.xlane.f32.xlu0 %v6932
      %v6934 = vpop.xlane.xlu0 %6933
      %v6935 = vsel %vm5317, %v6397, 0.0
      %6936 = vadd.xlane.f32.xlu0 %v6935
      %v6937 = vpop.xlane.xlu0 %6936
      %v6938 = vsel %vm5317, %v6399, 0.0
      %6939 = vadd.xlane.f32.xlu0 %v6938
      %v6940 = vpop.xlane.xlu0 %6939
      %v6941 = vsel %vm5317, %v6401, 0.0
      %6942 = vadd.xlane.f32.xlu0 %v6941
      %v6943 = vpop.xlane.xlu0 %6942
      %v6944 = vsel %vm5317, %v6403, 0.0
      %6945 = vadd.xlane.f32.xlu0 %v6944
      %v6946 = vpop.xlane.xlu0 %6945
      %v6947 = vsel %vm5317, %v6405, 0.0
      %6948 = vadd.xlane.f32.xlu0 %v6947
      %v6949 = vpop.xlane.xlu0 %6948
      %v6950 = vsel %vm5317, %v6407, 0.0
      %6951 = vadd.xlane.f32.xlu0 %v6950
      %v6952 = vpop.xlane.xlu0 %6951
      %v6953 = vsel %vm5317, %v6409, 0.0
      %6954 = vadd.xlane.f32.xlu0 %v6953
      %v6955 = vpop.xlane.xlu0 %6954
      %v6956 = vsel %vm5317, %v6411, 0.0
      %6957 = vadd.xlane.f32.xlu0 %v6956
      %v6958 = vpop.xlane.xlu0 %6957
      %v6959 = vsel %vm5317, %v6413, 0.0
      %6960 = vadd.xlane.f32.xlu0 %v6959
      %v6961 = vpop.xlane.xlu0 %6960
      %v6962 = vsel %vm5317, %v6415, 0.0
      %6963 = vadd.xlane.f32.xlu0 %v6962
      %v6964 = vpop.xlane.xlu0 %6963
      %v6965 = vsel %vm5317, %v6417, 0.0
      %6966 = vadd.xlane.f32.xlu0 %v6965
      %v6967 = vpop.xlane.xlu0 %6966
      %v6968 = vsel %vm5317, %v6419, 0.0
      %6969 = vadd.xlane.f32.xlu0 %v6968
      %v6970 = vpop.xlane.xlu0 %6969
      %v6971 = vsel %vm5317, %v6421, 0.0
      %6972 = vadd.xlane.f32.xlu0 %v6971
      %v6973 = vpop.xlane.xlu0 %6972
      %v6974 = vsel %vm5317, %v6423, 0.0
      %6975 = vadd.xlane.f32.xlu0 %v6974
      %v6976 = vpop.xlane.xlu0 %6975
      %v6977 = vsel %vm5317, %v6425, 0.0
      %6978 = vadd.xlane.f32.xlu0 %v6977
      %v6979 = vpop.xlane.xlu0 %6978
      %v6980 = vsel %vm5317, %v6427, 0.0
      %6981 = vadd.xlane.f32.xlu0 %v6980
      %v6982 = vpop.xlane.xlu0 %6981
      %v6983 = vsel %vm5317, %v6429, 0.0
      %6984 = vadd.xlane.f32.xlu0 %v6983
      %v6985 = vpop.xlane.xlu0 %6984
      %v6986 = vsel %vm5317, %v6431, 0.0
      %6987 = vadd.xlane.f32.xlu0 %v6986
      %v6988 = vpop.xlane.xlu0 %6987
      %v6989 = vsel %vm5317, %v6433, 0.0
      %6990 = vadd.xlane.f32.xlu0 %v6989
      %v6991 = vpop.xlane.xlu0 %6990
      %v6992 = vsel %vm5317, %v6435, 0.0
      %6993 = vadd.xlane.f32.xlu0 %v6992
      %v6994 = vpop.xlane.xlu0 %6993
      %v6995 = vsel %vm5317, %v6437, 0.0
      %6996 = vadd.xlane.f32.xlu0 %v6995
      %v6997 = vpop.xlane.xlu0 %6996
      %v6998 = vsel %vm5317, %v6439, 0.0
      %6999 = vadd.xlane.f32.xlu0 %v6998
      %v7000 = vpop.xlane.xlu0 %6999
      %v7001 = vsel %vm5317, %v6441, 0.0
      %7002 = vadd.xlane.f32.xlu0 %v7001
      %v7003 = vpop.xlane.xlu0 %7002
      %v7004 = vsel %vm5317, %v6443, 0.0
      %7005 = vadd.xlane.f32.xlu0 %v7004
      %v7006 = vpop.xlane.xlu0 %7005
      %v7007 = vsel %vm5317, %v6445, 0.0
      %7008 = vadd.xlane.f32.xlu0 %v7007
      %v7009 = vpop.xlane.xlu0 %7008
      %v7010 = vsel %vm5317, %v6447, 0.0
      %7011 = vadd.xlane.f32.xlu0 %v7010
      %v7012 = vpop.xlane.xlu0 %7011
      %v7013 = vsel %vm5317, %v6449, 0.0
      %7014 = vadd.xlane.f32.xlu0 %v7013
      %v7015 = vpop.xlane.xlu0 %7014
      %v7016 = vsel %vm5317, %v6451, 0.0
      %7017 = vadd.xlane.f32.xlu0 %v7016
      %v7018 = vpop.xlane.xlu0 %7017
      %v7019 = vsel %vm5317, %v6453, 0.0
      %7020 = vadd.xlane.f32.xlu0 %v7019
      %v7021 = vpop.xlane.xlu0 %7020
      %v7022 = vsel %vm5317, %v6455, 0.0
      %7023 = vadd.xlane.f32.xlu0 %v7022
      %v7024 = vpop.xlane.xlu0 %7023
      %v7025 = vsel %vm5317, %v6457, 0.0
      %7026 = vadd.xlane.f32.xlu0 %v7025
      %v7027 = vpop.xlane.xlu0 %7026
      %v7028 = vsel %vm5317, %v6459, 0.0
      %7029 = vadd.xlane.f32.xlu0 %v7028
      %v7030 = vpop.xlane.xlu0 %7029
      %v7031 = vsel %vm5317, %v6461, 0.0
      %7032 = vadd.xlane.f32.xlu0 %v7031
      %v7033 = vpop.xlane.xlu0 %7032
      %v7034 = vsel %vm5317, %v6463, 0.0
      %7035 = vadd.xlane.f32.xlu0 %v7034
      %v7036 = vpop.xlane.xlu0 %7035
      %v7037 = vsel %vm5317, %v6465, 0.0
      %7038 = vadd.xlane.f32.xlu0 %v7037
      %v7039 = vpop.xlane.xlu0 %7038
      %v7040 = vsel %vm5317, %v6467, 0.0
      %7041 = vadd.xlane.f32.xlu0 %v7040
      %v7042 = vpop.xlane.xlu0 %7041
      %v7043 = vsel %vm5317, %v6469, 0.0
      %7044 = vadd.xlane.f32.xlu0 %v7043
      %v7045 = vpop.xlane.xlu0 %7044
      %v7046 = vsel %vm5317, %v6471, 0.0
      %7047 = vadd.xlane.f32.xlu0 %v7046
      %v7048 = vpop.xlane.xlu0 %7047
      %v7049 = vsel %vm5317, %v6473, 0.0
      %7050 = vadd.xlane.f32.xlu0 %v7049
      %v7051 = vpop.xlane.xlu0 %7050
      %v7052 = vsel %vm5317, %v6475, 0.0
      %7053 = vadd.xlane.f32.xlu0 %v7052
      %v7054 = vpop.xlane.xlu0 %7053
      %v7055 = vsel %vm5317, %v6477, 0.0
      %7056 = vadd.xlane.f32.xlu0 %v7055
      %v7057 = vpop.xlane.xlu0 %7056
      %v7058 = vsel %vm5317, %v6479, 0.0
      %7059 = vadd.xlane.f32.xlu0 %v7058
      %v7060 = vpop.xlane.xlu0 %7059
      %v7061 = vsel %vm5317, %v6481, 0.0
      %7062 = vadd.xlane.f32.xlu0 %v7061
      %v7063 = vpop.xlane.xlu0 %7062
      %v7064 = vsel %vm5317, %v6483, 0.0
      %7065 = vadd.xlane.f32.xlu0 %v7064
      %v7066 = vpop.xlane.xlu0 %7065
      %v7067 = vsel %vm5317, %v6485, 0.0
      %7068 = vadd.xlane.f32.xlu0 %v7067
      %v7069 = vpop.xlane.xlu0 %7068
      %v7070 = vsel %vm5317, %v6487, 0.0
      %7071 = vadd.xlane.f32.xlu0 %v7070
      %v7072 = vpop.xlane.xlu0 %7071
      %v7073 = vsel %vm5317, %v6489, 0.0
      %7074 = vadd.xlane.f32.xlu0 %v7073
      %v7075 = vpop.xlane.xlu0 %7074
      %v7076 = vsel %vm5317, %v6491, 0.0
      %7077 = vadd.xlane.f32.xlu0 %v7076
      %v7078 = vpop.xlane.xlu0 %7077
      %v7079 = vsel %vm5317, %v6493, 0.0
      %7080 = vadd.xlane.f32.xlu0 %v7079
      %v7081 = vpop.xlane.xlu0 %7080
      %v7082 = vsel %vm5317, %v6495, 0.0
      %7083 = vadd.xlane.f32.xlu0 %v7082
      %v7084 = vpop.xlane.xlu0 %7083
      %v7085 = vsel %vm5317, %v6497, 0.0
      %7086 = vadd.xlane.f32.xlu0 %v7085
      %v7087 = vpop.xlane.xlu0 %7086
      %v7088 = vsel %vm5317, %v6499, 0.0
      %7089 = vadd.xlane.f32.xlu0 %v7088
      %v7090 = vpop.xlane.xlu0 %7089
      %v7091 = vsel %vm5317, %v6501, 0.0
      %7092 = vadd.xlane.f32.xlu0 %v7091
      %v7093 = vpop.xlane.xlu0 %7092
      %v7094 = vsel %vm5317, %v6503, 0.0
      %7095 = vadd.xlane.f32.xlu0 %v7094
      %v7096 = vpop.xlane.xlu0 %7095
      %v7097 = vsel %vm5317, %v6505, 0.0
      %7098 = vadd.xlane.f32.xlu0 %v7097
      %v7099 = vpop.xlane.xlu0 %7098
      %v7100 = vsel %vm5317, %v6507, 0.0
      %7101 = vadd.xlane.f32.xlu0 %v7100
      %v7102 = vpop.xlane.xlu0 %7101
      %v7103 = vsel %vm5317, %v6509, 0.0
      %7104 = vadd.xlane.f32.xlu0 %v7103
      %v7105 = vpop.xlane.xlu0 %7104
      %v7106 = vsel %vm5317, %v6511, 0.0
      %7107 = vadd.xlane.f32.xlu0 %v7106
      %v7108 = vpop.xlane.xlu0 %7107
      %v7109 = vsel %vm5317, %v6513, 0.0
      %7110 = vadd.xlane.f32.xlu0 %v7109
      %v7111 = vpop.xlane.xlu0 %7110
      %v7112 = vsel %vm5317, %v6515, 0.0
      %7113 = vadd.xlane.f32.xlu0 %v7112
      %v7114 = vpop.xlane.xlu0 %7113
      %v7115 = vsel %vm5317, %v6517, 0.0
      %7116 = vadd.xlane.f32.xlu0 %v7115
      %v7117 = vpop.xlane.xlu0 %7116
      %v7118 = vsel %vm5317, %v6519, 0.0
      %7119 = vadd.xlane.f32.xlu0 %v7118
      %v7120 = vpop.xlane.xlu0 %7119
      %v7121 = vsel %vm5317, %v6521, 0.0
      %7122 = vadd.xlane.f32.xlu0 %v7121
      %v7123 = vpop.xlane.xlu0 %7122
      %v7124 = vsel %vm5317, %v6523, 0.0
      %7125 = vadd.xlane.f32.xlu0 %v7124
      %v7126 = vpop.xlane.xlu0 %7125
      %v7127 = vsel %vm5317, %v6525, 0.0
      %7128 = vadd.xlane.f32.xlu0 %v7127
      %v7129 = vpop.xlane.xlu0 %7128
      %v7130 = vsel %vm5317, %v6527, 0.0
      %7131 = vadd.xlane.f32.xlu0 %v7130
      %v7132 = vpop.xlane.xlu0 %7131
      %v7133 = vsel %vm5317, %v6529, 0.0
      %7134 = vadd.xlane.f32.xlu0 %v7133
      %v7135 = vpop.xlane.xlu0 %7134
      %v7136 = vsel %vm5317, %v6531, 0.0
      %7137 = vadd.xlane.f32.xlu0 %v7136
      %v7138 = vpop.xlane.xlu0 %7137
      %v7139 = vsel %vm5317, %v6533, 0.0
      %7140 = vadd.xlane.f32.xlu0 %v7139
      %v7141 = vpop.xlane.xlu0 %7140
      %v7142 = vsel %vm5317, %v6535, 0.0
      %7143 = vadd.xlane.f32.xlu0 %v7142
      %v7144 = vpop.xlane.xlu0 %7143
      %v7145 = vsel %vm5317, %v6537, 0.0
      %7146 = vadd.xlane.f32.xlu0 %v7145
      %v7147 = vpop.xlane.xlu0 %7146
      %v7148 = vsel %vm5317, %v6539, 0.0
      %7149 = vadd.xlane.f32.xlu0 %v7148
      %v7150 = vpop.xlane.xlu0 %7149
      %v7151 = vsel %vm5317, %v6541, 0.0
      %7152 = vadd.xlane.f32.xlu0 %v7151
      %v7153 = vpop.xlane.xlu0 %7152
      %v7154 = vsel %vm5317, %v6543, 0.0
      %7155 = vadd.xlane.f32.xlu0 %v7154
      %v7156 = vpop.xlane.xlu0 %7155
      %v7157 = vsel %vm5317, %v6545, 0.0
      %7158 = vadd.xlane.f32.xlu0 %v7157
      %v7159 = vpop.xlane.xlu0 %7158
      %v7160 = vsel %vm5317, %v6547, 0.0
      %7161 = vadd.xlane.f32.xlu0 %v7160
      %v7162 = vpop.xlane.xlu0 %7161
      %v7163 = vsel %vm5317, %v6549, 0.0
      %7164 = vadd.xlane.f32.xlu0 %v7163
      %v7165 = vpop.xlane.xlu0 %7164
      %v7166 = vsel %vm5317, %v6551, 0.0
      %7167 = vadd.xlane.f32.xlu0 %v7166
      %v7168 = vpop.xlane.xlu0 %7167
      %v7169 = vsel %vm5317, %v6553, 0.0
      %7170 = vadd.xlane.f32.xlu0 %v7169
      %v7171 = vpop.xlane.xlu0 %7170
      %v7172 = vsel %vm5317, %v6555, 0.0
      %7173 = vadd.xlane.f32.xlu0 %v7172
      %v7174 = vpop.xlane.xlu0 %7173
      %v7175 = vsel %vm5317, %v6557, 0.0
      %7176 = vadd.xlane.f32.xlu0 %v7175
      %v7177 = vpop.xlane.xlu0 %7176
      %v7178 = vsel %vm5317, %v6559, 0.0
      %7179 = vadd.xlane.f32.xlu0 %v7178
      %v7180 = vpop.xlane.xlu0 %7179
      %v7181 = vsel %vm5317, %v6561, 0.0
      %7182 = vadd.xlane.f32.xlu0 %v7181
      %v7183 = vpop.xlane.xlu0 %7182
      %v7184 = vsel %vm5317, %v6563, 0.0
      %7185 = vadd.xlane.f32.xlu0 %v7184
      %v7186 = vpop.xlane.xlu0 %7185
      %v7187 = vsel %vm5317, %v6565, 0.0
      %7188 = vadd.xlane.f32.xlu0 %v7187
      %v7189 = vpop.xlane.xlu0 %7188
      %v7190 = vsel %vm5317, %v6567, 0.0
      %7191 = vadd.xlane.f32.xlu0 %v7190
      %v7192 = vpop.xlane.xlu0 %7191
      %v7193 = vsel %vm5317, %v6569, 0.0
      %7194 = vadd.xlane.f32.xlu0 %v7193
      %v7195 = vpop.xlane.xlu0 %7194
      %v7196 = vsel %vm5317, %v6571, 0.0
      %7197 = vadd.xlane.f32.xlu0 %v7196
      %v7198 = vpop.xlane.xlu0 %7197
      %v7199 = vsel %vm5317, %v6573, 0.0
      %7200 = vadd.xlane.f32.xlu0 %v7199
      %v7201 = vpop.xlane.xlu0 %7200
      %v7202 = vsel %vm5317, %v6575, 0.0
      %7203 = vadd.xlane.f32.xlu0 %v7202
      %v7204 = vpop.xlane.xlu0 %7203
      %v7205 = vsel %vm5317, %v6577, 0.0
      %7206 = vadd.xlane.f32.xlu0 %v7205
      %v7207 = vpop.xlane.xlu0 %7206
      %v7208 = vsel %vm5317, %v6579, 0.0
      %7209 = vadd.xlane.f32.xlu0 %v7208
      %v7210 = vpop.xlane.xlu0 %7209
      %v7211 = vsel %vm5317, %v6581, 0.0
      %7212 = vadd.xlane.f32.xlu0 %v7211
      %v7213 = vpop.xlane.xlu0 %7212
      %v7214 = vsel %vm5317, %v6583, 0.0
      %7215 = vadd.xlane.f32.xlu0 %v7214
      %v7216 = vpop.xlane.xlu0 %7215
      %v7217 = vsel %vm5317, %v6585, 0.0
      %7218 = vadd.xlane.f32.xlu0 %v7217
      %v7219 = vpop.xlane.xlu0 %7218
      %v7220 = vsel %vm5317, %v6587, 0.0
      %7221 = vadd.xlane.f32.xlu0 %v7220
      %v7222 = vpop.xlane.xlu0 %7221
      %v7223 = vsel %vm5317, %v6589, 0.0
      %7224 = vadd.xlane.f32.xlu0 %v7223
      %v7225 = vpop.xlane.xlu0 %7224
      %v7226 = vsel %vm5317, %v6591, 0.0
      %7227 = vadd.xlane.f32.xlu0 %v7226
      %v7228 = vpop.xlane.xlu0 %7227
      %v7229 = vsel %vm5317, %v6593, 0.0
      %7230 = vadd.xlane.f32.xlu0 %v7229
      %v7231 = vpop.xlane.xlu0 %7230
      %v7232 = vsel %vm5317, %v6595, 0.0
      %7233 = vadd.xlane.f32.xlu0 %v7232
      %v7234 = vpop.xlane.xlu0 %7233
      %v7235 = vsel %vm5317, %v6597, 0.0
      %7236 = vadd.xlane.f32.xlu0 %v7235
      %v7237 = vpop.xlane.xlu0 %7236
      %v7238 = vsel %vm5317, %v6599, 0.0
      %7239 = vadd.xlane.f32.xlu0 %v7238
      %v7240 = vpop.xlane.xlu0 %7239
      %v7241 = vsel %vm5317, %v6601, 0.0
      %7242 = vadd.xlane.f32.xlu0 %v7241
      %v7243 = vpop.xlane.xlu0 %7242
      %v7244 = vsel %vm5317, %v6603, 0.0
      %7245 = vadd.xlane.f32.xlu0 %v7244
      %v7246 = vpop.xlane.xlu0 %7245
      %v7247 = vsel %vm5317, %v6605, 0.0
      %7248 = vadd.xlane.f32.xlu0 %v7247
      %v7249 = vpop.xlane.xlu0 %7248
      %v7250 = vsel %vm5317, %v6607, 0.0
      %7251 = vadd.xlane.f32.xlu0 %v7250
      %v7252 = vpop.xlane.xlu0 %7251
      %v7253 = vsel %vm5317, %v6609, 0.0
      %7254 = vadd.xlane.f32.xlu0 %v7253
      %v7255 = vpop.xlane.xlu0 %7254
      %v7256 = vsel %vm5317, %v6611, 0.0
      %7257 = vadd.xlane.f32.xlu0 %v7256
      %v7258 = vpop.xlane.xlu0 %7257
      %v7259 = vsel %vm5317, %v6613, 0.0
      %7260 = vadd.xlane.f32.xlu0 %v7259
      %v7261 = vpop.xlane.xlu0 %7260
      %v7262 = vsel %vm5317, %v6615, 0.0
      %7263 = vadd.xlane.f32.xlu0 %v7262
      %v7264 = vpop.xlane.xlu0 %7263
      %v7265 = vsel %vm5317, %v6617, 0.0
      %7266 = vadd.xlane.f32.xlu0 %v7265
      %v7267 = vpop.xlane.xlu0 %7266
      %v7268 = vsel %vm5317, %v6619, 0.0
      %7269 = vadd.xlane.f32.xlu0 %v7268
      %v7270 = vpop.xlane.xlu0 %7269
      %v7271 = vsel %vm5317, %v6621, 0.0
      %7272 = vadd.xlane.f32.xlu0 %v7271
      %v7273 = vpop.xlane.xlu0 %7272
      %v7274 = vsel %vm5317, %v6623, 0.0
      %7275 = vadd.xlane.f32.xlu0 %v7274
      %v7276 = vpop.xlane.xlu0 %7275
      %v7277 = vsel %vm5317, %v6625, 0.0
      %7278 = vadd.xlane.f32.xlu0 %v7277
      %v7279 = vpop.xlane.xlu0 %7278
      %v7280 = vsel %vm5317, %v6627, 0.0
      %7281 = vadd.xlane.f32.xlu0 %v7280
      %v7282 = vpop.xlane.xlu0 %7281
      %v7283 = vsel %vm5317, %v6629, 0.0
      %7284 = vadd.xlane.f32.xlu0 %v7283
      %v7285 = vpop.xlane.xlu0 %7284
      %v7286 = vsel %vm5317, %v6631, 0.0
      %7287 = vadd.xlane.f32.xlu0 %v7286
      %v7288 = vpop.xlane.xlu0 %7287
      %v7289 = vsel %vm5317, %v6633, 0.0
      %7290 = vadd.xlane.f32.xlu0 %v7289
      %v7291 = vpop.xlane.xlu0 %7290
      %v7292 = vsel %vm5317, %v6635, 0.0
      %7293 = vadd.xlane.f32.xlu0 %v7292
      %v7294 = vpop.xlane.xlu0 %7293
      %v7295 = vsel %vm5317, %v6637, 0.0
      %7296 = vadd.xlane.f32.xlu0 %v7295
      %v7297 = vpop.xlane.xlu0 %7296
      %v7298 = vsel %vm5317, %v6639, 0.0
      %7299 = vadd.xlane.f32.xlu0 %v7298
      %v7300 = vpop.xlane.xlu0 %7299
      %v7301 = vsel %vm5317, %v6641, 0.0
      %7302 = vadd.xlane.f32.xlu0 %v7301
      %v7303 = vpop.xlane.xlu0 %7302
      %v7304 = vsel %vm5317, %v6643, 0.0
      %7305 = vadd.xlane.f32.xlu0 %v7304
      %v7306 = vpop.xlane.xlu0 %7305
      %v7307 = vsel %vm5317, %v6645, 0.0
      %7308 = vadd.xlane.f32.xlu0 %v7307
      %v7309 = vpop.xlane.xlu0 %7308
      %v7310 = vsel %vm5317, %v6647, 0.0
      %7311 = vadd.xlane.f32.xlu0 %v7310
      %v7312 = vpop.xlane.xlu0 %7311
      %v7313 = vsel %vm5317, %v6649, 0.0
      %7314 = vadd.xlane.f32.xlu0 %v7313
      %v7315 = vpop.xlane.xlu0 %7314
      %v7316 = vsel %vm5317, %v6651, 0.0
      %7317 = vadd.xlane.f32.xlu0 %v7316
      %v7318 = vpop.xlane.xlu0 %7317
      %v7319 = vsel %vm5317, %v6653, 0.0
      %7320 = vadd.xlane.f32.xlu0 %v7319
      %v7321 = vpop.xlane.xlu0 %7320
      %v7322 = vsel %vm5317, %v6655, 0.0
      %7323 = vadd.xlane.f32.xlu0 %v7322
      %v7324 = vpop.xlane.xlu0 %7323
      %v7325 = vsel %vm5317, %v6657, 0.0
      %7326 = vadd.xlane.f32.xlu0 %v7325
      %v7327 = vpop.xlane.xlu0 %7326
      %v7328 = vsel %vm5317, %v6659, 0.0
      %7329 = vadd.xlane.f32.xlu0 %v7328
      %v7330 = vpop.xlane.xlu0 %7329
      %v7331 = vsel %vm5317, %v6661, 0.0
      %7332 = vadd.xlane.f32.xlu0 %v7331
      %v7333 = vpop.xlane.xlu0 %7332
      %v7334 = vsel %vm5317, %v6663, 0.0
      %7335 = vadd.xlane.f32.xlu0 %v7334
      %v7336 = vpop.xlane.xlu0 %7335
      %v7337 = vsel %vm5317, %v6665, 0.0
      %7338 = vadd.xlane.f32.xlu0 %v7337
      %v7339 = vpop.xlane.xlu0 %7338
      %v7340 = vsel %vm5317, %v6667, 0.0
      %7341 = vadd.xlane.f32.xlu0 %v7340
      %v7342 = vpop.xlane.xlu0 %7341
      %v7343 = vsel %vm5317, %v6669, 0.0
      %7344 = vadd.xlane.f32.xlu0 %v7343
      %v7345 = vpop.xlane.xlu0 %7344
      %v7346 = vsel %vm5317, %v6671, 0.0
      %7347 = vadd.xlane.f32.xlu0 %v7346
      %v7348 = vpop.xlane.xlu0 %7347
      %v7349 = vsel %vm5317, %v6673, 0.0
      %7350 = vadd.xlane.f32.xlu0 %v7349
      %v7351 = vpop.xlane.xlu0 %7350
      %v7352 = vsel %vm5317, %v6675, 0.0
      %7353 = vadd.xlane.f32.xlu0 %v7352
      %v7354 = vpop.xlane.xlu0 %7353
      %v7355 = vsel %vm5317, %v6677, 0.0
      %7356 = vadd.xlane.f32.xlu0 %v7355
      %v7357 = vpop.xlane.xlu0 %7356
      %v7358 = vsel %vm5317, %v6679, 0.0
      %7359 = vadd.xlane.f32.xlu0 %v7358
      %v7360 = vpop.xlane.xlu0 %7359
      %v7361 = vsel %vm5317, %v6681, 0.0
      %7362 = vadd.xlane.f32.xlu0 %v7361
      %v7363 = vpop.xlane.xlu0 %7362
      %v7364 = vsel %vm5317, %v6683, 0.0
      %7365 = vadd.xlane.f32.xlu0 %v7364
      %v7366 = vpop.xlane.xlu0 %7365
      %v7367 = vsel %vm5317, %v6685, 0.0
      %7368 = vadd.xlane.f32.xlu0 %v7367
      %v7369 = vpop.xlane.xlu0 %7368
      %v7370 = vsel %vm5317, %v6687, 0.0
      %7371 = vadd.xlane.f32.xlu0 %v7370
      %v7372 = vpop.xlane.xlu0 %7371
      %v7373 = vsel %vm5317, %v6689, 0.0
      %7374 = vadd.xlane.f32.xlu0 %v7373
      %v7375 = vpop.xlane.xlu0 %7374
      %v7376 = vsel %vm5317, %v6691, 0.0
      %7377 = vadd.xlane.f32.xlu0 %v7376
      %v7378 = vpop.xlane.xlu0 %7377
      %v7379 = vsel %vm5317, %v6693, 0.0
      %7380 = vadd.xlane.f32.xlu0 %v7379
      %v7381 = vpop.xlane.xlu0 %7380
      %v7382 = vsel %vm5317, %v6695, 0.0
      %7383 = vadd.xlane.f32.xlu0 %v7382
      %v7384 = vpop.xlane.xlu0 %7383
      %v7385 = vsel %vm5317, %v6697, 0.0
      %7386 = vadd.xlane.f32.xlu0 %v7385
      %v7387 = vpop.xlane.xlu0 %7386
      %v7388 = vsel %vm5317, %v6699, 0.0
      %7389 = vadd.xlane.f32.xlu0 %v7388
      %v7390 = vpop.xlane.xlu0 %7389
      %v7391 = vsel %vm5317, %v6701, 0.0
      %7392 = vadd.xlane.f32.xlu0 %v7391
      %v7393 = vpop.xlane.xlu0 %7392
      %v7394 = vsel %vm5317, %v6703, 0.0
      %7395 = vadd.xlane.f32.xlu0 %v7394
      %v7396 = vpop.xlane.xlu0 %7395
      %v7397 = vsel %vm5317, %v6705, 0.0
      %7398 = vadd.xlane.f32.xlu0 %v7397
      %v7399 = vpop.xlane.xlu0 %7398
      %v7400 = vsel %vm5317, %v6707, 0.0
      %7401 = vadd.xlane.f32.xlu0 %v7400
      %v7402 = vpop.xlane.xlu0 %7401
      %v7403 = vsel %vm5317, %v6709, 0.0
      %7404 = vadd.xlane.f32.xlu0 %v7403
      %v7405 = vpop.xlane.xlu0 %7404
      %v7406 = vsel %vm5317, %v6711, 0.0
      %7407 = vadd.xlane.f32.xlu0 %v7406
      %v7408 = vpop.xlane.xlu0 %7407
      %v7409 = vsel %vm5317, %v6713, 0.0
      %7410 = vadd.xlane.f32.xlu0 %v7409
      %v7411 = vpop.xlane.xlu0 %7410
      %v7412 = vsel %vm5317, %v6715, 0.0
      %7413 = vadd.xlane.f32.xlu0 %v7412
      %v7414 = vpop.xlane.xlu0 %7413
      %v7415 = vsel %vm5317, %v6717, 0.0
      %7416 = vadd.xlane.f32.xlu0 %v7415
      %v7417 = vpop.xlane.xlu0 %7416
      %v7418 = vsel %vm5317, %v6719, 0.0
      %7419 = vadd.xlane.f32.xlu0 %v7418
      %v7420 = vpop.xlane.xlu0 %7419
      %v7421 = vsel %vm5317, %v6721, 0.0
      %7422 = vadd.xlane.f32.xlu0 %v7421
      %v7423 = vpop.xlane.xlu0 %7422
      %v7424 = vsel %vm5317, %v6723, 0.0
      %7425 = vadd.xlane.f32.xlu0 %v7424
      %v7426 = vpop.xlane.xlu0 %7425
      %v7427 = vsel %vm5317, %v6725, 0.0
      %7428 = vadd.xlane.f32.xlu0 %v7427
      %v7429 = vpop.xlane.xlu0 %7428
      %v7430 = vsel %vm5317, %v6727, 0.0
      %7431 = vadd.xlane.f32.xlu0 %v7430
      %v7432 = vpop.xlane.xlu0 %7431
      %v7433 = vsel %vm5317, %v6729, 0.0
      %7434 = vadd.xlane.f32.xlu0 %v7433
      %v7435 = vpop.xlane.xlu0 %7434
      %v7436 = vsel %vm5317, %v6731, 0.0
      %7437 = vadd.xlane.f32.xlu0 %v7436
      %v7438 = vpop.xlane.xlu0 %7437
      %v7439 = vsel %vm5317, %v6733, 0.0
      %7440 = vadd.xlane.f32.xlu0 %v7439
      %v7441 = vpop.xlane.xlu0 %7440
      %v7442 = vsel %vm5317, %v6735, 0.0
      %7443 = vadd.xlane.f32.xlu0 %v7442
      %v7444 = vpop.xlane.xlu0 %7443
      %v7445 = vsel %vm5317, %v6737, 0.0
      %7446 = vadd.xlane.f32.xlu0 %v7445
      %v7447 = vpop.xlane.xlu0 %7446
      %v7448 = vsel %vm5317, %v6739, 0.0
      %7449 = vadd.xlane.f32.xlu0 %v7448
      %v7450 = vpop.xlane.xlu0 %7449
      %v7451 = vsel %vm5317, %v6741, 0.0
      %7452 = vadd.xlane.f32.xlu0 %v7451
      %v7453 = vpop.xlane.xlu0 %7452
      %v7454 = vsel %vm5317, %v6743, 0.0
      %7455 = vadd.xlane.f32.xlu0 %v7454
      %v7456 = vpop.xlane.xlu0 %7455
      %v7457 = vsel %vm5317, %v6745, 0.0
      %7458 = vadd.xlane.f32.xlu0 %v7457
      %v7459 = vpop.xlane.xlu0 %7458
      %v7460 = vsel %vm5317, %v6747, 0.0
      %7461 = vadd.xlane.f32.xlu0 %v7460
      %v7462 = vpop.xlane.xlu0 %7461
      %v7463 = vsel %vm5317, %v6749, 0.0
      %7464 = vadd.xlane.f32.xlu0 %v7463
      %v7465 = vpop.xlane.xlu0 %7464
      %v7466 = vsel %vm5317, %v6751, 0.0
      %7467 = vadd.xlane.f32.xlu0 %v7466
      %v7468 = vpop.xlane.xlu0 %7467
      %v7469 = vsel %vm5317, %v6753, 0.0
      %7470 = vadd.xlane.f32.xlu0 %v7469
      %v7471 = vpop.xlane.xlu0 %7470
      %v7472 = vsel %vm5317, %v6755, 0.0
      %7473 = vadd.xlane.f32.xlu0 %v7472
      %v7474 = vpop.xlane.xlu0 %7473
      %v7475 = vsel %vm5317, %v6757, 0.0
      %7476 = vadd.xlane.f32.xlu0 %v7475
      %v7477 = vpop.xlane.xlu0 %7476
      %v7478 = vsel %vm5317, %v6759, 0.0
      %7479 = vadd.xlane.f32.xlu0 %v7478
      %v7480 = vpop.xlane.xlu0 %7479
      %v7481 = vsel %vm5317, %v6761, 0.0
      %7482 = vadd.xlane.f32.xlu0 %v7481
      %v7483 = vpop.xlane.xlu0 %7482
      %v7484 = vsel %vm5317, %v6763, 0.0
      %7485 = vadd.xlane.f32.xlu0 %v7484
      %v7486 = vpop.xlane.xlu0 %7485
      %v7487 = vsel %vm5317, %v6765, 0.0
      %7488 = vadd.xlane.f32.xlu0 %v7487
      %v7489 = vpop.xlane.xlu0 %7488
      %v7490 = vsel %vm5317, %v6767, 0.0
      %7491 = vadd.xlane.f32.xlu0 %v7490
      %v7492 = vpop.xlane.xlu0 %7491
      %v7493 = vsel %vm5317, %v6769, 0.0
      %7494 = vadd.xlane.f32.xlu0 %v7493
      %v7495 = vpop.xlane.xlu0 %7494
      %v7496 = vsel %vm5317, %v6771, 0.0
      %7497 = vadd.xlane.f32.xlu0 %v7496
      %v7498 = vpop.xlane.xlu0 %7497
      %v7499 = vsel %vm5317, %v6773, 0.0
      %7500 = vadd.xlane.f32.xlu0 %v7499
      %v7501 = vpop.xlane.xlu0 %7500
      %v7502 = vsel %vm5317, %v6775, 0.0
      %7503 = vadd.xlane.f32.xlu0 %v7502
      %v7504 = vpop.xlane.xlu0 %7503
      %v7505 = vsel %vm5317, %v6777, 0.0
      %7506 = vadd.xlane.f32.xlu0 %v7505
      %v7507 = vpop.xlane.xlu0 %7506
      %v7508 = vsel %vm5317, %v6779, 0.0
      %7509 = vadd.xlane.f32.xlu0 %v7508
      %v7510 = vpop.xlane.xlu0 %7509
      %v7511 = vsel %vm5317, %v6781, 0.0
      %7512 = vadd.xlane.f32.xlu0 %v7511
      %v7513 = vpop.xlane.xlu0 %7512
      %v7514 = vsel %vm5317, %v6783, 0.0
      %7515 = vadd.xlane.f32.xlu0 %v7514
      %v7516 = vpop.xlane.xlu0 %7515
      %v7517 = vsel %vm5317, %v6785, 0.0
      %7518 = vadd.xlane.f32.xlu0 %v7517
      %v7519 = vpop.xlane.xlu0 %7518
      %v7520 = vsel %vm5317, %v6787, 0.0
      %7521 = vadd.xlane.f32.xlu0 %v7520
      %v7522 = vpop.xlane.xlu0 %7521
      %v7523 = vsel %vm5317, %v6789, 0.0
      %7524 = vadd.xlane.f32.xlu0 %v7523
      %v7525 = vpop.xlane.xlu0 %7524
      %v7526 = vsel %vm5317, %v6791, 0.0
      %7527 = vadd.xlane.f32.xlu0 %v7526
      %v7528 = vpop.xlane.xlu0 %7527
      %v7529 = vsel %vm5317, %v6793, 0.0
      %7530 = vadd.xlane.f32.xlu0 %v7529
      %v7531 = vpop.xlane.xlu0 %7530
      %v7532 = vsel %vm5317, %v6795, 0.0
      %7533 = vadd.xlane.f32.xlu0 %v7532
      %v7534 = vpop.xlane.xlu0 %7533
      %v7535 = vsel %vm5317, %v6797, 0.0
      %7536 = vadd.xlane.f32.xlu0 %v7535
      %v7537 = vpop.xlane.xlu0 %7536
      %v7538 = vsel %vm5317, %v6799, 0.0
      %7539 = vadd.xlane.f32.xlu0 %v7538
      %v7540 = vpop.xlane.xlu0 %7539
      %v7541 = vsel %vm5317, %v6801, 0.0
      %7542 = vadd.xlane.f32.xlu0 %v7541
      %v7543 = vpop.xlane.xlu0 %7542
      %v7544 = vsel %vm5317, %v6803, 0.0
      %7545 = vadd.xlane.f32.xlu0 %v7544
      %v7546 = vpop.xlane.xlu0 %7545
      %v7547 = vsel %vm5317, %v6805, 0.0
      %7548 = vadd.xlane.f32.xlu0 %v7547
      %v7549 = vpop.xlane.xlu0 %7548
      %v7550 = vsel %vm5317, %v6807, 0.0
      %7551 = vadd.xlane.f32.xlu0 %v7550
      %v7552 = vpop.xlane.xlu0 %7551
      %v7553 = vsel %vm5317, %v6809, 0.0
      %7554 = vadd.xlane.f32.xlu0 %v7553
      %v7555 = vpop.xlane.xlu0 %7554
      %v7556 = vsel %vm5317, %v6811, 0.0
      %7557 = vadd.xlane.f32.xlu0 %v7556
      %v7558 = vpop.xlane.xlu0 %7557
      %v7559 = vsel %vm5317, %v6813, 0.0
      %7560 = vadd.xlane.f32.xlu0 %v7559
      %v7561 = vpop.xlane.xlu0 %7560
      %v7562 = vsel %vm5317, %v6815, 0.0
      %7563 = vadd.xlane.f32.xlu0 %v7562
      %v7564 = vpop.xlane.xlu0 %7563
      %v7565 = vsel %vm5317, %v6817, 0.0
      %7566 = vadd.xlane.f32.xlu0 %v7565
      %v7567 = vpop.xlane.xlu0 %7566
      %v7568 = vsel %vm5317, %v6819, 0.0
      %7569 = vadd.xlane.f32.xlu0 %v7568
      %v7570 = vpop.xlane.xlu0 %7569
      %v7571 = vsel %vm5317, %v6821, 0.0
      %7572 = vadd.xlane.f32.xlu0 %v7571
      %v7573 = vpop.xlane.xlu0 %7572
      %v7574 = vsel %vm5317, %v6823, 0.0
      %7575 = vadd.xlane.f32.xlu0 %v7574
      %v7576 = vpop.xlane.xlu0 %7575
      %v7577 = vsel %vm5317, %v6825, 0.0
      %7578 = vadd.xlane.f32.xlu0 %v7577
      %v7579 = vpop.xlane.xlu0 %7578
      %v7580 = vsel %vm5317, %v6827, 0.0
      %7581 = vadd.xlane.f32.xlu0 %v7580
      %v7582 = vpop.xlane.xlu0 %7581
      %v7583 = vsel %vm5317, %v6829, 0.0
      %7584 = vadd.xlane.f32.xlu0 %v7583
      %v7585 = vpop.xlane.xlu0 %7584
      %v7586 = vsel %vm5317, %v6831, 0.0
      %7587 = vadd.xlane.f32.xlu0 %v7586
      %v7588 = vpop.xlane.xlu0 %7587
      %v7589 = vsel %vm5317, %v6833, 0.0
      %7590 = vadd.xlane.f32.xlu0 %v7589
      %v7591 = vpop.xlane.xlu0 %7590
      %v7592 = vsel %vm5317, %v6835, 0.0
      %7593 = vadd.xlane.f32.xlu0 %v7592
      %v7594 = vpop.xlane.xlu0 %7593
      %v7595 = vsel %vm5317, %v6837, 0.0
      %7596 = vadd.xlane.f32.xlu0 %v7595
      %v7597 = vpop.xlane.xlu0 %7596
      %v7598 = vsel %vm5317, %v6839, 0.0
      %7599 = vadd.xlane.f32.xlu0 %v7598
      %v7600 = vpop.xlane.xlu0 %7599
      %v7601 = vsel %vm5317, %v6841, 0.0
      %7602 = vadd.xlane.f32.xlu0 %v7601
      %v7603 = vpop.xlane.xlu0 %7602
      %v7604 = vsel %vm5317, %v6843, 0.0
      %7605 = vadd.xlane.f32.xlu0 %v7604
      %v7606 = vpop.xlane.xlu0 %7605
      %v7607 = vsel %vm5317, %v6845, 0.0
      %7608 = vadd.xlane.f32.xlu0 %v7607
      %v7609 = vpop.xlane.xlu0 %7608
      %v7610 = vsel %vm5317, %v6847, 0.0
      %7611 = vadd.xlane.f32.xlu0 %v7610
      %v7612 = vpop.xlane.xlu0 %7611
      %v7613 = vsel %vm5317, %v6849, 0.0
      %7614 = vadd.xlane.f32.xlu0 %v7613
      %v7615 = vpop.xlane.xlu0 %7614
      %v7616 = vsel %vm5317, %v6851, 0.0
      %7617 = vadd.xlane.f32.xlu0 %v7616
      %v7618 = vpop.xlane.xlu0 %7617
      %v7619 = vsel %vm5317, %v6853, 0.0
      %7620 = vadd.xlane.f32.xlu0 %v7619
      %v7621 = vpop.xlane.xlu0 %7620
      %v7622 = vrcp.pop %v6856
      %v7623 = vrcp.pop %v6859
      %v7624 = vrcp.pop %v6862
      %v7625 = vrcp.pop %v6865
      %v7626 = vrcp.pop %v6868
      %v7627 = vrcp.pop %v6871
      %v7628 = vrcp.pop %v6874
      %v7629 = vrcp.pop %v6877
      %v7630 = vrcp.pop %v6880
      %v7631 = vrcp.pop %v6883
      %v7632 = vrcp.pop %v6886
      %v7633 = vrcp.pop %v6889
      %v7634 = vrcp.pop %v6892
      %v7635 = vrcp.pop %v6895
      %v7636 = vrcp.pop %v6898
      %v7637 = vrcp.pop %v6901
      %v7638 = vrcp.pop %v6904
      %v7639 = vrcp.pop %v6907
      %v7640 = vrcp.pop %v6910
      %v7641 = vrcp.pop %v6913
      %v7642 = vrcp.pop %v6916
      %v7643 = vrcp.pop %v6919
      %v7644 = vrcp.pop %v6922
      %v7645 = vrcp.pop %v6925
      %v7646 = vrcp.pop %v6928
      %v7647 = vrcp.pop %v6931
      %v7648 = vrcp.pop %v6934
      %v7649 = vrcp.pop %v6937
      %v7650 = vrcp.pop %v6940
      %v7651 = vrcp.pop %v6943
      %v7652 = vrcp.pop %v6946
      %v7653 = vrcp.pop %v6949
      %v7654 = vrcp.pop %v6952
      %v7655 = vrcp.pop %v6955
      %v7656 = vrcp.pop %v6958
      %v7657 = vrcp.pop %v6961
      %v7658 = vrcp.pop %v6964
      %v7659 = vrcp.pop %v6967
      %v7660 = vrcp.pop %v6970
      %v7661 = vrcp.pop %v6973
      %v7662 = vrcp.pop %v6976
      %v7663 = vrcp.pop %v6979
      %v7664 = vrcp.pop %v6982
      %v7665 = vrcp.pop %v6985
      %v7666 = vrcp.pop %v6988
      %v7667 = vrcp.pop %v6991
      %v7668 = vrcp.pop %v6994
      %v7669 = vrcp.pop %v6997
      %v7670 = vrcp.pop %v7000
      %v7671 = vrcp.pop %v7003
      %v7672 = vrcp.pop %v7006
      %v7673 = vrcp.pop %v7009
      %v7674 = vrcp.pop %v7012
      %v7675 = vrcp.pop %v7015
      %v7676 = vrcp.pop %v7018
      %v7677 = vrcp.pop %v7021
      %v7678 = vrcp.pop %v7024
      %v7679 = vrcp.pop %v7027
      %v7680 = vrcp.pop %v7030
      %v7681 = vrcp.pop %v7033
      %v7682 = vrcp.pop %v7036
      %v7683 = vrcp.pop %v7039
      %v7684 = vrcp.pop %v7042
      %v7685 = vrcp.pop %v7045
      %v7686 = vrcp.pop %v7048
      %v7687 = vrcp.pop %v7051
      %v7688 = vrcp.pop %v7054
      %v7689 = vrcp.pop %v7057
      %v7690 = vrcp.pop %v7060
      %v7691 = vrcp.pop %v7063
      %v7692 = vrcp.pop %v7066
      %v7693 = vrcp.pop %v7069
      %v7694 = vrcp.pop %v7072
      %v7695 = vrcp.pop %v7075
      %v7696 = vrcp.pop %v7078
      %v7697 = vrcp.pop %v7081
      %v7698 = vrcp.pop %v7084
      %v7699 = vrcp.pop %v7087
      %v7700 = vrcp.pop %v7090
      %v7701 = vrcp.pop %v7093
      %v7702 = vrcp.pop %v7096
      %v7703 = vrcp.pop %v7099
      %v7704 = vrcp.pop %v7102
      %v7705 = vrcp.pop %v7105
      %v7706 = vrcp.pop %v7108
      %v7707 = vrcp.pop %v7111
      %v7708 = vrcp.pop %v7114
      %v7709 = vrcp.pop %v7117
      %v7710 = vrcp.pop %v7120
      %v7711 = vrcp.pop %v7123
      %v7712 = vrcp.pop %v7126
      %v7713 = vrcp.pop %v7129
      %v7714 = vrcp.pop %v7132
      %v7715 = vrcp.pop %v7135
      %v7716 = vrcp.pop %v7138
      %v7717 = vrcp.pop %v7141
      %v7718 = vrcp.pop %v7144
      %v7719 = vrcp.pop %v7147
      %v7720 = vrcp.pop %v7150
      %v7721 = vrcp.pop %v7153
      %v7722 = vrcp.pop %v7156
      %v7723 = vrcp.pop %v7159
      %v7724 = vrcp.pop %v7162
      %v7725 = vrcp.pop %v7165
      %v7726 = vrcp.pop %v7168
      %v7727 = vrcp.pop %v7171
      %v7728 = vrcp.pop %v7174
      %v7729 = vrcp.pop %v7177
      %v7730 = vrcp.pop %v7180
      %v7731 = vrcp.pop %v7183
      %v7732 = vrcp.pop %v7186
      %v7733 = vrcp.pop %v7189
      %v7734 = vrcp.pop %v7192
      %v7735 = vrcp.pop %v7195
      %v7736 = vrcp.pop %v7198
      %v7737 = vrcp.pop %v7201
      %v7738 = vrcp.pop %v7204
      %v7739 = vrcp.pop %v7207
      %v7740 = vrcp.pop %v7210
      %v7741 = vrcp.pop %v7213
      %v7742 = vrcp.pop %v7216
      %v7743 = vrcp.pop %v7219
      %v7744 = vrcp.pop %v7222
      %v7745 = vrcp.pop %v7225
      %v7746 = vrcp.pop %v7228
      %v7747 = vrcp.pop %v7231
      %v7748 = vrcp.pop %v7234
      %v7749 = vrcp.pop %v7237
      %v7750 = vrcp.pop %v7240
      %v7751 = vrcp.pop %v7243
      %v7752 = vrcp.pop %v7246
      %v7753 = vrcp.pop %v7249
      %v7754 = vrcp.pop %v7252
      %v7755 = vrcp.pop %v7255
      %v7756 = vrcp.pop %v7258
      %v7757 = vrcp.pop %v7261
      %v7758 = vrcp.pop %v7264
      %v7759 = vrcp.pop %v7267
      %v7760 = vrcp.pop %v7270
      %v7761 = vrcp.pop %v7273
      %v7762 = vrcp.pop %v7276
      %v7763 = vrcp.pop %v7279
      %v7764 = vrcp.pop %v7282
      %v7765 = vrcp.pop %v7285
      %v7766 = vrcp.pop %v7288
      %v7767 = vrcp.pop %v7291
      %v7768 = vrcp.pop %v7294
      %v7769 = vrcp.pop %v7297
      %v7770 = vrcp.pop %v7300
      %v7771 = vrcp.pop %v7303
      %v7772 = vrcp.pop %v7306
      %v7773 = vrcp.pop %v7309
      %v7774 = vrcp.pop %v7312
      %v7775 = vrcp.pop %v7315
      %v7776 = vrcp.pop %v7318
      %v7777 = vrcp.pop %v7321
      %v7778 = vrcp.pop %v7324
      %v7779 = vrcp.pop %v7327
      %v7780 = vrcp.pop %v7330
      %v7781 = vrcp.pop %v7333
      %v7782 = vrcp.pop %v7336
      %v7783 = vrcp.pop %v7339
      %v7784 = vrcp.pop %v7342
      %v7785 = vrcp.pop %v7345
      %v7786 = vrcp.pop %v7348
      %v7787 = vrcp.pop %v7351
      %v7788 = vrcp.pop %v7354
      %v7789 = vrcp.pop %v7357
      %v7790 = vrcp.pop %v7360
      %v7791 = vrcp.pop %v7363
      %v7792 = vrcp.pop %v7366
      %v7793 = vrcp.pop %v7369
      %v7794 = vrcp.pop %v7372
      %v7795 = vrcp.pop %v7375
      %v7796 = vrcp.pop %v7378
      %v7797 = vrcp.pop %v7381
      %v7798 = vrcp.pop %v7384
      %v7799 = vrcp.pop %v7387
      %v7800 = vrcp.pop %v7390
      %v7801 = vrcp.pop %v7393
      %v7802 = vrcp.pop %v7396
      %v7803 = vrcp.pop %v7399
      %v7804 = vrcp.pop %v7402
      %v7805 = vrcp.pop %v7405
      %v7806 = vrcp.pop %v7408
      %v7807 = vrcp.pop %v7411
      %v7808 = vrcp.pop %v7414
      %v7809 = vrcp.pop %v7417
      %v7810 = vrcp.pop %v7420
      %v7811 = vrcp.pop %v7423
      %v7812 = vrcp.pop %v7426
      %v7813 = vrcp.pop %v7429
      %v7814 = vrcp.pop %v7432
      %v7815 = vrcp.pop %v7435
      %v7816 = vrcp.pop %v7438
      %v7817 = vrcp.pop %v7441
      %v7818 = vrcp.pop %v7444
      %v7819 = vrcp.pop %v7447
      %v7820 = vrcp.pop %v7450
      %v7821 = vrcp.pop %v7453
      %v7822 = vrcp.pop %v7456
      %v7823 = vrcp.pop %v7459
      %v7824 = vrcp.pop %v7462
      %v7825 = vrcp.pop %v7465
      %v7826 = vrcp.pop %v7468
      %v7827 = vrcp.pop %v7471
      %v7828 = vrcp.pop %v7474
      %v7829 = vrcp.pop %v7477
      %v7830 = vrcp.pop %v7480
      %v7831 = vrcp.pop %v7483
      %v7832 = vrcp.pop %v7486
      %v7833 = vrcp.pop %v7489
      %v7834 = vrcp.pop %v7492
      %v7835 = vrcp.pop %v7495
      %v7836 = vrcp.pop %v7498
      %v7837 = vrcp.pop %v7501
      %v7838 = vrcp.pop %v7504
      %v7839 = vrcp.pop %v7507
      %v7840 = vrcp.pop %v7510
      %v7841 = vrcp.pop %v7513
      %v7842 = vrcp.pop %v7516
      %v7843 = vrcp.pop %v7519
      %v7844 = vrcp.pop %v7522
      %v7845 = vrcp.pop %v7525
      %v7846 = vrcp.pop %v7528
      %v7847 = vrcp.pop %v7531
      %v7848 = vrcp.pop %v7534
      %v7849 = vrcp.pop %v7537
      %v7850 = vrcp.pop %v7540
      %v7851 = vrcp.pop %v7543
      %v7852 = vrcp.pop %v7546
      %v7853 = vrcp.pop %v7549
      %v7854 = vrcp.pop %v7552
      %v7855 = vrcp.pop %v7555
      %v7856 = vrcp.pop %v7558
      %v7857 = vrcp.pop %v7561
      %v7858 = vrcp.pop %v7564
      %v7859 = vrcp.pop %v7567
      %v7860 = vrcp.pop %v7570
      %v7861 = vrcp.pop %v7573
      %v7862 = vrcp.pop %v7576
      %v7863 = vrcp.pop %v7579
      %v7864 = vrcp.pop %v7582
      %v7865 = vrcp.pop %v7585
      %v7866 = vrcp.pop %v7588
      %v7867 = vrcp.pop %v7591
      %v7868 = vrcp.pop %v7594
      %v7869 = vrcp.pop %v7597
      %v7870 = vrcp.pop %v7600
      %v7871 = vrcp.pop %v7603
      %v7872 = vrcp.pop %v7606
      %v7873 = vrcp.pop %v7609
      %v7874 = vrcp.pop %v7612
      %v7875 = vrcp.pop %v7615
      %v7876 = vrcp.pop %v7618
      %v7877 = vrcp.pop %v7621
      %v7878 = vmul.f32 %v6343, %v7622
      %v7879 = vmul.f32 %v6345, %v7623
      %v7880 = vmul.f32 %v6347, %v7624
      %v7881 = vmul.f32 %v6349, %v7625
      %v7882 = vmul.f32 %v6351, %v7626
      %v7883 = vmul.f32 %v6353, %v7627
      %v7884 = vmul.f32 %v6355, %v7628
      %v7885 = vmul.f32 %v6357, %v7629
      %v7886 = vmul.f32 %v6359, %v7630
      %v7887 = vmul.f32 %v6361, %v7631
      %v7888 = vmul.f32 %v6363, %v7632
      %v7889 = vmul.f32 %v6365, %v7633
      %v7890 = vmul.f32 %v6367, %v7634
      %v7891 = vmul.f32 %v6369, %v7635
      %v7892 = vmul.f32 %v6371, %v7636
      %v7893 = vmul.f32 %v6373, %v7637
      %v7894 = vmul.f32 %v6375, %v7638
      %v7895 = vmul.f32 %v6377, %v7639
      %v7896 = vmul.f32 %v6379, %v7640
      %v7897 = vmul.f32 %v6381, %v7641
      %v7898 = vmul.f32 %v6383, %v7642
      %v7899 = vmul.f32 %v6385, %v7643
      %v7900 = vmul.f32 %v6387, %v7644
      %v7901 = vmul.f32 %v6389, %v7645
      %v7902 = vmul.f32 %v6391, %v7646
      %v7903 = vmul.f32 %v6393, %v7647
      %v7904 = vmul.f32 %v6395, %v7648
      %v7905 = vmul.f32 %v6397, %v7649
      %v7906 = vmul.f32 %v6399, %v7650
      %v7907 = vmul.f32 %v6401, %v7651
      %v7908 = vmul.f32 %v6403, %v7652
      %v7909 = vmul.f32 %v6405, %v7653
      %v7910 = vmul.f32 %v6407, %v7654
      %v7911 = vmul.f32 %v6409, %v7655
      %v7912 = vmul.f32 %v6411, %v7656
      %v7913 = vmul.f32 %v6413, %v7657
      %v7914 = vmul.f32 %v6415, %v7658
      %v7915 = vmul.f32 %v6417, %v7659
      %v7916 = vmul.f32 %v6419, %v7660
      %v7917 = vmul.f32 %v6421, %v7661
      %v7918 = vmul.f32 %v6423, %v7662
      %v7919 = vmul.f32 %v6425, %v7663
      %v7920 = vmul.f32 %v6427, %v7664
      %v7921 = vmul.f32 %v6429, %v7665
      %v7922 = vmul.f32 %v6431, %v7666
      %v7923 = vmul.f32 %v6433, %v7667
      %v7924 = vmul.f32 %v6435, %v7668
      %v7925 = vmul.f32 %v6437, %v7669
      %v7926 = vmul.f32 %v6439, %v7670
      %v7927 = vmul.f32 %v6441, %v7671
      %v7928 = vmul.f32 %v6443, %v7672
      %v7929 = vmul.f32 %v6445, %v7673
      %v7930 = vmul.f32 %v6447, %v7674
      %v7931 = vmul.f32 %v6449, %v7675
      %v7932 = vmul.f32 %v6451, %v7676
      %v7933 = vmul.f32 %v6453, %v7677
      %v7934 = vmul.f32 %v6455, %v7678
      %v7935 = vmul.f32 %v6457, %v7679
      %v7936 = vmul.f32 %v6459, %v7680
      %v7937 = vmul.f32 %v6461, %v7681
      %v7938 = vmul.f32 %v6463, %v7682
      %v7939 = vmul.f32 %v6465, %v7683
      %v7940 = vmul.f32 %v6467, %v7684
      %v7941 = vmul.f32 %v6469, %v7685
      %v7942 = vmul.f32 %v6471, %v7686
      %v7943 = vmul.f32 %v6473, %v7687
      %v7944 = vmul.f32 %v6475, %v7688
      %v7945 = vmul.f32 %v6477, %v7689
      %v7946 = vmul.f32 %v6479, %v7690
      %v7947 = vmul.f32 %v6481, %v7691
      %v7948 = vmul.f32 %v6483, %v7692
      %v7949 = vmul.f32 %v6485, %v7693
      %v7950 = vmul.f32 %v6487, %v7694
      %v7951 = vmul.f32 %v6489, %v7695
      %v7952 = vmul.f32 %v6491, %v7696
      %v7953 = vmul.f32 %v6493, %v7697
      %v7954 = vmul.f32 %v6495, %v7698
      %v7955 = vmul.f32 %v6497, %v7699
      %v7956 = vmul.f32 %v6499, %v7700
      %v7957 = vmul.f32 %v6501, %v7701
      %v7958 = vmul.f32 %v6503, %v7702
      %v7959 = vmul.f32 %v6505, %v7703
      %v7960 = vmul.f32 %v6507, %v7704
      %v7961 = vmul.f32 %v6509, %v7705
      %v7962 = vmul.f32 %v6511, %v7706
      %v7963 = vmul.f32 %v6513, %v7707
      %v7964 = vmul.f32 %v6515, %v7708
      %v7965 = vmul.f32 %v6517, %v7709
      %v7966 = vmul.f32 %v6519, %v7710
      %v7967 = vmul.f32 %v6521, %v7711
      %v7968 = vmul.f32 %v6523, %v7712
      %v7969 = vmul.f32 %v6525, %v7713
      %v7970 = vmul.f32 %v6527, %v7714
      %v7971 = vmul.f32 %v6529, %v7715
      %v7972 = vmul.f32 %v6531, %v7716
      %v7973 = vmul.f32 %v6533, %v7717
      %v7974 = vmul.f32 %v6535, %v7718
      %v7975 = vmul.f32 %v6537, %v7719
      %v7976 = vmul.f32 %v6539, %v7720
      %v7977 = vmul.f32 %v6541, %v7721
      %v7978 = vmul.f32 %v6543, %v7722
      %v7979 = vmul.f32 %v6545, %v7723
      %v7980 = vmul.f32 %v6547, %v7724
      %v7981 = vmul.f32 %v6549, %v7725
      %v7982 = vmul.f32 %v6551, %v7726
      %v7983 = vmul.f32 %v6553, %v7727
      %v7984 = vmul.f32 %v6555, %v7728
      %v7985 = vmul.f32 %v6557, %v7729
      %v7986 = vmul.f32 %v6559, %v7730
      %v7987 = vmul.f32 %v6561, %v7731
      %v7988 = vmul.f32 %v6563, %v7732
      %v7989 = vmul.f32 %v6565, %v7733
      %v7990 = vmul.f32 %v6567, %v7734
      %v7991 = vmul.f32 %v6569, %v7735
      %v7992 = vmul.f32 %v6571, %v7736
      %v7993 = vmul.f32 %v6573, %v7737
      %v7994 = vmul.f32 %v6575, %v7738
      %v7995 = vmul.f32 %v6577, %v7739
      %v7996 = vmul.f32 %v6579, %v7740
      %v7997 = vmul.f32 %v6581, %v7741
      %v7998 = vmul.f32 %v6583, %v7742
      %v7999 = vmul.f32 %v6585, %v7743
      %v8000 = vmul.f32 %v6587, %v7744
      %v8001 = vmul.f32 %v6589, %v7745
      %v8002 = vmul.f32 %v6591, %v7746
      %v8003 = vmul.f32 %v6593, %v7747
      %v8004 = vmul.f32 %v6595, %v7748
      %v8005 = vmul.f32 %v6597, %v7749
      %v8006 = vmul.f32 %v6599, %v7750
      %v8007 = vmul.f32 %v6601, %v7751
      %v8008 = vmul.f32 %v6603, %v7752
      %v8009 = vmul.f32 %v6605, %v7753
      %v8010 = vmul.f32 %v6607, %v7754
      %v8011 = vmul.f32 %v6609, %v7755
      %v8012 = vmul.f32 %v6611, %v7756
      %v8013 = vmul.f32 %v6613, %v7757
      %v8014 = vmul.f32 %v6615, %v7758
      %v8015 = vmul.f32 %v6617, %v7759
      %v8016 = vmul.f32 %v6619, %v7760
      %v8017 = vmul.f32 %v6621, %v7761
      %v8018 = vmul.f32 %v6623, %v7762
      %v8019 = vmul.f32 %v6625, %v7763
      %v8020 = vmul.f32 %v6627, %v7764
      %v8021 = vmul.f32 %v6629, %v7765
      %v8022 = vmul.f32 %v6631, %v7766
      %v8023 = vmul.f32 %v6633, %v7767
      %v8024 = vmul.f32 %v6635, %v7768
      %v8025 = vmul.f32 %v6637, %v7769
      %v8026 = vmul.f32 %v6639, %v7770
      %v8027 = vmul.f32 %v6641, %v7771
      %v8028 = vmul.f32 %v6643, %v7772
      %v8029 = vmul.f32 %v6645, %v7773
      %v8030 = vmul.f32 %v6647, %v7774
      %v8031 = vmul.f32 %v6649, %v7775
      %v8032 = vmul.f32 %v6651, %v7776
      %v8033 = vmul.f32 %v6653, %v7777
      %v8034 = vmul.f32 %v6655, %v7778
      %v8035 = vmul.f32 %v6657, %v7779
      %v8036 = vmul.f32 %v6659, %v7780
      %v8037 = vmul.f32 %v6661, %v7781
      %v8038 = vmul.f32 %v6663, %v7782
      %v8039 = vmul.f32 %v6665, %v7783
      %v8040 = vmul.f32 %v6667, %v7784
      %v8041 = vmul.f32 %v6669, %v7785
      %v8042 = vmul.f32 %v6671, %v7786
      %v8043 = vmul.f32 %v6673, %v7787
      %v8044 = vmul.f32 %v6675, %v7788
      %v8045 = vmul.f32 %v6677, %v7789
      %v8046 = vmul.f32 %v6679, %v7790
      %v8047 = vmul.f32 %v6681, %v7791
      %v8048 = vmul.f32 %v6683, %v7792
      %v8049 = vmul.f32 %v6685, %v7793
      %v8050 = vmul.f32 %v6687, %v7794
      %v8051 = vmul.f32 %v6689, %v7795
      %v8052 = vmul.f32 %v6691, %v7796
      %v8053 = vmul.f32 %v6693, %v7797
      %v8054 = vmul.f32 %v6695, %v7798
      %v8055 = vmul.f32 %v6697, %v7799
      %v8056 = vmul.f32 %v6699, %v7800
      %v8057 = vmul.f32 %v6701, %v7801
      %v8058 = vmul.f32 %v6703, %v7802
      %v8059 = vmul.f32 %v6705, %v7803
      %v8060 = vmul.f32 %v6707, %v7804
      %v8061 = vmul.f32 %v6709, %v7805
      %v8062 = vmul.f32 %v6711, %v7806
      %v8063 = vmul.f32 %v6713, %v7807
      %v8064 = vmul.f32 %v6715, %v7808
      %v8065 = vmul.f32 %v6717, %v7809
      %v8066 = vmul.f32 %v6719, %v7810
      %v8067 = vmul.f32 %v6721, %v7811
      %v8068 = vmul.f32 %v6723, %v7812
      %v8069 = vmul.f32 %v6725, %v7813
      %v8070 = vmul.f32 %v6727, %v7814
      %v8071 = vmul.f32 %v6729, %v7815
      %v8072 = vmul.f32 %v6731, %v7816
      %v8073 = vmul.f32 %v6733, %v7817
      %v8074 = vmul.f32 %v6735, %v7818
      %v8075 = vmul.f32 %v6737, %v7819
      %v8076 = vmul.f32 %v6739, %v7820
      %v8077 = vmul.f32 %v6741, %v7821
      %v8078 = vmul.f32 %v6743, %v7822
      %v8079 = vmul.f32 %v6745, %v7823
      %v8080 = vmul.f32 %v6747, %v7824
      %v8081 = vmul.f32 %v6749, %v7825
      %v8082 = vmul.f32 %v6751, %v7826
      %v8083 = vmul.f32 %v6753, %v7827
      %v8084 = vmul.f32 %v6755, %v7828
      %v8085 = vmul.f32 %v6757, %v7829
      %v8086 = vmul.f32 %v6759, %v7830
      %v8087 = vmul.f32 %v6761, %v7831
      %v8088 = vmul.f32 %v6763, %v7832
      %v8089 = vmul.f32 %v6765, %v7833
      %v8090 = vmul.f32 %v6767, %v7834
      %v8091 = vmul.f32 %v6769, %v7835
      %v8092 = vmul.f32 %v6771, %v7836
      %v8093 = vmul.f32 %v6773, %v7837
      %v8094 = vmul.f32 %v6775, %v7838
      %v8095 = vmul.f32 %v6777, %v7839
      %v8096 = vmul.f32 %v6779, %v7840
      %v8097 = vmul.f32 %v6781, %v7841
      %v8098 = vmul.f32 %v6783, %v7842
      %v8099 = vmul.f32 %v6785, %v7843
      %v8100 = vmul.f32 %v6787, %v7844
      %v8101 = vmul.f32 %v6789, %v7845
      %v8102 = vmul.f32 %v6791, %v7846
      %v8103 = vmul.f32 %v6793, %v7847
      %v8104 = vmul.f32 %v6795, %v7848
      %v8105 = vmul.f32 %v6797, %v7849
      %v8106 = vmul.f32 %v6799, %v7850
      %v8107 = vmul.f32 %v6801, %v7851
      %v8108 = vmul.f32 %v6803, %v7852
      %v8109 = vmul.f32 %v6805, %v7853
      %v8110 = vmul.f32 %v6807, %v7854
      %v8111 = vmul.f32 %v6809, %v7855
      %v8112 = vmul.f32 %v6811, %v7856
      %v8113 = vmul.f32 %v6813, %v7857
      %v8114 = vmul.f32 %v6815, %v7858
      %v8115 = vmul.f32 %v6817, %v7859
      %v8116 = vmul.f32 %v6819, %v7860
      %v8117 = vmul.f32 %v6821, %v7861
      %v8118 = vmul.f32 %v6823, %v7862
      %v8119 = vmul.f32 %v6825, %v7863
      %v8120 = vmul.f32 %v6827, %v7864
      %v8121 = vmul.f32 %v6829, %v7865
      %v8122 = vmul.f32 %v6831, %v7866
      %v8123 = vmul.f32 %v6833, %v7867
      %v8124 = vmul.f32 %v6835, %v7868
      %v8125 = vmul.f32 %v6837, %v7869
      %v8126 = vmul.f32 %v6839, %v7870
      %v8127 = vmul.f32 %v6841, %v7871
      %v8128 = vmul.f32 %v6843, %v7872
      %v8129 = vmul.f32 %v6845, %v7873
      %v8130 = vmul.f32 %v6847, %v7874
      %v8131 = vmul.f32 %v6849, %v7875
      %v8132 = vmul.f32 %v6851, %v7876
      %v8133 = vmul.f32 %v6853, %v7877
      %v8134 = vld [vmem:[%s4] sm:$0x7]
      %v8136 = vsel %vm5317, %v7878, 0
      %v8139 = vsel %vm5317, %v7879, 0
      %v8142 = vsel %vm5317, %v7880, 0
      %v8145 = vsel %vm5317, %v7881, 0
      %v8148 = vsel %vm5317, %v7882, 0
      %v8151 = vsel %vm5317, %v7883, 0
      %v8154 = vsel %vm5317, %v7884, 0
      %v8157 = vsel %vm5317, %v7885, 0
      %v8160 = vsel %vm5317, %v7886, 0
      %v8163 = vsel %vm5317, %v7887, 0
      %v8166 = vsel %vm5317, %v7888, 0
      %v8169 = vsel %vm5317, %v7889, 0
      %v8172 = vsel %vm5317, %v7890, 0
      %v8175 = vsel %vm5317, %v7891, 0
      %v8178 = vsel %vm5317, %v7892, 0
      %v8181 = vsel %vm5317, %v7893, 0
      %v8184 = vsel %vm5317, %v7894, 0
      %v8187 = vsel %vm5317, %v7895, 0
      %v8190 = vsel %vm5317, %v7896, 0
      %v8193 = vsel %vm5317, %v7897, 0
      %v8196 = vsel %vm5317, %v7898, 0
      %v8199 = vsel %vm5317, %v7899, 0
      %v8202 = vsel %vm5317, %v7900, 0
      %v8205 = vsel %vm5317, %v7901, 0
      %v8208 = vsel %vm5317, %v7902, 0
      %v8211 = vsel %vm5317, %v7903, 0
      %v8214 = vsel %vm5317, %v7904, 0
      %v8217 = vsel %vm5317, %v7905, 0
      %v8220 = vsel %vm5317, %v7906, 0
      %v8223 = vsel %vm5317, %v7907, 0
      %v8226 = vsel %vm5317, %v7908, 0
      %v8229 = vsel %vm5317, %v7909, 0
      %v8232 = vsel %vm5317, %v7910, 0
      %v8235 = vsel %vm5317, %v7911, 0
      %v8238 = vsel %vm5317, %v7912, 0
      %v8241 = vsel %vm5317, %v7913, 0
      %v8244 = vsel %vm5317, %v7914, 0
      %v8247 = vsel %vm5317, %v7915, 0
      %v8250 = vsel %vm5317, %v7916, 0
      %v8253 = vsel %vm5317, %v7917, 0
      %v8256 = vsel %vm5317, %v7918, 0
      %v8259 = vsel %vm5317, %v7919, 0
      %v8262 = vsel %vm5317, %v7920, 0
      %v8265 = vsel %vm5317, %v7921, 0
      %v8268 = vsel %vm5317, %v7922, 0
      %v8271 = vsel %vm5317, %v7923, 0
      %v8274 = vsel %vm5317, %v7924, 0
      %v8277 = vsel %vm5317, %v7925, 0
      %v8280 = vsel %vm5317, %v7926, 0
      %v8283 = vsel %vm5317, %v7927, 0
      %v8286 = vsel %vm5317, %v7928, 0
      %v8289 = vsel %vm5317, %v7929, 0
      %v8292 = vsel %vm5317, %v7930, 0
      %v8295 = vsel %vm5317, %v7931, 0
      %v8298 = vsel %vm5317, %v7932, 0
      %v8301 = vsel %vm5317, %v7933, 0
      %v8304 = vsel %vm5317, %v7934, 0
      %v8307 = vsel %vm5317, %v7935, 0
      %v8310 = vsel %vm5317, %v7936, 0
      %v8313 = vsel %vm5317, %v7937, 0
      %v8316 = vsel %vm5317, %v7938, 0
      %v8319 = vsel %vm5317, %v7939, 0
      %v8322 = vsel %vm5317, %v7940, 0
      %v8325 = vsel %vm5317, %v7941, 0
      %v8328 = vsel %vm5317, %v7942, 0
      %v8331 = vsel %vm5317, %v7943, 0
      %v8334 = vsel %vm5317, %v7944, 0
      %v8337 = vsel %vm5317, %v7945, 0
      %v8340 = vsel %vm5317, %v7946, 0
      %v8343 = vsel %vm5317, %v7947, 0
      %v8346 = vsel %vm5317, %v7948, 0
      %v8349 = vsel %vm5317, %v7949, 0
      %v8352 = vsel %vm5317, %v7950, 0
      %v8355 = vsel %vm5317, %v7951, 0
      %v8358 = vsel %vm5317, %v7952, 0
      %v8361 = vsel %vm5317, %v7953, 0
      %v8364 = vsel %vm5317, %v7954, 0
      %v8367 = vsel %vm5317, %v7955, 0
      %v8370 = vsel %vm5317, %v7956, 0
      %v8373 = vsel %vm5317, %v7957, 0
      %v8376 = vsel %vm5317, %v7958, 0
      %v8379 = vsel %vm5317, %v7959, 0
      %v8382 = vsel %vm5317, %v7960, 0
      %v8385 = vsel %vm5317, %v7961, 0
      %v8388 = vsel %vm5317, %v7962, 0
      %v8391 = vsel %vm5317, %v7963, 0
      %v8394 = vsel %vm5317, %v7964, 0
      %v8397 = vsel %vm5317, %v7965, 0
      %v8400 = vsel %vm5317, %v7966, 0
      %v8403 = vsel %vm5317, %v7967, 0
      %v8406 = vsel %vm5317, %v7968, 0
      %v8409 = vsel %vm5317, %v7969, 0
      %v8412 = vsel %vm5317, %v7970, 0
      %v8415 = vsel %vm5317, %v7971, 0
      %v8418 = vsel %vm5317, %v7972, 0
      %v8421 = vsel %vm5317, %v7973, 0
      %v8424 = vsel %vm5317, %v7974, 0
      %v8427 = vsel %vm5317, %v7975, 0
      %v8430 = vsel %vm5317, %v7976, 0
      %v8433 = vsel %vm5317, %v7977, 0
      %v8436 = vsel %vm5317, %v7978, 0
      %v8439 = vsel %vm5317, %v7979, 0
      %v8442 = vsel %vm5317, %v7980, 0
      %v8445 = vsel %vm5317, %v7981, 0
      %v8448 = vsel %vm5317, %v7982, 0
      %v8451 = vsel %vm5317, %v7983, 0
      %v8454 = vsel %vm5317, %v7984, 0
      %v8457 = vsel %vm5317, %v7985, 0
      %v8460 = vsel %vm5317, %v7986, 0
      %v8463 = vsel %vm5317, %v7987, 0
      %v8466 = vsel %vm5317, %v7988, 0
      %v8469 = vsel %vm5317, %v7989, 0
      %v8472 = vsel %vm5317, %v7990, 0
      %v8475 = vsel %vm5317, %v7991, 0
      %v8478 = vsel %vm5317, %v7992, 0
      %v8481 = vsel %vm5317, %v7993, 0
      %v8484 = vsel %vm5317, %v7994, 0
      %v8487 = vsel %vm5317, %v7995, 0
      %v8490 = vsel %vm5317, %v7996, 0
      %v8493 = vsel %vm5317, %v7997, 0
      %v8496 = vsel %vm5317, %v7998, 0
      %v8499 = vsel %vm5317, %v7999, 0
      %v8502 = vsel %vm5317, %v8000, 0
      %v8505 = vsel %vm5317, %v8001, 0
      %v8508 = vsel %vm5317, %v8002, 0
      %v8511 = vsel %vm5317, %v8003, 0
      %v8514 = vsel %vm5317, %v8004, 0
      %v8517 = vsel %vm5317, %v8005, 0
      %v8520 = vsel %vm5317, %v8006, 0
      %v8523 = vsel %vm5317, %v8007, 0
      %v8526 = vsel %vm5317, %v8008, 0
      %v8529 = vsel %vm5317, %v8009, 0
      %v8532 = vsel %vm5317, %v8010, 0
      %v8535 = vsel %vm5317, %v8011, 0
      %v8538 = vsel %vm5317, %v8012, 0
      %v8541 = vsel %vm5317, %v8013, 0
      %v8544 = vsel %vm5317, %v8014, 0
      %v8547 = vsel %vm5317, %v8015, 0
      %v8550 = vsel %vm5317, %v8016, 0
      %v8553 = vsel %vm5317, %v8017, 0
      %v8556 = vsel %vm5317, %v8018, 0
      %v8559 = vsel %vm5317, %v8019, 0
      %v8562 = vsel %vm5317, %v8020, 0
      %v8565 = vsel %vm5317, %v8021, 0
      %v8568 = vsel %vm5317, %v8022, 0
      %v8571 = vsel %vm5317, %v8023, 0
      %v8574 = vsel %vm5317, %v8024, 0
      %v8577 = vsel %vm5317, %v8025, 0
      %v8580 = vsel %vm5317, %v8026, 0
      %v8583 = vsel %vm5317, %v8027, 0
      %v8586 = vsel %vm5317, %v8028, 0
      %v8589 = vsel %vm5317, %v8029, 0
      %v8592 = vsel %vm5317, %v8030, 0
      %v8595 = vsel %vm5317, %v8031, 0
      %v8598 = vsel %vm5317, %v8032, 0
      %v8601 = vsel %vm5317, %v8033, 0
      %v8604 = vsel %vm5317, %v8034, 0
      %v8607 = vsel %vm5317, %v8035, 0
      %v8610 = vsel %vm5317, %v8036, 0
      %v8613 = vsel %vm5317, %v8037, 0
      %v8616 = vsel %vm5317, %v8038, 0
      %v8619 = vsel %vm5317, %v8039, 0
      %v8622 = vsel %vm5317, %v8040, 0
      %v8625 = vsel %vm5317, %v8041, 0
      %v8628 = vsel %vm5317, %v8042, 0
      %v8631 = vsel %vm5317, %v8043, 0
      %v8634 = vsel %vm5317, %v8044, 0
      %v8637 = vsel %vm5317, %v8045, 0
      %v8640 = vsel %vm5317, %v8046, 0
      %v8643 = vsel %vm5317, %v8047, 0
      %v8646 = vsel %vm5317, %v8048, 0
      %v8649 = vsel %vm5317, %v8049, 0
      %v8652 = vsel %vm5317, %v8050, 0
      %v8655 = vsel %vm5317, %v8051, 0
      %v8658 = vsel %vm5317, %v8052, 0
      %v8661 = vsel %vm5317, %v8053, 0
      %v8664 = vsel %vm5317, %v8054, 0
      %v8667 = vsel %vm5317, %v8055, 0
      %v8670 = vsel %vm5317, %v8056, 0
      %v8673 = vsel %vm5317, %v8057, 0
      %v8676 = vsel %vm5317, %v8058, 0
      %v8679 = vsel %vm5317, %v8059, 0
      %v8682 = vsel %vm5317, %v8060, 0
      %v8685 = vsel %vm5317, %v8061, 0
      %v8688 = vsel %vm5317, %v8062, 0
      %v8691 = vsel %vm5317, %v8063, 0
      %v8694 = vsel %vm5317, %v8064, 0
      %v8697 = vsel %vm5317, %v8065, 0
      %v8700 = vsel %vm5317, %v8066, 0
      %v8703 = vsel %vm5317, %v8067, 0
      %v8706 = vsel %vm5317, %v8068, 0
      %v8709 = vsel %vm5317, %v8069, 0
      %v8712 = vsel %vm5317, %v8070, 0
      %v8715 = vsel %vm5317, %v8071, 0
      %v8718 = vsel %vm5317, %v8072, 0
      %v8721 = vsel %vm5317, %v8073, 0
      %v8724 = vsel %vm5317, %v8074, 0
      %v8727 = vsel %vm5317, %v8075, 0
      %v8730 = vsel %vm5317, %v8076, 0
      %v8733 = vsel %vm5317, %v8077, 0
      %v8736 = vsel %vm5317, %v8078, 0
      %v8739 = vsel %vm5317, %v8079, 0
      %v8742 = vsel %vm5317, %v8080, 0
      %v8745 = vsel %vm5317, %v8081, 0
      %v8748 = vsel %vm5317, %v8082, 0
      %v8751 = vsel %vm5317, %v8083, 0
      %v8754 = vsel %vm5317, %v8084, 0
      %v8757 = vsel %vm5317, %v8085, 0
      %v8760 = vsel %vm5317, %v8086, 0
      %v8763 = vsel %vm5317, %v8087, 0
      %v8766 = vsel %vm5317, %v8088, 0
      %v8769 = vsel %vm5317, %v8089, 0
      %v8772 = vsel %vm5317, %v8090, 0
      %v8775 = vsel %vm5317, %v8091, 0
      %v8778 = vsel %vm5317, %v8092, 0
      %v8781 = vsel %vm5317, %v8093, 0
      %v8784 = vsel %vm5317, %v8094, 0
      %v8787 = vsel %vm5317, %v8095, 0
      %v8790 = vsel %vm5317, %v8096, 0
      %v8793 = vsel %vm5317, %v8097, 0
      %v8796 = vsel %vm5317, %v8098, 0
      %v8799 = vsel %vm5317, %v8099, 0
      %v8802 = vsel %vm5317, %v8100, 0
      %v8805 = vsel %vm5317, %v8101, 0
      %v8808 = vsel %vm5317, %v8102, 0
      %v8811 = vsel %vm5317, %v8103, 0
      %v8814 = vsel %vm5317, %v8104, 0
      %v8817 = vsel %vm5317, %v8105, 0
      %v8820 = vsel %vm5317, %v8106, 0
      %v8823 = vsel %vm5317, %v8107, 0
      %v8826 = vsel %vm5317, %v8108, 0
      %v8829 = vsel %vm5317, %v8109, 0
      %v8832 = vsel %vm5317, %v8110, 0
      %v8835 = vsel %vm5317, %v8111, 0
      %v8838 = vsel %vm5317, %v8112, 0
      %v8841 = vsel %vm5317, %v8113, 0
      %v8844 = vsel %vm5317, %v8114, 0
      %v8847 = vsel %vm5317, %v8115, 0
      %v8850 = vsel %vm5317, %v8116, 0
      %v8853 = vsel %vm5317, %v8117, 0
      %v8856 = vsel %vm5317, %v8118, 0
      %v8859 = vsel %vm5317, %v8119, 0
      %v8862 = vsel %vm5317, %v8120, 0
      %v8865 = vsel %vm5317, %v8121, 0
      %v8868 = vsel %vm5317, %v8122, 0
      %v8871 = vsel %vm5317, %v8123, 0
      %v8874 = vsel %vm5317, %v8124, 0
      %v8877 = vsel %vm5317, %v8125, 0
      %v8880 = vsel %vm5317, %v8126, 0
      %v8883 = vsel %vm5317, %v8127, 0
      %v8886 = vsel %vm5317, %v8128, 0
      %v8889 = vsel %vm5317, %v8129, 0
      %v8892 = vsel %vm5317, %v8130, 0
      %v8895 = vsel %vm5317, %v8131, 0
      %v8898 = vsel %vm5317, %v8132, 0
      %v8901 = vsel %vm5317, %v8133, 0
      %vm8903 = vcmask 1042432
      %v8905 = vsel %vm8903, %v8134, 0
      %8907 = vmatprep.subr.mxu0 0.0
      %8908 = vmatpush1.msra.mxu0 0.0
      %8909 = vmatprep.subr.mxu0 0.0
      %8910 = vmatpush1.msra.mxu0 0.0
      %8911 = vmatprep.subr.mxu0 0.0
      %8912 = vmatpush1.msra.mxu0 0.0
      %8913 = vmatprep.subr.mxu0 0.0
      %8914 = vmatpush1.msra.mxu0 0.0
      %8915 = vmatprep.subr.mxu0 0.0
      %8916 = vmatpush1.msra.mxu0 0.0
      %8917 = vmatprep.subr.mxu0 0.0
      %8918 = vmatpush1.msra.mxu0 0.0
      %8919 = vmatprep.subr.mxu0 0.0
      %8920 = vmatpush1.msra.mxu0 0.0
      %8921 = vmatprep.subr.mxu0 0.0
      %8922 = vmatpush1.msra.mxu0 0.0
      %8923 = vmatprep.subr.mxu0 0.0
      %8924 = vmatpush1.msra.mxu0 0.0
      %8925 = vmatprep.subr.mxu0 0.0
      %8926 = vmatpush1.msra.mxu0 0.0
      %8927 = vmatprep.subr.mxu0 0.0
      %8928 = vmatpush1.msra.mxu0 0.0
      %8929 = vmatprep.subr.mxu0 0.0
      %8930 = vmatpush1.msra.mxu0 0.0
      %8931 = vmatprep.subr.mxu0 0.0
      %8932 = vmatpush1.msra.mxu0 0.0
      %8933 = vmatprep.subr.mxu0 0.0
      %8934 = vmatpush1.msra.mxu0 0.0
      %8935 = vmatprep.subr.mxu0 0.0
      %8936 = vmatpush1.msra.mxu0 0.0
      %8937 = vmatprep.subr.mxu0 0.0
      %8938 = vmatpush1.msra.mxu0 %v8905
      %8939 = vmatprep.subr.mxu0 0.0
      %8940 = vmatpush2.msra.mxu0 0.0
      %8941 = vmatprep.subr.mxu0 0.0
      %8942 = vmatpush2.msra.mxu0 0.0
      %8943 = vmatprep.subr.mxu0 0.0
      %8944 = vmatpush2.msra.mxu0 0.0
      %8945 = vmatprep.subr.mxu0 0.0
      %8946 = vmatpush2.msra.mxu0 0.0
      %8947 = vmatprep.subr.mxu0 0.0
      %8948 = vmatpush2.msra.mxu0 0.0
      %8949 = vmatprep.subr.mxu0 0.0
      %8950 = vmatpush2.msra.mxu0 0.0
      %8951 = vmatprep.subr.mxu0 0.0
      %8952 = vmatpush2.msra.mxu0 0.0
      %8953 = vmatprep.subr.mxu0 0.0
      %8954 = vmatpush2.msra.mxu0 0.0
      %8955 = vmatprep.subr.mxu0 0.0
      %8956 = vmatpush2.msra.mxu0 0.0
      %8957 = vmatprep.subr.mxu0 0.0
      %8958 = vmatpush2.msra.mxu0 0.0
      %8959 = vmatprep.subr.mxu0 0.0
      %8960 = vmatpush2.msra.mxu0 0.0
      %8961 = vmatprep.subr.mxu0 0.0
      %8962 = vmatpush2.msra.mxu0 0.0
      %8963 = vmatprep.subr.mxu0 0.0
      %8964 = vmatpush2.msra.mxu0 0.0
      %8965 = vmatprep.subr.mxu0 0.0
      %8966 = vmatpush2.msra.mxu0 0.0
      %8967 = vmatprep.subr.mxu0 0.0
      %8968 = vmatpush2.msra.mxu0 0.0
      %8969 = vmatprep.subr.mxu0 0.0
      %8970 = vmatpush2.msra.mxu0 0.0
      %8971 = vmatprep.mubr.f32.mxu0 0.0
      %8972 = vmatmul.mubr.f32.gmra.mxu0 %v8136
      %v8973 = vpop.f32.mrf.mxu0
      %v8974 = vadd.f32 0.0, %v8973
      %v8975 = vpop.f32.mrf.mxu0
      %8976 = vmatprep.mubr.f32.mxu0 0.0
      %8977 = vmatmul.mubr.f32.gmra.mxu0 %v8139
      %v8978 = vpop.f32.mrf.mxu0
      %v8979 = vadd.f32 0.0, %v8978
      %v8980 = vpop.f32.mrf.mxu0
      %8981 = vmatprep.mubr.f32.mxu0 0.0
      %8982 = vmatmul.mubr.f32.gmra.mxu0 %v8142
      %v8983 = vpop.f32.mrf.mxu0
      %v8984 = vadd.f32 0.0, %v8983
      %v8985 = vpop.f32.mrf.mxu0
      %8986 = vmatprep.mubr.f32.mxu0 0.0
      %8987 = vmatmul.mubr.f32.gmra.mxu0 %v8145
      %v8988 = vpop.f32.mrf.mxu0
      %v8989 = vadd.f32 0.0, %v8988
      %v8990 = vpop.f32.mrf.mxu0
      %8991 = vmatprep.mubr.f32.mxu0 0.0
      %8992 = vmatmul.mubr.f32.gmra.mxu0 %v8148
      %v8993 = vpop.f32.mrf.mxu0
      %v8994 = vadd.f32 0.0, %v8993
      %v8995 = vpop.f32.mrf.mxu0
      %8996 = vmatprep.mubr.f32.mxu0 0.0
      %8997 = vmatmul.mubr.f32.gmra.mxu0 %v8151
      %v8998 = vpop.f32.mrf.mxu0
      %v8999 = vadd.f32 0.0, %v8998
      %v9000 = vpop.f32.mrf.mxu0
      %9001 = vmatprep.mubr.f32.mxu0 0.0
      %9002 = vmatmul.mubr.f32.gmra.mxu0 %v8154
      %v9003 = vpop.f32.mrf.mxu0
      %v9004 = vadd.f32 0.0, %v9003
      %v9005 = vpop.f32.mrf.mxu0
      %9006 = vmatprep.mubr.f32.mxu0 0.0
      %9007 = vmatmul.mubr.f32.gmra.mxu0 %v8157
      %v9008 = vpop.f32.mrf.mxu0
      %v9009 = vadd.f32 0.0, %v9008
      %v9010 = vpop.f32.mrf.mxu0
      %9011 = vmatprep.mubr.f32.mxu0 0.0
      %9012 = vmatmul.mubr.f32.gmra.mxu0 %v8160
      %v9013 = vpop.f32.mrf.mxu0
      %v9014 = vadd.f32 0.0, %v9013
      %v9015 = vpop.f32.mrf.mxu0
      %9016 = vmatprep.mubr.f32.mxu0 0.0
      %9017 = vmatmul.mubr.f32.gmra.mxu0 %v8163
      %v9018 = vpop.f32.mrf.mxu0
      %v9019 = vadd.f32 0.0, %v9018
      %v9020 = vpop.f32.mrf.mxu0
      %9021 = vmatprep.mubr.f32.mxu0 0.0
      %9022 = vmatmul.mubr.f32.gmra.mxu0 %v8166
      %v9023 = vpop.f32.mrf.mxu0
      %v9024 = vadd.f32 0.0, %v9023
      %v9025 = vpop.f32.mrf.mxu0
      %9026 = vmatprep.mubr.f32.mxu0 0.0
      %9027 = vmatmul.mubr.f32.gmra.mxu0 %v8169
      %v9028 = vpop.f32.mrf.mxu0
      %v9029 = vadd.f32 0.0, %v9028
      %v9030 = vpop.f32.mrf.mxu0
      %9031 = vmatprep.mubr.f32.mxu0 0.0
      %9032 = vmatmul.mubr.f32.gmra.mxu0 %v8172
      %v9033 = vpop.f32.mrf.mxu0
      %v9034 = vadd.f32 0.0, %v9033
      %v9035 = vpop.f32.mrf.mxu0
      %9036 = vmatprep.mubr.f32.mxu0 0.0
      %9037 = vmatmul.mubr.f32.gmra.mxu0 %v8175
      %v9038 = vpop.f32.mrf.mxu0
      %v9039 = vadd.f32 0.0, %v9038
      %v9040 = vpop.f32.mrf.mxu0
      %9041 = vmatprep.mubr.f32.mxu0 0.0
      %9042 = vmatmul.mubr.f32.gmra.mxu0 %v8178
      %v9043 = vpop.f32.mrf.mxu0
      %v9044 = vadd.f32 0.0, %v9043
      %v9045 = vpop.f32.mrf.mxu0
      %9046 = vmatprep.mubr.f32.mxu0 0.0
      %9047 = vmatmul.mubr.f32.gmra.mxu0 %v8181
      %v9048 = vpop.f32.mrf.mxu0
      %v9049 = vadd.f32 0.0, %v9048
      %v9050 = vpop.f32.mrf.mxu0
      %9051 = vmatprep.mubr.f32.mxu0 0.0
      %9052 = vmatmul.mubr.f32.gmra.mxu0 %v8184
      %v9053 = vpop.f32.mrf.mxu0
      %v9054 = vadd.f32 0.0, %v9053
      %v9055 = vpop.f32.mrf.mxu0
      %9056 = vmatprep.mubr.f32.mxu0 0.0
      %9057 = vmatmul.mubr.f32.gmra.mxu0 %v8187
      %v9058 = vpop.f32.mrf.mxu0
      %v9059 = vadd.f32 0.0, %v9058
      %v9060 = vpop.f32.mrf.mxu0
      %9061 = vmatprep.mubr.f32.mxu0 0.0
      %9062 = vmatmul.mubr.f32.gmra.mxu0 %v8190
      %v9063 = vpop.f32.mrf.mxu0
      %v9064 = vadd.f32 0.0, %v9063
      %v9065 = vpop.f32.mrf.mxu0
      %9066 = vmatprep.mubr.f32.mxu0 0.0
      %9067 = vmatmul.mubr.f32.gmra.mxu0 %v8193
      %v9068 = vpop.f32.mrf.mxu0
      %v9069 = vadd.f32 0.0, %v9068
      %v9070 = vpop.f32.mrf.mxu0
      %9071 = vmatprep.mubr.f32.mxu0 0.0
      %9072 = vmatmul.mubr.f32.gmra.mxu0 %v8196
      %v9073 = vpop.f32.mrf.mxu0
      %v9074 = vadd.f32 0.0, %v9073
      %v9075 = vpop.f32.mrf.mxu0
      %9076 = vmatprep.mubr.f32.mxu0 0.0
      %9077 = vmatmul.mubr.f32.gmra.mxu0 %v8199
      %v9078 = vpop.f32.mrf.mxu0
      %v9079 = vadd.f32 0.0, %v9078
      %v9080 = vpop.f32.mrf.mxu0
      %9081 = vmatprep.mubr.f32.mxu0 0.0
      %9082 = vmatmul.mubr.f32.gmra.mxu0 %v8202
      %v9083 = vpop.f32.mrf.mxu0
      %v9084 = vadd.f32 0.0, %v9083
      %v9085 = vpop.f32.mrf.mxu0
      %9086 = vmatprep.mubr.f32.mxu0 0.0
      %9087 = vmatmul.mubr.f32.gmra.mxu0 %v8205
      %v9088 = vpop.f32.mrf.mxu0
      %v9089 = vadd.f32 0.0, %v9088
      %v9090 = vpop.f32.mrf.mxu0
      %9091 = vmatprep.mubr.f32.mxu0 0.0
      %9092 = vmatmul.mubr.f32.gmra.mxu0 %v8208
      %v9093 = vpop.f32.mrf.mxu0
      %v9094 = vadd.f32 0.0, %v9093
      %v9095 = vpop.f32.mrf.mxu0
      %9096 = vmatprep.mubr.f32.mxu0 0.0
      %9097 = vmatmul.mubr.f32.gmra.mxu0 %v8211
      %v9098 = vpop.f32.mrf.mxu0
      %v9099 = vadd.f32 0.0, %v9098
      %v9100 = vpop.f32.mrf.mxu0
      %9101 = vmatprep.mubr.f32.mxu0 0.0
      %9102 = vmatmul.mubr.f32.gmra.mxu0 %v8214
      %v9103 = vpop.f32.mrf.mxu0
      %v9104 = vadd.f32 0.0, %v9103
      %v9105 = vpop.f32.mrf.mxu0
      %9106 = vmatprep.mubr.f32.mxu0 0.0
      %9107 = vmatmul.mubr.f32.gmra.mxu0 %v8217
      %v9108 = vpop.f32.mrf.mxu0
      %v9109 = vadd.f32 0.0, %v9108
      %v9110 = vpop.f32.mrf.mxu0
      %9111 = vmatprep.mubr.f32.mxu0 0.0
      %9112 = vmatmul.mubr.f32.gmra.mxu0 %v8220
      %v9113 = vpop.f32.mrf.mxu0
      %v9114 = vadd.f32 0.0, %v9113
      %v9115 = vpop.f32.mrf.mxu0
      %9116 = vmatprep.mubr.f32.mxu0 0.0
      %9117 = vmatmul.mubr.f32.gmra.mxu0 %v8223
      %v9118 = vpop.f32.mrf.mxu0
      %v9119 = vadd.f32 0.0, %v9118
      %v9120 = vpop.f32.mrf.mxu0
      %9121 = vmatprep.mubr.f32.mxu0 0.0
      %9122 = vmatmul.mubr.f32.gmra.mxu0 %v8226
      %v9123 = vpop.f32.mrf.mxu0
      %v9124 = vadd.f32 0.0, %v9123
      %v9125 = vpop.f32.mrf.mxu0
      %9126 = vmatprep.mubr.f32.mxu0 0.0
      %9127 = vmatmul.mubr.f32.gmra.mxu0 %v8229
      %v9128 = vpop.f32.mrf.mxu0
      %v9129 = vadd.f32 0.0, %v9128
      %v9130 = vpop.f32.mrf.mxu0
      %9131 = vmatprep.mubr.f32.mxu0 0.0
      %9132 = vmatmul.mubr.f32.gmra.mxu0 %v8232
      %v9133 = vpop.f32.mrf.mxu0
      %v9134 = vadd.f32 0.0, %v9133
      %v9135 = vpop.f32.mrf.mxu0
      %9136 = vmatprep.mubr.f32.mxu0 0.0
      %9137 = vmatmul.mubr.f32.gmra.mxu0 %v8235
      %v9138 = vpop.f32.mrf.mxu0
      %v9139 = vadd.f32 0.0, %v9138
      %v9140 = vpop.f32.mrf.mxu0
      %9141 = vmatprep.mubr.f32.mxu0 0.0
      %9142 = vmatmul.mubr.f32.gmra.mxu0 %v8238
      %v9143 = vpop.f32.mrf.mxu0
      %v9144 = vadd.f32 0.0, %v9143
      %v9145 = vpop.f32.mrf.mxu0
      %9146 = vmatprep.mubr.f32.mxu0 0.0
      %9147 = vmatmul.mubr.f32.gmra.mxu0 %v8241
      %v9148 = vpop.f32.mrf.mxu0
      %v9149 = vadd.f32 0.0, %v9148
      %v9150 = vpop.f32.mrf.mxu0
      %9151 = vmatprep.mubr.f32.mxu0 0.0
      %9152 = vmatmul.mubr.f32.gmra.mxu0 %v8244
      %v9153 = vpop.f32.mrf.mxu0
      %v9154 = vadd.f32 0.0, %v9153
      %v9155 = vpop.f32.mrf.mxu0
      %9156 = vmatprep.mubr.f32.mxu0 0.0
      %9157 = vmatmul.mubr.f32.gmra.mxu0 %v8247
      %v9158 = vpop.f32.mrf.mxu0
      %v9159 = vadd.f32 0.0, %v9158
      %v9160 = vpop.f32.mrf.mxu0
      %9161 = vmatprep.mubr.f32.mxu0 0.0
      %9162 = vmatmul.mubr.f32.gmra.mxu0 %v8250
      %v9163 = vpop.f32.mrf.mxu0
      %v9164 = vadd.f32 0.0, %v9163
      %v9165 = vpop.f32.mrf.mxu0
      %9166 = vmatprep.mubr.f32.mxu0 0.0
      %9167 = vmatmul.mubr.f32.gmra.mxu0 %v8253
      %v9168 = vpop.f32.mrf.mxu0
      %v9169 = vadd.f32 0.0, %v9168
      %v9170 = vpop.f32.mrf.mxu0
      %9171 = vmatprep.mubr.f32.mxu0 0.0
      %9172 = vmatmul.mubr.f32.gmra.mxu0 %v8256
      %v9173 = vpop.f32.mrf.mxu0
      %v9174 = vadd.f32 0.0, %v9173
      %v9175 = vpop.f32.mrf.mxu0
      %9176 = vmatprep.mubr.f32.mxu0 0.0
      %9177 = vmatmul.mubr.f32.gmra.mxu0 %v8259
      %v9178 = vpop.f32.mrf.mxu0
      %v9179 = vadd.f32 0.0, %v9178
      %v9180 = vpop.f32.mrf.mxu0
      %9181 = vmatprep.mubr.f32.mxu0 0.0
      %9182 = vmatmul.mubr.f32.gmra.mxu0 %v8262
      %v9183 = vpop.f32.mrf.mxu0
      %v9184 = vadd.f32 0.0, %v9183
      %v9185 = vpop.f32.mrf.mxu0
      %9186 = vmatprep.mubr.f32.mxu0 0.0
      %9187 = vmatmul.mubr.f32.gmra.mxu0 %v8265
      %v9188 = vpop.f32.mrf.mxu0
      %v9189 = vadd.f32 0.0, %v9188
      %v9190 = vpop.f32.mrf.mxu0
      %9191 = vmatprep.mubr.f32.mxu0 0.0
      %9192 = vmatmul.mubr.f32.gmra.mxu0 %v8268
      %v9193 = vpop.f32.mrf.mxu0
      %v9194 = vadd.f32 0.0, %v9193
      %v9195 = vpop.f32.mrf.mxu0
      %9196 = vmatprep.mubr.f32.mxu0 0.0
      %9197 = vmatmul.mubr.f32.gmra.mxu0 %v8271
      %v9198 = vpop.f32.mrf.mxu0
      %v9199 = vadd.f32 0.0, %v9198
      %v9200 = vpop.f32.mrf.mxu0
      %9201 = vmatprep.mubr.f32.mxu0 0.0
      %9202 = vmatmul.mubr.f32.gmra.mxu0 %v8274
      %v9203 = vpop.f32.mrf.mxu0
      %v9204 = vadd.f32 0.0, %v9203
      %v9205 = vpop.f32.mrf.mxu0
      %9206 = vmatprep.mubr.f32.mxu0 0.0
      %9207 = vmatmul.mubr.f32.gmra.mxu0 %v8277
      %v9208 = vpop.f32.mrf.mxu0
      %v9209 = vadd.f32 0.0, %v9208
      %v9210 = vpop.f32.mrf.mxu0
      %9211 = vmatprep.mubr.f32.mxu0 0.0
      %9212 = vmatmul.mubr.f32.gmra.mxu0 %v8280
      %v9213 = vpop.f32.mrf.mxu0
      %v9214 = vadd.f32 0.0, %v9213
      %v9215 = vpop.f32.mrf.mxu0
      %9216 = vmatprep.mubr.f32.mxu0 0.0
      %9217 = vmatmul.mubr.f32.gmra.mxu0 %v8283
      %v9218 = vpop.f32.mrf.mxu0
      %v9219 = vadd.f32 0.0, %v9218
      %v9220 = vpop.f32.mrf.mxu0
      %9221 = vmatprep.mubr.f32.mxu0 0.0
      %9222 = vmatmul.mubr.f32.gmra.mxu0 %v8286
      %v9223 = vpop.f32.mrf.mxu0
      %v9224 = vadd.f32 0.0, %v9223
      %v9225 = vpop.f32.mrf.mxu0
      %9226 = vmatprep.mubr.f32.mxu0 0.0
      %9227 = vmatmul.mubr.f32.gmra.mxu0 %v8289
      %v9228 = vpop.f32.mrf.mxu0
      %v9229 = vadd.f32 0.0, %v9228
      %v9230 = vpop.f32.mrf.mxu0
      %9231 = vmatprep.mubr.f32.mxu0 0.0
      %9232 = vmatmul.mubr.f32.gmra.mxu0 %v8292
      %v9233 = vpop.f32.mrf.mxu0
      %v9234 = vadd.f32 0.0, %v9233
      %v9235 = vpop.f32.mrf.mxu0
      %9236 = vmatprep.mubr.f32.mxu0 0.0
      %9237 = vmatmul.mubr.f32.gmra.mxu0 %v8295
      %v9238 = vpop.f32.mrf.mxu0
      %v9239 = vadd.f32 0.0, %v9238
      %v9240 = vpop.f32.mrf.mxu0
      %9241 = vmatprep.mubr.f32.mxu0 0.0
      %9242 = vmatmul.mubr.f32.gmra.mxu0 %v8298
      %v9243 = vpop.f32.mrf.mxu0
      %v9244 = vadd.f32 0.0, %v9243
      %v9245 = vpop.f32.mrf.mxu0
      %9246 = vmatprep.mubr.f32.mxu0 0.0
      %9247 = vmatmul.mubr.f32.gmra.mxu0 %v8301
      %v9248 = vpop.f32.mrf.mxu0
      %v9249 = vadd.f32 0.0, %v9248
      %v9250 = vpop.f32.mrf.mxu0
      %9251 = vmatprep.mubr.f32.mxu0 0.0
      %9252 = vmatmul.mubr.f32.gmra.mxu0 %v8304
      %v9253 = vpop.f32.mrf.mxu0
      %v9254 = vadd.f32 0.0, %v9253
      %v9255 = vpop.f32.mrf.mxu0
      %9256 = vmatprep.mubr.f32.mxu0 0.0
      %9257 = vmatmul.mubr.f32.gmra.mxu0 %v8307
      %v9258 = vpop.f32.mrf.mxu0
      %v9259 = vadd.f32 0.0, %v9258
      %v9260 = vpop.f32.mrf.mxu0
      %9261 = vmatprep.mubr.f32.mxu0 0.0
      %9262 = vmatmul.mubr.f32.gmra.mxu0 %v8310
      %v9263 = vpop.f32.mrf.mxu0
      %v9264 = vadd.f32 0.0, %v9263
      %v9265 = vpop.f32.mrf.mxu0
      %9266 = vmatprep.mubr.f32.mxu0 0.0
      %9267 = vmatmul.mubr.f32.gmra.mxu0 %v8313
      %v9268 = vpop.f32.mrf.mxu0
      %v9269 = vadd.f32 0.0, %v9268
      %v9270 = vpop.f32.mrf.mxu0
      %9271 = vmatprep.mubr.f32.mxu0 0.0
      %9272 = vmatmul.mubr.f32.gmra.mxu0 %v8316
      %v9273 = vpop.f32.mrf.mxu0
      %v9274 = vadd.f32 0.0, %v9273
      %v9275 = vpop.f32.mrf.mxu0
      %9276 = vmatprep.mubr.f32.mxu0 0.0
      %9277 = vmatmul.mubr.f32.gmra.mxu0 %v8319
      %v9278 = vpop.f32.mrf.mxu0
      %v9279 = vadd.f32 0.0, %v9278
      %v9280 = vpop.f32.mrf.mxu0
      %9281 = vmatprep.mubr.f32.mxu0 0.0
      %9282 = vmatmul.mubr.f32.gmra.mxu0 %v8322
      %v9283 = vpop.f32.mrf.mxu0
      %v9284 = vadd.f32 0.0, %v9283
      %v9285 = vpop.f32.mrf.mxu0
      %9286 = vmatprep.mubr.f32.mxu0 0.0
      %9287 = vmatmul.mubr.f32.gmra.mxu0 %v8325
      %v9288 = vpop.f32.mrf.mxu0
      %v9289 = vadd.f32 0.0, %v9288
      %v9290 = vpop.f32.mrf.mxu0
      %9291 = vmatprep.mubr.f32.mxu0 0.0
      %9292 = vmatmul.mubr.f32.gmra.mxu0 %v8328
      %v9293 = vpop.f32.mrf.mxu0
      %v9294 = vadd.f32 0.0, %v9293
      %v9295 = vpop.f32.mrf.mxu0
      %9296 = vmatprep.mubr.f32.mxu0 0.0
      %9297 = vmatmul.mubr.f32.gmra.mxu0 %v8331
      %v9298 = vpop.f32.mrf.mxu0
      %v9299 = vadd.f32 0.0, %v9298
      %v9300 = vpop.f32.mrf.mxu0
      %9301 = vmatprep.mubr.f32.mxu0 0.0
      %9302 = vmatmul.mubr.f32.gmra.mxu0 %v8334
      %v9303 = vpop.f32.mrf.mxu0
      %v9304 = vadd.f32 0.0, %v9303
      %v9305 = vpop.f32.mrf.mxu0
      %9306 = vmatprep.mubr.f32.mxu0 0.0
      %9307 = vmatmul.mubr.f32.gmra.mxu0 %v8337
      %v9308 = vpop.f32.mrf.mxu0
      %v9309 = vadd.f32 0.0, %v9308
      %v9310 = vpop.f32.mrf.mxu0
      %9311 = vmatprep.mubr.f32.mxu0 0.0
      %9312 = vmatmul.mubr.f32.gmra.mxu0 %v8340
      %v9313 = vpop.f32.mrf.mxu0
      %v9314 = vadd.f32 0.0, %v9313
      %v9315 = vpop.f32.mrf.mxu0
      %9316 = vmatprep.mubr.f32.mxu0 0.0
      %9317 = vmatmul.mubr.f32.gmra.mxu0 %v8343
      %v9318 = vpop.f32.mrf.mxu0
      %v9319 = vadd.f32 0.0, %v9318
      %v9320 = vpop.f32.mrf.mxu0
      %9321 = vmatprep.mubr.f32.mxu0 0.0
      %9322 = vmatmul.mubr.f32.gmra.mxu0 %v8346
      %v9323 = vpop.f32.mrf.mxu0
      %v9324 = vadd.f32 0.0, %v9323
      %v9325 = vpop.f32.mrf.mxu0
      %9326 = vmatprep.mubr.f32.mxu0 0.0
      %9327 = vmatmul.mubr.f32.gmra.mxu0 %v8349
      %v9328 = vpop.f32.mrf.mxu0
      %v9329 = vadd.f32 0.0, %v9328
      %v9330 = vpop.f32.mrf.mxu0
      %9331 = vmatprep.mubr.f32.mxu0 0.0
      %9332 = vmatmul.mubr.f32.gmra.mxu0 %v8352
      %v9333 = vpop.f32.mrf.mxu0
      %v9334 = vadd.f32 0.0, %v9333
      %v9335 = vpop.f32.mrf.mxu0
      %9336 = vmatprep.mubr.f32.mxu0 0.0
      %9337 = vmatmul.mubr.f32.gmra.mxu0 %v8355
      %v9338 = vpop.f32.mrf.mxu0
      %v9339 = vadd.f32 0.0, %v9338
      %v9340 = vpop.f32.mrf.mxu0
      %9341 = vmatprep.mubr.f32.mxu0 0.0
      %9342 = vmatmul.mubr.f32.gmra.mxu0 %v8358
      %v9343 = vpop.f32.mrf.mxu0
      %v9344 = vadd.f32 0.0, %v9343
      %v9345 = vpop.f32.mrf.mxu0
      %9346 = vmatprep.mubr.f32.mxu0 0.0
      %9347 = vmatmul.mubr.f32.gmra.mxu0 %v8361
      %v9348 = vpop.f32.mrf.mxu0
      %v9349 = vadd.f32 0.0, %v9348
      %v9350 = vpop.f32.mrf.mxu0
      %9351 = vmatprep.mubr.f32.mxu0 0.0
      %9352 = vmatmul.mubr.f32.gmra.mxu0 %v8364
      %v9353 = vpop.f32.mrf.mxu0
      %v9354 = vadd.f32 0.0, %v9353
      %v9355 = vpop.f32.mrf.mxu0
      %9356 = vmatprep.mubr.f32.mxu0 0.0
      %9357 = vmatmul.mubr.f32.gmra.mxu0 %v8367
      %v9358 = vpop.f32.mrf.mxu0
      %v9359 = vadd.f32 0.0, %v9358
      %v9360 = vpop.f32.mrf.mxu0
      %9361 = vmatprep.mubr.f32.mxu0 0.0
      %9362 = vmatmul.mubr.f32.gmra.mxu0 %v8370
      %v9363 = vpop.f32.mrf.mxu0
      %v9364 = vadd.f32 0.0, %v9363
      %v9365 = vpop.f32.mrf.mxu0
      %9366 = vmatprep.mubr.f32.mxu0 0.0
      %9367 = vmatmul.mubr.f32.gmra.mxu0 %v8373
      %v9368 = vpop.f32.mrf.mxu0
      %v9369 = vadd.f32 0.0, %v9368
      %v9370 = vpop.f32.mrf.mxu0
      %9371 = vmatprep.mubr.f32.mxu0 0.0
      %9372 = vmatmul.mubr.f32.gmra.mxu0 %v8376
      %v9373 = vpop.f32.mrf.mxu0
      %v9374 = vadd.f32 0.0, %v9373
      %v9375 = vpop.f32.mrf.mxu0
      %9376 = vmatprep.mubr.f32.mxu0 0.0
      %9377 = vmatmul.mubr.f32.gmra.mxu0 %v8379
      %v9378 = vpop.f32.mrf.mxu0
      %v9379 = vadd.f32 0.0, %v9378
      %v9380 = vpop.f32.mrf.mxu0
      %9381 = vmatprep.mubr.f32.mxu0 0.0
      %9382 = vmatmul.mubr.f32.gmra.mxu0 %v8382
      %v9383 = vpop.f32.mrf.mxu0
      %v9384 = vadd.f32 0.0, %v9383
      %v9385 = vpop.f32.mrf.mxu0
      %9386 = vmatprep.mubr.f32.mxu0 0.0
      %9387 = vmatmul.mubr.f32.gmra.mxu0 %v8385
      %v9388 = vpop.f32.mrf.mxu0
      %v9389 = vadd.f32 0.0, %v9388
      %v9390 = vpop.f32.mrf.mxu0
      %9391 = vmatprep.mubr.f32.mxu0 0.0
      %9392 = vmatmul.mubr.f32.gmra.mxu0 %v8388
      %v9393 = vpop.f32.mrf.mxu0
      %v9394 = vadd.f32 0.0, %v9393
      %v9395 = vpop.f32.mrf.mxu0
      %9396 = vmatprep.mubr.f32.mxu0 0.0
      %9397 = vmatmul.mubr.f32.gmra.mxu0 %v8391
      %v9398 = vpop.f32.mrf.mxu0
      %v9399 = vadd.f32 0.0, %v9398
      %v9400 = vpop.f32.mrf.mxu0
      %9401 = vmatprep.mubr.f32.mxu0 0.0
      %9402 = vmatmul.mubr.f32.gmra.mxu0 %v8394
      %v9403 = vpop.f32.mrf.mxu0
      %v9404 = vadd.f32 0.0, %v9403
      %v9405 = vpop.f32.mrf.mxu0
      %9406 = vmatprep.mubr.f32.mxu0 0.0
      %9407 = vmatmul.mubr.f32.gmra.mxu0 %v8397
      %v9408 = vpop.f32.mrf.mxu0
      %v9409 = vadd.f32 0.0, %v9408
      %v9410 = vpop.f32.mrf.mxu0
      %9411 = vmatprep.mubr.f32.mxu0 0.0
      %9412 = vmatmul.mubr.f32.gmra.mxu0 %v8400
      %v9413 = vpop.f32.mrf.mxu0
      %v9414 = vadd.f32 0.0, %v9413
      %v9415 = vpop.f32.mrf.mxu0
      %9416 = vmatprep.mubr.f32.mxu0 0.0
      %9417 = vmatmul.mubr.f32.gmra.mxu0 %v8403
      %v9418 = vpop.f32.mrf.mxu0
      %v9419 = vadd.f32 0.0, %v9418
      %v9420 = vpop.f32.mrf.mxu0
      %9421 = vmatprep.mubr.f32.mxu0 0.0
      %9422 = vmatmul.mubr.f32.gmra.mxu0 %v8406
      %v9423 = vpop.f32.mrf.mxu0
      %v9424 = vadd.f32 0.0, %v9423
      %v9425 = vpop.f32.mrf.mxu0
      %9426 = vmatprep.mubr.f32.mxu0 0.0
      %9427 = vmatmul.mubr.f32.gmra.mxu0 %v8409
      %v9428 = vpop.f32.mrf.mxu0
      %v9429 = vadd.f32 0.0, %v9428
      %v9430 = vpop.f32.mrf.mxu0
      %9431 = vmatprep.mubr.f32.mxu0 0.0
      %9432 = vmatmul.mubr.f32.gmra.mxu0 %v8412
      %v9433 = vpop.f32.mrf.mxu0
      %v9434 = vadd.f32 0.0, %v9433
      %v9435 = vpop.f32.mrf.mxu0
      %9436 = vmatprep.mubr.f32.mxu0 0.0
      %9437 = vmatmul.mubr.f32.gmra.mxu0 %v8415
      %v9438 = vpop.f32.mrf.mxu0
      %v9439 = vadd.f32 0.0, %v9438
      %v9440 = vpop.f32.mrf.mxu0
      %9441 = vmatprep.mubr.f32.mxu0 0.0
      %9442 = vmatmul.mubr.f32.gmra.mxu0 %v8418
      %v9443 = vpop.f32.mrf.mxu0
      %v9444 = vadd.f32 0.0, %v9443
      %v9445 = vpop.f32.mrf.mxu0
      %9446 = vmatprep.mubr.f32.mxu0 0.0
      %9447 = vmatmul.mubr.f32.gmra.mxu0 %v8421
      %v9448 = vpop.f32.mrf.mxu0
      %v9449 = vadd.f32 0.0, %v9448
      %v9450 = vpop.f32.mrf.mxu0
      %9451 = vmatprep.mubr.f32.mxu0 0.0
      %9452 = vmatmul.mubr.f32.gmra.mxu0 %v8424
      %v9453 = vpop.f32.mrf.mxu0
      %v9454 = vadd.f32 0.0, %v9453
      %v9455 = vpop.f32.mrf.mxu0
      %9456 = vmatprep.mubr.f32.mxu0 0.0
      %9457 = vmatmul.mubr.f32.gmra.mxu0 %v8427
      %v9458 = vpop.f32.mrf.mxu0
      %v9459 = vadd.f32 0.0, %v9458
      %v9460 = vpop.f32.mrf.mxu0
      %9461 = vmatprep.mubr.f32.mxu0 0.0
      %9462 = vmatmul.mubr.f32.gmra.mxu0 %v8430
      %v9463 = vpop.f32.mrf.mxu0
      %v9464 = vadd.f32 0.0, %v9463
      %v9465 = vpop.f32.mrf.mxu0
      %9466 = vmatprep.mubr.f32.mxu0 0.0
      %9467 = vmatmul.mubr.f32.gmra.mxu0 %v8433
      %v9468 = vpop.f32.mrf.mxu0
      %v9469 = vadd.f32 0.0, %v9468
      %v9470 = vpop.f32.mrf.mxu0
      %9471 = vmatprep.mubr.f32.mxu0 0.0
      %9472 = vmatmul.mubr.f32.gmra.mxu0 %v8436
      %v9473 = vpop.f32.mrf.mxu0
      %v9474 = vadd.f32 0.0, %v9473
      %v9475 = vpop.f32.mrf.mxu0
      %9476 = vmatprep.mubr.f32.mxu0 0.0
      %9477 = vmatmul.mubr.f32.gmra.mxu0 %v8439
      %v9478 = vpop.f32.mrf.mxu0
      %v9479 = vadd.f32 0.0, %v9478
      %v9480 = vpop.f32.mrf.mxu0
      %9481 = vmatprep.mubr.f32.mxu0 0.0
      %9482 = vmatmul.mubr.f32.gmra.mxu0 %v8442
      %v9483 = vpop.f32.mrf.mxu0
      %v9484 = vadd.f32 0.0, %v9483
      %v9485 = vpop.f32.mrf.mxu0
      %9486 = vmatprep.mubr.f32.mxu0 0.0
      %9487 = vmatmul.mubr.f32.gmra.mxu0 %v8445
      %v9488 = vpop.f32.mrf.mxu0
      %v9489 = vadd.f32 0.0, %v9488
      %v9490 = vpop.f32.mrf.mxu0
      %9491 = vmatprep.mubr.f32.mxu0 0.0
      %9492 = vmatmul.mubr.f32.gmra.mxu0 %v8448
      %v9493 = vpop.f32.mrf.mxu0
      %v9494 = vadd.f32 0.0, %v9493
      %v9495 = vpop.f32.mrf.mxu0
      %9496 = vmatprep.mubr.f32.mxu0 0.0
      %9497 = vmatmul.mubr.f32.gmra.mxu0 %v8451
      %v9498 = vpop.f32.mrf.mxu0
      %v9499 = vadd.f32 0.0, %v9498
      %v9500 = vpop.f32.mrf.mxu0
      %9501 = vmatprep.mubr.f32.mxu0 0.0
      %9502 = vmatmul.mubr.f32.gmra.mxu0 %v8454
      %v9503 = vpop.f32.mrf.mxu0
      %v9504 = vadd.f32 0.0, %v9503
      %v9505 = vpop.f32.mrf.mxu0
      %9506 = vmatprep.mubr.f32.mxu0 0.0
      %9507 = vmatmul.mubr.f32.gmra.mxu0 %v8457
      %v9508 = vpop.f32.mrf.mxu0
      %v9509 = vadd.f32 0.0, %v9508
      %v9510 = vpop.f32.mrf.mxu0
      %9511 = vmatprep.mubr.f32.mxu0 0.0
      %9512 = vmatmul.mubr.f32.gmra.mxu0 %v8460
      %v9513 = vpop.f32.mrf.mxu0
      %v9514 = vadd.f32 0.0, %v9513
      %v9515 = vpop.f32.mrf.mxu0
      %9516 = vmatprep.mubr.f32.mxu0 0.0
      %9517 = vmatmul.mubr.f32.gmra.mxu0 %v8463
      %v9518 = vpop.f32.mrf.mxu0
      %v9519 = vadd.f32 0.0, %v9518
      %v9520 = vpop.f32.mrf.mxu0
      %9521 = vmatprep.mubr.f32.mxu0 0.0
      %9522 = vmatmul.mubr.f32.gmra.mxu0 %v8466
      %v9523 = vpop.f32.mrf.mxu0
      %v9524 = vadd.f32 0.0, %v9523
      %v9525 = vpop.f32.mrf.mxu0
      %9526 = vmatprep.mubr.f32.mxu0 0.0
      %9527 = vmatmul.mubr.f32.gmra.mxu0 %v8469
      %v9528 = vpop.f32.mrf.mxu0
      %v9529 = vadd.f32 0.0, %v9528
      %v9530 = vpop.f32.mrf.mxu0
      %9531 = vmatprep.mubr.f32.mxu0 0.0
      %9532 = vmatmul.mubr.f32.gmra.mxu0 %v8472
      %v9533 = vpop.f32.mrf.mxu0
      %v9534 = vadd.f32 0.0, %v9533
      %v9535 = vpop.f32.mrf.mxu0
      %9536 = vmatprep.mubr.f32.mxu0 0.0
      %9537 = vmatmul.mubr.f32.gmra.mxu0 %v8475
      %v9538 = vpop.f32.mrf.mxu0
      %v9539 = vadd.f32 0.0, %v9538
      %v9540 = vpop.f32.mrf.mxu0
      %9541 = vmatprep.mubr.f32.mxu0 0.0
      %9542 = vmatmul.mubr.f32.gmra.mxu0 %v8478
      %v9543 = vpop.f32.mrf.mxu0
      %v9544 = vadd.f32 0.0, %v9543
      %v9545 = vpop.f32.mrf.mxu0
      %9546 = vmatprep.mubr.f32.mxu0 0.0
      %9547 = vmatmul.mubr.f32.gmra.mxu0 %v8481
      %v9548 = vpop.f32.mrf.mxu0
      %v9549 = vadd.f32 0.0, %v9548
      %v9550 = vpop.f32.mrf.mxu0
      %9551 = vmatprep.mubr.f32.mxu0 0.0
      %9552 = vmatmul.mubr.f32.gmra.mxu0 %v8484
      %v9553 = vpop.f32.mrf.mxu0
      %v9554 = vadd.f32 0.0, %v9553
      %v9555 = vpop.f32.mrf.mxu0
      %9556 = vmatprep.mubr.f32.mxu0 0.0
      %9557 = vmatmul.mubr.f32.gmra.mxu0 %v8487
      %v9558 = vpop.f32.mrf.mxu0
      %v9559 = vadd.f32 0.0, %v9558
      %v9560 = vpop.f32.mrf.mxu0
      %9561 = vmatprep.mubr.f32.mxu0 0.0
      %9562 = vmatmul.mubr.f32.gmra.mxu0 %v8490
      %v9563 = vpop.f32.mrf.mxu0
      %v9564 = vadd.f32 0.0, %v9563
      %v9565 = vpop.f32.mrf.mxu0
      %9566 = vmatprep.mubr.f32.mxu0 0.0
      %9567 = vmatmul.mubr.f32.gmra.mxu0 %v8493
      %v9568 = vpop.f32.mrf.mxu0
      %v9569 = vadd.f32 0.0, %v9568
      %v9570 = vpop.f32.mrf.mxu0
      %9571 = vmatprep.mubr.f32.mxu0 0.0
      %9572 = vmatmul.mubr.f32.gmra.mxu0 %v8496
      %v9573 = vpop.f32.mrf.mxu0
      %v9574 = vadd.f32 0.0, %v9573
      %v9575 = vpop.f32.mrf.mxu0
      %9576 = vmatprep.mubr.f32.mxu0 0.0
      %9577 = vmatmul.mubr.f32.gmra.mxu0 %v8499
      %v9578 = vpop.f32.mrf.mxu0
      %v9579 = vadd.f32 0.0, %v9578
      %v9580 = vpop.f32.mrf.mxu0
      %9581 = vmatprep.mubr.f32.mxu0 0.0
      %9582 = vmatmul.mubr.f32.gmra.mxu0 %v8502
      %v9583 = vpop.f32.mrf.mxu0
      %v9584 = vadd.f32 0.0, %v9583
      %v9585 = vpop.f32.mrf.mxu0
      %9586 = vmatprep.mubr.f32.mxu0 0.0
      %9587 = vmatmul.mubr.f32.gmra.mxu0 %v8505
      %v9588 = vpop.f32.mrf.mxu0
      %v9589 = vadd.f32 0.0, %v9588
      %v9590 = vpop.f32.mrf.mxu0
      %9591 = vmatprep.mubr.f32.mxu0 0.0
      %9592 = vmatmul.mubr.f32.gmra.mxu0 %v8508
      %v9593 = vpop.f32.mrf.mxu0
      %v9594 = vadd.f32 0.0, %v9593
      %v9595 = vpop.f32.mrf.mxu0
      %9596 = vmatprep.mubr.f32.mxu0 0.0
      %9597 = vmatmul.mubr.f32.gmra.mxu0 %v8511
      %v9598 = vpop.f32.mrf.mxu0
      %v9599 = vadd.f32 0.0, %v9598
      %v9600 = vpop.f32.mrf.mxu0
      %9601 = vmatprep.mubr.f32.mxu0 0.0
      %9602 = vmatmul.mubr.f32.gmra.mxu0 %v8514
      %v9603 = vpop.f32.mrf.mxu0
      %v9604 = vadd.f32 0.0, %v9603
      %v9605 = vpop.f32.mrf.mxu0
      %9606 = vmatprep.mubr.f32.mxu0 0.0
      %9607 = vmatmul.mubr.f32.gmra.mxu0 %v8517
      %v9608 = vpop.f32.mrf.mxu0
      %v9609 = vadd.f32 0.0, %v9608
      %v9610 = vpop.f32.mrf.mxu0
      %9611 = vmatprep.mubr.f32.mxu0 0.0
      %9612 = vmatmul.mubr.f32.gmra.mxu0 %v8520
      %v9613 = vpop.f32.mrf.mxu0
      %v9614 = vadd.f32 0.0, %v9613
      %v9615 = vpop.f32.mrf.mxu0
      %9616 = vmatprep.mubr.f32.mxu0 0.0
      %9617 = vmatmul.mubr.f32.gmra.mxu0 %v8523
      %v9618 = vpop.f32.mrf.mxu0
      %v9619 = vadd.f32 0.0, %v9618
      %v9620 = vpop.f32.mrf.mxu0
      %9621 = vmatprep.mubr.f32.mxu0 0.0
      %9622 = vmatmul.mubr.f32.gmra.mxu0 %v8526
      %v9623 = vpop.f32.mrf.mxu0
      %v9624 = vadd.f32 0.0, %v9623
      %v9625 = vpop.f32.mrf.mxu0
      %9626 = vmatprep.mubr.f32.mxu0 0.0
      %9627 = vmatmul.mubr.f32.gmra.mxu0 %v8529
      %v9628 = vpop.f32.mrf.mxu0
      %v9629 = vadd.f32 0.0, %v9628
      %v9630 = vpop.f32.mrf.mxu0
      %9631 = vmatprep.mubr.f32.mxu0 0.0
      %9632 = vmatmul.mubr.f32.gmra.mxu0 %v8532
      %v9633 = vpop.f32.mrf.mxu0
      %v9634 = vadd.f32 0.0, %v9633
      %v9635 = vpop.f32.mrf.mxu0
      %9636 = vmatprep.mubr.f32.mxu0 0.0
      %9637 = vmatmul.mubr.f32.gmra.mxu0 %v8535
      %v9638 = vpop.f32.mrf.mxu0
      %v9639 = vadd.f32 0.0, %v9638
      %v9640 = vpop.f32.mrf.mxu0
      %9641 = vmatprep.mubr.f32.mxu0 0.0
      %9642 = vmatmul.mubr.f32.gmra.mxu0 %v8538
      %v9643 = vpop.f32.mrf.mxu0
      %v9644 = vadd.f32 0.0, %v9643
      %v9645 = vpop.f32.mrf.mxu0
      %9646 = vmatprep.mubr.f32.mxu0 0.0
      %9647 = vmatmul.mubr.f32.gmra.mxu0 %v8541
      %v9648 = vpop.f32.mrf.mxu0
      %v9649 = vadd.f32 0.0, %v9648
      %v9650 = vpop.f32.mrf.mxu0
      %9651 = vmatprep.mubr.f32.mxu0 0.0
      %9652 = vmatmul.mubr.f32.gmra.mxu0 %v8544
      %v9653 = vpop.f32.mrf.mxu0
      %v9654 = vadd.f32 0.0, %v9653
      %v9655 = vpop.f32.mrf.mxu0
      %9656 = vmatprep.mubr.f32.mxu0 0.0
      %9657 = vmatmul.mubr.f32.gmra.mxu0 %v8547
      %v9658 = vpop.f32.mrf.mxu0
      %v9659 = vadd.f32 0.0, %v9658
      %v9660 = vpop.f32.mrf.mxu0
      %9661 = vmatprep.mubr.f32.mxu0 0.0
      %9662 = vmatmul.mubr.f32.gmra.mxu0 %v8550
      %v9663 = vpop.f32.mrf.mxu0
      %v9664 = vadd.f32 0.0, %v9663
      %v9665 = vpop.f32.mrf.mxu0
      %9666 = vmatprep.mubr.f32.mxu0 0.0
      %9667 = vmatmul.mubr.f32.gmra.mxu0 %v8553
      %v9668 = vpop.f32.mrf.mxu0
      %v9669 = vadd.f32 0.0, %v9668
      %v9670 = vpop.f32.mrf.mxu0
      %9671 = vmatprep.mubr.f32.mxu0 0.0
      %9672 = vmatmul.mubr.f32.gmra.mxu0 %v8556
      %v9673 = vpop.f32.mrf.mxu0
      %v9674 = vadd.f32 0.0, %v9673
      %v9675 = vpop.f32.mrf.mxu0
      %9676 = vmatprep.mubr.f32.mxu0 0.0
      %9677 = vmatmul.mubr.f32.gmra.mxu0 %v8559
      %v9678 = vpop.f32.mrf.mxu0
      %v9679 = vadd.f32 0.0, %v9678
      %v9680 = vpop.f32.mrf.mxu0
      %9681 = vmatprep.mubr.f32.mxu0 0.0
      %9682 = vmatmul.mubr.f32.gmra.mxu0 %v8562
      %v9683 = vpop.f32.mrf.mxu0
      %v9684 = vadd.f32 0.0, %v9683
      %v9685 = vpop.f32.mrf.mxu0
      %9686 = vmatprep.mubr.f32.mxu0 0.0
      %9687 = vmatmul.mubr.f32.gmra.mxu0 %v8565
      %v9688 = vpop.f32.mrf.mxu0
      %v9689 = vadd.f32 0.0, %v9688
      %v9690 = vpop.f32.mrf.mxu0
      %9691 = vmatprep.mubr.f32.mxu0 0.0
      %9692 = vmatmul.mubr.f32.gmra.mxu0 %v8568
      %v9693 = vpop.f32.mrf.mxu0
      %v9694 = vadd.f32 0.0, %v9693
      %v9695 = vpop.f32.mrf.mxu0
      %9696 = vmatprep.mubr.f32.mxu0 0.0
      %9697 = vmatmul.mubr.f32.gmra.mxu0 %v8571
      %v9698 = vpop.f32.mrf.mxu0
      %v9699 = vadd.f32 0.0, %v9698
      %v9700 = vpop.f32.mrf.mxu0
      %9701 = vmatprep.mubr.f32.mxu0 0.0
      %9702 = vmatmul.mubr.f32.gmra.mxu0 %v8574
      %v9703 = vpop.f32.mrf.mxu0
      %v9704 = vadd.f32 0.0, %v9703
      %v9705 = vpop.f32.mrf.mxu0
      %9706 = vmatprep.mubr.f32.mxu0 0.0
      %9707 = vmatmul.mubr.f32.gmra.mxu0 %v8577
      %v9708 = vpop.f32.mrf.mxu0
      %v9709 = vadd.f32 0.0, %v9708
      %v9710 = vpop.f32.mrf.mxu0
      %9711 = vmatprep.mubr.f32.mxu0 0.0
      %9712 = vmatmul.mubr.f32.gmra.mxu0 %v8580
      %v9713 = vpop.f32.mrf.mxu0
      %v9714 = vadd.f32 0.0, %v9713
      %v9715 = vpop.f32.mrf.mxu0
      %9716 = vmatprep.mubr.f32.mxu0 0.0
      %9717 = vmatmul.mubr.f32.gmra.mxu0 %v8583
      %v9718 = vpop.f32.mrf.mxu0
      %v9719 = vadd.f32 0.0, %v9718
      %v9720 = vpop.f32.mrf.mxu0
      %9721 = vmatprep.mubr.f32.mxu0 0.0
      %9722 = vmatmul.mubr.f32.gmra.mxu0 %v8586
      %v9723 = vpop.f32.mrf.mxu0
      %v9724 = vadd.f32 0.0, %v9723
      %v9725 = vpop.f32.mrf.mxu0
      %9726 = vmatprep.mubr.f32.mxu0 0.0
      %9727 = vmatmul.mubr.f32.gmra.mxu0 %v8589
      %v9728 = vpop.f32.mrf.mxu0
      %v9729 = vadd.f32 0.0, %v9728
      %v9730 = vpop.f32.mrf.mxu0
      %9731 = vmatprep.mubr.f32.mxu0 0.0
      %9732 = vmatmul.mubr.f32.gmra.mxu0 %v8592
      %v9733 = vpop.f32.mrf.mxu0
      %v9734 = vadd.f32 0.0, %v9733
      %v9735 = vpop.f32.mrf.mxu0
      %9736 = vmatprep.mubr.f32.mxu0 0.0
      %9737 = vmatmul.mubr.f32.gmra.mxu0 %v8595
      %v9738 = vpop.f32.mrf.mxu0
      %v9739 = vadd.f32 0.0, %v9738
      %v9740 = vpop.f32.mrf.mxu0
      %9741 = vmatprep.mubr.f32.mxu0 0.0
      %9742 = vmatmul.mubr.f32.gmra.mxu0 %v8598
      %v9743 = vpop.f32.mrf.mxu0
      %v9744 = vadd.f32 0.0, %v9743
      %v9745 = vpop.f32.mrf.mxu0
      %9746 = vmatprep.mubr.f32.mxu0 0.0
      %9747 = vmatmul.mubr.f32.gmra.mxu0 %v8601
      %v9748 = vpop.f32.mrf.mxu0
      %v9749 = vadd.f32 0.0, %v9748
      %v9750 = vpop.f32.mrf.mxu0
      %9751 = vmatprep.mubr.f32.mxu0 0.0
      %9752 = vmatmul.mubr.f32.gmra.mxu0 %v8604
      %v9753 = vpop.f32.mrf.mxu0
      %v9754 = vadd.f32 0.0, %v9753
      %v9755 = vpop.f32.mrf.mxu0
      %9756 = vmatprep.mubr.f32.mxu0 0.0
      %9757 = vmatmul.mubr.f32.gmra.mxu0 %v8607
      %v9758 = vpop.f32.mrf.mxu0
      %v9759 = vadd.f32 0.0, %v9758
      %v9760 = vpop.f32.mrf.mxu0
      %9761 = vmatprep.mubr.f32.mxu0 0.0
      %9762 = vmatmul.mubr.f32.gmra.mxu0 %v8610
      %v9763 = vpop.f32.mrf.mxu0
      %v9764 = vadd.f32 0.0, %v9763
      %v9765 = vpop.f32.mrf.mxu0
      %9766 = vmatprep.mubr.f32.mxu0 0.0
      %9767 = vmatmul.mubr.f32.gmra.mxu0 %v8613
      %v9768 = vpop.f32.mrf.mxu0
      %v9769 = vadd.f32 0.0, %v9768
      %v9770 = vpop.f32.mrf.mxu0
      %9771 = vmatprep.mubr.f32.mxu0 0.0
      %9772 = vmatmul.mubr.f32.gmra.mxu0 %v8616
      %v9773 = vpop.f32.mrf.mxu0
      %v9774 = vadd.f32 0.0, %v9773
      %v9775 = vpop.f32.mrf.mxu0
      %9776 = vmatprep.mubr.f32.mxu0 0.0
      %9777 = vmatmul.mubr.f32.gmra.mxu0 %v8619
      %v9778 = vpop.f32.mrf.mxu0
      %v9779 = vadd.f32 0.0, %v9778
      %v9780 = vpop.f32.mrf.mxu0
      %9781 = vmatprep.mubr.f32.mxu0 0.0
      %9782 = vmatmul.mubr.f32.gmra.mxu0 %v8622
      %v9783 = vpop.f32.mrf.mxu0
      %v9784 = vadd.f32 0.0, %v9783
      %v9785 = vpop.f32.mrf.mxu0
      %9786 = vmatprep.mubr.f32.mxu0 0.0
      %9787 = vmatmul.mubr.f32.gmra.mxu0 %v8625
      %v9788 = vpop.f32.mrf.mxu0
      %v9789 = vadd.f32 0.0, %v9788
      %v9790 = vpop.f32.mrf.mxu0
      %9791 = vmatprep.mubr.f32.mxu0 0.0
      %9792 = vmatmul.mubr.f32.gmra.mxu0 %v8628
      %v9793 = vpop.f32.mrf.mxu0
      %v9794 = vadd.f32 0.0, %v9793
      %v9795 = vpop.f32.mrf.mxu0
      %9796 = vmatprep.mubr.f32.mxu0 0.0
      %9797 = vmatmul.mubr.f32.gmra.mxu0 %v8631
      %v9798 = vpop.f32.mrf.mxu0
      %v9799 = vadd.f32 0.0, %v9798
      %v9800 = vpop.f32.mrf.mxu0
      %9801 = vmatprep.mubr.f32.mxu0 0.0
      %9802 = vmatmul.mubr.f32.gmra.mxu0 %v8634
      %v9803 = vpop.f32.mrf.mxu0
      %v9804 = vadd.f32 0.0, %v9803
      %v9805 = vpop.f32.mrf.mxu0
      %9806 = vmatprep.mubr.f32.mxu0 0.0
      %9807 = vmatmul.mubr.f32.gmra.mxu0 %v8637
      %v9808 = vpop.f32.mrf.mxu0
      %v9809 = vadd.f32 0.0, %v9808
      %v9810 = vpop.f32.mrf.mxu0
      %9811 = vmatprep.mubr.f32.mxu0 0.0
      %9812 = vmatmul.mubr.f32.gmra.mxu0 %v8640
      %v9813 = vpop.f32.mrf.mxu0
      %v9814 = vadd.f32 0.0, %v9813
      %v9815 = vpop.f32.mrf.mxu0
      %9816 = vmatprep.mubr.f32.mxu0 0.0
      %9817 = vmatmul.mubr.f32.gmra.mxu0 %v8643
      %v9818 = vpop.f32.mrf.mxu0
      %v9819 = vadd.f32 0.0, %v9818
      %v9820 = vpop.f32.mrf.mxu0
      %9821 = vmatprep.mubr.f32.mxu0 0.0
      %9822 = vmatmul.mubr.f32.gmra.mxu0 %v8646
      %v9823 = vpop.f32.mrf.mxu0
      %v9824 = vadd.f32 0.0, %v9823
      %v9825 = vpop.f32.mrf.mxu0
      %9826 = vmatprep.mubr.f32.mxu0 0.0
      %9827 = vmatmul.mubr.f32.gmra.mxu0 %v8649
      %v9828 = vpop.f32.mrf.mxu0
      %v9829 = vadd.f32 0.0, %v9828
      %v9830 = vpop.f32.mrf.mxu0
      %9831 = vmatprep.mubr.f32.mxu0 0.0
      %9832 = vmatmul.mubr.f32.gmra.mxu0 %v8652
      %v9833 = vpop.f32.mrf.mxu0
      %v9834 = vadd.f32 0.0, %v9833
      %v9835 = vpop.f32.mrf.mxu0
      %9836 = vmatprep.mubr.f32.mxu0 0.0
      %9837 = vmatmul.mubr.f32.gmra.mxu0 %v8655
      %v9838 = vpop.f32.mrf.mxu0
      %v9839 = vadd.f32 0.0, %v9838
      %v9840 = vpop.f32.mrf.mxu0
      %9841 = vmatprep.mubr.f32.mxu0 0.0
      %9842 = vmatmul.mubr.f32.gmra.mxu0 %v8658
      %v9843 = vpop.f32.mrf.mxu0
      %v9844 = vadd.f32 0.0, %v9843
      %v9845 = vpop.f32.mrf.mxu0
      %9846 = vmatprep.mubr.f32.mxu0 0.0
      %9847 = vmatmul.mubr.f32.gmra.mxu0 %v8661
      %v9848 = vpop.f32.mrf.mxu0
      %v9849 = vadd.f32 0.0, %v9848
      %v9850 = vpop.f32.mrf.mxu0
      %9851 = vmatprep.mubr.f32.mxu0 0.0
      %9852 = vmatmul.mubr.f32.gmra.mxu0 %v8664
      %v9853 = vpop.f32.mrf.mxu0
      %v9854 = vadd.f32 0.0, %v9853
      %v9855 = vpop.f32.mrf.mxu0
      %9856 = vmatprep.mubr.f32.mxu0 0.0
      %9857 = vmatmul.mubr.f32.gmra.mxu0 %v8667
      %v9858 = vpop.f32.mrf.mxu0
      %v9859 = vadd.f32 0.0, %v9858
      %v9860 = vpop.f32.mrf.mxu0
      %9861 = vmatprep.mubr.f32.mxu0 0.0
      %9862 = vmatmul.mubr.f32.gmra.mxu0 %v8670
      %v9863 = vpop.f32.mrf.mxu0
      %v9864 = vadd.f32 0.0, %v9863
      %v9865 = vpop.f32.mrf.mxu0
      %9866 = vmatprep.mubr.f32.mxu0 0.0
      %9867 = vmatmul.mubr.f32.gmra.mxu0 %v8673
      %v9868 = vpop.f32.mrf.mxu0
      %v9869 = vadd.f32 0.0, %v9868
      %v9870 = vpop.f32.mrf.mxu0
      %9871 = vmatprep.mubr.f32.mxu0 0.0
      %9872 = vmatmul.mubr.f32.gmra.mxu0 %v8676
      %v9873 = vpop.f32.mrf.mxu0
      %v9874 = vadd.f32 0.0, %v9873
      %v9875 = vpop.f32.mrf.mxu0
      %9876 = vmatprep.mubr.f32.mxu0 0.0
      %9877 = vmatmul.mubr.f32.gmra.mxu0 %v8679
      %v9878 = vpop.f32.mrf.mxu0
      %v9879 = vadd.f32 0.0, %v9878
      %v9880 = vpop.f32.mrf.mxu0
      %9881 = vmatprep.mubr.f32.mxu0 0.0
      %9882 = vmatmul.mubr.f32.gmra.mxu0 %v8682
      %v9883 = vpop.f32.mrf.mxu0
      %v9884 = vadd.f32 0.0, %v9883
      %v9885 = vpop.f32.mrf.mxu0
      %9886 = vmatprep.mubr.f32.mxu0 0.0
      %9887 = vmatmul.mubr.f32.gmra.mxu0 %v8685
      %v9888 = vpop.f32.mrf.mxu0
      %v9889 = vadd.f32 0.0, %v9888
      %v9890 = vpop.f32.mrf.mxu0
      %9891 = vmatprep.mubr.f32.mxu0 0.0
      %9892 = vmatmul.mubr.f32.gmra.mxu0 %v8688
      %v9893 = vpop.f32.mrf.mxu0
      %v9894 = vadd.f32 0.0, %v9893
      %v9895 = vpop.f32.mrf.mxu0
      %9896 = vmatprep.mubr.f32.mxu0 0.0
      %9897 = vmatmul.mubr.f32.gmra.mxu0 %v8691
      %v9898 = vpop.f32.mrf.mxu0
      %v9899 = vadd.f32 0.0, %v9898
      %v9900 = vpop.f32.mrf.mxu0
      %9901 = vmatprep.mubr.f32.mxu0 0.0
      %9902 = vmatmul.mubr.f32.gmra.mxu0 %v8694
      %v9903 = vpop.f32.mrf.mxu0
      %v9904 = vadd.f32 0.0, %v9903
      %v9905 = vpop.f32.mrf.mxu0
      %9906 = vmatprep.mubr.f32.mxu0 0.0
      %9907 = vmatmul.mubr.f32.gmra.mxu0 %v8697
      %v9908 = vpop.f32.mrf.mxu0
      %v9909 = vadd.f32 0.0, %v9908
      %v9910 = vpop.f32.mrf.mxu0
      %9911 = vmatprep.mubr.f32.mxu0 0.0
      %9912 = vmatmul.mubr.f32.gmra.mxu0 %v8700
      %v9913 = vpop.f32.mrf.mxu0
      %v9914 = vadd.f32 0.0, %v9913
      %v9915 = vpop.f32.mrf.mxu0
      %9916 = vmatprep.mubr.f32.mxu0 0.0
      %9917 = vmatmul.mubr.f32.gmra.mxu0 %v8703
      %v9918 = vpop.f32.mrf.mxu0
      %v9919 = vadd.f32 0.0, %v9918
      %v9920 = vpop.f32.mrf.mxu0
      %9921 = vmatprep.mubr.f32.mxu0 0.0
      %9922 = vmatmul.mubr.f32.gmra.mxu0 %v8706
      %v9923 = vpop.f32.mrf.mxu0
      %v9924 = vadd.f32 0.0, %v9923
      %v9925 = vpop.f32.mrf.mxu0
      %9926 = vmatprep.mubr.f32.mxu0 0.0
      %9927 = vmatmul.mubr.f32.gmra.mxu0 %v8709
      %v9928 = vpop.f32.mrf.mxu0
      %v9929 = vadd.f32 0.0, %v9928
      %v9930 = vpop.f32.mrf.mxu0
      %9931 = vmatprep.mubr.f32.mxu0 0.0
      %9932 = vmatmul.mubr.f32.gmra.mxu0 %v8712
      %v9933 = vpop.f32.mrf.mxu0
      %v9934 = vadd.f32 0.0, %v9933
      %v9935 = vpop.f32.mrf.mxu0
      %9936 = vmatprep.mubr.f32.mxu0 0.0
      %9937 = vmatmul.mubr.f32.gmra.mxu0 %v8715
      %v9938 = vpop.f32.mrf.mxu0
      %v9939 = vadd.f32 0.0, %v9938
      %v9940 = vpop.f32.mrf.mxu0
      %9941 = vmatprep.mubr.f32.mxu0 0.0
      %9942 = vmatmul.mubr.f32.gmra.mxu0 %v8718
      %v9943 = vpop.f32.mrf.mxu0
      %v9944 = vadd.f32 0.0, %v9943
      %v9945 = vpop.f32.mrf.mxu0
      %9946 = vmatprep.mubr.f32.mxu0 0.0
      %9947 = vmatmul.mubr.f32.gmra.mxu0 %v8721
      %v9948 = vpop.f32.mrf.mxu0
      %v9949 = vadd.f32 0.0, %v9948
      %v9950 = vpop.f32.mrf.mxu0
      %9951 = vmatprep.mubr.f32.mxu0 0.0
      %9952 = vmatmul.mubr.f32.gmra.mxu0 %v8724
      %v9953 = vpop.f32.mrf.mxu0
      %v9954 = vadd.f32 0.0, %v9953
      %v9955 = vpop.f32.mrf.mxu0
      %9956 = vmatprep.mubr.f32.mxu0 0.0
      %9957 = vmatmul.mubr.f32.gmra.mxu0 %v8727
      %v9958 = vpop.f32.mrf.mxu0
      %v9959 = vadd.f32 0.0, %v9958
      %v9960 = vpop.f32.mrf.mxu0
      %9961 = vmatprep.mubr.f32.mxu0 0.0
      %9962 = vmatmul.mubr.f32.gmra.mxu0 %v8730
      %v9963 = vpop.f32.mrf.mxu0
      %v9964 = vadd.f32 0.0, %v9963
      %v9965 = vpop.f32.mrf.mxu0
      %9966 = vmatprep.mubr.f32.mxu0 0.0
      %9967 = vmatmul.mubr.f32.gmra.mxu0 %v8733
      %v9968 = vpop.f32.mrf.mxu0
      %v9969 = vadd.f32 0.0, %v9968
      %v9970 = vpop.f32.mrf.mxu0
      %9971 = vmatprep.mubr.f32.mxu0 0.0
      %9972 = vmatmul.mubr.f32.gmra.mxu0 %v8736
      %v9973 = vpop.f32.mrf.mxu0
      %v9974 = vadd.f32 0.0, %v9973
      %v9975 = vpop.f32.mrf.mxu0
      %9976 = vmatprep.mubr.f32.mxu0 0.0
      %9977 = vmatmul.mubr.f32.gmra.mxu0 %v8739
      %v9978 = vpop.f32.mrf.mxu0
      %v9979 = vadd.f32 0.0, %v9978
      %v9980 = vpop.f32.mrf.mxu0
      %9981 = vmatprep.mubr.f32.mxu0 0.0
      %9982 = vmatmul.mubr.f32.gmra.mxu0 %v8742
      %v9983 = vpop.f32.mrf.mxu0
      %v9984 = vadd.f32 0.0, %v9983
      %v9985 = vpop.f32.mrf.mxu0
      %9986 = vmatprep.mubr.f32.mxu0 0.0
      %9987 = vmatmul.mubr.f32.gmra.mxu0 %v8745
      %v9988 = vpop.f32.mrf.mxu0
      %v9989 = vadd.f32 0.0, %v9988
      %v9990 = vpop.f32.mrf.mxu0
      %9991 = vmatprep.mubr.f32.mxu0 0.0
      %9992 = vmatmul.mubr.f32.gmra.mxu0 %v8748
      %v9993 = vpop.f32.mrf.mxu0
      %v9994 = vadd.f32 0.0, %v9993
      %v9995 = vpop.f32.mrf.mxu0
      %9996 = vmatprep.mubr.f32.mxu0 0.0
      %9997 = vmatmul.mubr.f32.gmra.mxu0 %v8751
      %v9998 = vpop.f32.mrf.mxu0
      %v9999 = vadd.f32 0.0, %v9998
      %v10000 = vpop.f32.mrf.mxu0
      %10001 = vmatprep.mubr.f32.mxu0 0.0
      %10002 = vmatmul.mubr.f32.gmra.mxu0 %v8754
      %v10003 = vpop.f32.mrf.mxu0
      %v10004 = vadd.f32 0.0, %v10003
      %v10005 = vpop.f32.mrf.mxu0
      %10006 = vmatprep.mubr.f32.mxu0 0.0
      %10007 = vmatmul.mubr.f32.gmra.mxu0 %v8757
      %v10008 = vpop.f32.mrf.mxu0
      %v10009 = vadd.f32 0.0, %v10008
      %v10010 = vpop.f32.mrf.mxu0
      %10011 = vmatprep.mubr.f32.mxu0 0.0
      %10012 = vmatmul.mubr.f32.gmra.mxu0 %v8760
      %v10013 = vpop.f32.mrf.mxu0
      %v10014 = vadd.f32 0.0, %v10013
      %v10015 = vpop.f32.mrf.mxu0
      %10016 = vmatprep.mubr.f32.mxu0 0.0
      %10017 = vmatmul.mubr.f32.gmra.mxu0 %v8763
      %v10018 = vpop.f32.mrf.mxu0
      %v10019 = vadd.f32 0.0, %v10018
      %v10020 = vpop.f32.mrf.mxu0
      %10021 = vmatprep.mubr.f32.mxu0 0.0
      %10022 = vmatmul.mubr.f32.gmra.mxu0 %v8766
      %v10023 = vpop.f32.mrf.mxu0
      %v10024 = vadd.f32 0.0, %v10023
      %v10025 = vpop.f32.mrf.mxu0
      %10026 = vmatprep.mubr.f32.mxu0 0.0
      %10027 = vmatmul.mubr.f32.gmra.mxu0 %v8769
      %v10028 = vpop.f32.mrf.mxu0
      %v10029 = vadd.f32 0.0, %v10028
      %v10030 = vpop.f32.mrf.mxu0
      %10031 = vmatprep.mubr.f32.mxu0 0.0
      %10032 = vmatmul.mubr.f32.gmra.mxu0 %v8772
      %v10033 = vpop.f32.mrf.mxu0
      %v10034 = vadd.f32 0.0, %v10033
      %v10035 = vpop.f32.mrf.mxu0
      %10036 = vmatprep.mubr.f32.mxu0 0.0
      %10037 = vmatmul.mubr.f32.gmra.mxu0 %v8775
      %v10038 = vpop.f32.mrf.mxu0
      %v10039 = vadd.f32 0.0, %v10038
      %v10040 = vpop.f32.mrf.mxu0
      %10041 = vmatprep.mubr.f32.mxu0 0.0
      %10042 = vmatmul.mubr.f32.gmra.mxu0 %v8778
      %v10043 = vpop.f32.mrf.mxu0
      %v10044 = vadd.f32 0.0, %v10043
      %v10045 = vpop.f32.mrf.mxu0
      %10046 = vmatprep.mubr.f32.mxu0 0.0
      %10047 = vmatmul.mubr.f32.gmra.mxu0 %v8781
      %v10048 = vpop.f32.mrf.mxu0
      %v10049 = vadd.f32 0.0, %v10048
      %v10050 = vpop.f32.mrf.mxu0
      %10051 = vmatprep.mubr.f32.mxu0 0.0
      %10052 = vmatmul.mubr.f32.gmra.mxu0 %v8784
      %v10053 = vpop.f32.mrf.mxu0
      %v10054 = vadd.f32 0.0, %v10053
      %v10055 = vpop.f32.mrf.mxu0
      %10056 = vmatprep.mubr.f32.mxu0 0.0
      %10057 = vmatmul.mubr.f32.gmra.mxu0 %v8787
      %v10058 = vpop.f32.mrf.mxu0
      %v10059 = vadd.f32 0.0, %v10058
      %v10060 = vpop.f32.mrf.mxu0
      %10061 = vmatprep.mubr.f32.mxu0 0.0
      %10062 = vmatmul.mubr.f32.gmra.mxu0 %v8790
      %v10063 = vpop.f32.mrf.mxu0
      %v10064 = vadd.f32 0.0, %v10063
      %v10065 = vpop.f32.mrf.mxu0
      %10066 = vmatprep.mubr.f32.mxu0 0.0
      %10067 = vmatmul.mubr.f32.gmra.mxu0 %v8793
      %v10068 = vpop.f32.mrf.mxu0
      %v10069 = vadd.f32 0.0, %v10068
      %v10070 = vpop.f32.mrf.mxu0
      %10071 = vmatprep.mubr.f32.mxu0 0.0
      %10072 = vmatmul.mubr.f32.gmra.mxu0 %v8796
      %v10073 = vpop.f32.mrf.mxu0
      %v10074 = vadd.f32 0.0, %v10073
      %v10075 = vpop.f32.mrf.mxu0
      %10076 = vmatprep.mubr.f32.mxu0 0.0
      %10077 = vmatmul.mubr.f32.gmra.mxu0 %v8799
      %v10078 = vpop.f32.mrf.mxu0
      %v10079 = vadd.f32 0.0, %v10078
      %v10080 = vpop.f32.mrf.mxu0
      %10081 = vmatprep.mubr.f32.mxu0 0.0
      %10082 = vmatmul.mubr.f32.gmra.mxu0 %v8802
      %v10083 = vpop.f32.mrf.mxu0
      %v10084 = vadd.f32 0.0, %v10083
      %v10085 = vpop.f32.mrf.mxu0
      %10086 = vmatprep.mubr.f32.mxu0 0.0
      %10087 = vmatmul.mubr.f32.gmra.mxu0 %v8805
      %v10088 = vpop.f32.mrf.mxu0
      %v10089 = vadd.f32 0.0, %v10088
      %v10090 = vpop.f32.mrf.mxu0
      %10091 = vmatprep.mubr.f32.mxu0 0.0
      %10092 = vmatmul.mubr.f32.gmra.mxu0 %v8808
      %v10093 = vpop.f32.mrf.mxu0
      %v10094 = vadd.f32 0.0, %v10093
      %v10095 = vpop.f32.mrf.mxu0
      %10096 = vmatprep.mubr.f32.mxu0 0.0
      %10097 = vmatmul.mubr.f32.gmra.mxu0 %v8811
      %v10098 = vpop.f32.mrf.mxu0
      %v10099 = vadd.f32 0.0, %v10098
      %v10100 = vpop.f32.mrf.mxu0
      %10101 = vmatprep.mubr.f32.mxu0 0.0
      %10102 = vmatmul.mubr.f32.gmra.mxu0 %v8814
      %v10103 = vpop.f32.mrf.mxu0
      %v10104 = vadd.f32 0.0, %v10103
      %v10105 = vpop.f32.mrf.mxu0
      %10106 = vmatprep.mubr.f32.mxu0 0.0
      %10107 = vmatmul.mubr.f32.gmra.mxu0 %v8817
      %v10108 = vpop.f32.mrf.mxu0
      %v10109 = vadd.f32 0.0, %v10108
      %v10110 = vpop.f32.mrf.mxu0
      %10111 = vmatprep.mubr.f32.mxu0 0.0
      %10112 = vmatmul.mubr.f32.gmra.mxu0 %v8820
      %v10113 = vpop.f32.mrf.mxu0
      %v10114 = vadd.f32 0.0, %v10113
      %v10115 = vpop.f32.mrf.mxu0
      %10116 = vmatprep.mubr.f32.mxu0 0.0
      %10117 = vmatmul.mubr.f32.gmra.mxu0 %v8823
      %v10118 = vpop.f32.mrf.mxu0
      %v10119 = vadd.f32 0.0, %v10118
      %v10120 = vpop.f32.mrf.mxu0
      %10121 = vmatprep.mubr.f32.mxu0 0.0
      %10122 = vmatmul.mubr.f32.gmra.mxu0 %v8826
      %v10123 = vpop.f32.mrf.mxu0
      %v10124 = vadd.f32 0.0, %v10123
      %v10125 = vpop.f32.mrf.mxu0
      %10126 = vmatprep.mubr.f32.mxu0 0.0
      %10127 = vmatmul.mubr.f32.gmra.mxu0 %v8829
      %v10128 = vpop.f32.mrf.mxu0
      %v10129 = vadd.f32 0.0, %v10128
      %v10130 = vpop.f32.mrf.mxu0
      %10131 = vmatprep.mubr.f32.mxu0 0.0
      %10132 = vmatmul.mubr.f32.gmra.mxu0 %v8832
      %v10133 = vpop.f32.mrf.mxu0
      %v10134 = vadd.f32 0.0, %v10133
      %v10135 = vpop.f32.mrf.mxu0
      %10136 = vmatprep.mubr.f32.mxu0 0.0
      %10137 = vmatmul.mubr.f32.gmra.mxu0 %v8835
      %v10138 = vpop.f32.mrf.mxu0
      %v10139 = vadd.f32 0.0, %v10138
      %v10140 = vpop.f32.mrf.mxu0
      %10141 = vmatprep.mubr.f32.mxu0 0.0
      %10142 = vmatmul.mubr.f32.gmra.mxu0 %v8838
      %v10143 = vpop.f32.mrf.mxu0
      %v10144 = vadd.f32 0.0, %v10143
      %v10145 = vpop.f32.mrf.mxu0
      %10146 = vmatprep.mubr.f32.mxu0 0.0
      %10147 = vmatmul.mubr.f32.gmra.mxu0 %v8841
      %v10148 = vpop.f32.mrf.mxu0
      %v10149 = vadd.f32 0.0, %v10148
      %v10150 = vpop.f32.mrf.mxu0
      %10151 = vmatprep.mubr.f32.mxu0 0.0
      %10152 = vmatmul.mubr.f32.gmra.mxu0 %v8844
      %v10153 = vpop.f32.mrf.mxu0
      %v10154 = vadd.f32 0.0, %v10153
      %v10155 = vpop.f32.mrf.mxu0
      %10156 = vmatprep.mubr.f32.mxu0 0.0
      %10157 = vmatmul.mubr.f32.gmra.mxu0 %v8847
      %v10158 = vpop.f32.mrf.mxu0
      %v10159 = vadd.f32 0.0, %v10158
      %v10160 = vpop.f32.mrf.mxu0
      %10161 = vmatprep.mubr.f32.mxu0 0.0
      %10162 = vmatmul.mubr.f32.gmra.mxu0 %v8850
      %v10163 = vpop.f32.mrf.mxu0
      %v10164 = vadd.f32 0.0, %v10163
      %v10165 = vpop.f32.mrf.mxu0
      %10166 = vmatprep.mubr.f32.mxu0 0.0
      %10167 = vmatmul.mubr.f32.gmra.mxu0 %v8853
      %v10168 = vpop.f32.mrf.mxu0
      %v10169 = vadd.f32 0.0, %v10168
      %v10170 = vpop.f32.mrf.mxu0
      %10171 = vmatprep.mubr.f32.mxu0 0.0
      %10172 = vmatmul.mubr.f32.gmra.mxu0 %v8856
      %v10173 = vpop.f32.mrf.mxu0
      %v10174 = vadd.f32 0.0, %v10173
      %v10175 = vpop.f32.mrf.mxu0
      %10176 = vmatprep.mubr.f32.mxu0 0.0
      %10177 = vmatmul.mubr.f32.gmra.mxu0 %v8859
      %v10178 = vpop.f32.mrf.mxu0
      %v10179 = vadd.f32 0.0, %v10178
      %v10180 = vpop.f32.mrf.mxu0
      %10181 = vmatprep.mubr.f32.mxu0 0.0
      %10182 = vmatmul.mubr.f32.gmra.mxu0 %v8862
      %v10183 = vpop.f32.mrf.mxu0
      %v10184 = vadd.f32 0.0, %v10183
      %v10185 = vpop.f32.mrf.mxu0
      %10186 = vmatprep.mubr.f32.mxu0 0.0
      %10187 = vmatmul.mubr.f32.gmra.mxu0 %v8865
      %v10188 = vpop.f32.mrf.mxu0
      %v10189 = vadd.f32 0.0, %v10188
      %v10190 = vpop.f32.mrf.mxu0
      %10191 = vmatprep.mubr.f32.mxu0 0.0
      %10192 = vmatmul.mubr.f32.gmra.mxu0 %v8868
      %v10193 = vpop.f32.mrf.mxu0
      %v10194 = vadd.f32 0.0, %v10193
      %v10195 = vpop.f32.mrf.mxu0
      %10196 = vmatprep.mubr.f32.mxu0 0.0
      %10197 = vmatmul.mubr.f32.gmra.mxu0 %v8871
      %v10198 = vpop.f32.mrf.mxu0
      %v10199 = vadd.f32 0.0, %v10198
      %v10200 = vpop.f32.mrf.mxu0
      %10201 = vmatprep.mubr.f32.mxu0 0.0
      %10202 = vmatmul.mubr.f32.gmra.mxu0 %v8874
      %v10203 = vpop.f32.mrf.mxu0
      %v10204 = vadd.f32 0.0, %v10203
      %v10205 = vpop.f32.mrf.mxu0
      %10206 = vmatprep.mubr.f32.mxu0 0.0
      %10207 = vmatmul.mubr.f32.gmra.mxu0 %v8877
      %v10208 = vpop.f32.mrf.mxu0
      %v10209 = vadd.f32 0.0, %v10208
      %v10210 = vpop.f32.mrf.mxu0
      %10211 = vmatprep.mubr.f32.mxu0 0.0
      %10212 = vmatmul.mubr.f32.gmra.mxu0 %v8880
      %v10213 = vpop.f32.mrf.mxu0
      %v10214 = vadd.f32 0.0, %v10213
      %v10215 = vpop.f32.mrf.mxu0
      %10216 = vmatprep.mubr.f32.mxu0 0.0
      %10217 = vmatmul.mubr.f32.gmra.mxu0 %v8883
      %v10218 = vpop.f32.mrf.mxu0
      %v10219 = vadd.f32 0.0, %v10218
      %v10220 = vpop.f32.mrf.mxu0
      %10221 = vmatprep.mubr.f32.mxu0 0.0
      %10222 = vmatmul.mubr.f32.gmra.mxu0 %v8886
      %v10223 = vpop.f32.mrf.mxu0
      %v10224 = vadd.f32 0.0, %v10223
      %v10225 = vpop.f32.mrf.mxu0
      %10226 = vmatprep.mubr.f32.mxu0 0.0
      %10227 = vmatmul.mubr.f32.gmra.mxu0 %v8889
      %v10228 = vpop.f32.mrf.mxu0
      %v10229 = vadd.f32 0.0, %v10228
      %v10230 = vpop.f32.mrf.mxu0
      %10231 = vmatprep.mubr.f32.mxu0 0.0
      %10232 = vmatmul.mubr.f32.gmra.mxu0 %v8892
      %v10233 = vpop.f32.mrf.mxu0
      %v10234 = vadd.f32 0.0, %v10233
      %v10235 = vpop.f32.mrf.mxu0
      %10236 = vmatprep.mubr.f32.mxu0 0.0
      %10237 = vmatmul.mubr.f32.gmra.mxu0 %v8895
      %v10238 = vpop.f32.mrf.mxu0
      %v10239 = vadd.f32 0.0, %v10238
      %v10240 = vpop.f32.mrf.mxu0
      %10241 = vmatprep.mubr.f32.mxu0 0.0
      %10242 = vmatmul.mubr.f32.gmra.mxu0 %v8898
      %v10243 = vpop.f32.mrf.mxu0
      %v10244 = vadd.f32 0.0, %v10243
      %v10245 = vpop.f32.mrf.mxu0
      %10246 = vmatprep.mubr.f32.mxu0 0.0
      %10247 = vmatmul.mubr.f32.gmra.mxu0 %v8901
      %v10248 = vpop.f32.mrf.mxu0
      %v10249 = vadd.f32 0.0, %v10248
      %v10250 = vpop.f32.mrf.mxu0
      %10251 = vdwg.mxu0
      %v10252 = vmul.f32 %v8974, %v552
      %v10253 = vmul.f32 %v8979, %v553
      %v10254 = vmul.f32 %v8984, %v554
      %v10255 = vmul.f32 %v8989, %v555
      %v10256 = vmul.f32 %v8994, %v556
      %v10257 = vmul.f32 %v8999, %v557
      %v10258 = vmul.f32 %v9004, %v558
      %v10259 = vmul.f32 %v9009, %v559
      %v10260 = vmul.f32 %v9014, %v560
      %v10261 = vmul.f32 %v9019, %v561
      %v10262 = vmul.f32 %v9024, %v562
      %v10263 = vmul.f32 %v9029, %v563
      %v10264 = vmul.f32 %v9034, %v564
      %v10265 = vmul.f32 %v9039, %v565
      %v10266 = vmul.f32 %v9044, %v566
      %v10267 = vmul.f32 %v9049, %v567
      %v10268 = vmul.f32 %v9054, %v568
      %v10269 = vmul.f32 %v9059, %v569
      %v10270 = vmul.f32 %v9064, %v570
      %v10271 = vmul.f32 %v9069, %v571
      %v10272 = vmul.f32 %v9074, %v572
      %v10273 = vmul.f32 %v9079, %v573
      %v10274 = vmul.f32 %v9084, %v574
      %v10275 = vmul.f32 %v9089, %v575
      %v10276 = vmul.f32 %v9094, %v576
      %v10277 = vmul.f32 %v9099, %v577
      %v10278 = vmul.f32 %v9104, %v578
      %v10279 = vmul.f32 %v9109, %v579
      %v10280 = vmul.f32 %v9114, %v580
      %v10281 = vmul.f32 %v9119, %v581
      %v10282 = vmul.f32 %v9124, %v582
      %v10283 = vmul.f32 %v9129, %v583
      %v10284 = vmul.f32 %v9134, %v584
      %v10285 = vmul.f32 %v9139, %v585
      %v10286 = vmul.f32 %v9144, %v586
      %v10287 = vmul.f32 %v9149, %v587
      %v10288 = vmul.f32 %v9154, %v588
      %v10289 = vmul.f32 %v9159, %v589
      %v10290 = vmul.f32 %v9164, %v590
      %v10291 = vmul.f32 %v9169, %v591
      %v10292 = vmul.f32 %v9174, %v592
      %v10293 = vmul.f32 %v9179, %v593
      %v10294 = vmul.f32 %v9184, %v594
      %v10295 = vmul.f32 %v9189, %v595
      %v10296 = vmul.f32 %v9194, %v596
      %v10297 = vmul.f32 %v9199, %v597
      %v10298 = vmul.f32 %v9204, %v598
      %v10299 = vmul.f32 %v9209, %v599
      %v10300 = vmul.f32 %v9214, %v600
      %v10301 = vmul.f32 %v9219, %v601
      %v10302 = vmul.f32 %v9224, %v602
      %v10303 = vmul.f32 %v9229, %v603
      %v10304 = vmul.f32 %v9234, %v604
      %v10305 = vmul.f32 %v9239, %v605
      %v10306 = vmul.f32 %v9244, %v606
      %v10307 = vmul.f32 %v9249, %v607
      %v10308 = vmul.f32 %v9254, %v608
      %v10309 = vmul.f32 %v9259, %v609
      %v10310 = vmul.f32 %v9264, %v610
      %v10311 = vmul.f32 %v9269, %v611
      %v10312 = vmul.f32 %v9274, %v612
      %v10313 = vmul.f32 %v9279, %v613
      %v10314 = vmul.f32 %v9284, %v614
      %v10315 = vmul.f32 %v9289, %v615
      %v10316 = vmul.f32 %v9294, %v616
      %v10317 = vmul.f32 %v9299, %v617
      %v10318 = vmul.f32 %v9304, %v618
      %v10319 = vmul.f32 %v9309, %v619
      %v10320 = vmul.f32 %v9314, %v620
      %v10321 = vmul.f32 %v9319, %v621
      %v10322 = vmul.f32 %v9324, %v622
      %v10323 = vmul.f32 %v9329, %v623
      %v10324 = vmul.f32 %v9334, %v624
      %v10325 = vmul.f32 %v9339, %v625
      %v10326 = vmul.f32 %v9344, %v626
      %v10327 = vmul.f32 %v9349, %v627
      %v10328 = vmul.f32 %v9354, %v628
      %v10329 = vmul.f32 %v9359, %v629
      %v10330 = vmul.f32 %v9364, %v630
      %v10331 = vmul.f32 %v9369, %v631
      %v10332 = vmul.f32 %v9374, %v632
      %v10333 = vmul.f32 %v9379, %v633
      %v10334 = vmul.f32 %v9384, %v634
      %v10335 = vmul.f32 %v9389, %v635
      %v10336 = vmul.f32 %v9394, %v636
      %v10337 = vmul.f32 %v9399, %v637
      %v10338 = vmul.f32 %v9404, %v638
      %v10339 = vmul.f32 %v9409, %v639
      %v10340 = vmul.f32 %v9414, %v640
      %v10341 = vmul.f32 %v9419, %v641
      %v10342 = vmul.f32 %v9424, %v642
      %v10343 = vmul.f32 %v9429, %v643
      %v10344 = vmul.f32 %v9434, %v644
      %v10345 = vmul.f32 %v9439, %v645
      %v10346 = vmul.f32 %v9444, %v646
      %v10347 = vmul.f32 %v9449, %v647
      %v10348 = vmul.f32 %v9454, %v648
      %v10349 = vmul.f32 %v9459, %v649
      %v10350 = vmul.f32 %v9464, %v650
      %v10351 = vmul.f32 %v9469, %v651
      %v10352 = vmul.f32 %v9474, %v652
      %v10353 = vmul.f32 %v9479, %v653
      %v10354 = vmul.f32 %v9484, %v654
      %v10355 = vmul.f32 %v9489, %v655
      %v10356 = vmul.f32 %v9494, %v656
      %v10357 = vmul.f32 %v9499, %v657
      %v10358 = vmul.f32 %v9504, %v658
      %v10359 = vmul.f32 %v9509, %v659
      %v10360 = vmul.f32 %v9514, %v660
      %v10361 = vmul.f32 %v9519, %v661
      %v10362 = vmul.f32 %v9524, %v662
      %v10363 = vmul.f32 %v9529, %v663
      %v10364 = vmul.f32 %v9534, %v664
      %v10365 = vmul.f32 %v9539, %v665
      %v10366 = vmul.f32 %v9544, %v666
      %v10367 = vmul.f32 %v9549, %v667
      %v10368 = vmul.f32 %v9554, %v668
      %v10369 = vmul.f32 %v9559, %v669
      %v10370 = vmul.f32 %v9564, %v670
      %v10371 = vmul.f32 %v9569, %v671
      %v10372 = vmul.f32 %v9574, %v672
      %v10373 = vmul.f32 %v9579, %v673
      %v10374 = vmul.f32 %v9584, %v674
      %v10375 = vmul.f32 %v9589, %v675
      %v10376 = vmul.f32 %v9594, %v676
      %v10377 = vmul.f32 %v9599, %v677
      %v10378 = vmul.f32 %v9604, %v678
      %v10379 = vmul.f32 %v9609, %v679
      %v10380 = vmul.f32 %v9614, %v680
      %v10381 = vmul.f32 %v9619, %v681
      %v10382 = vmul.f32 %v9624, %v682
      %v10383 = vmul.f32 %v9629, %v683
      %v10384 = vmul.f32 %v9634, %v684
      %v10385 = vmul.f32 %v9639, %v685
      %v10386 = vmul.f32 %v9644, %v686
      %v10387 = vmul.f32 %v9649, %v687
      %v10388 = vmul.f32 %v9654, %v688
      %v10389 = vmul.f32 %v9659, %v689
      %v10390 = vmul.f32 %v9664, %v690
      %v10391 = vmul.f32 %v9669, %v691
      %v10392 = vmul.f32 %v9674, %v692
      %v10393 = vmul.f32 %v9679, %v693
      %v10394 = vmul.f32 %v9684, %v694
      %v10395 = vmul.f32 %v9689, %v695
      %v10396 = vmul.f32 %v9694, %v696
      %v10397 = vmul.f32 %v9699, %v697
      %v10398 = vmul.f32 %v9704, %v698
      %v10399 = vmul.f32 %v9709, %v699
      %v10400 = vmul.f32 %v9714, %v700
      %v10401 = vmul.f32 %v9719, %v701
      %v10402 = vmul.f32 %v9724, %v702
      %v10403 = vmul.f32 %v9729, %v703
      %v10404 = vmul.f32 %v9734, %v704
      %v10405 = vmul.f32 %v9739, %v705
      %v10406 = vmul.f32 %v9744, %v706
      %v10407 = vmul.f32 %v9749, %v707
      %v10408 = vmul.f32 %v9754, %v708
      %v10409 = vmul.f32 %v9759, %v709
      %v10410 = vmul.f32 %v9764, %v710
      %v10411 = vmul.f32 %v9769, %v711
      %v10412 = vmul.f32 %v9774, %v712
      %v10413 = vmul.f32 %v9779, %v713
      %v10414 = vmul.f32 %v9784, %v714
      %v10415 = vmul.f32 %v9789, %v715
      %v10416 = vmul.f32 %v9794, %v716
      %v10417 = vmul.f32 %v9799, %v717
      %v10418 = vmul.f32 %v9804, %v718
      %v10419 = vmul.f32 %v9809, %v719
      %v10420 = vmul.f32 %v9814, %v720
      %v10421 = vmul.f32 %v9819, %v721
      %v10422 = vmul.f32 %v9824, %v722
      %v10423 = vmul.f32 %v9829, %v723
      %v10424 = vmul.f32 %v9834, %v724
      %v10425 = vmul.f32 %v9839, %v725
      %v10426 = vmul.f32 %v9844, %v726
      %v10427 = vmul.f32 %v9849, %v727
      %v10428 = vmul.f32 %v9854, %v728
      %v10429 = vmul.f32 %v9859, %v729
      %v10430 = vmul.f32 %v9864, %v730
      %v10431 = vmul.f32 %v9869, %v731
      %v10432 = vmul.f32 %v9874, %v732
      %v10433 = vmul.f32 %v9879, %v733
      %v10434 = vmul.f32 %v9884, %v734
      %v10435 = vmul.f32 %v9889, %v735
      %v10436 = vmul.f32 %v9894, %v736
      %v10437 = vmul.f32 %v9899, %v737
      %v10438 = vmul.f32 %v9904, %v738
      %v10439 = vmul.f32 %v9909, %v739
      %v10440 = vmul.f32 %v9914, %v740
      %v10441 = vmul.f32 %v9919, %v741
      %v10442 = vmul.f32 %v9924, %v742
      %v10443 = vmul.f32 %v9929, %v743
      %v10444 = vmul.f32 %v9934, %v744
      %v10445 = vmul.f32 %v9939, %v745
      %v10446 = vmul.f32 %v9944, %v746
      %v10447 = vmul.f32 %v9949, %v747
      %v10448 = vmul.f32 %v9954, %v748
      %v10449 = vmul.f32 %v9959, %v749
      %v10450 = vmul.f32 %v9964, %v750
      %v10451 = vmul.f32 %v9969, %v751
      %v10452 = vmul.f32 %v9974, %v752
      %v10453 = vmul.f32 %v9979, %v753
      %v10454 = vmul.f32 %v9984, %v754
      %v10455 = vmul.f32 %v9989, %v755
      %v10456 = vmul.f32 %v9994, %v756
      %v10457 = vmul.f32 %v9999, %v757
      %v10458 = vmul.f32 %v10004, %v758
      %v10459 = vmul.f32 %v10009, %v759
      %v10460 = vmul.f32 %v10014, %v760
      %v10461 = vmul.f32 %v10019, %v761
      %v10462 = vmul.f32 %v10024, %v762
      %v10463 = vmul.f32 %v10029, %v763
      %v10464 = vmul.f32 %v10034, %v764
      %v10465 = vmul.f32 %v10039, %v765
      %v10466 = vmul.f32 %v10044, %v766
      %v10467 = vmul.f32 %v10049, %v767
      %v10468 = vmul.f32 %v10054, %v768
      %v10469 = vmul.f32 %v10059, %v769
      %v10470 = vmul.f32 %v10064, %v770
      %v10471 = vmul.f32 %v10069, %v771
      %v10472 = vmul.f32 %v10074, %v772
      %v10473 = vmul.f32 %v10079, %v773
      %v10474 = vmul.f32 %v10084, %v774
      %v10475 = vmul.f32 %v10089, %v775
      %v10476 = vmul.f32 %v10094, %v776
      %v10477 = vmul.f32 %v10099, %v777
      %v10478 = vmul.f32 %v10104, %v778
      %v10479 = vmul.f32 %v10109, %v779
      %v10480 = vmul.f32 %v10114, %v780
      %v10481 = vmul.f32 %v10119, %v781
      %v10482 = vmul.f32 %v10124, %v782
      %v10483 = vmul.f32 %v10129, %v783
      %v10484 = vmul.f32 %v10134, %v784
      %v10485 = vmul.f32 %v10139, %v785
      %v10486 = vmul.f32 %v10144, %v786
      %v10487 = vmul.f32 %v10149, %v787
      %v10488 = vmul.f32 %v10154, %v788
      %v10489 = vmul.f32 %v10159, %v789
      %v10490 = vmul.f32 %v10164, %v790
      %v10491 = vmul.f32 %v10169, %v791
      %v10492 = vmul.f32 %v10174, %v792
      %v10493 = vmul.f32 %v10179, %v793
      %v10494 = vmul.f32 %v10184, %v794
      %v10495 = vmul.f32 %v10189, %v795
      %v10496 = vmul.f32 %v10194, %v796
      %v10497 = vmul.f32 %v10199, %v797
      %v10498 = vmul.f32 %v10204, %v798
      %v10499 = vmul.f32 %v10209, %v799
      %v10500 = vmul.f32 %v10214, %v800
      %v10501 = vmul.f32 %v10219, %v801
      %v10502 = vmul.f32 %v10224, %v802
      %v10503 = vmul.f32 %v10229, %v803
      %v10504 = vmul.f32 %v10234, %v804
      %v10505 = vmul.f32 %v10239, %v805
      %v10506 = vmul.f32 %v10244, %v806
      %v10507 = vmul.f32 %v10249, %v807
      %v10508 = vld [vmem:[%s5] sm:$0xff]
      %v10509 = vld [vmem:[%s5 + $0x8] sm:$0xff]
      %v10510 = vld [vmem:[%s5 + $0x10] sm:$0xff]
      %v10511 = vld [vmem:[%s5 + $0x18] sm:$0xff]
      %v10512 = vld [vmem:[%s5 + $0x20] sm:$0xff]
      %v10513 = vld [vmem:[%s5 + $0x28] sm:$0xff]
      %v10514 = vld [vmem:[%s5 + $0x30] sm:$0xff]
      %v10515 = vld [vmem:[%s5 + $0x38] sm:$0xff]
      %v10516 = vld [vmem:[%s5 + $0x40] sm:$0xff]
      %v10517 = vld [vmem:[%s5 + $0x48] sm:$0xff]
      %v10518 = vld [vmem:[%s5 + $0x50] sm:$0xff]
      %v10519 = vld [vmem:[%s5 + $0x58] sm:$0xff]
      %s10520 = scalar_lea.vmem %s5, 96
      %v10521 = vld [vmem:[%s10520] sm:$0xff]
      %v10522 = vld [vmem:[%s10520 + $0x8] sm:$0xff]
      %v10523 = vld [vmem:[%s10520 + $0x10] sm:$0xff]
      %v10524 = vld [vmem:[%s10520 + $0x18] sm:$0xff]
      %v10525 = vld [vmem:[%s10520 + $0x20] sm:$0xff]
      %v10526 = vld [vmem:[%s10520 + $0x28] sm:$0xff]
      %v10527 = vld [vmem:[%s10520 + $0x30] sm:$0xff]
      %v10528 = vld [vmem:[%s10520 + $0x38] sm:$0xff]
      %v10529 = vld [vmem:[%s10520 + $0x40] sm:$0xff]
      %v10530 = vld [vmem:[%s10520 + $0x48] sm:$0xff]
      %v10531 = vld [vmem:[%s10520 + $0x50] sm:$0xff]
      %v10532 = vld [vmem:[%s10520 + $0x58] sm:$0xff]
      %v10534 = vsel %vm827, %v10316, 0
      %v10537 = vsel %vm827, %v10317, 0
      %v10540 = vsel %vm827, %v10318, 0
      %v10543 = vsel %vm827, %v10319, 0
      %v10546 = vsel %vm827, %v10320, 0
      %v10549 = vsel %vm827, %v10321, 0
      %v10552 = vsel %vm827, %v10322, 0
      %v10555 = vsel %vm827, %v10323, 0
      %v10558 = vsel %vm827, %v10324, 0
      %v10561 = vsel %vm827, %v10325, 0
      %v10564 = vsel %vm827, %v10326, 0
      %v10567 = vsel %vm827, %v10327, 0
      %v10570 = vsel %vm827, %v10328, 0
      %v10573 = vsel %vm827, %v10329, 0
      %v10576 = vsel %vm827, %v10330, 0
      %v10579 = vsel %vm827, %v10331, 0
      %v10582 = vsel %vm827, %v10332, 0
      %v10585 = vsel %vm827, %v10333, 0
      %v10588 = vsel %vm827, %v10334, 0
      %v10591 = vsel %vm827, %v10335, 0
      %v10594 = vsel %vm827, %v10336, 0
      %v10597 = vsel %vm827, %v10337, 0
      %v10600 = vsel %vm827, %v10338, 0
      %v10603 = vsel %vm827, %v10339, 0
      %v10606 = vsel %vm827, %v10340, 0
      %v10609 = vsel %vm827, %v10341, 0
      %v10612 = vsel %vm827, %v10342, 0
      %v10615 = vsel %vm827, %v10343, 0
      %v10618 = vsel %vm827, %v10344, 0
      %v10621 = vsel %vm827, %v10345, 0
      %v10624 = vsel %vm827, %v10346, 0
      %v10627 = vsel %vm827, %v10347, 0
      %v10630 = vsel %vm827, %v10348, 0
      %v10633 = vsel %vm827, %v10349, 0
      %v10636 = vsel %vm827, %v10350, 0
      %v10639 = vsel %vm827, %v10351, 0
      %v10642 = vsel %vm827, %v10352, 0
      %v10645 = vsel %vm827, %v10353, 0
      %v10648 = vsel %vm827, %v10354, 0
      %v10651 = vsel %vm827, %v10355, 0
      %v10654 = vsel %vm827, %v10356, 0
      %v10657 = vsel %vm827, %v10357, 0
      %v10660 = vsel %vm827, %v10358, 0
      %v10663 = vsel %vm827, %v10359, 0
      %v10666 = vsel %vm827, %v10360, 0
      %v10669 = vsel %vm827, %v10361, 0
      %v10672 = vsel %vm827, %v10362, 0
      %v10675 = vsel %vm827, %v10363, 0
      %v10678 = vsel %vm827, %v10364, 0
      %v10681 = vsel %vm827, %v10365, 0
      %v10684 = vsel %vm827, %v10366, 0
      %v10687 = vsel %vm827, %v10367, 0
      %v10690 = vsel %vm827, %v10368, 0
      %v10693 = vsel %vm827, %v10369, 0
      %v10696 = vsel %vm827, %v10370, 0
      %v10699 = vsel %vm827, %v10371, 0
      %v10702 = vsel %vm827, %v10372, 0
      %v10705 = vsel %vm827, %v10373, 0
      %v10708 = vsel %vm827, %v10374, 0
      %v10711 = vsel %vm827, %v10375, 0
      %v10714 = vsel %vm827, %v10376, 0
      %v10717 = vsel %vm827, %v10377, 0
      %v10720 = vsel %vm827, %v10378, 0
      %v10723 = vsel %vm827, %v10379, 0
      %10725 = vmatprep.subr.mxu0 0.0
      %10726 = vmatpush1.msra.mxu0 0.0
      %10727 = vmatprep.subr.mxu0 0.0
      %10728 = vmatpush1.msra.mxu0 0.0
      %10729 = vmatprep.subr.mxu0 0.0
      %10730 = vmatpush1.msra.mxu0 0.0
      %10731 = vmatprep.subr.mxu0 0.0
      %10732 = vmatpush1.msra.mxu0 0.0
      %10733 = vmatprep.subr.mxu0 0.0
      %10734 = vmatpush1.msra.mxu0 %v10532
      %10735 = vmatprep.subr.mxu0 0.0
      %10736 = vmatpush1.msra.mxu0 %v10531
      %10737 = vmatprep.subr.mxu0 0.0
      %10738 = vmatpush1.msra.mxu0 %v10530
      %10739 = vmatprep.subr.mxu0 0.0
      %10740 = vmatpush1.msra.mxu0 %v10529
      %10741 = vmatprep.subr.mxu0 0.0
      %10742 = vmatpush1.msra.mxu0 %v10528
      %10743 = vmatprep.subr.mxu0 0.0
      %10744 = vmatpush1.msra.mxu0 %v10527
      %10745 = vmatprep.subr.mxu0 0.0
      %10746 = vmatpush1.msra.mxu0 %v10526
      %10747 = vmatprep.subr.mxu0 0.0
      %10748 = vmatpush1.msra.mxu0 %v10525
      %10749 = vmatprep.subr.mxu0 0.0
      %10750 = vmatpush1.msra.mxu0 %v10524
      %10751 = vmatprep.subr.mxu0 0.0
      %10752 = vmatpush1.msra.mxu0 %v10523
      %10753 = vmatprep.subr.mxu0 0.0
      %10754 = vmatpush1.msra.mxu0 %v10522
      %10755 = vmatprep.subr.mxu0 0.0
      %10756 = vmatpush1.msra.mxu0 %v10521
      %10757 = vmatprep.subr.mxu0 0.0
      %10758 = vmatpush2.msra.mxu0 0.0
      %10759 = vmatprep.subr.mxu0 0.0
      %10760 = vmatpush2.msra.mxu0 0.0
      %10761 = vmatprep.subr.mxu0 0.0
      %10762 = vmatpush2.msra.mxu0 0.0
      %10763 = vmatprep.subr.mxu0 0.0
      %10764 = vmatpush2.msra.mxu0 0.0
      %10765 = vmatprep.subr.mxu0 0.0
      %10766 = vmatpush2.msra.mxu0 0.0
      %10767 = vmatprep.subr.mxu0 0.0
      %10768 = vmatpush2.msra.mxu0 0.0
      %10769 = vmatprep.subr.mxu0 0.0
      %10770 = vmatpush2.msra.mxu0 0.0
      %10771 = vmatprep.subr.mxu0 0.0
      %10772 = vmatpush2.msra.mxu0 0.0
      %10773 = vmatprep.subr.mxu0 0.0
      %10774 = vmatpush2.msra.mxu0 0.0
      %10775 = vmatprep.subr.mxu0 0.0
      %10776 = vmatpush2.msra.mxu0 0.0
      %10777 = vmatprep.subr.mxu0 0.0
      %10778 = vmatpush2.msra.mxu0 0.0
      %10779 = vmatprep.subr.mxu0 0.0
      %10780 = vmatpush2.msra.mxu0 0.0
      %10781 = vmatprep.subr.mxu0 0.0
      %10782 = vmatpush2.msra.mxu0 0.0
      %10783 = vmatprep.subr.mxu0 0.0
      %10784 = vmatpush2.msra.mxu0 0.0
      %10785 = vmatprep.subr.mxu0 0.0
      %10786 = vmatpush2.msra.mxu0 0.0
      %10787 = vmatprep.subr.mxu0 0.0
      %10788 = vmatpush2.msra.mxu0 0.0
      %10789 = vmatprep.mubr.f32.mxu0 0.0
      %10790 = vmatmul.mubr.f32.gmra.mxu0 %v10534
      %v10791 = vpop.f32.mrf.mxu0
      %v10792 = vadd.f32 0.0, %v10791
      %v10793 = vpop.f32.mrf.mxu0
      %10794 = vmatprep.mubr.f32.mxu0 0.0
      %10795 = vmatmul.mubr.f32.gmra.mxu0 %v10537
      %v10796 = vpop.f32.mrf.mxu0
      %v10797 = vadd.f32 0.0, %v10796
      %v10798 = vpop.f32.mrf.mxu0
      %10799 = vmatprep.mubr.f32.mxu0 0.0
      %10800 = vmatmul.mubr.f32.gmra.mxu0 %v10540
      %v10801 = vpop.f32.mrf.mxu0
      %v10802 = vadd.f32 0.0, %v10801
      %v10803 = vpop.f32.mrf.mxu0
      %10804 = vmatprep.mubr.f32.mxu0 0.0
      %10805 = vmatmul.mubr.f32.gmra.mxu0 %v10543
      %v10806 = vpop.f32.mrf.mxu0
      %v10807 = vadd.f32 0.0, %v10806
      %v10808 = vpop.f32.mrf.mxu0
      %10809 = vmatprep.mubr.f32.mxu0 0.0
      %10810 = vmatmul.mubr.f32.gmra.mxu0 %v10546
      %v10811 = vpop.f32.mrf.mxu0
      %v10812 = vadd.f32 0.0, %v10811
      %v10813 = vpop.f32.mrf.mxu0
      %10814 = vmatprep.mubr.f32.mxu0 0.0
      %10815 = vmatmul.mubr.f32.gmra.mxu0 %v10549
      %v10816 = vpop.f32.mrf.mxu0
      %v10817 = vadd.f32 0.0, %v10816
      %v10818 = vpop.f32.mrf.mxu0
      %10819 = vmatprep.mubr.f32.mxu0 0.0
      %10820 = vmatmul.mubr.f32.gmra.mxu0 %v10552
      %v10821 = vpop.f32.mrf.mxu0
      %v10822 = vadd.f32 0.0, %v10821
      %v10823 = vpop.f32.mrf.mxu0
      %10824 = vmatprep.mubr.f32.mxu0 0.0
      %10825 = vmatmul.mubr.f32.gmra.mxu0 %v10555
      %v10826 = vpop.f32.mrf.mxu0
      %v10827 = vadd.f32 0.0, %v10826
      %v10828 = vpop.f32.mrf.mxu0
      %10829 = vmatprep.mubr.f32.mxu0 0.0
      %10830 = vmatmul.mubr.f32.gmra.mxu0 %v10558
      %v10831 = vpop.f32.mrf.mxu0
      %v10832 = vadd.f32 0.0, %v10831
      %v10833 = vpop.f32.mrf.mxu0
      %10834 = vmatprep.mubr.f32.mxu0 0.0
      %10835 = vmatmul.mubr.f32.gmra.mxu0 %v10561
      %v10836 = vpop.f32.mrf.mxu0
      %v10837 = vadd.f32 0.0, %v10836
      %v10838 = vpop.f32.mrf.mxu0
      %10839 = vmatprep.mubr.f32.mxu0 0.0
      %10840 = vmatmul.mubr.f32.gmra.mxu0 %v10564
      %v10841 = vpop.f32.mrf.mxu0
      %v10842 = vadd.f32 0.0, %v10841
      %v10843 = vpop.f32.mrf.mxu0
      %10844 = vmatprep.mubr.f32.mxu0 0.0
      %10845 = vmatmul.mubr.f32.gmra.mxu0 %v10567
      %v10846 = vpop.f32.mrf.mxu0
      %v10847 = vadd.f32 0.0, %v10846
      %v10848 = vpop.f32.mrf.mxu0
      %10849 = vmatprep.mubr.f32.mxu0 0.0
      %10850 = vmatmul.mubr.f32.gmra.mxu0 %v10570
      %v10851 = vpop.f32.mrf.mxu0
      %v10852 = vadd.f32 0.0, %v10851
      %v10853 = vpop.f32.mrf.mxu0
      %10854 = vmatprep.mubr.f32.mxu0 0.0
      %10855 = vmatmul.mubr.f32.gmra.mxu0 %v10573
      %v10856 = vpop.f32.mrf.mxu0
      %v10857 = vadd.f32 0.0, %v10856
      %v10858 = vpop.f32.mrf.mxu0
      %10859 = vmatprep.mubr.f32.mxu0 0.0
      %10860 = vmatmul.mubr.f32.gmra.mxu0 %v10576
      %v10861 = vpop.f32.mrf.mxu0
      %v10862 = vadd.f32 0.0, %v10861
      %v10863 = vpop.f32.mrf.mxu0
      %10864 = vmatprep.mubr.f32.mxu0 0.0
      %10865 = vmatmul.mubr.f32.gmra.mxu0 %v10579
      %v10866 = vpop.f32.mrf.mxu0
      %v10867 = vadd.f32 0.0, %v10866
      %v10868 = vpop.f32.mrf.mxu0
      %10869 = vmatprep.mubr.f32.mxu0 0.0
      %10870 = vmatmul.mubr.f32.gmra.mxu0 %v10582
      %v10871 = vpop.f32.mrf.mxu0
      %v10872 = vadd.f32 0.0, %v10871
      %v10873 = vpop.f32.mrf.mxu0
      %10874 = vmatprep.mubr.f32.mxu0 0.0
      %10875 = vmatmul.mubr.f32.gmra.mxu0 %v10585
      %v10876 = vpop.f32.mrf.mxu0
      %v10877 = vadd.f32 0.0, %v10876
      %v10878 = vpop.f32.mrf.mxu0
      %10879 = vmatprep.mubr.f32.mxu0 0.0
      %10880 = vmatmul.mubr.f32.gmra.mxu0 %v10588
      %v10881 = vpop.f32.mrf.mxu0
      %v10882 = vadd.f32 0.0, %v10881
      %v10883 = vpop.f32.mrf.mxu0
      %10884 = vmatprep.mubr.f32.mxu0 0.0
      %10885 = vmatmul.mubr.f32.gmra.mxu0 %v10591
      %v10886 = vpop.f32.mrf.mxu0
      %v10887 = vadd.f32 0.0, %v10886
      %v10888 = vpop.f32.mrf.mxu0
      %10889 = vmatprep.mubr.f32.mxu0 0.0
      %10890 = vmatmul.mubr.f32.gmra.mxu0 %v10594
      %v10891 = vpop.f32.mrf.mxu0
      %v10892 = vadd.f32 0.0, %v10891
      %v10893 = vpop.f32.mrf.mxu0
      %10894 = vmatprep.mubr.f32.mxu0 0.0
      %10895 = vmatmul.mubr.f32.gmra.mxu0 %v10597
      %v10896 = vpop.f32.mrf.mxu0
      %v10897 = vadd.f32 0.0, %v10896
      %v10898 = vpop.f32.mrf.mxu0
      %10899 = vmatprep.mubr.f32.mxu0 0.0
      %10900 = vmatmul.mubr.f32.gmra.mxu0 %v10600
      %v10901 = vpop.f32.mrf.mxu0
      %v10902 = vadd.f32 0.0, %v10901
      %v10903 = vpop.f32.mrf.mxu0
      %10904 = vmatprep.mubr.f32.mxu0 0.0
      %10905 = vmatmul.mubr.f32.gmra.mxu0 %v10603
      %v10906 = vpop.f32.mrf.mxu0
      %v10907 = vadd.f32 0.0, %v10906
      %v10908 = vpop.f32.mrf.mxu0
      %10909 = vmatprep.mubr.f32.mxu0 0.0
      %10910 = vmatmul.mubr.f32.gmra.mxu0 %v10606
      %v10911 = vpop.f32.mrf.mxu0
      %v10912 = vadd.f32 0.0, %v10911
      %v10913 = vpop.f32.mrf.mxu0
      %10914 = vmatprep.mubr.f32.mxu0 0.0
      %10915 = vmatmul.mubr.f32.gmra.mxu0 %v10609
      %v10916 = vpop.f32.mrf.mxu0
      %v10917 = vadd.f32 0.0, %v10916
      %v10918 = vpop.f32.mrf.mxu0
      %10919 = vmatprep.mubr.f32.mxu0 0.0
      %10920 = vmatmul.mubr.f32.gmra.mxu0 %v10612
      %v10921 = vpop.f32.mrf.mxu0
      %v10922 = vadd.f32 0.0, %v10921
      %v10923 = vpop.f32.mrf.mxu0
      %10924 = vmatprep.mubr.f32.mxu0 0.0
      %10925 = vmatmul.mubr.f32.gmra.mxu0 %v10615
      %v10926 = vpop.f32.mrf.mxu0
      %v10927 = vadd.f32 0.0, %v10926
      %v10928 = vpop.f32.mrf.mxu0
      %10929 = vmatprep.mubr.f32.mxu0 0.0
      %10930 = vmatmul.mubr.f32.gmra.mxu0 %v10618
      %v10931 = vpop.f32.mrf.mxu0
      %v10932 = vadd.f32 0.0, %v10931
      %v10933 = vpop.f32.mrf.mxu0
      %10934 = vmatprep.mubr.f32.mxu0 0.0
      %10935 = vmatmul.mubr.f32.gmra.mxu0 %v10621
      %v10936 = vpop.f32.mrf.mxu0
      %v10937 = vadd.f32 0.0, %v10936
      %v10938 = vpop.f32.mrf.mxu0
      %10939 = vmatprep.mubr.f32.mxu0 0.0
      %10940 = vmatmul.mubr.f32.gmra.mxu0 %v10624
      %v10941 = vpop.f32.mrf.mxu0
      %v10942 = vadd.f32 0.0, %v10941
      %v10943 = vpop.f32.mrf.mxu0
      %10944 = vmatprep.mubr.f32.mxu0 0.0
      %10945 = vmatmul.mubr.f32.gmra.mxu0 %v10627
      %v10946 = vpop.f32.mrf.mxu0
      %v10947 = vadd.f32 0.0, %v10946
      %v10948 = vpop.f32.mrf.mxu0
      %10949 = vmatprep.mubr.f32.mxu0 0.0
      %10950 = vmatmul.mubr.f32.gmra.mxu0 %v10630
      %v10951 = vpop.f32.mrf.mxu0
      %v10952 = vadd.f32 0.0, %v10951
      %v10953 = vpop.f32.mrf.mxu0
      %10954 = vmatprep.mubr.f32.mxu0 0.0
      %10955 = vmatmul.mubr.f32.gmra.mxu0 %v10633
      %v10956 = vpop.f32.mrf.mxu0
      %v10957 = vadd.f32 0.0, %v10956
      %v10958 = vpop.f32.mrf.mxu0
      %10959 = vmatprep.mubr.f32.mxu0 0.0
      %10960 = vmatmul.mubr.f32.gmra.mxu0 %v10636
      %v10961 = vpop.f32.mrf.mxu0
      %v10962 = vadd.f32 0.0, %v10961
      %v10963 = vpop.f32.mrf.mxu0
      %10964 = vmatprep.mubr.f32.mxu0 0.0
      %10965 = vmatmul.mubr.f32.gmra.mxu0 %v10639
      %v10966 = vpop.f32.mrf.mxu0
      %v10967 = vadd.f32 0.0, %v10966
      %v10968 = vpop.f32.mrf.mxu0
      %10969 = vmatprep.mubr.f32.mxu0 0.0
      %10970 = vmatmul.mubr.f32.gmra.mxu0 %v10642
      %v10971 = vpop.f32.mrf.mxu0
      %v10972 = vadd.f32 0.0, %v10971
      %v10973 = vpop.f32.mrf.mxu0
      %10974 = vmatprep.mubr.f32.mxu0 0.0
      %10975 = vmatmul.mubr.f32.gmra.mxu0 %v10645
      %v10976 = vpop.f32.mrf.mxu0
      %v10977 = vadd.f32 0.0, %v10976
      %v10978 = vpop.f32.mrf.mxu0
      %10979 = vmatprep.mubr.f32.mxu0 0.0
      %10980 = vmatmul.mubr.f32.gmra.mxu0 %v10648
      %v10981 = vpop.f32.mrf.mxu0
      %v10982 = vadd.f32 0.0, %v10981
      %v10983 = vpop.f32.mrf.mxu0
      %10984 = vmatprep.mubr.f32.mxu0 0.0
      %10985 = vmatmul.mubr.f32.gmra.mxu0 %v10651
      %v10986 = vpop.f32.mrf.mxu0
      %v10987 = vadd.f32 0.0, %v10986
      %v10988 = vpop.f32.mrf.mxu0
      %10989 = vmatprep.mubr.f32.mxu0 0.0
      %10990 = vmatmul.mubr.f32.gmra.mxu0 %v10654
      %v10991 = vpop.f32.mrf.mxu0
      %v10992 = vadd.f32 0.0, %v10991
      %v10993 = vpop.f32.mrf.mxu0
      %10994 = vmatprep.mubr.f32.mxu0 0.0
      %10995 = vmatmul.mubr.f32.gmra.mxu0 %v10657
      %v10996 = vpop.f32.mrf.mxu0
      %v10997 = vadd.f32 0.0, %v10996
      %v10998 = vpop.f32.mrf.mxu0
      %10999 = vmatprep.mubr.f32.mxu0 0.0
      %11000 = vmatmul.mubr.f32.gmra.mxu0 %v10660
      %v11001 = vpop.f32.mrf.mxu0
      %v11002 = vadd.f32 0.0, %v11001
      %v11003 = vpop.f32.mrf.mxu0
      %11004 = vmatprep.mubr.f32.mxu0 0.0
      %11005 = vmatmul.mubr.f32.gmra.mxu0 %v10663
      %v11006 = vpop.f32.mrf.mxu0
      %v11007 = vadd.f32 0.0, %v11006
      %v11008 = vpop.f32.mrf.mxu0
      %11009 = vmatprep.mubr.f32.mxu0 0.0
      %11010 = vmatmul.mubr.f32.gmra.mxu0 %v10666
      %v11011 = vpop.f32.mrf.mxu0
      %v11012 = vadd.f32 0.0, %v11011
      %v11013 = vpop.f32.mrf.mxu0
      %11014 = vmatprep.mubr.f32.mxu0 0.0
      %11015 = vmatmul.mubr.f32.gmra.mxu0 %v10669
      %v11016 = vpop.f32.mrf.mxu0
      %v11017 = vadd.f32 0.0, %v11016
      %v11018 = vpop.f32.mrf.mxu0
      %11019 = vmatprep.mubr.f32.mxu0 0.0
      %11020 = vmatmul.mubr.f32.gmra.mxu0 %v10672
      %v11021 = vpop.f32.mrf.mxu0
      %v11022 = vadd.f32 0.0, %v11021
      %v11023 = vpop.f32.mrf.mxu0
      %11024 = vmatprep.mubr.f32.mxu0 0.0
      %11025 = vmatmul.mubr.f32.gmra.mxu0 %v10675
      %v11026 = vpop.f32.mrf.mxu0
      %v11027 = vadd.f32 0.0, %v11026
      %v11028 = vpop.f32.mrf.mxu0
      %11029 = vmatprep.mubr.f32.mxu0 0.0
      %11030 = vmatmul.mubr.f32.gmra.mxu0 %v10678
      %v11031 = vpop.f32.mrf.mxu0
      %v11032 = vadd.f32 0.0, %v11031
      %v11033 = vpop.f32.mrf.mxu0
      %11034 = vmatprep.mubr.f32.mxu0 0.0
      %11035 = vmatmul.mubr.f32.gmra.mxu0 %v10681
      %v11036 = vpop.f32.mrf.mxu0
      %v11037 = vadd.f32 0.0, %v11036
      %v11038 = vpop.f32.mrf.mxu0
      %11039 = vmatprep.mubr.f32.mxu0 0.0
      %11040 = vmatmul.mubr.f32.gmra.mxu0 %v10684
      %v11041 = vpop.f32.mrf.mxu0
      %v11042 = vadd.f32 0.0, %v11041
      %v11043 = vpop.f32.mrf.mxu0
      %11044 = vmatprep.mubr.f32.mxu0 0.0
      %11045 = vmatmul.mubr.f32.gmra.mxu0 %v10687
      %v11046 = vpop.f32.mrf.mxu0
      %v11047 = vadd.f32 0.0, %v11046
      %v11048 = vpop.f32.mrf.mxu0
      %11049 = vmatprep.mubr.f32.mxu0 0.0
      %11050 = vmatmul.mubr.f32.gmra.mxu0 %v10690
      %v11051 = vpop.f32.mrf.mxu0
      %v11052 = vadd.f32 0.0, %v11051
      %v11053 = vpop.f32.mrf.mxu0
      %11054 = vmatprep.mubr.f32.mxu0 0.0
      %11055 = vmatmul.mubr.f32.gmra.mxu0 %v10693
      %v11056 = vpop.f32.mrf.mxu0
      %v11057 = vadd.f32 0.0, %v11056
      %v11058 = vpop.f32.mrf.mxu0
      %11059 = vmatprep.mubr.f32.mxu0 0.0
      %11060 = vmatmul.mubr.f32.gmra.mxu0 %v10696
      %v11061 = vpop.f32.mrf.mxu0
      %v11062 = vadd.f32 0.0, %v11061
      %v11063 = vpop.f32.mrf.mxu0
      %11064 = vmatprep.mubr.f32.mxu0 0.0
      %11065 = vmatmul.mubr.f32.gmra.mxu0 %v10699
      %v11066 = vpop.f32.mrf.mxu0
      %v11067 = vadd.f32 0.0, %v11066
      %v11068 = vpop.f32.mrf.mxu0
      %11069 = vmatprep.mubr.f32.mxu0 0.0
      %11070 = vmatmul.mubr.f32.gmra.mxu0 %v10702
      %v11071 = vpop.f32.mrf.mxu0
      %v11072 = vadd.f32 0.0, %v11071
      %v11073 = vpop.f32.mrf.mxu0
      %11074 = vmatprep.mubr.f32.mxu0 0.0
      %11075 = vmatmul.mubr.f32.gmra.mxu0 %v10705
      %v11076 = vpop.f32.mrf.mxu0
      %v11077 = vadd.f32 0.0, %v11076
      %v11078 = vpop.f32.mrf.mxu0
      %11079 = vmatprep.mubr.f32.mxu0 0.0
      %11080 = vmatmul.mubr.f32.gmra.mxu0 %v10708
      %v11081 = vpop.f32.mrf.mxu0
      %v11082 = vadd.f32 0.0, %v11081
      %v11083 = vpop.f32.mrf.mxu0
      %11084 = vmatprep.mubr.f32.mxu0 0.0
      %11085 = vmatmul.mubr.f32.gmra.mxu0 %v10711
      %v11086 = vpop.f32.mrf.mxu0
      %v11087 = vadd.f32 0.0, %v11086
      %v11088 = vpop.f32.mrf.mxu0
      %11089 = vmatprep.mubr.f32.mxu0 0.0
      %11090 = vmatmul.mubr.f32.gmra.mxu0 %v10714
      %v11091 = vpop.f32.mrf.mxu0
      %v11092 = vadd.f32 0.0, %v11091
      %v11093 = vpop.f32.mrf.mxu0
      %11094 = vmatprep.mubr.f32.mxu0 0.0
      %11095 = vmatmul.mubr.f32.gmra.mxu0 %v10717
      %v11096 = vpop.f32.mrf.mxu0
      %v11097 = vadd.f32 0.0, %v11096
      %v11098 = vpop.f32.mrf.mxu0
      %11099 = vmatprep.mubr.f32.mxu0 0.0
      %11100 = vmatmul.mubr.f32.gmra.mxu0 %v10720
      %v11101 = vpop.f32.mrf.mxu0
      %v11102 = vadd.f32 0.0, %v11101
      %v11103 = vpop.f32.mrf.mxu0
      %11104 = vmatprep.mubr.f32.mxu0 0.0
      %11105 = vmatmul.mubr.f32.gmra.mxu0 %v10723
      %v11106 = vpop.f32.mrf.mxu0
      %v11107 = vadd.f32 0.0, %v11106
      %v11108 = vpop.f32.mrf.mxu0
      %11109 = vdwg.mxu0
      %v11111 = vsel %vm827, %v10252, 0
      %v11114 = vsel %vm827, %v10253, 0
      %v11117 = vsel %vm827, %v10254, 0
      %v11120 = vsel %vm827, %v10255, 0
      %v11123 = vsel %vm827, %v10256, 0
      %v11126 = vsel %vm827, %v10257, 0
      %v11129 = vsel %vm827, %v10258, 0
      %v11132 = vsel %vm827, %v10259, 0
      %v11135 = vsel %vm827, %v10260, 0
      %v11138 = vsel %vm827, %v10261, 0
      %v11141 = vsel %vm827, %v10262, 0
      %v11144 = vsel %vm827, %v10263, 0
      %v11147 = vsel %vm827, %v10264, 0
      %v11150 = vsel %vm827, %v10265, 0
      %v11153 = vsel %vm827, %v10266, 0
      %v11156 = vsel %vm827, %v10267, 0
      %v11159 = vsel %vm827, %v10268, 0
      %v11162 = vsel %vm827, %v10269, 0
      %v11165 = vsel %vm827, %v10270, 0
      %v11168 = vsel %vm827, %v10271, 0
      %v11171 = vsel %vm827, %v10272, 0
      %v11174 = vsel %vm827, %v10273, 0
      %v11177 = vsel %vm827, %v10274, 0
      %v11180 = vsel %vm827, %v10275, 0
      %v11183 = vsel %vm827, %v10276, 0
      %v11186 = vsel %vm827, %v10277, 0
      %v11189 = vsel %vm827, %v10278, 0
      %v11192 = vsel %vm827, %v10279, 0
      %v11195 = vsel %vm827, %v10280, 0
      %v11198 = vsel %vm827, %v10281, 0
      %v11201 = vsel %vm827, %v10282, 0
      %v11204 = vsel %vm827, %v10283, 0
      %v11207 = vsel %vm827, %v10284, 0
      %v11210 = vsel %vm827, %v10285, 0
      %v11213 = vsel %vm827, %v10286, 0
      %v11216 = vsel %vm827, %v10287, 0
      %v11219 = vsel %vm827, %v10288, 0
      %v11222 = vsel %vm827, %v10289, 0
      %v11225 = vsel %vm827, %v10290, 0
      %v11228 = vsel %vm827, %v10291, 0
      %v11231 = vsel %vm827, %v10292, 0
      %v11234 = vsel %vm827, %v10293, 0
      %v11237 = vsel %vm827, %v10294, 0
      %v11240 = vsel %vm827, %v10295, 0
      %v11243 = vsel %vm827, %v10296, 0
      %v11246 = vsel %vm827, %v10297, 0
      %v11249 = vsel %vm827, %v10298, 0
      %v11252 = vsel %vm827, %v10299, 0
      %v11255 = vsel %vm827, %v10300, 0
      %v11258 = vsel %vm827, %v10301, 0
      %v11261 = vsel %vm827, %v10302, 0
      %v11264 = vsel %vm827, %v10303, 0
      %v11267 = vsel %vm827, %v10304, 0
      %v11270 = vsel %vm827, %v10305, 0
      %v11273 = vsel %vm827, %v10306, 0
      %v11276 = vsel %vm827, %v10307, 0
      %v11279 = vsel %vm827, %v10308, 0
      %v11282 = vsel %vm827, %v10309, 0
      %v11285 = vsel %vm827, %v10310, 0
      %v11288 = vsel %vm827, %v10311, 0
      %v11291 = vsel %vm827, %v10312, 0
      %v11294 = vsel %vm827, %v10313, 0
      %v11297 = vsel %vm827, %v10314, 0
      %v11300 = vsel %vm827, %v10315, 0
      %11302 = vmatprep.subr.mxu0 0.0
      %11303 = vmatpush1.msra.mxu0 0.0
      %11304 = vmatprep.subr.mxu0 0.0
      %11305 = vmatpush1.msra.mxu0 0.0
      %11306 = vmatprep.subr.mxu0 0.0
      %11307 = vmatpush1.msra.mxu0 0.0
      %11308 = vmatprep.subr.mxu0 0.0
      %11309 = vmatpush1.msra.mxu0 0.0
      %11310 = vmatprep.subr.mxu0 0.0
      %11311 = vmatpush1.msra.mxu0 %v10519
      %11312 = vmatprep.subr.mxu0 0.0
      %11313 = vmatpush1.msra.mxu0 %v10518
      %11314 = vmatprep.subr.mxu0 0.0
      %11315 = vmatpush1.msra.mxu0 %v10517
      %11316 = vmatprep.subr.mxu0 0.0
      %11317 = vmatpush1.msra.mxu0 %v10516
      %11318 = vmatprep.subr.mxu0 0.0
      %11319 = vmatpush1.msra.mxu0 %v10515
      %11320 = vmatprep.subr.mxu0 0.0
      %11321 = vmatpush1.msra.mxu0 %v10514
      %11322 = vmatprep.subr.mxu0 0.0
      %11323 = vmatpush1.msra.mxu0 %v10513
      %11324 = vmatprep.subr.mxu0 0.0
      %11325 = vmatpush1.msra.mxu0 %v10512
      %11326 = vmatprep.subr.mxu0 0.0
      %11327 = vmatpush1.msra.mxu0 %v10511
      %11328 = vmatprep.subr.mxu0 0.0
      %11329 = vmatpush1.msra.mxu0 %v10510
      %11330 = vmatprep.subr.mxu0 0.0
      %11331 = vmatpush1.msra.mxu0 %v10509
      %11332 = vmatprep.subr.mxu0 0.0
      %11333 = vmatpush1.msra.mxu0 %v10508
      %11334 = vmatprep.subr.mxu0 0.0
      %11335 = vmatpush2.msra.mxu0 0.0
      %11336 = vmatprep.subr.mxu0 0.0
      %11337 = vmatpush2.msra.mxu0 0.0
      %11338 = vmatprep.subr.mxu0 0.0
      %11339 = vmatpush2.msra.mxu0 0.0
      %11340 = vmatprep.subr.mxu0 0.0
      %11341 = vmatpush2.msra.mxu0 0.0
      %11342 = vmatprep.subr.mxu0 0.0
      %11343 = vmatpush2.msra.mxu0 0.0
      %11344 = vmatprep.subr.mxu0 0.0
      %11345 = vmatpush2.msra.mxu0 0.0
      %11346 = vmatprep.subr.mxu0 0.0
      %11347 = vmatpush2.msra.mxu0 0.0
      %11348 = vmatprep.subr.mxu0 0.0
      %11349 = vmatpush2.msra.mxu0 0.0
      %11350 = vmatprep.subr.mxu0 0.0
      %11351 = vmatpush2.msra.mxu0 0.0
      %11352 = vmatprep.subr.mxu0 0.0
      %11353 = vmatpush2.msra.mxu0 0.0
      %11354 = vmatprep.subr.mxu0 0.0
      %11355 = vmatpush2.msra.mxu0 0.0
      %11356 = vmatprep.subr.mxu0 0.0
      %11357 = vmatpush2.msra.mxu0 0.0
      %11358 = vmatprep.subr.mxu0 0.0
      %11359 = vmatpush2.msra.mxu0 0.0
      %11360 = vmatprep.subr.mxu0 0.0
      %11361 = vmatpush2.msra.mxu0 0.0
      %11362 = vmatprep.subr.mxu0 0.0
      %11363 = vmatpush2.msra.mxu0 0.0
      %11364 = vmatprep.subr.mxu0 0.0
      %11365 = vmatpush2.msra.mxu0 0.0
      %11366 = vmatprep.mubr.f32.mxu0 0.0
      %11367 = vmatmul.mubr.f32.gmra.mxu0 %v11111
      %v11368 = vpop.f32.mrf.mxu0
      %v11369 = vadd.f32 %v10792, %v11368
      %v11370 = vpop.f32.mrf.mxu0
      %11371 = vmatprep.mubr.f32.mxu0 0.0
      %11372 = vmatmul.mubr.f32.gmra.mxu0 %v11114
      %v11373 = vpop.f32.mrf.mxu0
      %v11374 = vadd.f32 %v10797, %v11373
      %v11375 = vpop.f32.mrf.mxu0
      %11376 = vmatprep.mubr.f32.mxu0 0.0
      %11377 = vmatmul.mubr.f32.gmra.mxu0 %v11117
      %v11378 = vpop.f32.mrf.mxu0
      %v11379 = vadd.f32 %v10802, %v11378
      %v11380 = vpop.f32.mrf.mxu0
      %11381 = vmatprep.mubr.f32.mxu0 0.0
      %11382 = vmatmul.mubr.f32.gmra.mxu0 %v11120
      %v11383 = vpop.f32.mrf.mxu0
      %v11384 = vadd.f32 %v10807, %v11383
      %v11385 = vpop.f32.mrf.mxu0
      %11386 = vmatprep.mubr.f32.mxu0 0.0
      %11387 = vmatmul.mubr.f32.gmra.mxu0 %v11123
      %v11388 = vpop.f32.mrf.mxu0
      %v11389 = vadd.f32 %v10812, %v11388
      %v11390 = vpop.f32.mrf.mxu0
      %11391 = vmatprep.mubr.f32.mxu0 0.0
      %11392 = vmatmul.mubr.f32.gmra.mxu0 %v11126
      %v11393 = vpop.f32.mrf.mxu0
      %v11394 = vadd.f32 %v10817, %v11393
      %v11395 = vpop.f32.mrf.mxu0
      %11396 = vmatprep.mubr.f32.mxu0 0.0
      %11397 = vmatmul.mubr.f32.gmra.mxu0 %v11129
      %v11398 = vpop.f32.mrf.mxu0
      %v11399 = vadd.f32 %v10822, %v11398
      %v11400 = vpop.f32.mrf.mxu0
      %11401 = vmatprep.mubr.f32.mxu0 0.0
      %11402 = vmatmul.mubr.f32.gmra.mxu0 %v11132
      %v11403 = vpop.f32.mrf.mxu0
      %v11404 = vadd.f32 %v10827, %v11403
      %v11405 = vpop.f32.mrf.mxu0
      %11406 = vmatprep.mubr.f32.mxu0 0.0
      %11407 = vmatmul.mubr.f32.gmra.mxu0 %v11135
      %v11408 = vpop.f32.mrf.mxu0
      %v11409 = vadd.f32 %v10832, %v11408
      %v11410 = vpop.f32.mrf.mxu0
      %11411 = vmatprep.mubr.f32.mxu0 0.0
      %11412 = vmatmul.mubr.f32.gmra.mxu0 %v11138
      %v11413 = vpop.f32.mrf.mxu0
      %v11414 = vadd.f32 %v10837, %v11413
      %v11415 = vpop.f32.mrf.mxu0
      %11416 = vmatprep.mubr.f32.mxu0 0.0
      %11417 = vmatmul.mubr.f32.gmra.mxu0 %v11141
      %v11418 = vpop.f32.mrf.mxu0
      %v11419 = vadd.f32 %v10842, %v11418
      %v11420 = vpop.f32.mrf.mxu0
      %11421 = vmatprep.mubr.f32.mxu0 0.0
      %11422 = vmatmul.mubr.f32.gmra.mxu0 %v11144
      %v11423 = vpop.f32.mrf.mxu0
      %v11424 = vadd.f32 %v10847, %v11423
      %v11425 = vpop.f32.mrf.mxu0
      %11426 = vmatprep.mubr.f32.mxu0 0.0
      %11427 = vmatmul.mubr.f32.gmra.mxu0 %v11147
      %v11428 = vpop.f32.mrf.mxu0
      %v11429 = vadd.f32 %v10852, %v11428
      %v11430 = vpop.f32.mrf.mxu0
      %11431 = vmatprep.mubr.f32.mxu0 0.0
      %11432 = vmatmul.mubr.f32.gmra.mxu0 %v11150
      %v11433 = vpop.f32.mrf.mxu0
      %v11434 = vadd.f32 %v10857, %v11433
      %v11435 = vpop.f32.mrf.mxu0
      %11436 = vmatprep.mubr.f32.mxu0 0.0
      %11437 = vmatmul.mubr.f32.gmra.mxu0 %v11153
      %v11438 = vpop.f32.mrf.mxu0
      %v11439 = vadd.f32 %v10862, %v11438
      %v11440 = vpop.f32.mrf.mxu0
      %11441 = vmatprep.mubr.f32.mxu0 0.0
      %11442 = vmatmul.mubr.f32.gmra.mxu0 %v11156
      %v11443 = vpop.f32.mrf.mxu0
      %v11444 = vadd.f32 %v10867, %v11443
      %v11445 = vpop.f32.mrf.mxu0
      %11446 = vmatprep.mubr.f32.mxu0 0.0
      %11447 = vmatmul.mubr.f32.gmra.mxu0 %v11159
      %v11448 = vpop.f32.mrf.mxu0
      %v11449 = vadd.f32 %v10872, %v11448
      %v11450 = vpop.f32.mrf.mxu0
      %11451 = vmatprep.mubr.f32.mxu0 0.0
      %11452 = vmatmul.mubr.f32.gmra.mxu0 %v11162
      %v11453 = vpop.f32.mrf.mxu0
      %v11454 = vadd.f32 %v10877, %v11453
      %v11455 = vpop.f32.mrf.mxu0
      %11456 = vmatprep.mubr.f32.mxu0 0.0
      %11457 = vmatmul.mubr.f32.gmra.mxu0 %v11165
      %v11458 = vpop.f32.mrf.mxu0
      %v11459 = vadd.f32 %v10882, %v11458
      %v11460 = vpop.f32.mrf.mxu0
      %11461 = vmatprep.mubr.f32.mxu0 0.0
      %11462 = vmatmul.mubr.f32.gmra.mxu0 %v11168
      %v11463 = vpop.f32.mrf.mxu0
      %v11464 = vadd.f32 %v10887, %v11463
      %v11465 = vpop.f32.mrf.mxu0
      %11466 = vmatprep.mubr.f32.mxu0 0.0
      %11467 = vmatmul.mubr.f32.gmra.mxu0 %v11171
      %v11468 = vpop.f32.mrf.mxu0
      %v11469 = vadd.f32 %v10892, %v11468
      %v11470 = vpop.f32.mrf.mxu0
      %11471 = vmatprep.mubr.f32.mxu0 0.0
      %11472 = vmatmul.mubr.f32.gmra.mxu0 %v11174
      %v11473 = vpop.f32.mrf.mxu0
      %v11474 = vadd.f32 %v10897, %v11473
      %v11475 = vpop.f32.mrf.mxu0
      %11476 = vmatprep.mubr.f32.mxu0 0.0
      %11477 = vmatmul.mubr.f32.gmra.mxu0 %v11177
      %v11478 = vpop.f32.mrf.mxu0
      %v11479 = vadd.f32 %v10902, %v11478
      %v11480 = vpop.f32.mrf.mxu0
      %11481 = vmatprep.mubr.f32.mxu0 0.0
      %11482 = vmatmul.mubr.f32.gmra.mxu0 %v11180
      %v11483 = vpop.f32.mrf.mxu0
      %v11484 = vadd.f32 %v10907, %v11483
      %v11485 = vpop.f32.mrf.mxu0
      %11486 = vmatprep.mubr.f32.mxu0 0.0
      %11487 = vmatmul.mubr.f32.gmra.mxu0 %v11183
      %v11488 = vpop.f32.mrf.mxu0
      %v11489 = vadd.f32 %v10912, %v11488
      %v11490 = vpop.f32.mrf.mxu0
      %11491 = vmatprep.mubr.f32.mxu0 0.0
      %11492 = vmatmul.mubr.f32.gmra.mxu0 %v11186
      %v11493 = vpop.f32.mrf.mxu0
      %v11494 = vadd.f32 %v10917, %v11493
      %v11495 = vpop.f32.mrf.mxu0
      %11496 = vmatprep.mubr.f32.mxu0 0.0
      %11497 = vmatmul.mubr.f32.gmra.mxu0 %v11189
      %v11498 = vpop.f32.mrf.mxu0
      %v11499 = vadd.f32 %v10922, %v11498
      %v11500 = vpop.f32.mrf.mxu0
      %11501 = vmatprep.mubr.f32.mxu0 0.0
      %11502 = vmatmul.mubr.f32.gmra.mxu0 %v11192
      %v11503 = vpop.f32.mrf.mxu0
      %v11504 = vadd.f32 %v10927, %v11503
      %v11505 = vpop.f32.mrf.mxu0
      %11506 = vmatprep.mubr.f32.mxu0 0.0
      %11507 = vmatmul.mubr.f32.gmra.mxu0 %v11195
      %v11508 = vpop.f32.mrf.mxu0
      %v11509 = vadd.f32 %v10932, %v11508
      %v11510 = vpop.f32.mrf.mxu0
      %11511 = vmatprep.mubr.f32.mxu0 0.0
      %11512 = vmatmul.mubr.f32.gmra.mxu0 %v11198
      %v11513 = vpop.f32.mrf.mxu0
      %v11514 = vadd.f32 %v10937, %v11513
      %v11515 = vpop.f32.mrf.mxu0
      %11516 = vmatprep.mubr.f32.mxu0 0.0
      %11517 = vmatmul.mubr.f32.gmra.mxu0 %v11201
      %v11518 = vpop.f32.mrf.mxu0
      %v11519 = vadd.f32 %v10942, %v11518
      %v11520 = vpop.f32.mrf.mxu0
      %11521 = vmatprep.mubr.f32.mxu0 0.0
      %11522 = vmatmul.mubr.f32.gmra.mxu0 %v11204
      %v11523 = vpop.f32.mrf.mxu0
      %v11524 = vadd.f32 %v10947, %v11523
      %v11525 = vpop.f32.mrf.mxu0
      %11526 = vmatprep.mubr.f32.mxu0 0.0
      %11527 = vmatmul.mubr.f32.gmra.mxu0 %v11207
      %v11528 = vpop.f32.mrf.mxu0
      %v11529 = vadd.f32 %v10952, %v11528
      %v11530 = vpop.f32.mrf.mxu0
      %11531 = vmatprep.mubr.f32.mxu0 0.0
      %11532 = vmatmul.mubr.f32.gmra.mxu0 %v11210
      %v11533 = vpop.f32.mrf.mxu0
      %v11534 = vadd.f32 %v10957, %v11533
      %v11535 = vpop.f32.mrf.mxu0
      %11536 = vmatprep.mubr.f32.mxu0 0.0
      %11537 = vmatmul.mubr.f32.gmra.mxu0 %v11213
      %v11538 = vpop.f32.mrf.mxu0
      %v11539 = vadd.f32 %v10962, %v11538
      %v11540 = vpop.f32.mrf.mxu0
      %11541 = vmatprep.mubr.f32.mxu0 0.0
      %11542 = vmatmul.mubr.f32.gmra.mxu0 %v11216
      %v11543 = vpop.f32.mrf.mxu0
      %v11544 = vadd.f32 %v10967, %v11543
      %v11545 = vpop.f32.mrf.mxu0
      %11546 = vmatprep.mubr.f32.mxu0 0.0
      %11547 = vmatmul.mubr.f32.gmra.mxu0 %v11219
      %v11548 = vpop.f32.mrf.mxu0
      %v11549 = vadd.f32 %v10972, %v11548
      %v11550 = vpop.f32.mrf.mxu0
      %11551 = vmatprep.mubr.f32.mxu0 0.0
      %11552 = vmatmul.mubr.f32.gmra.mxu0 %v11222
      %v11553 = vpop.f32.mrf.mxu0
      %v11554 = vadd.f32 %v10977, %v11553
      %v11555 = vpop.f32.mrf.mxu0
      %11556 = vmatprep.mubr.f32.mxu0 0.0
      %11557 = vmatmul.mubr.f32.gmra.mxu0 %v11225
      %v11558 = vpop.f32.mrf.mxu0
      %v11559 = vadd.f32 %v10982, %v11558
      %v11560 = vpop.f32.mrf.mxu0
      %11561 = vmatprep.mubr.f32.mxu0 0.0
      %11562 = vmatmul.mubr.f32.gmra.mxu0 %v11228
      %v11563 = vpop.f32.mrf.mxu0
      %v11564 = vadd.f32 %v10987, %v11563
      %v11565 = vpop.f32.mrf.mxu0
      %11566 = vmatprep.mubr.f32.mxu0 0.0
      %11567 = vmatmul.mubr.f32.gmra.mxu0 %v11231
      %v11568 = vpop.f32.mrf.mxu0
      %v11569 = vadd.f32 %v10992, %v11568
      %v11570 = vpop.f32.mrf.mxu0
      %11571 = vmatprep.mubr.f32.mxu0 0.0
      %11572 = vmatmul.mubr.f32.gmra.mxu0 %v11234
      %v11573 = vpop.f32.mrf.mxu0
      %v11574 = vadd.f32 %v10997, %v11573
      %v11575 = vpop.f32.mrf.mxu0
      %11576 = vmatprep.mubr.f32.mxu0 0.0
      %11577 = vmatmul.mubr.f32.gmra.mxu0 %v11237
      %v11578 = vpop.f32.mrf.mxu0
      %v11579 = vadd.f32 %v11002, %v11578
      %v11580 = vpop.f32.mrf.mxu0
      %11581 = vmatprep.mubr.f32.mxu0 0.0
      %11582 = vmatmul.mubr.f32.gmra.mxu0 %v11240
      %v11583 = vpop.f32.mrf.mxu0
      %v11584 = vadd.f32 %v11007, %v11583
      %v11585 = vpop.f32.mrf.mxu0
      %11586 = vmatprep.mubr.f32.mxu0 0.0
      %11587 = vmatmul.mubr.f32.gmra.mxu0 %v11243
      %v11588 = vpop.f32.mrf.mxu0
      %v11589 = vadd.f32 %v11012, %v11588
      %v11590 = vpop.f32.mrf.mxu0
      %11591 = vmatprep.mubr.f32.mxu0 0.0
      %11592 = vmatmul.mubr.f32.gmra.mxu0 %v11246
      %v11593 = vpop.f32.mrf.mxu0
      %v11594 = vadd.f32 %v11017, %v11593
      %v11595 = vpop.f32.mrf.mxu0
      %11596 = vmatprep.mubr.f32.mxu0 0.0
      %11597 = vmatmul.mubr.f32.gmra.mxu0 %v11249
      %v11598 = vpop.f32.mrf.mxu0
      %v11599 = vadd.f32 %v11022, %v11598
      %v11600 = vpop.f32.mrf.mxu0
      %11601 = vmatprep.mubr.f32.mxu0 0.0
      %11602 = vmatmul.mubr.f32.gmra.mxu0 %v11252
      %v11603 = vpop.f32.mrf.mxu0
      %v11604 = vadd.f32 %v11027, %v11603
      %v11605 = vpop.f32.mrf.mxu0
      %11606 = vmatprep.mubr.f32.mxu0 0.0
      %11607 = vmatmul.mubr.f32.gmra.mxu0 %v11255
      %v11608 = vpop.f32.mrf.mxu0
      %v11609 = vadd.f32 %v11032, %v11608
      %v11610 = vpop.f32.mrf.mxu0
      %11611 = vmatprep.mubr.f32.mxu0 0.0
      %11612 = vmatmul.mubr.f32.gmra.mxu0 %v11258
      %v11613 = vpop.f32.mrf.mxu0
      %v11614 = vadd.f32 %v11037, %v11613
      %v11615 = vpop.f32.mrf.mxu0
      %11616 = vmatprep.mubr.f32.mxu0 0.0
      %11617 = vmatmul.mubr.f32.gmra.mxu0 %v11261
      %v11618 = vpop.f32.mrf.mxu0
      %v11619 = vadd.f32 %v11042, %v11618
      %v11620 = vpop.f32.mrf.mxu0
      %11621 = vmatprep.mubr.f32.mxu0 0.0
      %11622 = vmatmul.mubr.f32.gmra.mxu0 %v11264
      %v11623 = vpop.f32.mrf.mxu0
      %v11624 = vadd.f32 %v11047, %v11623
      %v11625 = vpop.f32.mrf.mxu0
      %11626 = vmatprep.mubr.f32.mxu0 0.0
      %11627 = vmatmul.mubr.f32.gmra.mxu0 %v11267
      %v11628 = vpop.f32.mrf.mxu0
      %v11629 = vadd.f32 %v11052, %v11628
      %v11630 = vpop.f32.mrf.mxu0
      %11631 = vmatprep.mubr.f32.mxu0 0.0
      %11632 = vmatmul.mubr.f32.gmra.mxu0 %v11270
      %v11633 = vpop.f32.mrf.mxu0
      %v11634 = vadd.f32 %v11057, %v11633
      %v11635 = vpop.f32.mrf.mxu0
      %11636 = vmatprep.mubr.f32.mxu0 0.0
      %11637 = vmatmul.mubr.f32.gmra.mxu0 %v11273
      %v11638 = vpop.f32.mrf.mxu0
      %v11639 = vadd.f32 %v11062, %v11638
      %v11640 = vpop.f32.mrf.mxu0
      %11641 = vmatprep.mubr.f32.mxu0 0.0
      %11642 = vmatmul.mubr.f32.gmra.mxu0 %v11276
      %v11643 = vpop.f32.mrf.mxu0
      %v11644 = vadd.f32 %v11067, %v11643
      %v11645 = vpop.f32.mrf.mxu0
      %11646 = vmatprep.mubr.f32.mxu0 0.0
      %11647 = vmatmul.mubr.f32.gmra.mxu0 %v11279
      %v11648 = vpop.f32.mrf.mxu0
      %v11649 = vadd.f32 %v11072, %v11648
      %v11650 = vpop.f32.mrf.mxu0
      %11651 = vmatprep.mubr.f32.mxu0 0.0
      %11652 = vmatmul.mubr.f32.gmra.mxu0 %v11282
      %v11653 = vpop.f32.mrf.mxu0
      %v11654 = vadd.f32 %v11077, %v11653
      %v11655 = vpop.f32.mrf.mxu0
      %11656 = vmatprep.mubr.f32.mxu0 0.0
      %11657 = vmatmul.mubr.f32.gmra.mxu0 %v11285
      %v11658 = vpop.f32.mrf.mxu0
      %v11659 = vadd.f32 %v11082, %v11658
      %v11660 = vpop.f32.mrf.mxu0
      %11661 = vmatprep.mubr.f32.mxu0 0.0
      %11662 = vmatmul.mubr.f32.gmra.mxu0 %v11288
      %v11663 = vpop.f32.mrf.mxu0
      %v11664 = vadd.f32 %v11087, %v11663
      %v11665 = vpop.f32.mrf.mxu0
      %11666 = vmatprep.mubr.f32.mxu0 0.0
      %11667 = vmatmul.mubr.f32.gmra.mxu0 %v11291
      %v11668 = vpop.f32.mrf.mxu0
      %v11669 = vadd.f32 %v11092, %v11668
      %v11670 = vpop.f32.mrf.mxu0
      %11671 = vmatprep.mubr.f32.mxu0 0.0
      %11672 = vmatmul.mubr.f32.gmra.mxu0 %v11294
      %v11673 = vpop.f32.mrf.mxu0
      %v11674 = vadd.f32 %v11097, %v11673
      %v11675 = vpop.f32.mrf.mxu0
      %11676 = vmatprep.mubr.f32.mxu0 0.0
      %11677 = vmatmul.mubr.f32.gmra.mxu0 %v11297
      %v11678 = vpop.f32.mrf.mxu0
      %v11679 = vadd.f32 %v11102, %v11678
      %v11680 = vpop.f32.mrf.mxu0
      %11681 = vmatprep.mubr.f32.mxu0 0.0
      %11682 = vmatmul.mubr.f32.gmra.mxu0 %v11300
      %v11683 = vpop.f32.mrf.mxu0
      %v11684 = vadd.f32 %v11107, %v11683
      %v11685 = vpop.f32.mrf.mxu0
      %11686 = vdwg.mxu0
      %s11687 = scalar_lea.vmem %s5, 192
      %v11688 = vld [vmem:[%s11687] sm:$0xff]
      %v11689 = vld [vmem:[%s11687 + $0x8] sm:$0xff]
      %v11690 = vld [vmem:[%s11687 + $0x10] sm:$0xff]
      %v11691 = vld [vmem:[%s11687 + $0x18] sm:$0xff]
      %v11692 = vld [vmem:[%s11687 + $0x20] sm:$0xff]
      %v11693 = vld [vmem:[%s11687 + $0x28] sm:$0xff]
      %v11694 = vld [vmem:[%s11687 + $0x30] sm:$0xff]
      %v11695 = vld [vmem:[%s11687 + $0x38] sm:$0xff]
      %v11696 = vld [vmem:[%s11687 + $0x40] sm:$0xff]
      %v11697 = vld [vmem:[%s11687 + $0x48] sm:$0xff]
      %v11698 = vld [vmem:[%s11687 + $0x50] sm:$0xff]
      %v11699 = vld [vmem:[%s11687 + $0x58] sm:$0xff]
      %v11701 = vsel %vm827, %v10380, 0
      %v11704 = vsel %vm827, %v10381, 0
      %v11707 = vsel %vm827, %v10382, 0
      %v11710 = vsel %vm827, %v10383, 0
      %v11713 = vsel %vm827, %v10384, 0
      %v11716 = vsel %vm827, %v10385, 0
      %v11719 = vsel %vm827, %v10386, 0
      %v11722 = vsel %vm827, %v10387, 0
      %v11725 = vsel %vm827, %v10388, 0
      %v11728 = vsel %vm827, %v10389, 0
      %v11731 = vsel %vm827, %v10390, 0
      %v11734 = vsel %vm827, %v10391, 0
      %v11737 = vsel %vm827, %v10392, 0
      %v11740 = vsel %vm827, %v10393, 0
      %v11743 = vsel %vm827, %v10394, 0
      %v11746 = vsel %vm827, %v10395, 0
      %v11749 = vsel %vm827, %v10396, 0
      %v11752 = vsel %vm827, %v10397, 0
      %v11755 = vsel %vm827, %v10398, 0
      %v11758 = vsel %vm827, %v10399, 0
      %v11761 = vsel %vm827, %v10400, 0
      %v11764 = vsel %vm827, %v10401, 0
      %v11767 = vsel %vm827, %v10402, 0
      %v11770 = vsel %vm827, %v10403, 0
      %v11773 = vsel %vm827, %v10404, 0
      %v11776 = vsel %vm827, %v10405, 0
      %v11779 = vsel %vm827, %v10406, 0
      %v11782 = vsel %vm827, %v10407, 0
      %v11785 = vsel %vm827, %v10408, 0
      %v11788 = vsel %vm827, %v10409, 0
      %v11791 = vsel %vm827, %v10410, 0
      %v11794 = vsel %vm827, %v10411, 0
      %v11797 = vsel %vm827, %v10412, 0
      %v11800 = vsel %vm827, %v10413, 0
      %v11803 = vsel %vm827, %v10414, 0
      %v11806 = vsel %vm827, %v10415, 0
      %v11809 = vsel %vm827, %v10416, 0
      %v11812 = vsel %vm827, %v10417, 0
      %v11815 = vsel %vm827, %v10418, 0
      %v11818 = vsel %vm827, %v10419, 0
      %v11821 = vsel %vm827, %v10420, 0
      %v11824 = vsel %vm827, %v10421, 0
      %v11827 = vsel %vm827, %v10422, 0
      %v11830 = vsel %vm827, %v10423, 0
      %v11833 = vsel %vm827, %v10424, 0
      %v11836 = vsel %vm827, %v10425, 0
      %v11839 = vsel %vm827, %v10426, 0
      %v11842 = vsel %vm827, %v10427, 0
      %v11845 = vsel %vm827, %v10428, 0
      %v11848 = vsel %vm827, %v10429, 0
      %v11851 = vsel %vm827, %v10430, 0
      %v11854 = vsel %vm827, %v10431, 0
      %v11857 = vsel %vm827, %v10432, 0
      %v11860 = vsel %vm827, %v10433, 0
      %v11863 = vsel %vm827, %v10434, 0
      %v11866 = vsel %vm827, %v10435, 0
      %v11869 = vsel %vm827, %v10436, 0
      %v11872 = vsel %vm827, %v10437, 0
      %v11875 = vsel %vm827, %v10438, 0
      %v11878 = vsel %vm827, %v10439, 0
      %v11881 = vsel %vm827, %v10440, 0
      %v11884 = vsel %vm827, %v10441, 0
      %v11887 = vsel %vm827, %v10442, 0
      %v11890 = vsel %vm827, %v10443, 0
      %11892 = vmatprep.subr.mxu0 0.0
      %11893 = vmatpush1.msra.mxu0 0.0
      %11894 = vmatprep.subr.mxu0 0.0
      %11895 = vmatpush1.msra.mxu0 0.0
      %11896 = vmatprep.subr.mxu0 0.0
      %11897 = vmatpush1.msra.mxu0 0.0
      %11898 = vmatprep.subr.mxu0 0.0
      %11899 = vmatpush1.msra.mxu0 0.0
      %11900 = vmatprep.subr.mxu0 0.0
      %11901 = vmatpush1.msra.mxu0 %v11699
      %11902 = vmatprep.subr.mxu0 0.0
      %11903 = vmatpush1.msra.mxu0 %v11698
      %11904 = vmatprep.subr.mxu0 0.0
      %11905 = vmatpush1.msra.mxu0 %v11697
      %11906 = vmatprep.subr.mxu0 0.0
      %11907 = vmatpush1.msra.mxu0 %v11696
      %11908 = vmatprep.subr.mxu0 0.0
      %11909 = vmatpush1.msra.mxu0 %v11695
      %11910 = vmatprep.subr.mxu0 0.0
      %11911 = vmatpush1.msra.mxu0 %v11694
      %11912 = vmatprep.subr.mxu0 0.0
      %11913 = vmatpush1.msra.mxu0 %v11693
      %11914 = vmatprep.subr.mxu0 0.0
      %11915 = vmatpush1.msra.mxu0 %v11692
      %11916 = vmatprep.subr.mxu0 0.0
      %11917 = vmatpush1.msra.mxu0 %v11691
      %11918 = vmatprep.subr.mxu0 0.0
      %11919 = vmatpush1.msra.mxu0 %v11690
      %11920 = vmatprep.subr.mxu0 0.0
      %11921 = vmatpush1.msra.mxu0 %v11689
      %11922 = vmatprep.subr.mxu0 0.0
      %11923 = vmatpush1.msra.mxu0 %v11688
      %11924 = vmatprep.subr.mxu0 0.0
      %11925 = vmatpush2.msra.mxu0 0.0
      %11926 = vmatprep.subr.mxu0 0.0
      %11927 = vmatpush2.msra.mxu0 0.0
      %11928 = vmatprep.subr.mxu0 0.0
      %11929 = vmatpush2.msra.mxu0 0.0
      %11930 = vmatprep.subr.mxu0 0.0
      %11931 = vmatpush2.msra.mxu0 0.0
      %11932 = vmatprep.subr.mxu0 0.0
      %11933 = vmatpush2.msra.mxu0 0.0
      %11934 = vmatprep.subr.mxu0 0.0
      %11935 = vmatpush2.msra.mxu0 0.0
      %11936 = vmatprep.subr.mxu0 0.0
      %11937 = vmatpush2.msra.mxu0 0.0
      %11938 = vmatprep.subr.mxu0 0.0
      %11939 = vmatpush2.msra.mxu0 0.0
      %11940 = vmatprep.subr.mxu0 0.0
      %11941 = vmatpush2.msra.mxu0 0.0
      %11942 = vmatprep.subr.mxu0 0.0
      %11943 = vmatpush2.msra.mxu0 0.0
      %11944 = vmatprep.subr.mxu0 0.0
      %11945 = vmatpush2.msra.mxu0 0.0
      %11946 = vmatprep.subr.mxu0 0.0
      %11947 = vmatpush2.msra.mxu0 0.0
      %11948 = vmatprep.subr.mxu0 0.0
      %11949 = vmatpush2.msra.mxu0 0.0
      %11950 = vmatprep.subr.mxu0 0.0
      %11951 = vmatpush2.msra.mxu0 0.0
      %11952 = vmatprep.subr.mxu0 0.0
      %11953 = vmatpush2.msra.mxu0 0.0
      %11954 = vmatprep.subr.mxu0 0.0
      %11955 = vmatpush2.msra.mxu0 0.0
      %11956 = vmatprep.mubr.f32.mxu0 0.0
      %11957 = vmatmul.mubr.f32.gmra.mxu0 %v11701
      %v11958 = vpop.f32.mrf.mxu0
      %v11959 = vadd.f32 0.0, %v11958
      %v11960 = vpop.f32.mrf.mxu0
      %11961 = vmatprep.mubr.f32.mxu0 0.0
      %11962 = vmatmul.mubr.f32.gmra.mxu0 %v11704
      %v11963 = vpop.f32.mrf.mxu0
      %v11964 = vadd.f32 0.0, %v11963
      %v11965 = vpop.f32.mrf.mxu0
      %11966 = vmatprep.mubr.f32.mxu0 0.0
      %11967 = vmatmul.mubr.f32.gmra.mxu0 %v11707
      %v11968 = vpop.f32.mrf.mxu0
      %v11969 = vadd.f32 0.0, %v11968
      %v11970 = vpop.f32.mrf.mxu0
      %11971 = vmatprep.mubr.f32.mxu0 0.0
      %11972 = vmatmul.mubr.f32.gmra.mxu0 %v11710
      %v11973 = vpop.f32.mrf.mxu0
      %v11974 = vadd.f32 0.0, %v11973
      %v11975 = vpop.f32.mrf.mxu0
      %11976 = vmatprep.mubr.f32.mxu0 0.0
      %11977 = vmatmul.mubr.f32.gmra.mxu0 %v11713
      %v11978 = vpop.f32.mrf.mxu0
      %v11979 = vadd.f32 0.0, %v11978
      %v11980 = vpop.f32.mrf.mxu0
      %11981 = vmatprep.mubr.f32.mxu0 0.0
      %11982 = vmatmul.mubr.f32.gmra.mxu0 %v11716
      %v11983 = vpop.f32.mrf.mxu0
      %v11984 = vadd.f32 0.0, %v11983
      %v11985 = vpop.f32.mrf.mxu0
      %11986 = vmatprep.mubr.f32.mxu0 0.0
      %11987 = vmatmul.mubr.f32.gmra.mxu0 %v11719
      %v11988 = vpop.f32.mrf.mxu0
      %v11989 = vadd.f32 0.0, %v11988
      %v11990 = vpop.f32.mrf.mxu0
      %11991 = vmatprep.mubr.f32.mxu0 0.0
      %11992 = vmatmul.mubr.f32.gmra.mxu0 %v11722
      %v11993 = vpop.f32.mrf.mxu0
      %v11994 = vadd.f32 0.0, %v11993
      %v11995 = vpop.f32.mrf.mxu0
      %11996 = vmatprep.mubr.f32.mxu0 0.0
      %11997 = vmatmul.mubr.f32.gmra.mxu0 %v11725
      %v11998 = vpop.f32.mrf.mxu0
      %v11999 = vadd.f32 0.0, %v11998
      %v12000 = vpop.f32.mrf.mxu0
      %12001 = vmatprep.mubr.f32.mxu0 0.0
      %12002 = vmatmul.mubr.f32.gmra.mxu0 %v11728
      %v12003 = vpop.f32.mrf.mxu0
      %v12004 = vadd.f32 0.0, %v12003
      %v12005 = vpop.f32.mrf.mxu0
      %12006 = vmatprep.mubr.f32.mxu0 0.0
      %12007 = vmatmul.mubr.f32.gmra.mxu0 %v11731
      %v12008 = vpop.f32.mrf.mxu0
      %v12009 = vadd.f32 0.0, %v12008
      %v12010 = vpop.f32.mrf.mxu0
      %12011 = vmatprep.mubr.f32.mxu0 0.0
      %12012 = vmatmul.mubr.f32.gmra.mxu0 %v11734
      %v12013 = vpop.f32.mrf.mxu0
      %v12014 = vadd.f32 0.0, %v12013
      %v12015 = vpop.f32.mrf.mxu0
      %12016 = vmatprep.mubr.f32.mxu0 0.0
      %12017 = vmatmul.mubr.f32.gmra.mxu0 %v11737
      %v12018 = vpop.f32.mrf.mxu0
      %v12019 = vadd.f32 0.0, %v12018
      %v12020 = vpop.f32.mrf.mxu0
      %12021 = vmatprep.mubr.f32.mxu0 0.0
      %12022 = vmatmul.mubr.f32.gmra.mxu0 %v11740
      %v12023 = vpop.f32.mrf.mxu0
      %v12024 = vadd.f32 0.0, %v12023
      %v12025 = vpop.f32.mrf.mxu0
      %12026 = vmatprep.mubr.f32.mxu0 0.0
      %12027 = vmatmul.mubr.f32.gmra.mxu0 %v11743
      %v12028 = vpop.f32.mrf.mxu0
      %v12029 = vadd.f32 0.0, %v12028
      %v12030 = vpop.f32.mrf.mxu0
      %12031 = vmatprep.mubr.f32.mxu0 0.0
      %12032 = vmatmul.mubr.f32.gmra.mxu0 %v11746
      %v12033 = vpop.f32.mrf.mxu0
      %v12034 = vadd.f32 0.0, %v12033
      %v12035 = vpop.f32.mrf.mxu0
      %12036 = vmatprep.mubr.f32.mxu0 0.0
      %12037 = vmatmul.mubr.f32.gmra.mxu0 %v11749
      %v12038 = vpop.f32.mrf.mxu0
      %v12039 = vadd.f32 0.0, %v12038
      %v12040 = vpop.f32.mrf.mxu0
      %12041 = vmatprep.mubr.f32.mxu0 0.0
      %12042 = vmatmul.mubr.f32.gmra.mxu0 %v11752
      %v12043 = vpop.f32.mrf.mxu0
      %v12044 = vadd.f32 0.0, %v12043
      %v12045 = vpop.f32.mrf.mxu0
      %12046 = vmatprep.mubr.f32.mxu0 0.0
      %12047 = vmatmul.mubr.f32.gmra.mxu0 %v11755
      %v12048 = vpop.f32.mrf.mxu0
      %v12049 = vadd.f32 0.0, %v12048
      %v12050 = vpop.f32.mrf.mxu0
      %12051 = vmatprep.mubr.f32.mxu0 0.0
      %12052 = vmatmul.mubr.f32.gmra.mxu0 %v11758
      %v12053 = vpop.f32.mrf.mxu0
      %v12054 = vadd.f32 0.0, %v12053
      %v12055 = vpop.f32.mrf.mxu0
      %12056 = vmatprep.mubr.f32.mxu0 0.0
      %12057 = vmatmul.mubr.f32.gmra.mxu0 %v11761
      %v12058 = vpop.f32.mrf.mxu0
      %v12059 = vadd.f32 0.0, %v12058
      %v12060 = vpop.f32.mrf.mxu0
      %12061 = vmatprep.mubr.f32.mxu0 0.0
      %12062 = vmatmul.mubr.f32.gmra.mxu0 %v11764
      %v12063 = vpop.f32.mrf.mxu0
      %v12064 = vadd.f32 0.0, %v12063
      %v12065 = vpop.f32.mrf.mxu0
      %12066 = vmatprep.mubr.f32.mxu0 0.0
      %12067 = vmatmul.mubr.f32.gmra.mxu0 %v11767
      %v12068 = vpop.f32.mrf.mxu0
      %v12069 = vadd.f32 0.0, %v12068
      %v12070 = vpop.f32.mrf.mxu0
      %12071 = vmatprep.mubr.f32.mxu0 0.0
      %12072 = vmatmul.mubr.f32.gmra.mxu0 %v11770
      %v12073 = vpop.f32.mrf.mxu0
      %v12074 = vadd.f32 0.0, %v12073
      %v12075 = vpop.f32.mrf.mxu0
      %12076 = vmatprep.mubr.f32.mxu0 0.0
      %12077 = vmatmul.mubr.f32.gmra.mxu0 %v11773
      %v12078 = vpop.f32.mrf.mxu0
      %v12079 = vadd.f32 0.0, %v12078
      %v12080 = vpop.f32.mrf.mxu0
      %12081 = vmatprep.mubr.f32.mxu0 0.0
      %12082 = vmatmul.mubr.f32.gmra.mxu0 %v11776
      %v12083 = vpop.f32.mrf.mxu0
      %v12084 = vadd.f32 0.0, %v12083
      %v12085 = vpop.f32.mrf.mxu0
      %12086 = vmatprep.mubr.f32.mxu0 0.0
      %12087 = vmatmul.mubr.f32.gmra.mxu0 %v11779
      %v12088 = vpop.f32.mrf.mxu0
      %v12089 = vadd.f32 0.0, %v12088
      %v12090 = vpop.f32.mrf.mxu0
      %12091 = vmatprep.mubr.f32.mxu0 0.0
      %12092 = vmatmul.mubr.f32.gmra.mxu0 %v11782
      %v12093 = vpop.f32.mrf.mxu0
      %v12094 = vadd.f32 0.0, %v12093
      %v12095 = vpop.f32.mrf.mxu0
      %12096 = vmatprep.mubr.f32.mxu0 0.0
      %12097 = vmatmul.mubr.f32.gmra.mxu0 %v11785
      %v12098 = vpop.f32.mrf.mxu0
      %v12099 = vadd.f32 0.0, %v12098
      %v12100 = vpop.f32.mrf.mxu0
      %12101 = vmatprep.mubr.f32.mxu0 0.0
      %12102 = vmatmul.mubr.f32.gmra.mxu0 %v11788
      %v12103 = vpop.f32.mrf.mxu0
      %v12104 = vadd.f32 0.0, %v12103
      %v12105 = vpop.f32.mrf.mxu0
      %12106 = vmatprep.mubr.f32.mxu0 0.0
      %12107 = vmatmul.mubr.f32.gmra.mxu0 %v11791
      %v12108 = vpop.f32.mrf.mxu0
      %v12109 = vadd.f32 0.0, %v12108
      %v12110 = vpop.f32.mrf.mxu0
      %12111 = vmatprep.mubr.f32.mxu0 0.0
      %12112 = vmatmul.mubr.f32.gmra.mxu0 %v11794
      %v12113 = vpop.f32.mrf.mxu0
      %v12114 = vadd.f32 0.0, %v12113
      %v12115 = vpop.f32.mrf.mxu0
      %12116 = vmatprep.mubr.f32.mxu0 0.0
      %12117 = vmatmul.mubr.f32.gmra.mxu0 %v11797
      %v12118 = vpop.f32.mrf.mxu0
      %v12119 = vadd.f32 0.0, %v12118
      %v12120 = vpop.f32.mrf.mxu0
      %12121 = vmatprep.mubr.f32.mxu0 0.0
      %12122 = vmatmul.mubr.f32.gmra.mxu0 %v11800
      %v12123 = vpop.f32.mrf.mxu0
      %v12124 = vadd.f32 0.0, %v12123
      %v12125 = vpop.f32.mrf.mxu0
      %12126 = vmatprep.mubr.f32.mxu0 0.0
      %12127 = vmatmul.mubr.f32.gmra.mxu0 %v11803
      %v12128 = vpop.f32.mrf.mxu0
      %v12129 = vadd.f32 0.0, %v12128
      %v12130 = vpop.f32.mrf.mxu0
      %12131 = vmatprep.mubr.f32.mxu0 0.0
      %12132 = vmatmul.mubr.f32.gmra.mxu0 %v11806
      %v12133 = vpop.f32.mrf.mxu0
      %v12134 = vadd.f32 0.0, %v12133
      %v12135 = vpop.f32.mrf.mxu0
      %12136 = vmatprep.mubr.f32.mxu0 0.0
      %12137 = vmatmul.mubr.f32.gmra.mxu0 %v11809
      %v12138 = vpop.f32.mrf.mxu0
      %v12139 = vadd.f32 0.0, %v12138
      %v12140 = vpop.f32.mrf.mxu0
      %12141 = vmatprep.mubr.f32.mxu0 0.0
      %12142 = vmatmul.mubr.f32.gmra.mxu0 %v11812
      %v12143 = vpop.f32.mrf.mxu0
      %v12144 = vadd.f32 0.0, %v12143
      %v12145 = vpop.f32.mrf.mxu0
      %12146 = vmatprep.mubr.f32.mxu0 0.0
      %12147 = vmatmul.mubr.f32.gmra.mxu0 %v11815
      %v12148 = vpop.f32.mrf.mxu0
      %v12149 = vadd.f32 0.0, %v12148
      %v12150 = vpop.f32.mrf.mxu0
      %12151 = vmatprep.mubr.f32.mxu0 0.0
      %12152 = vmatmul.mubr.f32.gmra.mxu0 %v11818
      %v12153 = vpop.f32.mrf.mxu0
      %v12154 = vadd.f32 0.0, %v12153
      %v12155 = vpop.f32.mrf.mxu0
      %12156 = vmatprep.mubr.f32.mxu0 0.0
      %12157 = vmatmul.mubr.f32.gmra.mxu0 %v11821
      %v12158 = vpop.f32.mrf.mxu0
      %v12159 = vadd.f32 0.0, %v12158
      %v12160 = vpop.f32.mrf.mxu0
      %12161 = vmatprep.mubr.f32.mxu0 0.0
      %12162 = vmatmul.mubr.f32.gmra.mxu0 %v11824
      %v12163 = vpop.f32.mrf.mxu0
      %v12164 = vadd.f32 0.0, %v12163
      %v12165 = vpop.f32.mrf.mxu0
      %12166 = vmatprep.mubr.f32.mxu0 0.0
      %12167 = vmatmul.mubr.f32.gmra.mxu0 %v11827
      %v12168 = vpop.f32.mrf.mxu0
      %v12169 = vadd.f32 0.0, %v12168
      %v12170 = vpop.f32.mrf.mxu0
      %12171 = vmatprep.mubr.f32.mxu0 0.0
      %12172 = vmatmul.mubr.f32.gmra.mxu0 %v11830
      %v12173 = vpop.f32.mrf.mxu0
      %v12174 = vadd.f32 0.0, %v12173
      %v12175 = vpop.f32.mrf.mxu0
      %12176 = vmatprep.mubr.f32.mxu0 0.0
      %12177 = vmatmul.mubr.f32.gmra.mxu0 %v11833
      %v12178 = vpop.f32.mrf.mxu0
      %v12179 = vadd.f32 0.0, %v12178
      %v12180 = vpop.f32.mrf.mxu0
      %12181 = vmatprep.mubr.f32.mxu0 0.0
      %12182 = vmatmul.mubr.f32.gmra.mxu0 %v11836
      %v12183 = vpop.f32.mrf.mxu0
      %v12184 = vadd.f32 0.0, %v12183
      %v12185 = vpop.f32.mrf.mxu0
      %12186 = vmatprep.mubr.f32.mxu0 0.0
      %12187 = vmatmul.mubr.f32.gmra.mxu0 %v11839
      %v12188 = vpop.f32.mrf.mxu0
      %v12189 = vadd.f32 0.0, %v12188
      %v12190 = vpop.f32.mrf.mxu0
      %12191 = vmatprep.mubr.f32.mxu0 0.0
      %12192 = vmatmul.mubr.f32.gmra.mxu0 %v11842
      %v12193 = vpop.f32.mrf.mxu0
      %v12194 = vadd.f32 0.0, %v12193
      %v12195 = vpop.f32.mrf.mxu0
      %12196 = vmatprep.mubr.f32.mxu0 0.0
      %12197 = vmatmul.mubr.f32.gmra.mxu0 %v11845
      %v12198 = vpop.f32.mrf.mxu0
      %v12199 = vadd.f32 0.0, %v12198
      %v12200 = vpop.f32.mrf.mxu0
      %12201 = vmatprep.mubr.f32.mxu0 0.0
      %12202 = vmatmul.mubr.f32.gmra.mxu0 %v11848
      %v12203 = vpop.f32.mrf.mxu0
      %v12204 = vadd.f32 0.0, %v12203
      %v12205 = vpop.f32.mrf.mxu0
      %12206 = vmatprep.mubr.f32.mxu0 0.0
      %12207 = vmatmul.mubr.f32.gmra.mxu0 %v11851
      %v12208 = vpop.f32.mrf.mxu0
      %v12209 = vadd.f32 0.0, %v12208
      %v12210 = vpop.f32.mrf.mxu0
      %12211 = vmatprep.mubr.f32.mxu0 0.0
      %12212 = vmatmul.mubr.f32.gmra.mxu0 %v11854
      %v12213 = vpop.f32.mrf.mxu0
      %v12214 = vadd.f32 0.0, %v12213
      %v12215 = vpop.f32.mrf.mxu0
      %12216 = vmatprep.mubr.f32.mxu0 0.0
      %12217 = vmatmul.mubr.f32.gmra.mxu0 %v11857
      %v12218 = vpop.f32.mrf.mxu0
      %v12219 = vadd.f32 0.0, %v12218
      %v12220 = vpop.f32.mrf.mxu0
      %12221 = vmatprep.mubr.f32.mxu0 0.0
      %12222 = vmatmul.mubr.f32.gmra.mxu0 %v11860
      %v12223 = vpop.f32.mrf.mxu0
      %v12224 = vadd.f32 0.0, %v12223
      %v12225 = vpop.f32.mrf.mxu0
      %12226 = vmatprep.mubr.f32.mxu0 0.0
      %12227 = vmatmul.mubr.f32.gmra.mxu0 %v11863
      %v12228 = vpop.f32.mrf.mxu0
      %v12229 = vadd.f32 0.0, %v12228
      %v12230 = vpop.f32.mrf.mxu0
      %12231 = vmatprep.mubr.f32.mxu0 0.0
      %12232 = vmatmul.mubr.f32.gmra.mxu0 %v11866
      %v12233 = vpop.f32.mrf.mxu0
      %v12234 = vadd.f32 0.0, %v12233
      %v12235 = vpop.f32.mrf.mxu0
      %12236 = vmatprep.mubr.f32.mxu0 0.0
      %12237 = vmatmul.mubr.f32.gmra.mxu0 %v11869
      %v12238 = vpop.f32.mrf.mxu0
      %v12239 = vadd.f32 0.0, %v12238
      %v12240 = vpop.f32.mrf.mxu0
      %12241 = vmatprep.mubr.f32.mxu0 0.0
      %12242 = vmatmul.mubr.f32.gmra.mxu0 %v11872
      %v12243 = vpop.f32.mrf.mxu0
      %v12244 = vadd.f32 0.0, %v12243
      %v12245 = vpop.f32.mrf.mxu0
      %12246 = vmatprep.mubr.f32.mxu0 0.0
      %12247 = vmatmul.mubr.f32.gmra.mxu0 %v11875
      %v12248 = vpop.f32.mrf.mxu0
      %v12249 = vadd.f32 0.0, %v12248
      %v12250 = vpop.f32.mrf.mxu0
      %12251 = vmatprep.mubr.f32.mxu0 0.0
      %12252 = vmatmul.mubr.f32.gmra.mxu0 %v11878
      %v12253 = vpop.f32.mrf.mxu0
      %v12254 = vadd.f32 0.0, %v12253
      %v12255 = vpop.f32.mrf.mxu0
      %12256 = vmatprep.mubr.f32.mxu0 0.0
      %12257 = vmatmul.mubr.f32.gmra.mxu0 %v11881
      %v12258 = vpop.f32.mrf.mxu0
      %v12259 = vadd.f32 0.0, %v12258
      %v12260 = vpop.f32.mrf.mxu0
      %12261 = vmatprep.mubr.f32.mxu0 0.0
      %12262 = vmatmul.mubr.f32.gmra.mxu0 %v11884
      %v12263 = vpop.f32.mrf.mxu0
      %v12264 = vadd.f32 0.0, %v12263
      %v12265 = vpop.f32.mrf.mxu0
      %12266 = vmatprep.mubr.f32.mxu0 0.0
      %12267 = vmatmul.mubr.f32.gmra.mxu0 %v11887
      %v12268 = vpop.f32.mrf.mxu0
      %v12269 = vadd.f32 0.0, %v12268
      %v12270 = vpop.f32.mrf.mxu0
      %12271 = vmatprep.mubr.f32.mxu0 0.0
      %12272 = vmatmul.mubr.f32.gmra.mxu0 %v11890
      %v12273 = vpop.f32.mrf.mxu0
      %v12274 = vadd.f32 0.0, %v12273
      %v12275 = vpop.f32.mrf.mxu0
      %12276 = vdwg.mxu0
      %v12277 = vadd.f32 %v11369, %v11959
      %v12278 = vadd.f32 %v11374, %v11964
      %v12279 = vadd.f32 %v11379, %v11969
      %v12280 = vadd.f32 %v11384, %v11974
      %v12281 = vadd.f32 %v11389, %v11979
      %v12282 = vadd.f32 %v11394, %v11984
      %v12283 = vadd.f32 %v11399, %v11989
      %v12284 = vadd.f32 %v11404, %v11994
      %v12285 = vadd.f32 %v11409, %v11999
      %v12286 = vadd.f32 %v11414, %v12004
      %v12287 = vadd.f32 %v11419, %v12009
      %v12288 = vadd.f32 %v11424, %v12014
      %v12289 = vadd.f32 %v11429, %v12019
      %v12290 = vadd.f32 %v11434, %v12024
      %v12291 = vadd.f32 %v11439, %v12029
      %v12292 = vadd.f32 %v11444, %v12034
      %v12293 = vadd.f32 %v11449, %v12039
      %v12294 = vadd.f32 %v11454, %v12044
      %v12295 = vadd.f32 %v11459, %v12049
      %v12296 = vadd.f32 %v11464, %v12054
      %v12297 = vadd.f32 %v11469, %v12059
      %v12298 = vadd.f32 %v11474, %v12064
      %v12299 = vadd.f32 %v11479, %v12069
      %v12300 = vadd.f32 %v11484, %v12074
      %v12301 = vadd.f32 %v11489, %v12079
      %v12302 = vadd.f32 %v11494, %v12084
      %v12303 = vadd.f32 %v11499, %v12089
      %v12304 = vadd.f32 %v11504, %v12094
      %v12305 = vadd.f32 %v11509, %v12099
      %v12306 = vadd.f32 %v11514, %v12104
      %v12307 = vadd.f32 %v11519, %v12109
      %v12308 = vadd.f32 %v11524, %v12114
      %v12309 = vadd.f32 %v11529, %v12119
      %v12310 = vadd.f32 %v11534, %v12124
      %v12311 = vadd.f32 %v11539, %v12129
      %v12312 = vadd.f32 %v11544, %v12134
      %v12313 = vadd.f32 %v11549, %v12139
      %v12314 = vadd.f32 %v11554, %v12144
      %v12315 = vadd.f32 %v11559, %v12149
      %v12316 = vadd.f32 %v11564, %v12154
      %v12317 = vadd.f32 %v11569, %v12159
      %v12318 = vadd.f32 %v11574, %v12164
      %v12319 = vadd.f32 %v11579, %v12169
      %v12320 = vadd.f32 %v11584, %v12174
      %v12321 = vadd.f32 %v11589, %v12179
      %v12322 = vadd.f32 %v11594, %v12184
      %v12323 = vadd.f32 %v11599, %v12189
      %v12324 = vadd.f32 %v11604, %v12194
      %v12325 = vadd.f32 %v11609, %v12199
      %v12326 = vadd.f32 %v11614, %v12204
      %v12327 = vadd.f32 %v11619, %v12209
      %v12328 = vadd.f32 %v11624, %v12214
      %v12329 = vadd.f32 %v11629, %v12219
      %v12330 = vadd.f32 %v11634, %v12224
      %v12331 = vadd.f32 %v11639, %v12229
      %v12332 = vadd.f32 %v11644, %v12234
      %v12333 = vadd.f32 %v11649, %v12239
      %v12334 = vadd.f32 %v11654, %v12244
      %v12335 = vadd.f32 %v11659, %v12249
      %v12336 = vadd.f32 %v11664, %v12254
      %v12337 = vadd.f32 %v11669, %v12259
      %v12338 = vadd.f32 %v11674, %v12264
      %v12339 = vadd.f32 %v11679, %v12269
      %v12340 = vadd.f32 %v11684, %v12274
      %s12341 = scalar_lea.vmem %s5, 288
      %v12342 = vld [vmem:[%s12341] sm:$0xff]
      %v12343 = vld [vmem:[%s12341 + $0x8] sm:$0xff]
      %v12344 = vld [vmem:[%s12341 + $0x10] sm:$0xff]
      %v12345 = vld [vmem:[%s12341 + $0x18] sm:$0xff]
      %v12346 = vld [vmem:[%s12341 + $0x20] sm:$0xff]
      %v12347 = vld [vmem:[%s12341 + $0x28] sm:$0xff]
      %v12348 = vld [vmem:[%s12341 + $0x30] sm:$0xff]
      %v12349 = vld [vmem:[%s12341 + $0x38] sm:$0xff]
      %v12350 = vld [vmem:[%s12341 + $0x40] sm:$0xff]
      %v12351 = vld [vmem:[%s12341 + $0x48] sm:$0xff]
      %v12352 = vld [vmem:[%s12341 + $0x50] sm:$0xff]
      %v12353 = vld [vmem:[%s12341 + $0x58] sm:$0xff]
      %v12355 = vsel %vm827, %v10444, 0
      %v12358 = vsel %vm827, %v10445, 0
      %v12361 = vsel %vm827, %v10446, 0
      %v12364 = vsel %vm827, %v10447, 0
      %v12367 = vsel %vm827, %v10448, 0
      %v12370 = vsel %vm827, %v10449, 0
      %v12373 = vsel %vm827, %v10450, 0
      %v12376 = vsel %vm827, %v10451, 0
      %v12379 = vsel %vm827, %v10452, 0
      %v12382 = vsel %vm827, %v10453, 0
      %v12385 = vsel %vm827, %v10454, 0
      %v12388 = vsel %vm827, %v10455, 0
      %v12391 = vsel %vm827, %v10456, 0
      %v12394 = vsel %vm827, %v10457, 0
      %v12397 = vsel %vm827, %v10458, 0
      %v12400 = vsel %vm827, %v10459, 0
      %v12403 = vsel %vm827, %v10460, 0
      %v12406 = vsel %vm827, %v10461, 0
      %v12409 = vsel %vm827, %v10462, 0
      %v12412 = vsel %vm827, %v10463, 0
      %v12415 = vsel %vm827, %v10464, 0
      %v12418 = vsel %vm827, %v10465, 0
      %v12421 = vsel %vm827, %v10466, 0
      %v12424 = vsel %vm827, %v10467, 0
      %v12427 = vsel %vm827, %v10468, 0
      %v12430 = vsel %vm827, %v10469, 0
      %v12433 = vsel %vm827, %v10470, 0
      %v12436 = vsel %vm827, %v10471, 0
      %v12439 = vsel %vm827, %v10472, 0
      %v12442 = vsel %vm827, %v10473, 0
      %v12445 = vsel %vm827, %v10474, 0
      %v12448 = vsel %vm827, %v10475, 0
      %v12451 = vsel %vm827, %v10476, 0
      %v12454 = vsel %vm827, %v10477, 0
      %v12457 = vsel %vm827, %v10478, 0
      %v12460 = vsel %vm827, %v10479, 0
      %v12463 = vsel %vm827, %v10480, 0
      %v12466 = vsel %vm827, %v10481, 0
      %v12469 = vsel %vm827, %v10482, 0
      %v12472 = vsel %vm827, %v10483, 0
      %v12475 = vsel %vm827, %v10484, 0
      %v12478 = vsel %vm827, %v10485, 0
      %v12481 = vsel %vm827, %v10486, 0
      %v12484 = vsel %vm827, %v10487, 0
      %v12487 = vsel %vm827, %v10488, 0
      %v12490 = vsel %vm827, %v10489, 0
      %v12493 = vsel %vm827, %v10490, 0
      %v12496 = vsel %vm827, %v10491, 0
      %v12499 = vsel %vm827, %v10492, 0
      %v12502 = vsel %vm827, %v10493, 0
      %v12505 = vsel %vm827, %v10494, 0
      %v12508 = vsel %vm827, %v10495, 0
      %v12511 = vsel %vm827, %v10496, 0
      %v12514 = vsel %vm827, %v10497, 0
      %v12517 = vsel %vm827, %v10498, 0
      %v12520 = vsel %vm827, %v10499, 0
      %v12523 = vsel %vm827, %v10500, 0
      %v12526 = vsel %vm827, %v10501, 0
      %v12529 = vsel %vm827, %v10502, 0
      %v12532 = vsel %vm827, %v10503, 0
      %v12535 = vsel %vm827, %v10504, 0
      %v12538 = vsel %vm827, %v10505, 0
      %v12541 = vsel %vm827, %v10506, 0
      %v12544 = vsel %vm827, %v10507, 0
      %12546 = vmatprep.subr.mxu0 0.0
      %12547 = vmatpush1.msra.mxu0 0.0
      %12548 = vmatprep.subr.mxu0 0.0
      %12549 = vmatpush1.msra.mxu0 0.0
      %12550 = vmatprep.subr.mxu0 0.0
      %12551 = vmatpush1.msra.mxu0 0.0
      %12552 = vmatprep.subr.mxu0 0.0
      %12553 = vmatpush1.msra.mxu0 0.0
      %12554 = vmatprep.subr.mxu0 0.0
      %12555 = vmatpush1.msra.mxu0 %v12353
      %12556 = vmatprep.subr.mxu0 0.0
      %12557 = vmatpush1.msra.mxu0 %v12352
      %12558 = vmatprep.subr.mxu0 0.0
      %12559 = vmatpush1.msra.mxu0 %v12351
      %12560 = vmatprep.subr.mxu0 0.0
      %12561 = vmatpush1.msra.mxu0 %v12350
      %12562 = vmatprep.subr.mxu0 0.0
      %12563 = vmatpush1.msra.mxu0 %v12349
      %12564 = vmatprep.subr.mxu0 0.0
      %12565 = vmatpush1.msra.mxu0 %v12348
      %12566 = vmatprep.subr.mxu0 0.0
      %12567 = vmatpush1.msra.mxu0 %v12347
      %12568 = vmatprep.subr.mxu0 0.0
      %12569 = vmatpush1.msra.mxu0 %v12346
      %12570 = vmatprep.subr.mxu0 0.0
      %12571 = vmatpush1.msra.mxu0 %v12345
      %12572 = vmatprep.subr.mxu0 0.0
      %12573 = vmatpush1.msra.mxu0 %v12344
      %12574 = vmatprep.subr.mxu0 0.0
      %12575 = vmatpush1.msra.mxu0 %v12343
      %12576 = vmatprep.subr.mxu0 0.0
      %12577 = vmatpush1.msra.mxu0 %v12342
      %12578 = vmatprep.subr.mxu0 0.0
      %12579 = vmatpush2.msra.mxu0 0.0
      %12580 = vmatprep.subr.mxu0 0.0
      %12581 = vmatpush2.msra.mxu0 0.0
      %12582 = vmatprep.subr.mxu0 0.0
      %12583 = vmatpush2.msra.mxu0 0.0
      %12584 = vmatprep.subr.mxu0 0.0
      %12585 = vmatpush2.msra.mxu0 0.0
      %12586 = vmatprep.subr.mxu0 0.0
      %12587 = vmatpush2.msra.mxu0 0.0
      %12588 = vmatprep.subr.mxu0 0.0
      %12589 = vmatpush2.msra.mxu0 0.0
      %12590 = vmatprep.subr.mxu0 0.0
      %12591 = vmatpush2.msra.mxu0 0.0
      %12592 = vmatprep.subr.mxu0 0.0
      %12593 = vmatpush2.msra.mxu0 0.0
      %12594 = vmatprep.subr.mxu0 0.0
      %12595 = vmatpush2.msra.mxu0 0.0
      %12596 = vmatprep.subr.mxu0 0.0
      %12597 = vmatpush2.msra.mxu0 0.0
      %12598 = vmatprep.subr.mxu0 0.0
      %12599 = vmatpush2.msra.mxu0 0.0
      %12600 = vmatprep.subr.mxu0 0.0
      %12601 = vmatpush2.msra.mxu0 0.0
      %12602 = vmatprep.subr.mxu0 0.0
      %12603 = vmatpush2.msra.mxu0 0.0
      %12604 = vmatprep.subr.mxu0 0.0
      %12605 = vmatpush2.msra.mxu0 0.0
      %12606 = vmatprep.subr.mxu0 0.0
      %12607 = vmatpush2.msra.mxu0 0.0
      %12608 = vmatprep.subr.mxu0 0.0
      %12609 = vmatpush2.msra.mxu0 0.0
      %12610 = vmatprep.mubr.f32.mxu0 0.0
      %12611 = vmatmul.mubr.f32.gmra.mxu0 %v12355
      %v12612 = vpop.f32.mrf.mxu0
      %v12613 = vadd.f32 0.0, %v12612
      %v12614 = vpop.f32.mrf.mxu0
      %12615 = vmatprep.mubr.f32.mxu0 0.0
      %12616 = vmatmul.mubr.f32.gmra.mxu0 %v12358
      %v12617 = vpop.f32.mrf.mxu0
      %v12618 = vadd.f32 0.0, %v12617
      %v12619 = vpop.f32.mrf.mxu0
      %12620 = vmatprep.mubr.f32.mxu0 0.0
      %12621 = vmatmul.mubr.f32.gmra.mxu0 %v12361
      %v12622 = vpop.f32.mrf.mxu0
      %v12623 = vadd.f32 0.0, %v12622
      %v12624 = vpop.f32.mrf.mxu0
      %12625 = vmatprep.mubr.f32.mxu0 0.0
      %12626 = vmatmul.mubr.f32.gmra.mxu0 %v12364
      %v12627 = vpop.f32.mrf.mxu0
      %v12628 = vadd.f32 0.0, %v12627
      %v12629 = vpop.f32.mrf.mxu0
      %12630 = vmatprep.mubr.f32.mxu0 0.0
      %12631 = vmatmul.mubr.f32.gmra.mxu0 %v12367
      %v12632 = vpop.f32.mrf.mxu0
      %v12633 = vadd.f32 0.0, %v12632
      %v12634 = vpop.f32.mrf.mxu0
      %12635 = vmatprep.mubr.f32.mxu0 0.0
      %12636 = vmatmul.mubr.f32.gmra.mxu0 %v12370
      %v12637 = vpop.f32.mrf.mxu0
      %v12638 = vadd.f32 0.0, %v12637
      %v12639 = vpop.f32.mrf.mxu0
      %12640 = vmatprep.mubr.f32.mxu0 0.0
      %12641 = vmatmul.mubr.f32.gmra.mxu0 %v12373
      %v12642 = vpop.f32.mrf.mxu0
      %v12643 = vadd.f32 0.0, %v12642
      %v12644 = vpop.f32.mrf.mxu0
      %12645 = vmatprep.mubr.f32.mxu0 0.0
      %12646 = vmatmul.mubr.f32.gmra.mxu0 %v12376
      %v12647 = vpop.f32.mrf.mxu0
      %v12648 = vadd.f32 0.0, %v12647
      %v12649 = vpop.f32.mrf.mxu0
      %12650 = vmatprep.mubr.f32.mxu0 0.0
      %12651 = vmatmul.mubr.f32.gmra.mxu0 %v12379
      %v12652 = vpop.f32.mrf.mxu0
      %v12653 = vadd.f32 0.0, %v12652
      %v12654 = vpop.f32.mrf.mxu0
      %12655 = vmatprep.mubr.f32.mxu0 0.0
      %12656 = vmatmul.mubr.f32.gmra.mxu0 %v12382
      %v12657 = vpop.f32.mrf.mxu0
      %v12658 = vadd.f32 0.0, %v12657
      %v12659 = vpop.f32.mrf.mxu0
      %12660 = vmatprep.mubr.f32.mxu0 0.0
      %12661 = vmatmul.mubr.f32.gmra.mxu0 %v12385
      %v12662 = vpop.f32.mrf.mxu0
      %v12663 = vadd.f32 0.0, %v12662
      %v12664 = vpop.f32.mrf.mxu0
      %12665 = vmatprep.mubr.f32.mxu0 0.0
      %12666 = vmatmul.mubr.f32.gmra.mxu0 %v12388
      %v12667 = vpop.f32.mrf.mxu0
      %v12668 = vadd.f32 0.0, %v12667
      %v12669 = vpop.f32.mrf.mxu0
      %12670 = vmatprep.mubr.f32.mxu0 0.0
      %12671 = vmatmul.mubr.f32.gmra.mxu0 %v12391
      %v12672 = vpop.f32.mrf.mxu0
      %v12673 = vadd.f32 0.0, %v12672
      %v12674 = vpop.f32.mrf.mxu0
      %12675 = vmatprep.mubr.f32.mxu0 0.0
      %12676 = vmatmul.mubr.f32.gmra.mxu0 %v12394
      %v12677 = vpop.f32.mrf.mxu0
      %v12678 = vadd.f32 0.0, %v12677
      %v12679 = vpop.f32.mrf.mxu0
      %12680 = vmatprep.mubr.f32.mxu0 0.0
      %12681 = vmatmul.mubr.f32.gmra.mxu0 %v12397
      %v12682 = vpop.f32.mrf.mxu0
      %v12683 = vadd.f32 0.0, %v12682
      %v12684 = vpop.f32.mrf.mxu0
      %12685 = vmatprep.mubr.f32.mxu0 0.0
      %12686 = vmatmul.mubr.f32.gmra.mxu0 %v12400
      %v12687 = vpop.f32.mrf.mxu0
      %v12688 = vadd.f32 0.0, %v12687
      %v12689 = vpop.f32.mrf.mxu0
      %12690 = vmatprep.mubr.f32.mxu0 0.0
      %12691 = vmatmul.mubr.f32.gmra.mxu0 %v12403
      %v12692 = vpop.f32.mrf.mxu0
      %v12693 = vadd.f32 0.0, %v12692
      %v12694 = vpop.f32.mrf.mxu0
      %12695 = vmatprep.mubr.f32.mxu0 0.0
      %12696 = vmatmul.mubr.f32.gmra.mxu0 %v12406
      %v12697 = vpop.f32.mrf.mxu0
      %v12698 = vadd.f32 0.0, %v12697
      %v12699 = vpop.f32.mrf.mxu0
      %12700 = vmatprep.mubr.f32.mxu0 0.0
      %12701 = vmatmul.mubr.f32.gmra.mxu0 %v12409
      %v12702 = vpop.f32.mrf.mxu0
      %v12703 = vadd.f32 0.0, %v12702
      %v12704 = vpop.f32.mrf.mxu0
      %12705 = vmatprep.mubr.f32.mxu0 0.0
      %12706 = vmatmul.mubr.f32.gmra.mxu0 %v12412
      %v12707 = vpop.f32.mrf.mxu0
      %v12708 = vadd.f32 0.0, %v12707
      %v12709 = vpop.f32.mrf.mxu0
      %12710 = vmatprep.mubr.f32.mxu0 0.0
      %12711 = vmatmul.mubr.f32.gmra.mxu0 %v12415
      %v12712 = vpop.f32.mrf.mxu0
      %v12713 = vadd.f32 0.0, %v12712
      %v12714 = vpop.f32.mrf.mxu0
      %12715 = vmatprep.mubr.f32.mxu0 0.0
      %12716 = vmatmul.mubr.f32.gmra.mxu0 %v12418
      %v12717 = vpop.f32.mrf.mxu0
      %v12718 = vadd.f32 0.0, %v12717
      %v12719 = vpop.f32.mrf.mxu0
      %12720 = vmatprep.mubr.f32.mxu0 0.0
      %12721 = vmatmul.mubr.f32.gmra.mxu0 %v12421
      %v12722 = vpop.f32.mrf.mxu0
      %v12723 = vadd.f32 0.0, %v12722
      %v12724 = vpop.f32.mrf.mxu0
      %12725 = vmatprep.mubr.f32.mxu0 0.0
      %12726 = vmatmul.mubr.f32.gmra.mxu0 %v12424
      %v12727 = vpop.f32.mrf.mxu0
      %v12728 = vadd.f32 0.0, %v12727
      %v12729 = vpop.f32.mrf.mxu0
      %12730 = vmatprep.mubr.f32.mxu0 0.0
      %12731 = vmatmul.mubr.f32.gmra.mxu0 %v12427
      %v12732 = vpop.f32.mrf.mxu0
      %v12733 = vadd.f32 0.0, %v12732
      %v12734 = vpop.f32.mrf.mxu0
      %12735 = vmatprep.mubr.f32.mxu0 0.0
      %12736 = vmatmul.mubr.f32.gmra.mxu0 %v12430
      %v12737 = vpop.f32.mrf.mxu0
      %v12738 = vadd.f32 0.0, %v12737
      %v12739 = vpop.f32.mrf.mxu0
      %12740 = vmatprep.mubr.f32.mxu0 0.0
      %12741 = vmatmul.mubr.f32.gmra.mxu0 %v12433
      %v12742 = vpop.f32.mrf.mxu0
      %v12743 = vadd.f32 0.0, %v12742
      %v12744 = vpop.f32.mrf.mxu0
      %12745 = vmatprep.mubr.f32.mxu0 0.0
      %12746 = vmatmul.mubr.f32.gmra.mxu0 %v12436
      %v12747 = vpop.f32.mrf.mxu0
      %v12748 = vadd.f32 0.0, %v12747
      %v12749 = vpop.f32.mrf.mxu0
      %12750 = vmatprep.mubr.f32.mxu0 0.0
      %12751 = vmatmul.mubr.f32.gmra.mxu0 %v12439
      %v12752 = vpop.f32.mrf.mxu0
      %v12753 = vadd.f32 0.0, %v12752
      %v12754 = vpop.f32.mrf.mxu0
      %12755 = vmatprep.mubr.f32.mxu0 0.0
      %12756 = vmatmul.mubr.f32.gmra.mxu0 %v12442
      %v12757 = vpop.f32.mrf.mxu0
      %v12758 = vadd.f32 0.0, %v12757
      %v12759 = vpop.f32.mrf.mxu0
      %12760 = vmatprep.mubr.f32.mxu0 0.0
      %12761 = vmatmul.mubr.f32.gmra.mxu0 %v12445
      %v12762 = vpop.f32.mrf.mxu0
      %v12763 = vadd.f32 0.0, %v12762
      %v12764 = vpop.f32.mrf.mxu0
      %12765 = vmatprep.mubr.f32.mxu0 0.0
      %12766 = vmatmul.mubr.f32.gmra.mxu0 %v12448
      %v12767 = vpop.f32.mrf.mxu0
      %v12768 = vadd.f32 0.0, %v12767
      %v12769 = vpop.f32.mrf.mxu0
      %12770 = vmatprep.mubr.f32.mxu0 0.0
      %12771 = vmatmul.mubr.f32.gmra.mxu0 %v12451
      %v12772 = vpop.f32.mrf.mxu0
      %v12773 = vadd.f32 0.0, %v12772
      %v12774 = vpop.f32.mrf.mxu0
      %12775 = vmatprep.mubr.f32.mxu0 0.0
      %12776 = vmatmul.mubr.f32.gmra.mxu0 %v12454
      %v12777 = vpop.f32.mrf.mxu0
      %v12778 = vadd.f32 0.0, %v12777
      %v12779 = vpop.f32.mrf.mxu0
      %12780 = vmatprep.mubr.f32.mxu0 0.0
      %12781 = vmatmul.mubr.f32.gmra.mxu0 %v12457
      %v12782 = vpop.f32.mrf.mxu0
      %v12783 = vadd.f32 0.0, %v12782
      %v12784 = vpop.f32.mrf.mxu0
      %12785 = vmatprep.mubr.f32.mxu0 0.0
      %12786 = vmatmul.mubr.f32.gmra.mxu0 %v12460
      %v12787 = vpop.f32.mrf.mxu0
      %v12788 = vadd.f32 0.0, %v12787
      %v12789 = vpop.f32.mrf.mxu0
      %12790 = vmatprep.mubr.f32.mxu0 0.0
      %12791 = vmatmul.mubr.f32.gmra.mxu0 %v12463
      %v12792 = vpop.f32.mrf.mxu0
      %v12793 = vadd.f32 0.0, %v12792
      %v12794 = vpop.f32.mrf.mxu0
      %12795 = vmatprep.mubr.f32.mxu0 0.0
      %12796 = vmatmul.mubr.f32.gmra.mxu0 %v12466
      %v12797 = vpop.f32.mrf.mxu0
      %v12798 = vadd.f32 0.0, %v12797
      %v12799 = vpop.f32.mrf.mxu0
      %12800 = vmatprep.mubr.f32.mxu0 0.0
      %12801 = vmatmul.mubr.f32.gmra.mxu0 %v12469
      %v12802 = vpop.f32.mrf.mxu0
      %v12803 = vadd.f32 0.0, %v12802
      %v12804 = vpop.f32.mrf.mxu0
      %12805 = vmatprep.mubr.f32.mxu0 0.0
      %12806 = vmatmul.mubr.f32.gmra.mxu0 %v12472
      %v12807 = vpop.f32.mrf.mxu0
      %v12808 = vadd.f32 0.0, %v12807
      %v12809 = vpop.f32.mrf.mxu0
      %12810 = vmatprep.mubr.f32.mxu0 0.0
      %12811 = vmatmul.mubr.f32.gmra.mxu0 %v12475
      %v12812 = vpop.f32.mrf.mxu0
      %v12813 = vadd.f32 0.0, %v12812
      %v12814 = vpop.f32.mrf.mxu0
      %12815 = vmatprep.mubr.f32.mxu0 0.0
      %12816 = vmatmul.mubr.f32.gmra.mxu0 %v12478
      %v12817 = vpop.f32.mrf.mxu0
      %v12818 = vadd.f32 0.0, %v12817
      %v12819 = vpop.f32.mrf.mxu0
      %12820 = vmatprep.mubr.f32.mxu0 0.0
      %12821 = vmatmul.mubr.f32.gmra.mxu0 %v12481
      %v12822 = vpop.f32.mrf.mxu0
      %v12823 = vadd.f32 0.0, %v12822
      %v12824 = vpop.f32.mrf.mxu0
      %12825 = vmatprep.mubr.f32.mxu0 0.0
      %12826 = vmatmul.mubr.f32.gmra.mxu0 %v12484
      %v12827 = vpop.f32.mrf.mxu0
      %v12828 = vadd.f32 0.0, %v12827
      %v12829 = vpop.f32.mrf.mxu0
      %12830 = vmatprep.mubr.f32.mxu0 0.0
      %12831 = vmatmul.mubr.f32.gmra.mxu0 %v12487
      %v12832 = vpop.f32.mrf.mxu0
      %v12833 = vadd.f32 0.0, %v12832
      %v12834 = vpop.f32.mrf.mxu0
      %12835 = vmatprep.mubr.f32.mxu0 0.0
      %12836 = vmatmul.mubr.f32.gmra.mxu0 %v12490
      %v12837 = vpop.f32.mrf.mxu0
      %v12838 = vadd.f32 0.0, %v12837
      %v12839 = vpop.f32.mrf.mxu0
      %12840 = vmatprep.mubr.f32.mxu0 0.0
      %12841 = vmatmul.mubr.f32.gmra.mxu0 %v12493
      %v12842 = vpop.f32.mrf.mxu0
      %v12843 = vadd.f32 0.0, %v12842
      %v12844 = vpop.f32.mrf.mxu0
      %12845 = vmatprep.mubr.f32.mxu0 0.0
      %12846 = vmatmul.mubr.f32.gmra.mxu0 %v12496
      %v12847 = vpop.f32.mrf.mxu0
      %v12848 = vadd.f32 0.0, %v12847
      %v12849 = vpop.f32.mrf.mxu0
      %12850 = vmatprep.mubr.f32.mxu0 0.0
      %12851 = vmatmul.mubr.f32.gmra.mxu0 %v12499
      %v12852 = vpop.f32.mrf.mxu0
      %v12853 = vadd.f32 0.0, %v12852
      %v12854 = vpop.f32.mrf.mxu0
      %12855 = vmatprep.mubr.f32.mxu0 0.0
      %12856 = vmatmul.mubr.f32.gmra.mxu0 %v12502
      %v12857 = vpop.f32.mrf.mxu0
      %v12858 = vadd.f32 0.0, %v12857
      %v12859 = vpop.f32.mrf.mxu0
      %12860 = vmatprep.mubr.f32.mxu0 0.0
      %12861 = vmatmul.mubr.f32.gmra.mxu0 %v12505
      %v12862 = vpop.f32.mrf.mxu0
      %v12863 = vadd.f32 0.0, %v12862
      %v12864 = vpop.f32.mrf.mxu0
      %12865 = vmatprep.mubr.f32.mxu0 0.0
      %12866 = vmatmul.mubr.f32.gmra.mxu0 %v12508
      %v12867 = vpop.f32.mrf.mxu0
      %v12868 = vadd.f32 0.0, %v12867
      %v12869 = vpop.f32.mrf.mxu0
      %12870 = vmatprep.mubr.f32.mxu0 0.0
      %12871 = vmatmul.mubr.f32.gmra.mxu0 %v12511
      %v12872 = vpop.f32.mrf.mxu0
      %v12873 = vadd.f32 0.0, %v12872
      %v12874 = vpop.f32.mrf.mxu0
      %12875 = vmatprep.mubr.f32.mxu0 0.0
      %12876 = vmatmul.mubr.f32.gmra.mxu0 %v12514
      %v12877 = vpop.f32.mrf.mxu0
      %v12878 = vadd.f32 0.0, %v12877
      %v12879 = vpop.f32.mrf.mxu0
      %12880 = vmatprep.mubr.f32.mxu0 0.0
      %12881 = vmatmul.mubr.f32.gmra.mxu0 %v12517
      %v12882 = vpop.f32.mrf.mxu0
      %v12883 = vadd.f32 0.0, %v12882
      %v12884 = vpop.f32.mrf.mxu0
      %12885 = vmatprep.mubr.f32.mxu0 0.0
      %12886 = vmatmul.mubr.f32.gmra.mxu0 %v12520
      %v12887 = vpop.f32.mrf.mxu0
      %v12888 = vadd.f32 0.0, %v12887
      %v12889 = vpop.f32.mrf.mxu0
      %12890 = vmatprep.mubr.f32.mxu0 0.0
      %12891 = vmatmul.mubr.f32.gmra.mxu0 %v12523
      %v12892 = vpop.f32.mrf.mxu0
      %v12893 = vadd.f32 0.0, %v12892
      %v12894 = vpop.f32.mrf.mxu0
      %12895 = vmatprep.mubr.f32.mxu0 0.0
      %12896 = vmatmul.mubr.f32.gmra.mxu0 %v12526
      %v12897 = vpop.f32.mrf.mxu0
      %v12898 = vadd.f32 0.0, %v12897
      %v12899 = vpop.f32.mrf.mxu0
      %12900 = vmatprep.mubr.f32.mxu0 0.0
      %12901 = vmatmul.mubr.f32.gmra.mxu0 %v12529
      %v12902 = vpop.f32.mrf.mxu0
      %v12903 = vadd.f32 0.0, %v12902
      %v12904 = vpop.f32.mrf.mxu0
      %12905 = vmatprep.mubr.f32.mxu0 0.0
      %12906 = vmatmul.mubr.f32.gmra.mxu0 %v12532
      %v12907 = vpop.f32.mrf.mxu0
      %v12908 = vadd.f32 0.0, %v12907
      %v12909 = vpop.f32.mrf.mxu0
      %12910 = vmatprep.mubr.f32.mxu0 0.0
      %12911 = vmatmul.mubr.f32.gmra.mxu0 %v12535
      %v12912 = vpop.f32.mrf.mxu0
      %v12913 = vadd.f32 0.0, %v12912
      %v12914 = vpop.f32.mrf.mxu0
      %12915 = vmatprep.mubr.f32.mxu0 0.0
      %12916 = vmatmul.mubr.f32.gmra.mxu0 %v12538
      %v12917 = vpop.f32.mrf.mxu0
      %v12918 = vadd.f32 0.0, %v12917
      %v12919 = vpop.f32.mrf.mxu0
      %12920 = vmatprep.mubr.f32.mxu0 0.0
      %12921 = vmatmul.mubr.f32.gmra.mxu0 %v12541
      %v12922 = vpop.f32.mrf.mxu0
      %v12923 = vadd.f32 0.0, %v12922
      %v12924 = vpop.f32.mrf.mxu0
      %12925 = vmatprep.mubr.f32.mxu0 0.0
      %12926 = vmatmul.mubr.f32.gmra.mxu0 %v12544
      %v12927 = vpop.f32.mrf.mxu0
      %v12928 = vadd.f32 0.0, %v12927
      %v12929 = vpop.f32.mrf.mxu0
      %12930 = vdwg.mxu0
      %v12931 = vadd.f32 %v12277, %v12613
      %v12932 = vadd.f32 %v12278, %v12618
      %v12933 = vadd.f32 %v12279, %v12623
      %v12934 = vadd.f32 %v12280, %v12628
      %v12935 = vadd.f32 %v12281, %v12633
      %v12936 = vadd.f32 %v12282, %v12638
      %v12937 = vadd.f32 %v12283, %v12643
      %v12938 = vadd.f32 %v12284, %v12648
      %v12939 = vadd.f32 %v12285, %v12653
      %v12940 = vadd.f32 %v12286, %v12658
      %v12941 = vadd.f32 %v12287, %v12663
      %v12942 = vadd.f32 %v12288, %v12668
      %v12943 = vadd.f32 %v12289, %v12673
      %v12944 = vadd.f32 %v12290, %v12678
      %v12945 = vadd.f32 %v12291, %v12683
      %v12946 = vadd.f32 %v12292, %v12688
      %v12947 = vadd.f32 %v12293, %v12693
      %v12948 = vadd.f32 %v12294, %v12698
      %v12949 = vadd.f32 %v12295, %v12703
      %v12950 = vadd.f32 %v12296, %v12708
      %v12951 = vadd.f32 %v12297, %v12713
      %v12952 = vadd.f32 %v12298, %v12718
      %v12953 = vadd.f32 %v12299, %v12723
      %v12954 = vadd.f32 %v12300, %v12728
      %v12955 = vadd.f32 %v12301, %v12733
      %v12956 = vadd.f32 %v12302, %v12738
      %v12957 = vadd.f32 %v12303, %v12743
      %v12958 = vadd.f32 %v12304, %v12748
      %v12959 = vadd.f32 %v12305, %v12753
      %v12960 = vadd.f32 %v12306, %v12758
      %v12961 = vadd.f32 %v12307, %v12763
      %v12962 = vadd.f32 %v12308, %v12768
      %v12963 = vadd.f32 %v12309, %v12773
      %v12964 = vadd.f32 %v12310, %v12778
      %v12965 = vadd.f32 %v12311, %v12783
      %v12966 = vadd.f32 %v12312, %v12788
      %v12967 = vadd.f32 %v12313, %v12793
      %v12968 = vadd.f32 %v12314, %v12798
      %v12969 = vadd.f32 %v12315, %v12803
      %v12970 = vadd.f32 %v12316, %v12808
      %v12971 = vadd.f32 %v12317, %v12813
      %v12972 = vadd.f32 %v12318, %v12818
      %v12973 = vadd.f32 %v12319, %v12823
      %v12974 = vadd.f32 %v12320, %v12828
      %v12975 = vadd.f32 %v12321, %v12833
      %v12976 = vadd.f32 %v12322, %v12838
      %v12977 = vadd.f32 %v12323, %v12843
      %v12978 = vadd.f32 %v12324, %v12848
      %v12979 = vadd.f32 %v12325, %v12853
      %v12980 = vadd.f32 %v12326, %v12858
      %v12981 = vadd.f32 %v12327, %v12863
      %v12982 = vadd.f32 %v12328, %v12868
      %v12983 = vadd.f32 %v12329, %v12873
      %v12984 = vadd.f32 %v12330, %v12878
      %v12985 = vadd.f32 %v12331, %v12883
      %v12986 = vadd.f32 %v12332, %v12888
      %v12987 = vadd.f32 %v12333, %v12893
      %v12988 = vadd.f32 %v12334, %v12898
      %v12989 = vadd.f32 %v12335, %v12903
      %v12990 = vadd.f32 %v12336, %v12908
      %v12991 = vadd.f32 %v12337, %v12913
      %v12992 = vadd.f32 %v12338, %v12918
      %v12993 = vadd.f32 %v12339, %v12923
      %v12994 = vadd.f32 %v12340, %v12928
      %12995 = vst [vmem:[%s288] sm:$0xff] %v12931
      %12996 = vst [vmem:[%s288 + $0x8] sm:$0xff] %v12932
      %12997 = vst [vmem:[%s288 + $0x10] sm:$0xff] %v12933
      %12998 = vst [vmem:[%s288 + $0x18] sm:$0xff] %v12934
      %12999 = vst [vmem:[%s288 + $0x20] sm:$0xff] %v12935
      %13000 = vst [vmem:[%s288 + $0x28] sm:$0xff] %v12936
      %13001 = vst [vmem:[%s288 + $0x30] sm:$0xff] %v12937
      %13002 = vst [vmem:[%s288 + $0x38] sm:$0xff] %v12938
      %13003 = vst [vmem:[%s288 + $0x40] sm:$0xff] %v12939
      %13004 = vst [vmem:[%s288 + $0x48] sm:$0xff] %v12940
      %13005 = vst [vmem:[%s288 + $0x50] sm:$0xff] %v12941
      %13006 = vst [vmem:[%s288 + $0x58] sm:$0xff] %v12942
      %13007 = vst [vmem:[%s288 + $0x60] sm:$0xff] %v12943
      %13008 = vst [vmem:[%s288 + $0x68] sm:$0xff] %v12944
      %13009 = vst [vmem:[%s288 + $0x70] sm:$0xff] %v12945
      %13010 = vst [vmem:[%s288 + $0x78] sm:$0xff] %v12946
      %13011 = vst [vmem:[%s288 + $0x80] sm:$0xff] %v12947
      %13012 = vst [vmem:[%s288 + $0x88] sm:$0xff] %v12948
      %13013 = vst [vmem:[%s288 + $0x90] sm:$0xff] %v12949
      %13014 = vst [vmem:[%s288 + $0x98] sm:$0xff] %v12950
      %13015 = vst [vmem:[%s288 + $0xa0] sm:$0xff] %v12951
      %13016 = vst [vmem:[%s288 + $0xa8] sm:$0xff] %v12952
      %13017 = vst [vmem:[%s288 + $0xb0] sm:$0xff] %v12953
      %13018 = vst [vmem:[%s288 + $0xb8] sm:$0xff] %v12954
      %13019 = vst [vmem:[%s288 + $0xc0] sm:$0xff] %v12955
      %13020 = vst [vmem:[%s288 + $0xc8] sm:$0xff] %v12956
      %13021 = vst [vmem:[%s288 + $0xd0] sm:$0xff] %v12957
      %13022 = vst [vmem:[%s288 + $0xd8] sm:$0xff] %v12958
      %13023 = vst [vmem:[%s288 + $0xe0] sm:$0xff] %v12959
      %13024 = vst [vmem:[%s288 + $0xe8] sm:$0xff] %v12960
      %13025 = vst [vmem:[%s288 + $0xf0] sm:$0xff] %v12961
      %13026 = vst [vmem:[%s288 + $0xf8] sm:$0xff] %v12962
      %13027 = vst [vmem:[%s288 + $0x100] sm:$0xff] %v12963
      %13028 = vst [vmem:[%s288 + $0x108] sm:$0xff] %v12964
      %13029 = vst [vmem:[%s288 + $0x110] sm:$0xff] %v12965
      %13030 = vst [vmem:[%s288 + $0x118] sm:$0xff] %v12966
      %13031 = vst [vmem:[%s288 + $0x120] sm:$0xff] %v12967
      %13032 = vst [vmem:[%s288 + $0x128] sm:$0xff] %v12968
      %13033 = vst [vmem:[%s288 + $0x130] sm:$0xff] %v12969
      %13034 = vst [vmem:[%s288 + $0x138] sm:$0xff] %v12970
      %13035 = vst [vmem:[%s288 + $0x140] sm:$0xff] %v12971
      %13036 = vst [vmem:[%s288 + $0x148] sm:$0xff] %v12972
      %13037 = vst [vmem:[%s288 + $0x150] sm:$0xff] %v12973
      %13038 = vst [vmem:[%s288 + $0x158] sm:$0xff] %v12974
      %13039 = vst [vmem:[%s288 + $0x160] sm:$0xff] %v12975
      %13040 = vst [vmem:[%s288 + $0x168] sm:$0xff] %v12976
      %13041 = vst [vmem:[%s288 + $0x170] sm:$0xff] %v12977
      %13042 = vst [vmem:[%s288 + $0x178] sm:$0xff] %v12978
      %13043 = vst [vmem:[%s288 + $0x180] sm:$0xff] %v12979
      %13044 = vst [vmem:[%s288 + $0x188] sm:$0xff] %v12980
      %13045 = vst [vmem:[%s288 + $0x190] sm:$0xff] %v12981
      %13046 = vst [vmem:[%s288 + $0x198] sm:$0xff] %v12982
      %13047 = vst [vmem:[%s288 + $0x1a0] sm:$0xff] %v12983
      %13048 = vst [vmem:[%s288 + $0x1a8] sm:$0xff] %v12984
      %13049 = vst [vmem:[%s288 + $0x1b0] sm:$0xff] %v12985
      %13050 = vst [vmem:[%s288 + $0x1b8] sm:$0xff] %v12986
      %13051 = vst [vmem:[%s288 + $0x1c0] sm:$0xff] %v12987
      %13052 = vst [vmem:[%s288 + $0x1c8] sm:$0xff] %v12988
      %13053 = vst [vmem:[%s288 + $0x1d0] sm:$0xff] %v12989
      %13054 = vst [vmem:[%s288 + $0x1d8] sm:$0xff] %v12990
      %13055 = vst [vmem:[%s288 + $0x1e0] sm:$0xff] %v12991
      %13056 = vst [vmem:[%s288 + $0x1e8] sm:$0xff] %v12992
      %13057 = vst [vmem:[%s288 + $0x1f0] sm:$0xff] %v12993
      %13058 = vst [vmem:[%s288 + $0x1f8] sm:$0xff] %v12994
      %13059 = vst.msk [vmem:[%s294] sm:$0xff] %vm5317, %v7878
      %13060 = vst.msk [vmem:[%s294 + $0x8] sm:$0xff] %vm5317, %v7879
      %13061 = vst.msk [vmem:[%s294 + $0x10] sm:$0xff] %vm5317, %v7880
      %13062 = vst.msk [vmem:[%s294 + $0x18] sm:$0xff] %vm5317, %v7881
      %13063 = vst.msk [vmem:[%s294 + $0x20] sm:$0xff] %vm5317, %v7882
      %13064 = vst.msk [vmem:[%s294 + $0x28] sm:$0xff] %vm5317, %v7883
      %13065 = vst.msk [vmem:[%s294 + $0x30] sm:$0xff] %vm5317, %v7884
      %13066 = vst.msk [vmem:[%s294 + $0x38] sm:$0xff] %vm5317, %v7885
      %13067 = vst.msk [vmem:[%s294 + $0x40] sm:$0xff] %vm5317, %v7886
      %13068 = vst.msk [vmem:[%s294 + $0x48] sm:$0xff] %vm5317, %v7887
      %13069 = vst.msk [vmem:[%s294 + $0x50] sm:$0xff] %vm5317, %v7888
      %13070 = vst.msk [vmem:[%s294 + $0x58] sm:$0xff] %vm5317, %v7889
      %13071 = vst.msk [vmem:[%s294 + $0x60] sm:$0xff] %vm5317, %v7890
      %13072 = vst.msk [vmem:[%s294 + $0x68] sm:$0xff] %vm5317, %v7891
      %13073 = vst.msk [vmem:[%s294 + $0x70] sm:$0xff] %vm5317, %v7892
      %13074 = vst.msk [vmem:[%s294 + $0x78] sm:$0xff] %vm5317, %v7893
      %13075 = vst.msk [vmem:[%s294 + $0x80] sm:$0xff] %vm5317, %v7894
      %13076 = vst.msk [vmem:[%s294 + $0x88] sm:$0xff] %vm5317, %v7895
      %13077 = vst.msk [vmem:[%s294 + $0x90] sm:$0xff] %vm5317, %v7896
      %13078 = vst.msk [vmem:[%s294 + $0x98] sm:$0xff] %vm5317, %v7897
      %13079 = vst.msk [vmem:[%s294 + $0xa0] sm:$0xff] %vm5317, %v7898
      %13080 = vst.msk [vmem:[%s294 + $0xa8] sm:$0xff] %vm5317, %v7899
      %13081 = vst.msk [vmem:[%s294 + $0xb0] sm:$0xff] %vm5317, %v7900
      %13082 = vst.msk [vmem:[%s294 + $0xb8] sm:$0xff] %vm5317, %v7901
      %13083 = vst.msk [vmem:[%s294 + $0xc0] sm:$0xff] %vm5317, %v7902
      %13084 = vst.msk [vmem:[%s294 + $0xc8] sm:$0xff] %vm5317, %v7903
      %13085 = vst.msk [vmem:[%s294 + $0xd0] sm:$0xff] %vm5317, %v7904
      %13086 = vst.msk [vmem:[%s294 + $0xd8] sm:$0xff] %vm5317, %v7905
      %13087 = vst.msk [vmem:[%s294 + $0xe0] sm:$0xff] %vm5317, %v7906
      %13088 = vst.msk [vmem:[%s294 + $0xe8] sm:$0xff] %vm5317, %v7907
      %13089 = vst.msk [vmem:[%s294 + $0xf0] sm:$0xff] %vm5317, %v7908
      %13090 = vst.msk [vmem:[%s294 + $0xf8] sm:$0xff] %vm5317, %v7909
      %13091 = vst.msk [vmem:[%s294 + $0x100] sm:$0xff] %vm5317, %v7910
      %13092 = vst.msk [vmem:[%s294 + $0x108] sm:$0xff] %vm5317, %v7911
      %13093 = vst.msk [vmem:[%s294 + $0x110] sm:$0xff] %vm5317, %v7912
      %13094 = vst.msk [vmem:[%s294 + $0x118] sm:$0xff] %vm5317, %v7913
      %13095 = vst.msk [vmem:[%s294 + $0x120] sm:$0xff] %vm5317, %v7914
      %13096 = vst.msk [vmem:[%s294 + $0x128] sm:$0xff] %vm5317, %v7915
      %13097 = vst.msk [vmem:[%s294 + $0x130] sm:$0xff] %vm5317, %v7916
      %13098 = vst.msk [vmem:[%s294 + $0x138] sm:$0xff] %vm5317, %v7917
      %13099 = vst.msk [vmem:[%s294 + $0x140] sm:$0xff] %vm5317, %v7918
      %13100 = vst.msk [vmem:[%s294 + $0x148] sm:$0xff] %vm5317, %v7919
      %13101 = vst.msk [vmem:[%s294 + $0x150] sm:$0xff] %vm5317, %v7920
      %13102 = vst.msk [vmem:[%s294 + $0x158] sm:$0xff] %vm5317, %v7921
      %13103 = vst.msk [vmem:[%s294 + $0x160] sm:$0xff] %vm5317, %v7922
      %13104 = vst.msk [vmem:[%s294 + $0x168] sm:$0xff] %vm5317, %v7923
      %13105 = vst.msk [vmem:[%s294 + $0x170] sm:$0xff] %vm5317, %v7924
      %13106 = vst.msk [vmem:[%s294 + $0x178] sm:$0xff] %vm5317, %v7925
      %13107 = vst.msk [vmem:[%s294 + $0x180] sm:$0xff] %vm5317, %v7926
      %13108 = vst.msk [vmem:[%s294 + $0x188] sm:$0xff] %vm5317, %v7927
      %13109 = vst.msk [vmem:[%s294 + $0x190] sm:$0xff] %vm5317, %v7928
      %13110 = vst.msk [vmem:[%s294 + $0x198] sm:$0xff] %vm5317, %v7929
      %13111 = vst.msk [vmem:[%s294 + $0x1a0] sm:$0xff] %vm5317, %v7930
      %13112 = vst.msk [vmem:[%s294 + $0x1a8] sm:$0xff] %vm5317, %v7931
      %13113 = vst.msk [vmem:[%s294 + $0x1b0] sm:$0xff] %vm5317, %v7932
      %13114 = vst.msk [vmem:[%s294 + $0x1b8] sm:$0xff] %vm5317, %v7933
      %13115 = vst.msk [vmem:[%s294 + $0x1c0] sm:$0xff] %vm5317, %v7934
      %13116 = vst.msk [vmem:[%s294 + $0x1c8] sm:$0xff] %vm5317, %v7935
      %13117 = vst.msk [vmem:[%s294 + $0x1d0] sm:$0xff] %vm5317, %v7936
      %13118 = vst.msk [vmem:[%s294 + $0x1d8] sm:$0xff] %vm5317, %v7937
      %13119 = vst.msk [vmem:[%s294 + $0x1e0] sm:$0xff] %vm5317, %v7938
      %13120 = vst.msk [vmem:[%s294 + $0x1e8] sm:$0xff] %vm5317, %v7939
      %13121 = vst.msk [vmem:[%s294 + $0x1f0] sm:$0xff] %vm5317, %v7940
      %13122 = vst.msk [vmem:[%s294 + $0x1f8] sm:$0xff] %vm5317, %v7941
      %13123 = vst.msk [vmem:[%s294 + $0x200] sm:$0xff] %vm5317, %v7942
      %13124 = vst.msk [vmem:[%s294 + $0x208] sm:$0xff] %vm5317, %v7943
      %13125 = vst.msk [vmem:[%s294 + $0x210] sm:$0xff] %vm5317, %v7944
      %13126 = vst.msk [vmem:[%s294 + $0x218] sm:$0xff] %vm5317, %v7945
      %13127 = vst.msk [vmem:[%s294 + $0x220] sm:$0xff] %vm5317, %v7946
      %13128 = vst.msk [vmem:[%s294 + $0x228] sm:$0xff] %vm5317, %v7947
      %13129 = vst.msk [vmem:[%s294 + $0x230] sm:$0xff] %vm5317, %v7948
      %13130 = vst.msk [vmem:[%s294 + $0x238] sm:$0xff] %vm5317, %v7949
      %13131 = vst.msk [vmem:[%s294 + $0x240] sm:$0xff] %vm5317, %v7950
      %13132 = vst.msk [vmem:[%s294 + $0x248] sm:$0xff] %vm5317, %v7951
      %13133 = vst.msk [vmem:[%s294 + $0x250] sm:$0xff] %vm5317, %v7952
      %13134 = vst.msk [vmem:[%s294 + $0x258] sm:$0xff] %vm5317, %v7953
      %13135 = vst.msk [vmem:[%s294 + $0x260] sm:$0xff] %vm5317, %v7954
      %13136 = vst.msk [vmem:[%s294 + $0x268] sm:$0xff] %vm5317, %v7955
      %13137 = vst.msk [vmem:[%s294 + $0x270] sm:$0xff] %vm5317, %v7956
      %13138 = vst.msk [vmem:[%s294 + $0x278] sm:$0xff] %vm5317, %v7957
      %13139 = vst.msk [vmem:[%s294 + $0x280] sm:$0xff] %vm5317, %v7958
      %13140 = vst.msk [vmem:[%s294 + $0x288] sm:$0xff] %vm5317, %v7959
      %13141 = vst.msk [vmem:[%s294 + $0x290] sm:$0xff] %vm5317, %v7960
      %13142 = vst.msk [vmem:[%s294 + $0x298] sm:$0xff] %vm5317, %v7961
      %13143 = vst.msk [vmem:[%s294 + $0x2a0] sm:$0xff] %vm5317, %v7962
      %13144 = vst.msk [vmem:[%s294 + $0x2a8] sm:$0xff] %vm5317, %v7963
      %13145 = vst.msk [vmem:[%s294 + $0x2b0] sm:$0xff] %vm5317, %v7964
      %13146 = vst.msk [vmem:[%s294 + $0x2b8] sm:$0xff] %vm5317, %v7965
      %13147 = vst.msk [vmem:[%s294 + $0x2c0] sm:$0xff] %vm5317, %v7966
      %13148 = vst.msk [vmem:[%s294 + $0x2c8] sm:$0xff] %vm5317, %v7967
      %13149 = vst.msk [vmem:[%s294 + $0x2d0] sm:$0xff] %vm5317, %v7968
      %13150 = vst.msk [vmem:[%s294 + $0x2d8] sm:$0xff] %vm5317, %v7969
      %13151 = vst.msk [vmem:[%s294 + $0x2e0] sm:$0xff] %vm5317, %v7970
      %13152 = vst.msk [vmem:[%s294 + $0x2e8] sm:$0xff] %vm5317, %v7971
      %13153 = vst.msk [vmem:[%s294 + $0x2f0] sm:$0xff] %vm5317, %v7972
      %13154 = vst.msk [vmem:[%s294 + $0x2f8] sm:$0xff] %vm5317, %v7973
      %13155 = vst.msk [vmem:[%s294 + $0x300] sm:$0xff] %vm5317, %v7974
      %13156 = vst.msk [vmem:[%s294 + $0x308] sm:$0xff] %vm5317, %v7975
      %13157 = vst.msk [vmem:[%s294 + $0x310] sm:$0xff] %vm5317, %v7976
      %13158 = vst.msk [vmem:[%s294 + $0x318] sm:$0xff] %vm5317, %v7977
      %13159 = vst.msk [vmem:[%s294 + $0x320] sm:$0xff] %vm5317, %v7978
      %13160 = vst.msk [vmem:[%s294 + $0x328] sm:$0xff] %vm5317, %v7979
      %13161 = vst.msk [vmem:[%s294 + $0x330] sm:$0xff] %vm5317, %v7980
      %13162 = vst.msk [vmem:[%s294 + $0x338] sm:$0xff] %vm5317, %v7981
      %13163 = vst.msk [vmem:[%s294 + $0x340] sm:$0xff] %vm5317, %v7982
      %13164 = vst.msk [vmem:[%s294 + $0x348] sm:$0xff] %vm5317, %v7983
      %13165 = vst.msk [vmem:[%s294 + $0x350] sm:$0xff] %vm5317, %v7984
      %13166 = vst.msk [vmem:[%s294 + $0x358] sm:$0xff] %vm5317, %v7985
      %13167 = vst.msk [vmem:[%s294 + $0x360] sm:$0xff] %vm5317, %v7986
      %13168 = vst.msk [vmem:[%s294 + $0x368] sm:$0xff] %vm5317, %v7987
      %13169 = vst.msk [vmem:[%s294 + $0x370] sm:$0xff] %vm5317, %v7988
      %13170 = vst.msk [vmem:[%s294 + $0x378] sm:$0xff] %vm5317, %v7989
      %13171 = vst.msk [vmem:[%s294 + $0x380] sm:$0xff] %vm5317, %v7990
      %13172 = vst.msk [vmem:[%s294 + $0x388] sm:$0xff] %vm5317, %v7991
      %13173 = vst.msk [vmem:[%s294 + $0x390] sm:$0xff] %vm5317, %v7992
      %13174 = vst.msk [vmem:[%s294 + $0x398] sm:$0xff] %vm5317, %v7993
      %13175 = vst.msk [vmem:[%s294 + $0x3a0] sm:$0xff] %vm5317, %v7994
      %13176 = vst.msk [vmem:[%s294 + $0x3a8] sm:$0xff] %vm5317, %v7995
      %13177 = vst.msk [vmem:[%s294 + $0x3b0] sm:$0xff] %vm5317, %v7996
      %13178 = vst.msk [vmem:[%s294 + $0x3b8] sm:$0xff] %vm5317, %v7997
      %13179 = vst.msk [vmem:[%s294 + $0x3c0] sm:$0xff] %vm5317, %v7998
      %13180 = vst.msk [vmem:[%s294 + $0x3c8] sm:$0xff] %vm5317, %v7999
      %13181 = vst.msk [vmem:[%s294 + $0x3d0] sm:$0xff] %vm5317, %v8000
      %13182 = vst.msk [vmem:[%s294 + $0x3d8] sm:$0xff] %vm5317, %v8001
      %13183 = vst.msk [vmem:[%s294 + $0x3e0] sm:$0xff] %vm5317, %v8002
      %13184 = vst.msk [vmem:[%s294 + $0x3e8] sm:$0xff] %vm5317, %v8003
      %13185 = vst.msk [vmem:[%s294 + $0x3f0] sm:$0xff] %vm5317, %v8004
      %13186 = vst.msk [vmem:[%s294 + $0x3f8] sm:$0xff] %vm5317, %v8005
      %13187 = vst.msk [vmem:[%s294 + $0x400] sm:$0xff] %vm5317, %v8006
      %13188 = vst.msk [vmem:[%s294 + $0x408] sm:$0xff] %vm5317, %v8007
      %13189 = vst.msk [vmem:[%s294 + $0x410] sm:$0xff] %vm5317, %v8008
      %13190 = vst.msk [vmem:[%s294 + $0x418] sm:$0xff] %vm5317, %v8009
      %13191 = vst.msk [vmem:[%s294 + $0x420] sm:$0xff] %vm5317, %v8010
      %13192 = vst.msk [vmem:[%s294 + $0x428] sm:$0xff] %vm5317, %v8011
      %13193 = vst.msk [vmem:[%s294 + $0x430] sm:$0xff] %vm5317, %v8012
      %13194 = vst.msk [vmem:[%s294 + $0x438] sm:$0xff] %vm5317, %v8013
      %13195 = vst.msk [vmem:[%s294 + $0x440] sm:$0xff] %vm5317, %v8014
      %13196 = vst.msk [vmem:[%s294 + $0x448] sm:$0xff] %vm5317, %v8015
      %13197 = vst.msk [vmem:[%s294 + $0x450] sm:$0xff] %vm5317, %v8016
      %13198 = vst.msk [vmem:[%s294 + $0x458] sm:$0xff] %vm5317, %v8017
      %13199 = vst.msk [vmem:[%s294 + $0x460] sm:$0xff] %vm5317, %v8018
      %13200 = vst.msk [vmem:[%s294 + $0x468] sm:$0xff] %vm5317, %v8019
      %13201 = vst.msk [vmem:[%s294 + $0x470] sm:$0xff] %vm5317, %v8020
      %13202 = vst.msk [vmem:[%s294 + $0x478] sm:$0xff] %vm5317, %v8021
      %13203 = vst.msk [vmem:[%s294 + $0x480] sm:$0xff] %vm5317, %v8022
      %13204 = vst.msk [vmem:[%s294 + $0x488] sm:$0xff] %vm5317, %v8023
      %13205 = vst.msk [vmem:[%s294 + $0x490] sm:$0xff] %vm5317, %v8024
      %13206 = vst.msk [vmem:[%s294 + $0x498] sm:$0xff] %vm5317, %v8025
      %13207 = vst.msk [vmem:[%s294 + $0x4a0] sm:$0xff] %vm5317, %v8026
      %13208 = vst.msk [vmem:[%s294 + $0x4a8] sm:$0xff] %vm5317, %v8027
      %13209 = vst.msk [vmem:[%s294 + $0x4b0] sm:$0xff] %vm5317, %v8028
      %13210 = vst.msk [vmem:[%s294 + $0x4b8] sm:$0xff] %vm5317, %v8029
      %13211 = vst.msk [vmem:[%s294 + $0x4c0] sm:$0xff] %vm5317, %v8030
      %13212 = vst.msk [vmem:[%s294 + $0x4c8] sm:$0xff] %vm5317, %v8031
      %13213 = vst.msk [vmem:[%s294 + $0x4d0] sm:$0xff] %vm5317, %v8032
      %13214 = vst.msk [vmem:[%s294 + $0x4d8] sm:$0xff] %vm5317, %v8033
      %13215 = vst.msk [vmem:[%s294 + $0x4e0] sm:$0xff] %vm5317, %v8034
      %13216 = vst.msk [vmem:[%s294 + $0x4e8] sm:$0xff] %vm5317, %v8035
      %13217 = vst.msk [vmem:[%s294 + $0x4f0] sm:$0xff] %vm5317, %v8036
      %13218 = vst.msk [vmem:[%s294 + $0x4f8] sm:$0xff] %vm5317, %v8037
      %13219 = vst.msk [vmem:[%s294 + $0x500] sm:$0xff] %vm5317, %v8038
      %13220 = vst.msk [vmem:[%s294 + $0x508] sm:$0xff] %vm5317, %v8039
      %13221 = vst.msk [vmem:[%s294 + $0x510] sm:$0xff] %vm5317, %v8040
      %13222 = vst.msk [vmem:[%s294 + $0x518] sm:$0xff] %vm5317, %v8041
      %13223 = vst.msk [vmem:[%s294 + $0x520] sm:$0xff] %vm5317, %v8042
      %13224 = vst.msk [vmem:[%s294 + $0x528] sm:$0xff] %vm5317, %v8043
      %13225 = vst.msk [vmem:[%s294 + $0x530] sm:$0xff] %vm5317, %v8044
      %13226 = vst.msk [vmem:[%s294 + $0x538] sm:$0xff] %vm5317, %v8045
      %13227 = vst.msk [vmem:[%s294 + $0x540] sm:$0xff] %vm5317, %v8046
      %13228 = vst.msk [vmem:[%s294 + $0x548] sm:$0xff] %vm5317, %v8047
      %13229 = vst.msk [vmem:[%s294 + $0x550] sm:$0xff] %vm5317, %v8048
      %13230 = vst.msk [vmem:[%s294 + $0x558] sm:$0xff] %vm5317, %v8049
      %13231 = vst.msk [vmem:[%s294 + $0x560] sm:$0xff] %vm5317, %v8050
      %13232 = vst.msk [vmem:[%s294 + $0x568] sm:$0xff] %vm5317, %v8051
      %13233 = vst.msk [vmem:[%s294 + $0x570] sm:$0xff] %vm5317, %v8052
      %13234 = vst.msk [vmem:[%s294 + $0x578] sm:$0xff] %vm5317, %v8053
      %13235 = vst.msk [vmem:[%s294 + $0x580] sm:$0xff] %vm5317, %v8054
      %13236 = vst.msk [vmem:[%s294 + $0x588] sm:$0xff] %vm5317, %v8055
      %13237 = vst.msk [vmem:[%s294 + $0x590] sm:$0xff] %vm5317, %v8056
      %13238 = vst.msk [vmem:[%s294 + $0x598] sm:$0xff] %vm5317, %v8057
      %13239 = vst.msk [vmem:[%s294 + $0x5a0] sm:$0xff] %vm5317, %v8058
      %13240 = vst.msk [vmem:[%s294 + $0x5a8] sm:$0xff] %vm5317, %v8059
      %13241 = vst.msk [vmem:[%s294 + $0x5b0] sm:$0xff] %vm5317, %v8060
      %13242 = vst.msk [vmem:[%s294 + $0x5b8] sm:$0xff] %vm5317, %v8061
      %13243 = vst.msk [vmem:[%s294 + $0x5c0] sm:$0xff] %vm5317, %v8062
      %13244 = vst.msk [vmem:[%s294 + $0x5c8] sm:$0xff] %vm5317, %v8063
      %13245 = vst.msk [vmem:[%s294 + $0x5d0] sm:$0xff] %vm5317, %v8064
      %13246 = vst.msk [vmem:[%s294 + $0x5d8] sm:$0xff] %vm5317, %v8065
      %13247 = vst.msk [vmem:[%s294 + $0x5e0] sm:$0xff] %vm5317, %v8066
      %13248 = vst.msk [vmem:[%s294 + $0x5e8] sm:$0xff] %vm5317, %v8067
      %13249 = vst.msk [vmem:[%s294 + $0x5f0] sm:$0xff] %vm5317, %v8068
      %13250 = vst.msk [vmem:[%s294 + $0x5f8] sm:$0xff] %vm5317, %v8069
      %13251 = vst.msk [vmem:[%s294 + $0x600] sm:$0xff] %vm5317, %v8070
      %13252 = vst.msk [vmem:[%s294 + $0x608] sm:$0xff] %vm5317, %v8071
      %13253 = vst.msk [vmem:[%s294 + $0x610] sm:$0xff] %vm5317, %v8072
      %13254 = vst.msk [vmem:[%s294 + $0x618] sm:$0xff] %vm5317, %v8073
      %13255 = vst.msk [vmem:[%s294 + $0x620] sm:$0xff] %vm5317, %v8074
      %13256 = vst.msk [vmem:[%s294 + $0x628] sm:$0xff] %vm5317, %v8075
      %13257 = vst.msk [vmem:[%s294 + $0x630] sm:$0xff] %vm5317, %v8076
      %13258 = vst.msk [vmem:[%s294 + $0x638] sm:$0xff] %vm5317, %v8077
      %13259 = vst.msk [vmem:[%s294 + $0x640] sm:$0xff] %vm5317, %v8078
      %13260 = vst.msk [vmem:[%s294 + $0x648] sm:$0xff] %vm5317, %v8079
      %13261 = vst.msk [vmem:[%s294 + $0x650] sm:$0xff] %vm5317, %v8080
      %13262 = vst.msk [vmem:[%s294 + $0x658] sm:$0xff] %vm5317, %v8081
      %13263 = vst.msk [vmem:[%s294 + $0x660] sm:$0xff] %vm5317, %v8082
      %13264 = vst.msk [vmem:[%s294 + $0x668] sm:$0xff] %vm5317, %v8083
      %13265 = vst.msk [vmem:[%s294 + $0x670] sm:$0xff] %vm5317, %v8084
      %13266 = vst.msk [vmem:[%s294 + $0x678] sm:$0xff] %vm5317, %v8085
      %13267 = vst.msk [vmem:[%s294 + $0x680] sm:$0xff] %vm5317, %v8086
      %13268 = vst.msk [vmem:[%s294 + $0x688] sm:$0xff] %vm5317, %v8087
      %13269 = vst.msk [vmem:[%s294 + $0x690] sm:$0xff] %vm5317, %v8088
      %13270 = vst.msk [vmem:[%s294 + $0x698] sm:$0xff] %vm5317, %v8089
      %13271 = vst.msk [vmem:[%s294 + $0x6a0] sm:$0xff] %vm5317, %v8090
      %13272 = vst.msk [vmem:[%s294 + $0x6a8] sm:$0xff] %vm5317, %v8091
      %13273 = vst.msk [vmem:[%s294 + $0x6b0] sm:$0xff] %vm5317, %v8092
      %13274 = vst.msk [vmem:[%s294 + $0x6b8] sm:$0xff] %vm5317, %v8093
      %13275 = vst.msk [vmem:[%s294 + $0x6c0] sm:$0xff] %vm5317, %v8094
      %13276 = vst.msk [vmem:[%s294 + $0x6c8] sm:$0xff] %vm5317, %v8095
      %13277 = vst.msk [vmem:[%s294 + $0x6d0] sm:$0xff] %vm5317, %v8096
      %13278 = vst.msk [vmem:[%s294 + $0x6d8] sm:$0xff] %vm5317, %v8097
      %13279 = vst.msk [vmem:[%s294 + $0x6e0] sm:$0xff] %vm5317, %v8098
      %13280 = vst.msk [vmem:[%s294 + $0x6e8] sm:$0xff] %vm5317, %v8099
      %13281 = vst.msk [vmem:[%s294 + $0x6f0] sm:$0xff] %vm5317, %v8100
      %13282 = vst.msk [vmem:[%s294 + $0x6f8] sm:$0xff] %vm5317, %v8101
      %13283 = vst.msk [vmem:[%s294 + $0x700] sm:$0xff] %vm5317, %v8102
      %13284 = vst.msk [vmem:[%s294 + $0x708] sm:$0xff] %vm5317, %v8103
      %13285 = vst.msk [vmem:[%s294 + $0x710] sm:$0xff] %vm5317, %v8104
      %13286 = vst.msk [vmem:[%s294 + $0x718] sm:$0xff] %vm5317, %v8105
      %13287 = vst.msk [vmem:[%s294 + $0x720] sm:$0xff] %vm5317, %v8106
      %13288 = vst.msk [vmem:[%s294 + $0x728] sm:$0xff] %vm5317, %v8107
      %13289 = vst.msk [vmem:[%s294 + $0x730] sm:$0xff] %vm5317, %v8108
      %13290 = vst.msk [vmem:[%s294 + $0x738] sm:$0xff] %vm5317, %v8109
      %13291 = vst.msk [vmem:[%s294 + $0x740] sm:$0xff] %vm5317, %v8110
      %13292 = vst.msk [vmem:[%s294 + $0x748] sm:$0xff] %vm5317, %v8111
      %13293 = vst.msk [vmem:[%s294 + $0x750] sm:$0xff] %vm5317, %v8112
      %13294 = vst.msk [vmem:[%s294 + $0x758] sm:$0xff] %vm5317, %v8113
      %13295 = vst.msk [vmem:[%s294 + $0x760] sm:$0xff] %vm5317, %v8114
      %13296 = vst.msk [vmem:[%s294 + $0x768] sm:$0xff] %vm5317, %v8115
      %13297 = vst.msk [vmem:[%s294 + $0x770] sm:$0xff] %vm5317, %v8116
      %13298 = vst.msk [vmem:[%s294 + $0x778] sm:$0xff] %vm5317, %v8117
      %13299 = vst.msk [vmem:[%s294 + $0x780] sm:$0xff] %vm5317, %v8118
      %13300 = vst.msk [vmem:[%s294 + $0x788] sm:$0xff] %vm5317, %v8119
      %13301 = vst.msk [vmem:[%s294 + $0x790] sm:$0xff] %vm5317, %v8120
      %13302 = vst.msk [vmem:[%s294 + $0x798] sm:$0xff] %vm5317, %v8121
      %13303 = vst.msk [vmem:[%s294 + $0x7a0] sm:$0xff] %vm5317, %v8122
      %13304 = vst.msk [vmem:[%s294 + $0x7a8] sm:$0xff] %vm5317, %v8123
      %13305 = vst.msk [vmem:[%s294 + $0x7b0] sm:$0xff] %vm5317, %v8124
      %13306 = vst.msk [vmem:[%s294 + $0x7b8] sm:$0xff] %vm5317, %v8125
      %13307 = vst.msk [vmem:[%s294 + $0x7c0] sm:$0xff] %vm5317, %v8126
      %13308 = vst.msk [vmem:[%s294 + $0x7c8] sm:$0xff] %vm5317, %v8127
      %13309 = vst.msk [vmem:[%s294 + $0x7d0] sm:$0xff] %vm5317, %v8128
      %13310 = vst.msk [vmem:[%s294 + $0x7d8] sm:$0xff] %vm5317, %v8129
      %13311 = vst.msk [vmem:[%s294 + $0x7e0] sm:$0xff] %vm5317, %v8130
      %13312 = vst.msk [vmem:[%s294 + $0x7e8] sm:$0xff] %vm5317, %v8131
      %13313 = vst.msk [vmem:[%s294 + $0x7f0] sm:$0xff] %vm5317, %v8132
      %13314 = vst.msk [vmem:[%s294 + $0x7f8] sm:$0xff] %vm5317, %v8133
      %s13315 = smul.u32 64, %s19
      %p13316 = scmp.lt.s32.totalorder %s13315, 127
      %s13317 = scalar_select %p13316, %s13315, 127
      %s13318 = smul.addr %s13317, 8
      %s13319 = scalar_lea.vmem %s6, %s13318
      %s13320 = smul.u32 256, %s19
      %p13321 = scmp.lt.s32.totalorder %s13320, 511
      %s13322 = scalar_select %p13321, %s13320, 511
      %s13323 = smul.addr %s13322, 8
      %s13324 = scalar_lea.vmem %s7, %s13323
      // Predicated region
      $region45: #{attention_forward.1} parent=43 // pred_check
        %p13325 = pneg %p168
      $region46: #{attention_forward.1} parent=43 // pred_check_branch
        %13327 = sbr.rel (%p13325) target = $region48
      $region47: #{attention_forward.1} parent=43 // pred_region
        %s13328 = smul.u32 64, %s19
      $region48: #{attention_forward.1} parent=43 // pred_fallthru
        _
      // Predicated region
      $region49: #{attention_forward.1} parent=43 // pred_check
        %p13329 = pneg %p194
      $region50: #{attention_forward.1} parent=43 // pred_check_branch
        %13331 = sbr.rel (%p13329) target = $region52
      $region51: #{attention_forward.1} parent=43 // pred_region
        %s13332 = smul.u32 256, %s19
      $region52: #{attention_forward.1} parent=43 // pred_fallthru
        _
    $region44: #{attention_forward.1} parent=5 // pred_fallthru
      _
    %p13333 = scmp.le.s32.totalorder 2, %s14
    // Predicated region
    $region53: #{attention_forward.1} parent=5 // pred_check
      %p13334 = pneg %p13333
    $region54: #{attention_forward.1} parent=5 // pred_check_branch
      %13336 = sbr.rel (%p13334) target = $region56
    $region55: #{attention_forward.1} parent=5 // pred_region
      %s13337 = ssub.s32 %s14, 2
      // Predicated region
      $region57: #{attention_forward.1} parent=55 // pred_check
        %p13338 = pneg %p174
      $region58: #{attention_forward.1} parent=55 // pred_check_branch
        %13340 = sbr.rel (%p13338) target = $region60
      $region59: #{attention_forward.1} parent=55 // pred_region
        %s13341 = smul.u32 64, %s20
        %p13342 = scmp.lt.s32.totalorder %s13341, 127
        %s13343 = scalar_select %p13342, %s13341, 127
        %s13344 = smul.addr %s13343, 8
        %s13345 = scalar_lea.vmem %s6, %s13344
      $region60: #{attention_forward.1} parent=55 // pred_fallthru
        _
      // Predicated region
      $region61: #{attention_forward.1} parent=55 // pred_check
        %p13346 = pneg %p200
      $region62: #{attention_forward.1} parent=55 // pred_check_branch
        %13348 = sbr.rel (%p13346) target = $region64
      $region63: #{attention_forward.1} parent=55 // pred_region
        %s13349 = smul.u32 256, %s20
        %p13350 = scmp.lt.s32.totalorder %s13349, 511
        %s13351 = scalar_select %p13350, %s13349, 511
        %s13352 = smul.addr %s13351, 8
        %s13353 = scalar_lea.vmem %s7, %s13352
      $region64: #{attention_forward.1} parent=55 // pred_fallthru
        _
    $region56: #{attention_forward.1} parent=5 // pred_fallthru
      _
  $region6: #{attention_forward.1} parent=0 // loop_footer
    %s18 = sadd.s32 1, %s14
  $region7: #{attention_forward.1} parent=0 // loop_footer_branch
    %13 = sbr.rel target = $region3
  $region8: #{attention_forward.1} parent=0 // loop_exit
    _

</llo_original>
